<compile_context>
chip_gen: v5e
topology: v5e:2x2
jax: 0.10.0
libtpu: 0.0.40
codegen_flags: <defaults>
</compile_context>

<pallas_src>
import functools

import jax
import jax.numpy as jnp
from jax.experimental import pallas as pl
from jax.experimental.pallas import tpu as pltpu


# ----------------------------------------------------------------------------
# Pallas matmul kernel (the hot path): C = act(A @ B + bias)
#   - bf16 operands, f32 accumulation (preferred_element_type)
#   - K kept whole in one block (K <= 640 for every layer of this model), so no
#     reduction grid axis, no accumulator scratch, no zero-init pass.
# ----------------------------------------------------------------------------

def _round_up(x, m):
    return (x + m - 1) // m * m


def _make_mm_kernel(act):
    def kernel(a_ref, b_ref, bias_ref, o_ref):
        r = jnp.dot(a_ref[...], b_ref[...], preferred_element_type=jnp.float32)
        r = r + bias_ref[...]
        if act == 'relu':
            r = jnp.maximum(r, 0.0)
        elif act == 'sigmoid':
            r = jax.nn.sigmoid(r)
        elif act == 'tanh':
            r = jnp.tanh(r)
        o_ref[...] = r.astype(o_ref.dtype)

    return kernel


_MM_KERNELS = {a: _make_mm_kernel(a) for a in (None, 'relu', 'sigmoid', 'tanh')}


def pallas_matmul(a, b, bias=None, act=None):
    """a: (M,K), b: (K,N), bias: (N,) f32 or None -> (M,N) f32.

    Operands are fed to the MXU as bf16 with f32 accumulation; the bias add and
    activation stay f32 in the kernel epilogue.  M is tiled in multiples of 8
    (single block if M<=1024); K and N use full-array blocks so no 128-padding or
    pad/slice HBM passes are required (only a tiny K%8 pad on a few layers).
    """
    M, K = a.shape
    K2, N = b.shape
    assert K == K2
    a = a.astype(jnp.bfloat16)
    b = b.astype(jnp.bfloat16)

    Kp = _round_up(K, 8)
    if Kp != K:
        a = jnp.pad(a, ((0, 0), (0, Kp - K)))
        b = jnp.pad(b, ((0, Kp - K), (0, 0)))

    if M <= 1024:
        TM = _round_up(M, 8)
    else:
        nb = -(-M // 256)                       # number of M blocks
        TM = _round_up(-(-M // nb), 8)          # ~256-row tiles, 8-aligned, minimal pad
    Mp = _round_up(M, TM)
    if Mp != M:
        a = jnp.pad(a, ((0, Mp - M), (0, 0)))

    bias_vec = jnp.zeros((N,), jnp.float32) if bias is None else bias.astype(jnp.float32)
    bias2d = bias_vec.reshape(1, N)

    out = pl.pallas_call(
        _MM_KERNELS[act],
        out_shape=jax.ShapeDtypeStruct((Mp, N), jnp.float32),
        grid=(Mp // TM,),
        in_specs=[
            pl.BlockSpec((TM, Kp), lambda i: (i, 0)),
            pl.BlockSpec((Kp, N), lambda i: (0, 0)),
            pl.BlockSpec((1, N), lambda i: (0, 0)),
        ],
        out_specs=pl.BlockSpec((TM, N), lambda i: (i, 0)),
        compiler_params=pltpu.CompilerParams(
            dimension_semantics=("parallel",)),
    )(a, b, bias2d)
    if Mp != M:
        out = out[:M]
    return out


# ----------------------------------------------------------------------------
# Convolution = im2col (JAX glue, bf16) + Pallas matmul
# ----------------------------------------------------------------------------

def _pair(v):
    return (v, v) if isinstance(v, int) else v


def im2col(x, kh, kw, stride=1, padding=0, dilation=1):
    """x: (N,H,W,C) -> (N,OH,OW, kh*kw*C), patch ordering (ki, kj, c)."""
    sh, sw = _pair(stride)
    ph, pw = _pair(padding)
    dh, dw = _pair(dilation)
    N, H, W, C = x.shape
    xp = jnp.pad(x, ((0, 0), (ph, ph), (pw, pw), (0, 0)))
    OH = (H + 2 * ph - dh * (kh - 1) - 1) // sh + 1
    OW = (W + 2 * pw - dw * (kw - 1) - 1) // sw + 1
    cols = []
    for i in range(kh):
        for j in range(kw):
            cols.append(xp[:, i * dh: i * dh + sh * (OH - 1) + 1: sh,
                           j * dw: j * dw + sw * (OW - 1) + 1: sw, :])
    return jnp.concatenate(cols, axis=-1)


def conv2d(x, p, stride=1, padding=0, dilation=1, act=None):
    """x: (N,H,W,Cin), p['w']: (kh,kw,Cin,Cout) HWIO, p['b']: (Cout,)."""
    w, b = p['w'], p['b']
    kh, kw, cin, cout = w.shape
    if kh == 1 and kw == 1 and stride == 1 and padding == 0 and dilation == 1:
        N_, OH, OW, _ = x.shape
        cols = x.reshape(N_ * OH * OW, cin)          # 1x1: no im2col needed
    else:
        # cast to bf16 *before* im2col so the materialized patch buffer is half-size
        cols = im2col(x.astype(jnp.bfloat16), kh, kw, stride, padding, dilation)
        N_, OH, OW, Kc = cols.shape
        cols = cols.reshape(N_ * OH * OW, Kc)
    out = pallas_matmul(cols, w.reshape(kh * kw * cin, cout), b, act)
    return out.reshape(N_, OH, OW, cout)


def fold_bn_into_conv(cp, bnp, eps=1e-5):
    """Fold inference-mode batch norm into the conv weights/bias (weights kept bf16)."""
    scale = bnp['gamma'] / jnp.sqrt(bnp['var'] + eps)
    w = cp['w'].astype(jnp.float32) * scale
    b = (cp['b'] - bnp['mean']) * scale + bnp['beta']
    return {'w': w.astype(jnp.bfloat16), 'b': b}


def fold_encoder(p):
    return {'conv1': fold_bn_into_conv(p['conv1'], p['bn1']),
            'conv2': fold_bn_into_conv(p['conv2'], p['bn2']),
            'conv3': fold_bn_into_conv(p['conv3'], p['bn3']),
            'conv4': p['conv4']}


def fold_matching_net(p):
    """Fold BN and split conv1 along input channels into its f1 / f2 halves."""
    c1 = fold_bn_into_conv(p['conv1'], p['bn1'])
    c = c1['w'].shape[2] // 2
    return {
        'conv1f1': {'w': c1['w'][:, :, :c, :], 'b': jnp.zeros_like(c1['b'])},
        'conv1f2': {'w': c1['w'][:, :, c:, :], 'b': c1['b']},
        'conv2': fold_bn_into_conv(p['conv2'], p['bn2']),
        'conv3': p['conv3'],
    }


# ----------------------------------------------------------------------------
# Plain-JAX glue: norms, pooling, bilinear sampling, coordinate grids
# ----------------------------------------------------------------------------

def instance_norm(x, eps=1e-5):
    mean = x.mean(axis=(1, 2), keepdims=True)
    var = x.var(axis=(1, 2), keepdims=True)
    return (x - mean) / jnp.sqrt(var + eps)


def avg_pool2(x):
    B, H, W, C = x.shape
    return x.reshape(B, H // 2, 2, W // 2, 2, C).mean(axis=(2, 4))


def coordinate_grid(batch, h, w):
    ys, xs = jnp.meshgrid(jnp.arange(h, dtype=jnp.float32),
                          jnp.arange(w, dtype=jnp.float32), indexing='ij')
    g = jnp.stack([xs, ys], axis=-1)              # (h, w, 2) = (x, y)
    return jnp.broadcast_to(g, (batch, h, w, 2))


def grid_sample_nhwc(img, grid):
    """Bilinear, align_corners=True, zero padding. img (B,Hi,Wi,C), grid (B,Hg,Wg,2)=(x,y) in [-1,1]."""
    # TODO(synk): data-dependent gather left to XLA; a one-hot-matmul Pallas variant only pays
    #             off when the source map is tiny relative to the number of sample points.
    B, Hi, Wi, C = img.shape
    x = (grid[..., 0] + 1.0) * 0.5 * (Wi - 1)
    y = (grid[..., 1] + 1.0) * 0.5 * (Hi - 1)
    x0 = jnp.floor(x)
    y0 = jnp.floor(y)
    x1, y1 = x0 + 1.0, y0 + 1.0

    def gather(xi, yi):
        valid = (xi >= 0) & (xi <= Wi - 1) & (yi >= 0) & (yi <= Hi - 1)
        xc = jnp.clip(xi, 0, Wi - 1).astype(jnp.int32)
        yc = jnp.clip(yi, 0, Hi - 1).astype(jnp.int32)
        bidx = jnp.arange(B).reshape(B, 1, 1)
        vals = img[bidx, yc, xc]                   # (B,Hg,Wg,C)
        return vals * valid[..., None].astype(img.dtype)

    wa = (x1 - x) * (y1 - y)
    wb = (x1 - x) * (y - y0)
    wc = (x - x0) * (y1 - y)
    wd = (x - x0) * (y - y0)
    return (wa[..., None] * gather(x0, y0) + wb[..., None] * gather(x0, y1) +
            wc[..., None] * gather(x1, y0) + wd[..., None] * gather(x1, y1))


# ----------------------------------------------------------------------------
# Sub-networks
# ----------------------------------------------------------------------------

def feature_encoder_instance(p, x):
    """fnet: conv stack with per-sample instance norm (not foldable)."""
    x = conv2d(x, p['conv1'], stride=2, padding=3)          # 7x7 /2
    x = jnp.maximum(instance_norm(x), 0.0)
    x = conv2d(x, p['conv2'], stride=2, padding=1)          # 3x3 /2
    x = jnp.maximum(instance_norm(x), 0.0)
    x = conv2d(x, p['conv3'], stride=2, padding=1)          # 3x3 /2
    x = jnp.maximum(instance_norm(x), 0.0)
    x = conv2d(x, p['conv4'])                               # 1x1
    return x


def feature_encoder_folded(pf, x):
    """cnet: convs with inference BN pre-folded -> ReLU fused into the matmul epilogue."""
    x = conv2d(x, pf['conv1'], stride=2, padding=3, act='relu')
    x = conv2d(x, pf['conv2'], stride=2, padding=1, act='relu')
    x = conv2d(x, pf['conv3'], stride=2, padding=1, act='relu')
    x = conv2d(x, pf['conv4'])
    return x


def matching_net_cost(mp, f1, samp):
    """DICL matching net with the f1 half of conv1 hoisted out of the displacement batch.

    f1: (B,h,w,c); samp: (B,D,D,h,w,c).  Returns per-displacement cost (B, D*D, h, w)."""
    B, D, _, h, w, c = samp.shape
    y1 = conv2d(f1, mp['conv1f1'], padding=1)                         # once per level
    y2 = conv2d(samp.reshape(B * D * D, h, w, c), mp['conv1f2'], padding=1)
    nch = y2.shape[-1]
    y = jnp.maximum(y2.reshape(B, D * D, h, w, nch) + y1[:, None], 0.0)
    x = y.reshape(B * D * D, h, w, nch)
    x = conv2d(x, mp['conv2'], padding=1, act='relu')
    x = conv2d(x, mp['conv3'], padding=1)                             # (B*D*D,h,w,1)
    return x.reshape(B, D * D, h, w)


def correlation_module(mnet_p, dap_p, fmap1, fmap2, coords, radius):
    """Exact CorrelationModule.forward semantics (dap=True, 'separate', mask_costs=[])."""
    B, h, w, _ = coords.shape
    r = radius
    D = 2 * r + 1
    dx = jnp.linspace(-r, r, D, dtype=jnp.float32)
    dy = jnp.linspace(-r, r, D, dtype=jnp.float32)
    delta = jnp.stack(jnp.meshgrid(dx, dy, indexing='ij'), axis=-1)    # (D,D,2)
    delta = delta.reshape(1, D, 1, D, 1, 2)
    coords_e = coords.reshape(B, 1, h, 1, w, 2)

    out = []
    for i, (f1, f2) in enumerate(zip(fmap1, fmap2)):
        # NOTE: the reference code normalizes with fmap1's (full-resolution) spatial dims.
        _, h1, w1, c = f1.shape
        cen = coords_e / (2.0 ** i) + delta                            # (B,D,h,D,w,2)
        cx = 2.0 * cen[..., 0] / max(w1 - 1, 1) - 1.0
        cy = 2.0 * cen[..., 1] / max(h1 - 1, 1) - 1.0
        grid = jnp.stack([cx, cy], axis=-1).reshape(B, D * h, D * w, 2)

        samp = grid_sample_nhwc(f2, grid)                              # (B,D*h,D*w,c)
        samp = samp.reshape(B, D, h, D, w, c).transpose(0, 1, 3, 2, 4, 5)  # (B,D,D,h,w,c)

        cost = matching_net_cost(mnet_p[i], f1, samp)                  # (B,D*D,h,w)

        # DAP ('separate'): 1x1 conv over displacement channels, identity-initialized, no bias.
        cost = cost.transpose(0, 2, 3, 1).reshape(B * h * w, D * D)
        cost = pallas_matmul(cost, dap_p[i].T)
        cost = cost.reshape(B, h, w, D * D)
        out.append(cost)

    return jnp.concatenate(out, axis=-1)                               # (B,h,w, levels*D*D)


def update_block(p, h, x, corr, flow):
    """RAFT BasicUpdateBlock: motion encoder + SepConvGRU + flow head (+ fused upsample-mask head)."""
    hdim = h.shape[-1]
    cor = conv2d(corr, p['convc1'], act='relu')                        # 1x1
    cor = conv2d(cor, p['convc2'], padding=1, act='relu')              # 3x3
    flo = conv2d(flow, p['convf1'], padding=3, act='relu')             # 7x7
    flo = conv2d(flo, p['convf2'], padding=1, act='relu')              # 3x3
    mf = conv2d(jnp.concatenate([cor, flo], axis=-1), p['conv'], padding=1, act='relu')
    mf = jnp.concatenate([mf, flow], axis=-1)
    inp = jnp.concatenate([x, mf], axis=-1)

    # horizontal (1x5) GRU — z and r gates share the same input: fused into one matmul
    hx = jnp.concatenate([h, inp], axis=-1)
    zr = conv2d(hx, p['convzr1'], padding=(0, 2), act='sigmoid')
    z, r = zr[..., :hdim], zr[..., hdim:]
    q = conv2d(jnp.concatenate([r * h, inp], axis=-1), p['convq1'], padding=(0, 2), act='tanh')
    h = (1.0 - z) * h + z * q
    # vertical (5x1) GRU
    hx = jnp.concatenate([h, inp], axis=-1)
    zr = conv2d(hx, p['convzr2'], padding=(2, 0), act='sigmoid')
    z, r = zr[..., :hdim], zr[..., hdim:]
    q = conv2d(jnp.concatenate([r * h, inp], axis=-1), p['convq2'], padding=(2, 0), act='tanh')
    h = (1.0 - z) * h + z * q

    # flow-head conv1 and upnet conv1 both read the new h: fused 3x3 conv with a
    # lane-dense 128-wide output, then split.
    hid = conv2d(h, p['head1'], padding=1, act='relu')                 # (..,128)
    d = conv2d(hid[..., :64], p['fh2'], padding=1)                     # flow delta (..,2)
    mask_logits = conv2d(hid[..., 64:], p['up2'])                      # 1x1 -> 8*8*9
    return h, d, mask_logits


def up8_network(mask_logits, flow):
    """Learned 8x convex upsampling of flow (mask logits already computed from h)."""
    m = 0.25 * mask_logits
    B, H, W, _ = flow.shape
    mask = jax.nn.softmax(m.reshape(B, H, W, 9, 8, 8), axis=3)
    fp = jnp.pad(8.0 * flow, ((0, 0), (1, 1), (1, 1), (0, 0)))
    neigh = jnp.stack([fp[:, i:i + H, j:j + W, :]
                       for i in range(3) for j in range(3)], axis=3)   # (B,H,W,9,2)
    up = jnp.einsum('bhwkpq,bhwkc->bhwpqc', mask, neigh)               # (B,H,W,8,8,2)
    up = up.transpose(0, 1, 3, 2, 4, 5).reshape(B, 8 * H, 8 * W, 2)
    return up


# ----------------------------------------------------------------------------
# Full forward pass
# ----------------------------------------------------------------------------

def raft_plus_dicl_forward(params, img1, img2, *, cfg):
    levels, radius = cfg['levels'], cfg['radius']
    hdim, cdim = cfg['hdim'], cfg['cdim']
    iterations = cfg['iterations']

    # NCHW -> NHWC
    img1 = jnp.transpose(img1, (0, 2, 3, 1)).astype(jnp.float32)
    img2 = jnp.transpose(img2, (0, 2, 3, 1)).astype(jnp.float32)
    B, H, W, _ = img1.shape

    # fold inference-mode BN into conv weights once (context encoder + matching nets)
    cnet_p = fold_encoder(params['cnet'])
    mnet_p = [fold_matching_net(mp) for mp in params['cvol']['mnet']]
    dap_p = params['cvol']['dap']

    # fnet: PoolEncoder (raft-avgpool), shared weights + per-sample instance norm ->
    # run both frames in a single batched pass, then split.
    feats = feature_encoder_instance(params['fnet'], jnp.concatenate([img1, img2], axis=0))
    f1, f2 = feats[:B], feats[B:]
    fmap1 = [f1] * levels
    fmap2 = [f2]
    cur = f2
    for _ in range(1, levels):
        cur = avg_pool2(cur)
        fmap2.append(cur)

    # context net
    ctx = feature_encoder_folded(cnet_p, img1)
    h = jnp.tanh(ctx[..., :hdim])
    x = jnp.maximum(ctx[..., hdim:hdim + cdim], 0.0)

    coords0 = coordinate_grid(B, H // 8, W // 8)
    coords1 = coords0
    flow = coords1 - coords0

    out = []
    for _ in range(iterations):
        corr = correlation_module(mnet_p, dap_p, fmap1, fmap2, coords1, radius)
        h, d, mask_logits = update_block(params['update'], h, x, corr, flow)
        coords1 = coords1 + d
        flow = coords1 - coords0
        flow_up = up8_network(mask_logits, flow)
        out.append(jnp.transpose(flow_up, (0, 3, 1, 2)))               # back to NCHW (B,2,H,W)
    # TODO(synk): corr_flow / flow_reg branch not exercised (default corr_flow=False).
    return out


# ----------------------------------------------------------------------------
# Deterministic parameter initialization (weights stored bf16, biases/BN f32)
# ----------------------------------------------------------------------------

def init_params(key, *, corr_channels, levels, radius, hdim, cdim):
    keys = list(jax.random.split(key, 256))
    kidx = [0]

    def nxt():
        k = keys[kidx[0]]
        kidx[0] += 1
        return k

    def conv_p(kh, kw, cin, cout):
        std = (2.0 / (kh * kw * cin)) ** 0.5
        w = std * jax.random.normal(nxt(), (kh, kw, cin, cout), jnp.float32)
        return {'w': w.astype(jnp.bfloat16), 'b': jnp.zeros((cout,), jnp.float32)}

    def bn_p(c):
        return {'gamma': jnp.ones((c,), jnp.float32), 'beta': jnp.zeros((c,), jnp.float32),
                'mean': jnp.zeros((c,), jnp.float32), 'var': jnp.ones((c,), jnp.float32)}

    def enc(out_dim):
        return {'conv1': conv_p(7, 7, 3, 32), 'bn1': bn_p(32),
                'conv2': conv_p(3, 3, 32, 48), 'bn2': bn_p(48),
                'conv3': conv_p(3, 3, 48, 64), 'bn3': bn_p(64),
                'conv4': conv_p(1, 1, 64, out_dim)}

    D = 2 * radius + 1
    corr_planes = levels * D * D
    mdim = 64

    params = {
        'fnet': enc(corr_channels),
        'cnet': enc(hdim + cdim),
        'cvol': {
            'mnet': [{'conv1': conv_p(3, 3, 2 * corr_channels, 64), 'bn1': bn_p(64),
                      'conv2': conv_p(3, 3, 64, 32), 'bn2': bn_p(32),
                      'conv3': conv_p(3, 3, 32, 1)} for _ in range(levels)],
            'dap': [jnp.eye(D * D, dtype=jnp.float32) for _ in range(levels)],
        },
        'update': {
            'convc1': conv_p(1, 1, corr_planes, 64),
            'convc2': conv_p(3, 3, 64, 48),
            'convf1': conv_p(7, 7, 2, 32),
            'convf2': conv_p(3, 3, 32, 16),
            'conv':   conv_p(3, 3, 48 + 16, mdim - 2),
            'convzr1': conv_p(1, 5, hdim + mdim + cdim, 2 * hdim),   # fused z+r (horizontal)
            'convq1':  conv_p(1, 5, hdim + mdim + cdim, hdim),
            'convzr2': conv_p(5, 1, hdim + mdim + cdim, 2 * hdim),   # fused z+r (vertical)
            'convq2':  conv_p(5, 1, hdim + mdim + cdim, hdim),
            'head1': conv_p(3, 3, hdim, 128),   # fused flow-head conv1 (64) + upnet conv1 (64)
            'fh2':   conv_p(3, 3, 64, 2),
            'up2':   conv_p(1, 1, 64, 8 * 8 * 9),
        },
    }
    return params


# ----------------------------------------------------------------------------
# Driver
# ----------------------------------------------------------------------------

if __name__ == "__main__":
    cfg = dict(levels=2, radius=3, hdim=32, cdim=32, iterations=2)
    corr_channels = 16
    B, H, W = 2, 3, 32  # placeholder to keep linters quiet
    B, H, W = 2, 32, 32

    key = jax.random.PRNGKey(0)
    k_img1, k_img2, k_par = jax.random.split(key, 3)
    img1 = jax.random.normal(k_img1, (B, 3, H, W), jnp.float32)
    img2 = jax.random.normal(k_img2, (B, 3, H, W), jnp.float32)

    params = init_params(k_par, corr_channels=corr_channels, levels=cfg['levels'],
                         radius=cfg['radius'], hdim=cfg['hdim'], cdim=cfg['cdim'])

    fwd = jax.jit(functools.partial(raft_plus_dicl_forward, cfg=cfg))
    outputs = fwd(params, img1, img2)
    outputs = [jax.block_until_ready(o) for o in outputs]

    assert len(outputs) == cfg['iterations']
    for o in outputs:
        assert o.shape == (B, 2, H, W), o.shape
        assert o.dtype == jnp.float32
        assert bool(jnp.all(jnp.isfinite(o)))

    print("KERNEL_OK")
</pallas_src>

<mosaic_0001>
module attributes {stable_mosaic.version = 11 : i64} {
  func.func @kernel(%arg0: i32, %arg1: memref<1024x152xbf16, #tpu.memory_space<vmem>>, %arg2: memref<152x32xbf16, #tpu.memory_space<vmem>>, %arg3: memref<1x32xf32, #tpu.memory_space<vmem>>, %arg4: memref<1024x32xf32, #tpu.memory_space<vmem>>) attributes {dimension_semantics = [#tpu.dimension_semantics<parallel>], iteration_bounds = array<i64: 1>, scalar_prefetch = 0 : i64, scratch_operands = 0 : i64, tpu.core_type = #tpu.core_type<tc>, window_params = [{transform_indices = @transform_0, window_bounds = array<i64: 1024, 152>}, {pipeline_mode = #tpu.pipeline_mode<synchronous>, transform_indices = @transform_1, window_bounds = array<i64: 152, 32>}, {pipeline_mode = #tpu.pipeline_mode<synchronous>, transform_indices = @transform_2, window_bounds = array<i64: 1, 32>}, {transform_indices = @transform_3, window_bounds = array<i64: 1024, 32>}]} {
    %c0 = arith.constant 0 : index
    %c0_0 = arith.constant 0 : index
    %0 = vector.load %arg1[%c0, %c0_0] : memref<1024x152xbf16, #tpu.memory_space<vmem>>, vector<1024x152xbf16>
    %c0_1 = arith.constant 0 : index
    %c0_2 = arith.constant 0 : index
    %1 = vector.load %arg2[%c0_1, %c0_2] : memref<152x32xbf16, #tpu.memory_space<vmem>>, vector<152x32xbf16>
    %cst = arith.constant dense<0.000000e+00> : vector<1024x32xf32>
    %2 = tpu.matmul %0, %1, %cst {dimension_numbers = #tpu.dot_dimension_numbers<[1], [0], [0], [1], [0, 0, 1, 1], [], []>} : vector<1024x152xbf16>, vector<152x32xbf16>, vector<1024x32xf32> -> vector<1024x32xf32>
    %c0_3 = arith.constant 0 : index
    %c0_4 = arith.constant 0 : index
    %3 = vector.load %arg3[%c0_3, %c0_4] : memref<1x32xf32, #tpu.memory_space<vmem>>, vector<1x32xf32>
    %4 = vector.broadcast %3 : vector<1x32xf32> to vector<1024x32xf32>
    %5 = arith.addf %2, %4 : vector<1024x32xf32>
    %c0_5 = arith.constant 0 : index
    %c0_6 = arith.constant 0 : index
    %6 = vector.load %arg4[%c0_5, %c0_6] : memref<1024x32xf32, #tpu.memory_space<vmem>>, vector<1024x32xf32>
    tpu.vector_store %arg4[%c0_5, %c0_6], %5 {strides = array<i32>} : memref<1024x32xf32, #tpu.memory_space<vmem>>, vector<1024x32xf32>,
    return
  }
  func.func @transform_0(%arg0: i32) -> (i32, i32) {
    %c0_i32 = arith.constant 0 : i32
    %c0_i32_0 = arith.constant 0 : i32
    return %arg0, %c0_i32 : i32, i32
  }
  func.func @transform_1(%arg0: i32) -> (i32, i32) {
    %c0_i32 = arith.constant 0 : i32
    %c0_i32_0 = arith.constant 0 : i32
    %c0_i32_1 = arith.constant 0 : i32
    return %c0_i32, %c0_i32_0 : i32, i32
  }
  func.func @transform_2(%arg0: i32) -> (i32, i32) {
    %c0_i32 = arith.constant 0 : i32
    %c0_i32_0 = arith.constant 0 : i32
    %c0_i32_1 = arith.constant 0 : i32
    return %c0_i32, %c0_i32_0 : i32, i32
  }
  func.func @transform_3(%arg0: i32) -> (i32, i32) {
    %c0_i32 = arith.constant 0 : i32
    %c0_i32_0 = arith.constant 0 : i32
    return %arg0, %c0_i32 : i32, i32
  }
}

module attributes {stable_mosaic.version = 11 : i64} {
  func.func @kernel(%arg0: i32, %arg1: memref<256x288xbf16, #tpu.memory_space<vmem>>, %arg2: memref<288x48xbf16, #tpu.memory_space<vmem>>, %arg3: memref<1x48xf32, #tpu.memory_space<vmem>>, %arg4: memref<256x48xf32, #tpu.memory_space<vmem>>) attributes {dimension_semantics = [#tpu.dimension_semantics<parallel>], iteration_bounds = array<i64: 1>, scalar_prefetch = 0 : i64, scratch_operands = 0 : i64, tpu.core_type = #tpu.core_type<tc>, window_params = [{transform_indices = @transform_0, window_bounds = array<i64: 256, 288>}, {pipeline_mode = #tpu.pipeline_mode<synchronous>, transform_indices = @transform_1, window_bounds = array<i64: 288, 48>}, {pipeline_mode = #tpu.pipeline_mode<synchronous>, transform_indices = @transform_2, window_bounds = array<i64: 1, 48>}, {transform_indices = @transform_3, window_bounds = array<i64: 256, 48>}]} {
    %c0 = arith.constant 0 : index
    %c0_0 = arith.constant 0 : index
    %0 = vector.load %arg1[%c0, %c0_0] : memref<256x288xbf16, #tpu.memory_space<vmem>>, vector<256x288xbf16>
    %c0_1 = arith.constant 0 : index
    %c0_2 = arith.constant 0 : index
    %1 = vector.load %arg2[%c0_1, %c0_2] : memref<288x48xbf16, #tpu.memory_space<vmem>>, vector<288x48xbf16>
    %cst = arith.constant dense<0.000000e+00> : vector<256x48xf32>
    %2 = tpu.matmul %0, %1, %cst {dimension_numbers = #tpu.dot_dimension_numbers<[1], [0], [0], [1], [0, 0, 1, 1], [], []>} : vector<256x288xbf16>, vector<288x48xbf16>, vector<256x48xf32> -> vector<256x48xf32>
    %c0_3 = arith.constant 0 : index
    %c0_4 = arith.constant 0 : index
    %3 = vector.load %arg3[%c0_3, %c0_4] : memref<1x48xf32, #tpu.memory_space<vmem>>, vector<1x48xf32>
    %4 = vector.broadcast %3 : vector<1x48xf32> to vector<256x48xf32>
    %5 = arith.addf %2, %4 : vector<256x48xf32>
    %c0_5 = arith.constant 0 : index
    %c0_6 = arith.constant 0 : index
    %6 = vector.load %arg4[%c0_5, %c0_6] : memref<256x48xf32, #tpu.memory_space<vmem>>, vector<256x48xf32>
    tpu.vector_store %arg4[%c0_5, %c0_6], %5 {strides = array<i32>} : memref<256x48xf32, #tpu.memory_space<vmem>>, vector<256x48xf32>,
    return
  }
  func.func @transform_0(%arg0: i32) -> (i32, i32) {
    %c0_i32 = arith.constant 0 : i32
    %c0_i32_0 = arith.constant 0 : i32
    return %arg0, %c0_i32 : i32, i32
  }
  func.func @transform_1(%arg0: i32) -> (i32, i32) {
    %c0_i32 = arith.constant 0 : i32
    %c0_i32_0 = arith.constant 0 : i32
    %c0_i32_1 = arith.constant 0 : i32
    return %c0_i32, %c0_i32_0 : i32, i32
  }
  func.func @transform_2(%arg0: i32) -> (i32, i32) {
    %c0_i32 = arith.constant 0 : i32
    %c0_i32_0 = arith.constant 0 : i32
    %c0_i32_1 = arith.constant 0 : i32
    return %c0_i32, %c0_i32_0 : i32, i32
  }
  func.func @transform_3(%arg0: i32) -> (i32, i32) {
    %c0_i32 = arith.constant 0 : i32
    %c0_i32_0 = arith.constant 0 : i32
    return %arg0, %c0_i32 : i32, i32
  }
}

module attributes {stable_mosaic.version = 11 : i64} {
  func.func @kernel(%arg0: i32, %arg1: memref<64x432xbf16, #tpu.memory_space<vmem>>, %arg2: memref<432x64xbf16, #tpu.memory_space<vmem>>, %arg3: memref<1x64xf32, #tpu.memory_space<vmem>>, %arg4: memref<64x64xf32, #tpu.memory_space<vmem>>) attributes {dimension_semantics = [#tpu.dimension_semantics<parallel>], iteration_bounds = array<i64: 1>, scalar_prefetch = 0 : i64, scratch_operands = 0 : i64, tpu.core_type = #tpu.core_type<tc>, window_params = [{transform_indices = @transform_0, window_bounds = array<i64: 64, 432>}, {pipeline_mode = #tpu.pipeline_mode<synchronous>, transform_indices = @transform_1, window_bounds = array<i64: 432, 64>}, {pipeline_mode = #tpu.pipeline_mode<synchronous>, transform_indices = @transform_2, window_bounds = array<i64: 1, 64>}, {transform_indices = @transform_3, window_bounds = array<i64: 64, 64>}]} {
    %c0 = arith.constant 0 : index
    %c0_0 = arith.constant 0 : index
    %0 = vector.load %arg1[%c0, %c0_0] : memref<64x432xbf16, #tpu.memory_space<vmem>>, vector<64x432xbf16>
    %c0_1 = arith.constant 0 : index
    %c0_2 = arith.constant 0 : index
    %1 = vector.load %arg2[%c0_1, %c0_2] : memref<432x64xbf16, #tpu.memory_space<vmem>>, vector<432x64xbf16>
    %cst = arith.constant dense<0.000000e+00> : vector<64x64xf32>
    %2 = tpu.matmul %0, %1, %cst {dimension_numbers = #tpu.dot_dimension_numbers<[1], [0], [0], [1], [0, 0, 1, 1], [], []>} : vector<64x432xbf16>, vector<432x64xbf16>, vector<64x64xf32> -> vector<64x64xf32>
    %c0_3 = arith.constant 0 : index
    %c0_4 = arith.constant 0 : index
    %3 = vector.load %arg3[%c0_3, %c0_4] : memref<1x64xf32, #tpu.memory_space<vmem>>, vector<1x64xf32>
    %4 = vector.broadcast %3 : vector<1x64xf32> to vector<64x64xf32>
    %5 = arith.addf %2, %4 : vector<64x64xf32>
    %c0_5 = arith.constant 0 : index
    %c0_6 = arith.constant 0 : index
    %6 = vector.load %arg4[%c0_5, %c0_6] : memref<64x64xf32, #tpu.memory_space<vmem>>, vector<64x64xf32>
    tpu.vector_store %arg4[%c0_5, %c0_6], %5 {strides = array<i32>} : memref<64x64xf32, #tpu.memory_space<vmem>>, vector<64x64xf32>,
    return
  }
  func.func @transform_0(%arg0: i32) -> (i32, i32) {
    %c0_i32 = arith.constant 0 : i32
    %c0_i32_0 = arith.constant 0 : i32
    return %arg0, %c0_i32 : i32, i32
  }
  func.func @transform_1(%arg0: i32) -> (i32, i32) {
    %c0_i32 = arith.constant 0 : i32
    %c0_i32_0 = arith.constant 0 : i32
    %c0_i32_1 = arith.constant 0 : i32
    return %c0_i32, %c0_i32_0 : i32, i32
  }
  func.func @transform_2(%arg0: i32) -> (i32, i32) {
    %c0_i32 = arith.constant 0 : i32
    %c0_i32_0 = arith.constant 0 : i32
    %c0_i32_1 = arith.constant 0 : i32
    return %c0_i32, %c0_i32_0 : i32, i32
  }
  func.func @transform_3(%arg0: i32) -> (i32, i32) {
    %c0_i32 = arith.constant 0 : i32
    %c0_i32_0 = arith.constant 0 : i32
    return %arg0, %c0_i32 : i32, i32
  }
}

module attributes {stable_mosaic.version = 11 : i64} {
  func.func @kernel(%arg0: i32, %arg1: memref<64x64xbf16, #tpu.memory_space<vmem>>, %arg2: memref<64x16xbf16, #tpu.memory_space<vmem>>, %arg3: memref<1x16xf32, #tpu.memory_space<vmem>>, %arg4: memref<64x16xf32, #tpu.memory_space<vmem>>) attributes {dimension_semantics = [#tpu.dimension_semantics<parallel>], iteration_bounds = array<i64: 1>, scalar_prefetch = 0 : i64, scratch_operands = 0 : i64, tpu.core_type = #tpu.core_type<tc>, window_params = [{transform_indices = @transform_0, window_bounds = array<i64: 64, 64>}, {pipeline_mode = #tpu.pipeline_mode<synchronous>, transform_indices = @transform_1, window_bounds = array<i64: 64, 16>}, {pipeline_mode = #tpu.pipeline_mode<synchronous>, transform_indices = @transform_2, window_bounds = array<i64: 1, 16>}, {transform_indices = @transform_3, window_bounds = array<i64: 64, 16>}]} {
    %c0 = arith.constant 0 : index
    %c0_0 = arith.constant 0 : index
    %0 = vector.load %arg1[%c0, %c0_0] : memref<64x64xbf16, #tpu.memory_space<vmem>>, vector<64x64xbf16>
    %c0_1 = arith.constant 0 : index
    %c0_2 = arith.constant 0 : index
    %1 = vector.load %arg2[%c0_1, %c0_2] : memref<64x16xbf16, #tpu.memory_space<vmem>>, vector<64x16xbf16>
    %cst = arith.constant dense<0.000000e+00> : vector<64x16xf32>
    %2 = tpu.matmul %0, %1, %cst {dimension_numbers = #tpu.dot_dimension_numbers<[1], [0], [0], [1], [0, 0, 1, 1], [], []>} : vector<64x64xbf16>, vector<64x16xbf16>, vector<64x16xf32> -> vector<64x16xf32>
    %c0_3 = arith.constant 0 : index
    %c0_4 = arith.constant 0 : index
    %3 = vector.load %arg3[%c0_3, %c0_4] : memref<1x16xf32, #tpu.memory_space<vmem>>, vector<1x16xf32>
    %4 = vector.broadcast %3 : vector<1x16xf32> to vector<64x16xf32>
    %5 = arith.addf %2, %4 : vector<64x16xf32>
    %c0_5 = arith.constant 0 : index
    %c0_6 = arith.constant 0 : index
    %6 = vector.load %arg4[%c0_5, %c0_6] : memref<64x16xf32, #tpu.memory_space<vmem>>, vector<64x16xf32>
    tpu.vector_store %arg4[%c0_5, %c0_6], %5 {strides = array<i32>} : memref<64x16xf32, #tpu.memory_space<vmem>>, vector<64x16xf32>,
    return
  }
  func.func @transform_0(%arg0: i32) -> (i32, i32) {
    %c0_i32 = arith.constant 0 : i32
    %c0_i32_0 = arith.constant 0 : i32
    return %arg0, %c0_i32 : i32, i32
  }
  func.func @transform_1(%arg0: i32) -> (i32, i32) {
    %c0_i32 = arith.constant 0 : i32
    %c0_i32_0 = arith.constant 0 : i32
    %c0_i32_1 = arith.constant 0 : i32
    return %c0_i32, %c0_i32_0 : i32, i32
  }
  func.func @transform_2(%arg0: i32) -> (i32, i32) {
    %c0_i32 = arith.constant 0 : i32
    %c0_i32_0 = arith.constant 0 : i32
    %c0_i32_1 = arith.constant 0 : i32
    return %c0_i32, %c0_i32_0 : i32, i32
  }
  func.func @transform_3(%arg0: i32) -> (i32, i32) {
    %c0_i32 = arith.constant 0 : i32
    %c0_i32_0 = arith.constant 0 : i32
    return %arg0, %c0_i32 : i32, i32
  }
}

module attributes {stable_mosaic.version = 11 : i64} {
  func.func @kernel(%arg0: i32, %arg1: memref<224x144xbf16, #tpu.memory_space<vmem>>, %arg2: memref<144x64xbf16, #tpu.memory_space<vmem>>, %arg3: memref<1x64xf32, #tpu.memory_space<vmem>>, %arg4: memref<224x64xf32, #tpu.memory_space<vmem>>) attributes {dimension_semantics = [#tpu.dimension_semantics<parallel>], iteration_bounds = array<i64: 7>, scalar_prefetch = 0 : i64, scratch_operands = 0 : i64, tpu.core_type = #tpu.core_type<tc>, window_params = [{transform_indices = @transform_0, window_bounds = array<i64: 224, 144>}, {pipeline_mode = #tpu.pipeline_mode<synchronous>, transform_indices = @transform_1, window_bounds = array<i64: 144, 64>}, {pipeline_mode = #tpu.pipeline_mode<synchronous>, transform_indices = @transform_2, window_bounds = array<i64: 1, 64>}, {transform_indices = @transform_3, window_bounds = array<i64: 224, 64>}]} {
    %c0 = arith.constant 0 : index
    %c0_0 = arith.constant 0 : index
    %0 = vector.load %arg1[%c0, %c0_0] : memref<224x144xbf16, #tpu.memory_space<vmem>>, vector<224x144xbf16>
    %c0_1 = arith.constant 0 : index
    %c0_2 = arith.constant 0 : index
    %1 = vector.load %arg2[%c0_1, %c0_2] : memref<144x64xbf16, #tpu.memory_space<vmem>>, vector<144x64xbf16>
    %cst = arith.constant dense<0.000000e+00> : vector<224x64xf32>
    %2 = tpu.matmul %0, %1, %cst {dimension_numbers = #tpu.dot_dimension_numbers<[1], [0], [0], [1], [0, 0, 1, 1], [], []>} : vector<224x144xbf16>, vector<144x64xbf16>, vector<224x64xf32> -> vector<224x64xf32>
    %c0_3 = arith.constant 0 : index
    %c0_4 = arith.constant 0 : index
    %3 = vector.load %arg3[%c0_3, %c0_4] : memref<1x64xf32, #tpu.memory_space<vmem>>, vector<1x64xf32>
    %4 = vector.broadcast %3 : vector<1x64xf32> to vector<224x64xf32>
    %5 = arith.addf %2, %4 : vector<224x64xf32>
    %c0_5 = arith.constant 0 : index
    %c0_6 = arith.constant 0 : index
    %6 = vector.load %arg4[%c0_5, %c0_6] : memref<224x64xf32, #tpu.memory_space<vmem>>, vector<224x64xf32>
    tpu.vector_store %arg4[%c0_5, %c0_6], %5 {strides = array<i32>} : memref<224x64xf32, #tpu.memory_space<vmem>>, vector<224x64xf32>,
    return
  }
  func.func @transform_0(%arg0: i32) -> (i32, i32) {
    %c0_i32 = arith.constant 0 : i32
    %c0_i32_0 = arith.constant 0 : i32
    return %arg0, %c0_i32 : i32, i32
  }
  func.func @transform_1(%arg0: i32) -> (i32, i32) {
    %c0_i32 = arith.constant 0 : i32
    %c0_i32_0 = arith.constant 0 : i32
    %c0_i32_1 = arith.constant 0 : i32
    return %c0_i32, %c0_i32_0 : i32, i32
  }
  func.func @transform_2(%arg0: i32) -> (i32, i32) {
    %c0_i32 = arith.constant 0 : i32
    %c0_i32_0 = arith.constant 0 : i32
    %c0_i32_1 = arith.constant 0 : i32
    return %c0_i32, %c0_i32_0 : i32, i32
  }
  func.func @transform_3(%arg0: i32) -> (i32, i32) {
    %c0_i32 = arith.constant 0 : i32
    %c0_i32_0 = arith.constant 0 : i32
    return %arg0, %c0_i32 : i32, i32
  }
}

module attributes {stable_mosaic.version = 11 : i64} {
  func.func @kernel(%arg0: i32, %arg1: memref<32x144xbf16, #tpu.memory_space<vmem>>, %arg2: memref<144x64xbf16, #tpu.memory_space<vmem>>, %arg3: memref<1x64xf32, #tpu.memory_space<vmem>>, %arg4: memref<32x64xf32, #tpu.memory_space<vmem>>) attributes {dimension_semantics = [#tpu.dimension_semantics<parallel>], iteration_bounds = array<i64: 1>, scalar_prefetch = 0 : i64, scratch_operands = 0 : i64, tpu.core_type = #tpu.core_type<tc>, window_params = [{transform_indices = @transform_0, window_bounds = array<i64: 32, 144>}, {pipeline_mode = #tpu.pipeline_mode<synchronous>, transform_indices = @transform_1, window_bounds = array<i64: 144, 64>}, {pipeline_mode = #tpu.pipeline_mode<synchronous>, transform_indices = @transform_2, window_bounds = array<i64: 1, 64>}, {transform_indices = @transform_3, window_bounds = array<i64: 32, 64>}]} {
    %c0 = arith.constant 0 : index
    %c0_0 = arith.constant 0 : index
    %0 = vector.load %arg1[%c0, %c0_0] : memref<32x144xbf16, #tpu.memory_space<vmem>>, vector<32x144xbf16>
    %c0_1 = arith.constant 0 : index
    %c0_2 = arith.constant 0 : index
    %1 = vector.load %arg2[%c0_1, %c0_2] : memref<144x64xbf16, #tpu.memory_space<vmem>>, vector<144x64xbf16>
    %cst = arith.constant dense<0.000000e+00> : vector<32x64xf32>
    %2 = tpu.matmul %0, %1, %cst {dimension_numbers = #tpu.dot_dimension_numbers<[1], [0], [0], [1], [0, 0, 1, 1], [], []>} : vector<32x144xbf16>, vector<144x64xbf16>, vector<32x64xf32> -> vector<32x64xf32>
    %c0_3 = arith.constant 0 : index
    %c0_4 = arith.constant 0 : index
    %3 = vector.load %arg3[%c0_3, %c0_4] : memref<1x64xf32, #tpu.memory_space<vmem>>, vector<1x64xf32>
    %4 = vector.broadcast %3 : vector<1x64xf32> to vector<32x64xf32>
    %5 = arith.addf %2, %4 : vector<32x64xf32>
    %c0_5 = arith.constant 0 : index
    %c0_6 = arith.constant 0 : index
    %6 = vector.load %arg4[%c0_5, %c0_6] : memref<32x64xf32, #tpu.memory_space<vmem>>, vector<32x64xf32>
    tpu.vector_store %arg4[%c0_5, %c0_6], %5 {strides = array<i32>} : memref<32x64xf32, #tpu.memory_space<vmem>>, vector<32x64xf32>,
    return
  }
  func.func @transform_0(%arg0: i32) -> (i32, i32) {
    %c0_i32 = arith.constant 0 : i32
    %c0_i32_0 = arith.constant 0 : i32
    return %arg0, %c0_i32 : i32, i32
  }
  func.func @transform_1(%arg0: i32) -> (i32, i32) {
    %c0_i32 = arith.constant 0 : i32
    %c0_i32_0 = arith.constant 0 : i32
    %c0_i32_1 = arith.constant 0 : i32
    return %c0_i32, %c0_i32_0 : i32, i32
  }
  func.func @transform_2(%arg0: i32) -> (i32, i32) {
    %c0_i32 = arith.constant 0 : i32
    %c0_i32_0 = arith.constant 0 : i32
    %c0_i32_1 = arith.constant 0 : i32
    return %c0_i32, %c0_i32_0 : i32, i32
  }
  func.func @transform_3(%arg0: i32) -> (i32, i32) {
    %c0_i32 = arith.constant 0 : i32
    %c0_i32_0 = arith.constant 0 : i32
    return %arg0, %c0_i32 : i32, i32
  }
}

module attributes {stable_mosaic.version = 11 : i64} {
  func.func @kernel(%arg0: i32, %arg1: memref<224x576xbf16, #tpu.memory_space<vmem>>, %arg2: memref<576x32xbf16, #tpu.memory_space<vmem>>, %arg3: memref<1x32xf32, #tpu.memory_space<vmem>>, %arg4: memref<224x32xf32, #tpu.memory_space<vmem>>) attributes {dimension_semantics = [#tpu.dimension_semantics<parallel>], iteration_bounds = array<i64: 7>, scalar_prefetch = 0 : i64, scratch_operands = 0 : i64, tpu.core_type = #tpu.core_type<tc>, window_params = [{transform_indices = @transform_0, window_bounds = array<i64: 224, 576>}, {pipeline_mode = #tpu.pipeline_mode<synchronous>, transform_indices = @transform_1, window_bounds = array<i64: 576, 32>}, {pipeline_mode = #tpu.pipeline_mode<synchronous>, transform_indices = @transform_2, window_bounds = array<i64: 1, 32>}, {transform_indices = @transform_3, window_bounds = array<i64: 224, 32>}]} {
    %c0 = arith.constant 0 : index
    %c0_0 = arith.constant 0 : index
    %0 = vector.load %arg1[%c0, %c0_0] : memref<224x576xbf16, #tpu.memory_space<vmem>>, vector<224x576xbf16>
    %c0_1 = arith.constant 0 : index
    %c0_2 = arith.constant 0 : index
    %1 = vector.load %arg2[%c0_1, %c0_2] : memref<576x32xbf16, #tpu.memory_space<vmem>>, vector<576x32xbf16>
    %cst = arith.constant dense<0.000000e+00> : vector<224x32xf32>
    %2 = tpu.matmul %0, %1, %cst {dimension_numbers = #tpu.dot_dimension_numbers<[1], [0], [0], [1], [0, 0, 1, 1], [], []>} : vector<224x576xbf16>, vector<576x32xbf16>, vector<224x32xf32> -> vector<224x32xf32>
    %c0_3 = arith.constant 0 : index
    %c0_4 = arith.constant 0 : index
    %3 = vector.load %arg3[%c0_3, %c0_4] : memref<1x32xf32, #tpu.memory_space<vmem>>, vector<1x32xf32>
    %4 = vector.broadcast %3 : vector<1x32xf32> to vector<224x32xf32>
    %5 = arith.addf %2, %4 : vector<224x32xf32>
    %cst_5 = arith.constant 0.000000e+00 : f32
    %6 = vector.broadcast %cst_5 : f32 to vector<224x32xf32>
    %7 = arith.maximumf %5, %6 : vector<224x32xf32>
    %c0_6 = arith.constant 0 : index
    %c0_7 = arith.constant 0 : index
    %8 = vector.load %arg4[%c0_6, %c0_7] : memref<224x32xf32, #tpu.memory_space<vmem>>, vector<224x32xf32>
    tpu.vector_store %arg4[%c0_6, %c0_7], %7 {strides = array<i32>} : memref<224x32xf32, #tpu.memory_space<vmem>>, vector<224x32xf32>,
    return
  }
  func.func @transform_0(%arg0: i32) -> (i32, i32) {
    %c0_i32 = arith.constant 0 : i32
    %c0_i32_0 = arith.constant 0 : i32
    return %arg0, %c0_i32 : i32, i32
  }
  func.func @transform_1(%arg0: i32) -> (i32, i32) {
    %c0_i32 = arith.constant 0 : i32
    %c0_i32_0 = arith.constant 0 : i32
    %c0_i32_1 = arith.constant 0 : i32
    return %c0_i32, %c0_i32_0 : i32, i32
  }
  func.func @transform_2(%arg0: i32) -> (i32, i32) {
    %c0_i32 = arith.constant 0 : i32
    %c0_i32_0 = arith.constant 0 : i32
    %c0_i32_1 = arith.constant 0 : i32
    return %c0_i32, %c0_i32_0 : i32, i32
  }
  func.func @transform_3(%arg0: i32) -> (i32, i32) {
    %c0_i32 = arith.constant 0 : i32
    %c0_i32_0 = arith.constant 0 : i32
    return %arg0, %c0_i32 : i32, i32
  }
}

module attributes {stable_mosaic.version = 11 : i64} {
  func.func @kernel(%arg0: i32, %arg1: memref<224x288xbf16, #tpu.memory_space<vmem>>, %arg2: memref<288x1xbf16, #tpu.memory_space<vmem>>, %arg3: memref<1x1xf32, #tpu.memory_space<vmem>>, %arg4: memref<224x1xf32, #tpu.memory_space<vmem>>) attributes {dimension_semantics = [#tpu.dimension_semantics<parallel>], iteration_bounds = array<i64: 7>, scalar_prefetch = 0 : i64, scratch_operands = 0 : i64, tpu.core_type = #tpu.core_type<tc>, window_params = [{transform_indices = @transform_0, window_bounds = array<i64: 224, 288>}, {pipeline_mode = #tpu.pipeline_mode<synchronous>, transform_indices = @transform_1, window_bounds = array<i64: 288, 1>}, {pipeline_mode = #tpu.pipeline_mode<synchronous>, transform_indices = @transform_2, window_bounds = array<i64: 1, 1>}, {transform_indices = @transform_3, window_bounds = array<i64: 224, 1>}]} {
    %c0 = arith.constant 0 : index
    %c0_0 = arith.constant 0 : index
    %0 = vector.load %arg1[%c0, %c0_0] : memref<224x288xbf16, #tpu.memory_space<vmem>>, vector<224x288xbf16>
    %c0_1 = arith.constant 0 : index
    %c0_2 = arith.constant 0 : index
    %1 = vector.load %arg2[%c0_1, %c0_2] : memref<288x1xbf16, #tpu.memory_space<vmem>>, vector<288x1xbf16>
    %cst = arith.constant dense<0.000000e+00> : vector<224x1xf32>
    %2 = tpu.matmul %0, %1, %cst {dimension_numbers = #tpu.dot_dimension_numbers<[1], [0], [0], [1], [0, 0, 1, 1], [], []>} : vector<224x288xbf16>, vector<288x1xbf16>, vector<224x1xf32> -> vector<224x1xf32>
    %c0_3 = arith.constant 0 : index
    %c0_4 = arith.constant 0 : index
    %3 = vector.load %arg3[%c0_3, %c0_4] : memref<1x1xf32, #tpu.memory_space<vmem>>, vector<1x1xf32>
    %4 = vector.broadcast %3 : vector<1x1xf32> to vector<224x1xf32>
    %5 = arith.addf %2, %4 : vector<224x1xf32>
    %c0_5 = arith.constant 0 : index
    %c0_6 = arith.constant 0 : index
    %6 = vector.load %arg4[%c0_5, %c0_6] : memref<224x1xf32, #tpu.memory_space<vmem>>, vector<224x1xf32>
    tpu.vector_store %arg4[%c0_5, %c0_6], %5 {strides = array<i32>} : memref<224x1xf32, #tpu.memory_space<vmem>>, vector<224x1xf32>,
    return
  }
  func.func @transform_0(%arg0: i32) -> (i32, i32) {
    %c0_i32 = arith.constant 0 : i32
    %c0_i32_0 = arith.constant 0 : i32
    return %arg0, %c0_i32 : i32, i32
  }
  func.func @transform_1(%arg0: i32) -> (i32, i32) {
    %c0_i32 = arith.constant 0 : i32
    %c0_i32_0 = arith.constant 0 : i32
    %c0_i32_1 = arith.constant 0 : i32
    return %c0_i32, %c0_i32_0 : i32, i32
  }
  func.func @transform_2(%arg0: i32) -> (i32, i32) {
    %c0_i32 = arith.constant 0 : i32
    %c0_i32_0 = arith.constant 0 : i32
    %c0_i32_1 = arith.constant 0 : i32
    return %c0_i32, %c0_i32_0 : i32, i32
  }
  func.func @transform_3(%arg0: i32) -> (i32, i32) {
    %c0_i32 = arith.constant 0 : i32
    %c0_i32_0 = arith.constant 0 : i32
    return %arg0, %c0_i32 : i32, i32
  }
}

module attributes {stable_mosaic.version = 11 : i64} {
  func.func @kernel(%arg0: i32, %arg1: memref<32x56xbf16, #tpu.memory_space<vmem>>, %arg2: memref<56x49xbf16, #tpu.memory_space<vmem>>, %arg3: memref<1x49xf32, #tpu.memory_space<vmem>>, %arg4: memref<32x49xf32, #tpu.memory_space<vmem>>) attributes {dimension_semantics = [#tpu.dimension_semantics<parallel>], iteration_bounds = array<i64: 1>, scalar_prefetch = 0 : i64, scratch_operands = 0 : i64, tpu.core_type = #tpu.core_type<tc>, window_params = [{transform_indices = @transform_0, window_bounds = array<i64: 32, 56>}, {pipeline_mode = #tpu.pipeline_mode<synchronous>, transform_indices = @transform_1, window_bounds = array<i64: 56, 49>}, {pipeline_mode = #tpu.pipeline_mode<synchronous>, transform_indices = @transform_2, window_bounds = array<i64: 1, 49>}, {transform_indices = @transform_3, window_bounds = array<i64: 32, 49>}]} {
    %c0 = arith.constant 0 : index
    %c0_0 = arith.constant 0 : index
    %0 = vector.load %arg1[%c0, %c0_0] : memref<32x56xbf16, #tpu.memory_space<vmem>>, vector<32x56xbf16>
    %c0_1 = arith.constant 0 : index
    %c0_2 = arith.constant 0 : index
    %1 = vector.load %arg2[%c0_1, %c0_2] : memref<56x49xbf16, #tpu.memory_space<vmem>>, vector<56x49xbf16>
    %cst = arith.constant dense<0.000000e+00> : vector<32x49xf32>
    %2 = tpu.matmul %0, %1, %cst {dimension_numbers = #tpu.dot_dimension_numbers<[1], [0], [0], [1], [0, 0, 1, 1], [], []>} : vector<32x56xbf16>, vector<56x49xbf16>, vector<32x49xf32> -> vector<32x49xf32>
    %c0_3 = arith.constant 0 : index
    %c0_4 = arith.constant 0 : index
    %3 = vector.load %arg3[%c0_3, %c0_4] : memref<1x49xf32, #tpu.memory_space<vmem>>, vector<1x49xf32>
    %4 = vector.broadcast %3 : vector<1x49xf32> to vector<32x49xf32>
    %5 = arith.addf %2, %4 : vector<32x49xf32>
    %c0_5 = arith.constant 0 : index
    %c0_6 = arith.constant 0 : index
    %6 = vector.load %arg4[%c0_5, %c0_6] : memref<32x49xf32, #tpu.memory_space<vmem>>, vector<32x49xf32>
    tpu.vector_store %arg4[%c0_5, %c0_6], %5 {strides = array<i32>} : memref<32x49xf32, #tpu.memory_space<vmem>>, vector<32x49xf32>,
    return
  }
  func.func @transform_0(%arg0: i32) -> (i32, i32) {
    %c0_i32 = arith.constant 0 : i32
    %c0_i32_0 = arith.constant 0 : i32
    return %arg0, %c0_i32 : i32, i32
  }
  func.func @transform_1(%arg0: i32) -> (i32, i32) {
    %c0_i32 = arith.constant 0 : i32
    %c0_i32_0 = arith.constant 0 : i32
    %c0_i32_1 = arith.constant 0 : i32
    return %c0_i32, %c0_i32_0 : i32, i32
  }
  func.func @transform_2(%arg0: i32) -> (i32, i32) {
    %c0_i32 = arith.constant 0 : i32
    %c0_i32_0 = arith.constant 0 : i32
    %c0_i32_1 = arith.constant 0 : i32
    return %c0_i32, %c0_i32_0 : i32, i32
  }
  func.func @transform_3(%arg0: i32) -> (i32, i32) {
    %c0_i32 = arith.constant 0 : i32
    %c0_i32_0 = arith.constant 0 : i32
    return %arg0, %c0_i32 : i32, i32
  }
}

module attributes {stable_mosaic.version = 11 : i64} {
  func.func @kernel(%arg0: i32, %arg1: memref<32x104xbf16, #tpu.memory_space<vmem>>, %arg2: memref<104x64xbf16, #tpu.memory_space<vmem>>, %arg3: memref<1x64xf32, #tpu.memory_space<vmem>>, %arg4: memref<32x64xf32, #tpu.memory_space<vmem>>) attributes {dimension_semantics = [#tpu.dimension_semantics<parallel>], iteration_bounds = array<i64: 1>, scalar_prefetch = 0 : i64, scratch_operands = 0 : i64, tpu.core_type = #tpu.core_type<tc>, window_params = [{transform_indices = @transform_0, window_bounds = array<i64: 32, 104>}, {pipeline_mode = #tpu.pipeline_mode<synchronous>, transform_indices = @transform_1, window_bounds = array<i64: 104, 64>}, {pipeline_mode = #tpu.pipeline_mode<synchronous>, transform_indices = @transform_2, window_bounds = array<i64: 1, 64>}, {transform_indices = @transform_3, window_bounds = array<i64: 32, 64>}]} {
    %c0 = arith.constant 0 : index
    %c0_0 = arith.constant 0 : index
    %0 = vector.load %arg1[%c0, %c0_0] : memref<32x104xbf16, #tpu.memory_space<vmem>>, vector<32x104xbf16>
    %c0_1 = arith.constant 0 : index
    %c0_2 = arith.constant 0 : index
    %1 = vector.load %arg2[%c0_1, %c0_2] : memref<104x64xbf16, #tpu.memory_space<vmem>>, vector<104x64xbf16>
    %cst = arith.constant dense<0.000000e+00> : vector<32x64xf32>
    %2 = tpu.matmul %0, %1, %cst {dimension_numbers = #tpu.dot_dimension_numbers<[1], [0], [0], [1], [0, 0, 1, 1], [], []>} : vector<32x104xbf16>, vector<104x64xbf16>, vector<32x64xf32> -> vector<32x64xf32>
    %c0_3 = arith.constant 0 : index
    %c0_4 = arith.constant 0 : index
    %3 = vector.load %arg3[%c0_3, %c0_4] : memref<1x64xf32, #tpu.memory_space<vmem>>, vector<1x64xf32>
    %4 = vector.broadcast %3 : vector<1x64xf32> to vector<32x64xf32>
    %5 = arith.addf %2, %4 : vector<32x64xf32>
    %cst_5 = arith.constant 0.000000e+00 : f32
    %6 = vector.broadcast %cst_5 : f32 to vector<32x64xf32>
    %7 = arith.maximumf %5, %6 : vector<32x64xf32>
    %c0_6 = arith.constant 0 : index
    %c0_7 = arith.constant 0 : index
    %8 = vector.load %arg4[%c0_6, %c0_7] : memref<32x64xf32, #tpu.memory_space<vmem>>, vector<32x64xf32>
    tpu.vector_store %arg4[%c0_6, %c0_7], %7 {strides = array<i32>} : memref<32x64xf32, #tpu.memory_space<vmem>>, vector<32x64xf32>,
    return
  }
  func.func @transform_0(%arg0: i32) -> (i32, i32) {
    %c0_i32 = arith.constant 0 : i32
    %c0_i32_0 = arith.constant 0 : i32
    return %arg0, %c0_i32 : i32, i32
  }
  func.func @transform_1(%arg0: i32) -> (i32, i32) {
    %c0_i32 = arith.constant 0 : i32
    %c0_i32_0 = arith.constant 0 : i32
    %c0_i32_1 = arith.constant 0 : i32
    return %c0_i32, %c0_i32_0 : i32, i32
  }
  func.func @transform_2(%arg0: i32) -> (i32, i32) {
    %c0_i32 = arith.constant 0 : i32
    %c0_i32_0 = arith.constant 0 : i32
    %c0_i32_1 = arith.constant 0 : i32
    return %c0_i32, %c0_i32_0 : i32, i32
  }
  func.func @transform_3(%arg0: i32) -> (i32, i32) {
    %c0_i32 = arith.constant 0 : i32
    %c0_i32_0 = arith.constant 0 : i32
    return %arg0, %c0_i32 : i32, i32
  }
}

module attributes {stable_mosaic.version = 11 : i64} {
  func.func @kernel(%arg0: i32, %arg1: memref<32x576xbf16, #tpu.memory_space<vmem>>, %arg2: memref<576x48xbf16, #tpu.memory_space<vmem>>, %arg3: memref<1x48xf32, #tpu.memory_space<vmem>>, %arg4: memref<32x48xf32, #tpu.memory_space<vmem>>) attributes {dimension_semantics = [#tpu.dimension_semantics<parallel>], iteration_bounds = array<i64: 1>, scalar_prefetch = 0 : i64, scratch_operands = 0 : i64, tpu.core_type = #tpu.core_type<tc>, window_params = [{transform_indices = @transform_0, window_bounds = array<i64: 32, 576>}, {pipeline_mode = #tpu.pipeline_mode<synchronous>, transform_indices = @transform_1, window_bounds = array<i64: 576, 48>}, {pipeline_mode = #tpu.pipeline_mode<synchronous>, transform_indices = @transform_2, window_bounds = array<i64: 1, 48>}, {transform_indices = @transform_3, window_bounds = array<i64: 32, 48>}]} {
    %c0 = arith.constant 0 : index
    %c0_0 = arith.constant 0 : index
    %0 = vector.load %arg1[%c0, %c0_0] : memref<32x576xbf16, #tpu.memory_space<vmem>>, vector<32x576xbf16>
    %c0_1 = arith.constant 0 : index
    %c0_2 = arith.constant 0 : index
    %1 = vector.load %arg2[%c0_1, %c0_2] : memref<576x48xbf16, #tpu.memory_space<vmem>>, vector<576x48xbf16>
    %cst = arith.constant dense<0.000000e+00> : vector<32x48xf32>
    %2 = tpu.matmul %0, %1, %cst {dimension_numbers = #tpu.dot_dimension_numbers<[1], [0], [0], [1], [0, 0, 1, 1], [], []>} : vector<32x576xbf16>, vector<576x48xbf16>, vector<32x48xf32> -> vector<32x48xf32>
    %c0_3 = arith.constant 0 : index
    %c0_4 = arith.constant 0 : index
    %3 = vector.load %arg3[%c0_3, %c0_4] : memref<1x48xf32, #tpu.memory_space<vmem>>, vector<1x48xf32>
    %4 = vector.broadcast %3 : vector<1x48xf32> to vector<32x48xf32>
    %5 = arith.addf %2, %4 : vector<32x48xf32>
    %cst_5 = arith.constant 0.000000e+00 : f32
    %6 = vector.broadcast %cst_5 : f32 to vector<32x48xf32>
    %7 = arith.maximumf %5, %6 : vector<32x48xf32>
    %c0_6 = arith.constant 0 : index
    %c0_7 = arith.constant 0 : index
    %8 = vector.load %arg4[%c0_6, %c0_7] : memref<32x48xf32, #tpu.memory_space<vmem>>, vector<32x48xf32>
    tpu.vector_store %arg4[%c0_6, %c0_7], %7 {strides = array<i32>} : memref<32x48xf32, #tpu.memory_space<vmem>>, vector<32x48xf32>,
    return
  }
  func.func @transform_0(%arg0: i32) -> (i32, i32) {
    %c0_i32 = arith.constant 0 : i32
    %c0_i32_0 = arith.constant 0 : i32
    return %arg0, %c0_i32 : i32, i32
  }
  func.func @transform_1(%arg0: i32) -> (i32, i32) {
    %c0_i32 = arith.constant 0 : i32
    %c0_i32_0 = arith.constant 0 : i32
    %c0_i32_1 = arith.constant 0 : i32
    return %c0_i32, %c0_i32_0 : i32, i32
  }
  func.func @transform_2(%arg0: i32) -> (i32, i32) {
    %c0_i32 = arith.constant 0 : i32
    %c0_i32_0 = arith.constant 0 : i32
    %c0_i32_1 = arith.constant 0 : i32
    return %c0_i32, %c0_i32_0 : i32, i32
  }
  func.func @transform_3(%arg0: i32) -> (i32, i32) {
    %c0_i32 = arith.constant 0 : i32
    %c0_i32_0 = arith.constant 0 : i32
    return %arg0, %c0_i32 : i32, i32
  }
}

module attributes {stable_mosaic.version = 11 : i64} {
  func.func @kernel(%arg0: i32, %arg1: memref<32x104xbf16, #tpu.memory_space<vmem>>, %arg2: memref<104x32xbf16, #tpu.memory_space<vmem>>, %arg3: memref<1x32xf32, #tpu.memory_space<vmem>>, %arg4: memref<32x32xf32, #tpu.memory_space<vmem>>) attributes {dimension_semantics = [#tpu.dimension_semantics<parallel>], iteration_bounds = array<i64: 1>, scalar_prefetch = 0 : i64, scratch_operands = 0 : i64, tpu.core_type = #tpu.core_type<tc>, window_params = [{transform_indices = @transform_0, window_bounds = array<i64: 32, 104>}, {pipeline_mode = #tpu.pipeline_mode<synchronous>, transform_indices = @transform_1, window_bounds = array<i64: 104, 32>}, {pipeline_mode = #tpu.pipeline_mode<synchronous>, transform_indices = @transform_2, window_bounds = array<i64: 1, 32>}, {transform_indices = @transform_3, window_bounds = array<i64: 32, 32>}]} {
    %c0 = arith.constant 0 : index
    %c0_0 = arith.constant 0 : index
    %0 = vector.load %arg1[%c0, %c0_0] : memref<32x104xbf16, #tpu.memory_space<vmem>>, vector<32x104xbf16>
    %c0_1 = arith.constant 0 : index
    %c0_2 = arith.constant 0 : index
    %1 = vector.load %arg2[%c0_1, %c0_2] : memref<104x32xbf16, #tpu.memory_space<vmem>>, vector<104x32xbf16>
    %cst = arith.constant dense<0.000000e+00> : vector<32x32xf32>
    %2 = tpu.matmul %0, %1, %cst {dimension_numbers = #tpu.dot_dimension_numbers<[1], [0], [0], [1], [0, 0, 1, 1], [], []>} : vector<32x104xbf16>, vector<104x32xbf16>, vector<32x32xf32> -> vector<32x32xf32>
    %c0_3 = arith.constant 0 : index
    %c0_4 = arith.constant 0 : index
    %3 = vector.load %arg3[%c0_3, %c0_4] : memref<1x32xf32, #tpu.memory_space<vmem>>, vector<1x32xf32>
    %4 = vector.broadcast %3 : vector<1x32xf32> to vector<32x32xf32>
    %5 = arith.addf %2, %4 : vector<32x32xf32>
    %cst_5 = arith.constant 0.000000e+00 : f32
    %6 = vector.broadcast %cst_5 : f32 to vector<32x32xf32>
    %7 = arith.maximumf %5, %6 : vector<32x32xf32>
    %c0_6 = arith.constant 0 : index
    %c0_7 = arith.constant 0 : index
    %8 = vector.load %arg4[%c0_6, %c0_7] : memref<32x32xf32, #tpu.memory_space<vmem>>, vector<32x32xf32>
    tpu.vector_store %arg4[%c0_6, %c0_7], %7 {strides = array<i32>} : memref<32x32xf32, #tpu.memory_space<vmem>>, vector<32x32xf32>,
    return
  }
  func.func @transform_0(%arg0: i32) -> (i32, i32) {
    %c0_i32 = arith.constant 0 : i32
    %c0_i32_0 = arith.constant 0 : i32
    return %arg0, %c0_i32 : i32, i32
  }
  func.func @transform_1(%arg0: i32) -> (i32, i32) {
    %c0_i32 = arith.constant 0 : i32
    %c0_i32_0 = arith.constant 0 : i32
    %c0_i32_1 = arith.constant 0 : i32
    return %c0_i32, %c0_i32_0 : i32, i32
  }
  func.func @transform_2(%arg0: i32) -> (i32, i32) {
    %c0_i32 = arith.constant 0 : i32
    %c0_i32_0 = arith.constant 0 : i32
    %c0_i32_1 = arith.constant 0 : i32
    return %c0_i32, %c0_i32_0 : i32, i32
  }
  func.func @transform_3(%arg0: i32) -> (i32, i32) {
    %c0_i32 = arith.constant 0 : i32
    %c0_i32_0 = arith.constant 0 : i32
    return %arg0, %c0_i32 : i32, i32
  }
}

module attributes {stable_mosaic.version = 11 : i64} {
  func.func @kernel(%arg0: i32, %arg1: memref<32x288xbf16, #tpu.memory_space<vmem>>, %arg2: memref<288x16xbf16, #tpu.memory_space<vmem>>, %arg3: memref<1x16xf32, #tpu.memory_space<vmem>>, %arg4: memref<32x16xf32, #tpu.memory_space<vmem>>) attributes {dimension_semantics = [#tpu.dimension_semantics<parallel>], iteration_bounds = array<i64: 1>, scalar_prefetch = 0 : i64, scratch_operands = 0 : i64, tpu.core_type = #tpu.core_type<tc>, window_params = [{transform_indices = @transform_0, window_bounds = array<i64: 32, 288>}, {pipeline_mode = #tpu.pipeline_mode<synchronous>, transform_indices = @transform_1, window_bounds = array<i64: 288, 16>}, {pipeline_mode = #tpu.pipeline_mode<synchronous>, transform_indices = @transform_2, window_bounds = array<i64: 1, 16>}, {transform_indices = @transform_3, window_bounds = array<i64: 32, 16>}]} {
    %c0 = arith.constant 0 : index
    %c0_0 = arith.constant 0 : index
    %0 = vector.load %arg1[%c0, %c0_0] : memref<32x288xbf16, #tpu.memory_space<vmem>>, vector<32x288xbf16>
    %c0_1 = arith.constant 0 : index
    %c0_2 = arith.constant 0 : index
    %1 = vector.load %arg2[%c0_1, %c0_2] : memref<288x16xbf16, #tpu.memory_space<vmem>>, vector<288x16xbf16>
    %cst = arith.constant dense<0.000000e+00> : vector<32x16xf32>
    %2 = tpu.matmul %0, %1, %cst {dimension_numbers = #tpu.dot_dimension_numbers<[1], [0], [0], [1], [0, 0, 1, 1], [], []>} : vector<32x288xbf16>, vector<288x16xbf16>, vector<32x16xf32> -> vector<32x16xf32>
    %c0_3 = arith.constant 0 : index
    %c0_4 = arith.constant 0 : index
    %3 = vector.load %arg3[%c0_3, %c0_4] : memref<1x16xf32, #tpu.memory_space<vmem>>, vector<1x16xf32>
    %4 = vector.broadcast %3 : vector<1x16xf32> to vector<32x16xf32>
    %5 = arith.addf %2, %4 : vector<32x16xf32>
    %cst_5 = arith.constant 0.000000e+00 : f32
    %6 = vector.broadcast %cst_5 : f32 to vector<32x16xf32>
    %7 = arith.maximumf %5, %6 : vector<32x16xf32>
    %c0_6 = arith.constant 0 : index
    %c0_7 = arith.constant 0 : index
    %8 = vector.load %arg4[%c0_6, %c0_7] : memref<32x16xf32, #tpu.memory_space<vmem>>, vector<32x16xf32>
    tpu.vector_store %arg4[%c0_6, %c0_7], %7 {strides = array<i32>} : memref<32x16xf32, #tpu.memory_space<vmem>>, vector<32x16xf32>,
    return
  }
  func.func @transform_0(%arg0: i32) -> (i32, i32) {
    %c0_i32 = arith.constant 0 : i32
    %c0_i32_0 = arith.constant 0 : i32
    return %arg0, %c0_i32 : i32, i32
  }
  func.func @transform_1(%arg0: i32) -> (i32, i32) {
    %c0_i32 = arith.constant 0 : i32
    %c0_i32_0 = arith.constant 0 : i32
    %c0_i32_1 = arith.constant 0 : i32
    return %c0_i32, %c0_i32_0 : i32, i32
  }
  func.func @transform_2(%arg0: i32) -> (i32, i32) {
    %c0_i32 = arith.constant 0 : i32
    %c0_i32_0 = arith.constant 0 : i32
    %c0_i32_1 = arith.constant 0 : i32
    return %c0_i32, %c0_i32_0 : i32, i32
  }
  func.func @transform_3(%arg0: i32) -> (i32, i32) {
    %c0_i32 = arith.constant 0 : i32
    %c0_i32_0 = arith.constant 0 : i32
    return %arg0, %c0_i32 : i32, i32
  }
}

module attributes {stable_mosaic.version = 11 : i64} {
  func.func @kernel(%arg0: i32, %arg1: memref<32x576xbf16, #tpu.memory_space<vmem>>, %arg2: memref<576x62xbf16, #tpu.memory_space<vmem>>, %arg3: memref<1x62xf32, #tpu.memory_space<vmem>>, %arg4: memref<32x62xf32, #tpu.memory_space<vmem>>) attributes {dimension_semantics = [#tpu.dimension_semantics<parallel>], iteration_bounds = array<i64: 1>, scalar_prefetch = 0 : i64, scratch_operands = 0 : i64, tpu.core_type = #tpu.core_type<tc>, window_params = [{transform_indices = @transform_0, window_bounds = array<i64: 32, 576>}, {pipeline_mode = #tpu.pipeline_mode<synchronous>, transform_indices = @transform_1, window_bounds = array<i64: 576, 62>}, {pipeline_mode = #tpu.pipeline_mode<synchronous>, transform_indices = @transform_2, window_bounds = array<i64: 1, 62>}, {transform_indices = @transform_3, window_bounds = array<i64: 32, 62>}]} {
    %c0 = arith.constant 0 : index
    %c0_0 = arith.constant 0 : index
    %0 = vector.load %arg1[%c0, %c0_0] : memref<32x576xbf16, #tpu.memory_space<vmem>>, vector<32x576xbf16>
    %c0_1 = arith.constant 0 : index
    %c0_2 = arith.constant 0 : index
    %1 = vector.load %arg2[%c0_1, %c0_2] : memref<576x62xbf16, #tpu.memory_space<vmem>>, vector<576x62xbf16>
    %cst = arith.constant dense<0.000000e+00> : vector<32x62xf32>
    %2 = tpu.matmul %0, %1, %cst {dimension_numbers = #tpu.dot_dimension_numbers<[1], [0], [0], [1], [0, 0, 1, 1], [], []>} : vector<32x576xbf16>, vector<576x62xbf16>, vector<32x62xf32> -> vector<32x62xf32>
    %c0_3 = arith.constant 0 : index
    %c0_4 = arith.constant 0 : index
    %3 = vector.load %arg3[%c0_3, %c0_4] : memref<1x62xf32, #tpu.memory_space<vmem>>, vector<1x62xf32>
    %4 = vector.broadcast %3 : vector<1x62xf32> to vector<32x62xf32>
    %5 = arith.addf %2, %4 : vector<32x62xf32>
    %cst_5 = arith.constant 0.000000e+00 : f32
    %6 = vector.broadcast %cst_5 : f32 to vector<32x62xf32>
    %7 = arith.maximumf %5, %6 : vector<32x62xf32>
    %c0_6 = arith.constant 0 : index
    %c0_7 = arith.constant 0 : index
    %8 = vector.load %arg4[%c0_6, %c0_7] : memref<32x62xf32, #tpu.memory_space<vmem>>, vector<32x62xf32>
    tpu.vector_store %arg4[%c0_6, %c0_7], %7 {strides = array<i32>} : memref<32x62xf32, #tpu.memory_space<vmem>>, vector<32x62xf32>,
    return
  }
  func.func @transform_0(%arg0: i32) -> (i32, i32) {
    %c0_i32 = arith.constant 0 : i32
    %c0_i32_0 = arith.constant 0 : i32
    return %arg0, %c0_i32 : i32, i32
  }
  func.func @transform_1(%arg0: i32) -> (i32, i32) {
    %c0_i32 = arith.constant 0 : i32
    %c0_i32_0 = arith.constant 0 : i32
    %c0_i32_1 = arith.constant 0 : i32
    return %c0_i32, %c0_i32_0 : i32, i32
  }
  func.func @transform_2(%arg0: i32) -> (i32, i32) {
    %c0_i32 = arith.constant 0 : i32
    %c0_i32_0 = arith.constant 0 : i32
    %c0_i32_1 = arith.constant 0 : i32
    return %c0_i32, %c0_i32_0 : i32, i32
  }
  func.func @transform_3(%arg0: i32) -> (i32, i32) {
    %c0_i32 = arith.constant 0 : i32
    %c0_i32_0 = arith.constant 0 : i32
    return %arg0, %c0_i32 : i32, i32
  }
}

module attributes {stable_mosaic.version = 11 : i64} {
  func.func @kernel(%arg0: i32, %arg1: memref<512x152xbf16, #tpu.memory_space<vmem>>, %arg2: memref<152x32xbf16, #tpu.memory_space<vmem>>, %arg3: memref<1x32xf32, #tpu.memory_space<vmem>>, %arg4: memref<512x32xf32, #tpu.memory_space<vmem>>) attributes {dimension_semantics = [#tpu.dimension_semantics<parallel>], iteration_bounds = array<i64: 1>, scalar_prefetch = 0 : i64, scratch_operands = 0 : i64, tpu.core_type = #tpu.core_type<tc>, window_params = [{transform_indices = @transform_0, window_bounds = array<i64: 512, 152>}, {pipeline_mode = #tpu.pipeline_mode<synchronous>, transform_indices = @transform_1, window_bounds = array<i64: 152, 32>}, {pipeline_mode = #tpu.pipeline_mode<synchronous>, transform_indices = @transform_2, window_bounds = array<i64: 1, 32>}, {transform_indices = @transform_3, window_bounds = array<i64: 512, 32>}]} {
    %c0 = arith.constant 0 : index
    %c0_0 = arith.constant 0 : index
    %0 = vector.load %arg1[%c0, %c0_0] : memref<512x152xbf16, #tpu.memory_space<vmem>>, vector<512x152xbf16>
    %c0_1 = arith.constant 0 : index
    %c0_2 = arith.constant 0 : index
    %1 = vector.load %arg2[%c0_1, %c0_2] : memref<152x32xbf16, #tpu.memory_space<vmem>>, vector<152x32xbf16>
    %cst = arith.constant dense<0.000000e+00> : vector<512x32xf32>
    %2 = tpu.matmul %0, %1, %cst {dimension_numbers = #tpu.dot_dimension_numbers<[1], [0], [0], [1], [0, 0, 1, 1], [], []>} : vector<512x152xbf16>, vector<152x32xbf16>, vector<512x32xf32> -> vector<512x32xf32>
    %c0_3 = arith.constant 0 : index
    %c0_4 = arith.constant 0 : index
    %3 = vector.load %arg3[%c0_3, %c0_4] : memref<1x32xf32, #tpu.memory_space<vmem>>, vector<1x32xf32>
    %4 = vector.broadcast %3 : vector<1x32xf32> to vector<512x32xf32>
    %5 = arith.addf %2, %4 : vector<512x32xf32>
    %cst_5 = arith.constant 0.000000e+00 : f32
    %6 = vector.broadcast %cst_5 : f32 to vector<512x32xf32>
    %7 = arith.maximumf %5, %6 : vector<512x32xf32>
    %c0_6 = arith.constant 0 : index
    %c0_7 = arith.constant 0 : index
    %8 = vector.load %arg4[%c0_6, %c0_7] : memref<512x32xf32, #tpu.memory_space<vmem>>, vector<512x32xf32>
    tpu.vector_store %arg4[%c0_6, %c0_7], %7 {strides = array<i32>} : memref<512x32xf32, #tpu.memory_space<vmem>>, vector<512x32xf32>,
    return
  }
  func.func @transform_0(%arg0: i32) -> (i32, i32) {
    %c0_i32 = arith.constant 0 : i32
    %c0_i32_0 = arith.constant 0 : i32
    return %arg0, %c0_i32 : i32, i32
  }
  func.func @transform_1(%arg0: i32) -> (i32, i32) {
    %c0_i32 = arith.constant 0 : i32
    %c0_i32_0 = arith.constant 0 : i32
    %c0_i32_1 = arith.constant 0 : i32
    return %c0_i32, %c0_i32_0 : i32, i32
  }
  func.func @transform_2(%arg0: i32) -> (i32, i32) {
    %c0_i32 = arith.constant 0 : i32
    %c0_i32_0 = arith.constant 0 : i32
    %c0_i32_1 = arith.constant 0 : i32
    return %c0_i32, %c0_i32_0 : i32, i32
  }
  func.func @transform_3(%arg0: i32) -> (i32, i32) {
    %c0_i32 = arith.constant 0 : i32
    %c0_i32_0 = arith.constant 0 : i32
    return %arg0, %c0_i32 : i32, i32
  }
}

module attributes {stable_mosaic.version = 11 : i64} {
  func.func @kernel(%arg0: i32, %arg1: memref<128x288xbf16, #tpu.memory_space<vmem>>, %arg2: memref<288x48xbf16, #tpu.memory_space<vmem>>, %arg3: memref<1x48xf32, #tpu.memory_space<vmem>>, %arg4: memref<128x48xf32, #tpu.memory_space<vmem>>) attributes {dimension_semantics = [#tpu.dimension_semantics<parallel>], iteration_bounds = array<i64: 1>, scalar_prefetch = 0 : i64, scratch_operands = 0 : i64, tpu.core_type = #tpu.core_type<tc>, window_params = [{transform_indices = @transform_0, window_bounds = array<i64: 128, 288>}, {pipeline_mode = #tpu.pipeline_mode<synchronous>, transform_indices = @transform_1, window_bounds = array<i64: 288, 48>}, {pipeline_mode = #tpu.pipeline_mode<synchronous>, transform_indices = @transform_2, window_bounds = array<i64: 1, 48>}, {transform_indices = @transform_3, window_bounds = array<i64: 128, 48>}]} {
    %c0 = arith.constant 0 : index
    %c0_0 = arith.constant 0 : index
    %0 = vector.load %arg1[%c0, %c0_0] : memref<128x288xbf16, #tpu.memory_space<vmem>>, vector<128x288xbf16>
    %c0_1 = arith.constant 0 : index
    %c0_2 = arith.constant 0 : index
    %1 = vector.load %arg2[%c0_1, %c0_2] : memref<288x48xbf16, #tpu.memory_space<vmem>>, vector<288x48xbf16>
    %cst = arith.constant dense<0.000000e+00> : vector<128x48xf32>
    %2 = tpu.matmul %0, %1, %cst {dimension_numbers = #tpu.dot_dimension_numbers<[1], [0], [0], [1], [0, 0, 1, 1], [], []>} : vector<128x288xbf16>, vector<288x48xbf16>, vector<128x48xf32> -> vector<128x48xf32>
    %c0_3 = arith.constant 0 : index
    %c0_4 = arith.constant 0 : index
    %3 = vector.load %arg3[%c0_3, %c0_4] : memref<1x48xf32, #tpu.memory_space<vmem>>, vector<1x48xf32>
    %4 = vector.broadcast %3 : vector<1x48xf32> to vector<128x48xf32>
    %5 = arith.addf %2, %4 : vector<128x48xf32>
    %cst_5 = arith.constant 0.000000e+00 : f32
    %6 = vector.broadcast %cst_5 : f32 to vector<128x48xf32>
    %7 = arith.maximumf %5, %6 : vector<128x48xf32>
    %c0_6 = arith.constant 0 : index
    %c0_7 = arith.constant 0 : index
    %8 = vector.load %arg4[%c0_6, %c0_7] : memref<128x48xf32, #tpu.memory_space<vmem>>, vector<128x48xf32>
    tpu.vector_store %arg4[%c0_6, %c0_7], %7 {strides = array<i32>} : memref<128x48xf32, #tpu.memory_space<vmem>>, vector<128x48xf32>,
    return
  }
  func.func @transform_0(%arg0: i32) -> (i32, i32) {
    %c0_i32 = arith.constant 0 : i32
    %c0_i32_0 = arith.constant 0 : i32
    return %arg0, %c0_i32 : i32, i32
  }
  func.func @transform_1(%arg0: i32) -> (i32, i32) {
    %c0_i32 = arith.constant 0 : i32
    %c0_i32_0 = arith.constant 0 : i32
    %c0_i32_1 = arith.constant 0 : i32
    return %c0_i32, %c0_i32_0 : i32, i32
  }
  func.func @transform_2(%arg0: i32) -> (i32, i32) {
    %c0_i32 = arith.constant 0 : i32
    %c0_i32_0 = arith.constant 0 : i32
    %c0_i32_1 = arith.constant 0 : i32
    return %c0_i32, %c0_i32_0 : i32, i32
  }
  func.func @transform_3(%arg0: i32) -> (i32, i32) {
    %c0_i32 = arith.constant 0 : i32
    %c0_i32_0 = arith.constant 0 : i32
    return %arg0, %c0_i32 : i32, i32
  }
}

module attributes {stable_mosaic.version = 11 : i64} {
  func.func @kernel(%arg0: i32, %arg1: memref<32x432xbf16, #tpu.memory_space<vmem>>, %arg2: memref<432x64xbf16, #tpu.memory_space<vmem>>, %arg3: memref<1x64xf32, #tpu.memory_space<vmem>>, %arg4: memref<32x64xf32, #tpu.memory_space<vmem>>) attributes {dimension_semantics = [#tpu.dimension_semantics<parallel>], iteration_bounds = array<i64: 1>, scalar_prefetch = 0 : i64, scratch_operands = 0 : i64, tpu.core_type = #tpu.core_type<tc>, window_params = [{transform_indices = @transform_0, window_bounds = array<i64: 32, 432>}, {pipeline_mode = #tpu.pipeline_mode<synchronous>, transform_indices = @transform_1, window_bounds = array<i64: 432, 64>}, {pipeline_mode = #tpu.pipeline_mode<synchronous>, transform_indices = @transform_2, window_bounds = array<i64: 1, 64>}, {transform_indices = @transform_3, window_bounds = array<i64: 32, 64>}]} {
    %c0 = arith.constant 0 : index
    %c0_0 = arith.constant 0 : index
    %0 = vector.load %arg1[%c0, %c0_0] : memref<32x432xbf16, #tpu.memory_space<vmem>>, vector<32x432xbf16>
    %c0_1 = arith.constant 0 : index
    %c0_2 = arith.constant 0 : index
    %1 = vector.load %arg2[%c0_1, %c0_2] : memref<432x64xbf16, #tpu.memory_space<vmem>>, vector<432x64xbf16>
    %cst = arith.constant dense<0.000000e+00> : vector<32x64xf32>
    %2 = tpu.matmul %0, %1, %cst {dimension_numbers = #tpu.dot_dimension_numbers<[1], [0], [0], [1], [0, 0, 1, 1], [], []>} : vector<32x432xbf16>, vector<432x64xbf16>, vector<32x64xf32> -> vector<32x64xf32>
    %c0_3 = arith.constant 0 : index
    %c0_4 = arith.constant 0 : index
    %3 = vector.load %arg3[%c0_3, %c0_4] : memref<1x64xf32, #tpu.memory_space<vmem>>, vector<1x64xf32>
    %4 = vector.broadcast %3 : vector<1x64xf32> to vector<32x64xf32>
    %5 = arith.addf %2, %4 : vector<32x64xf32>
    %cst_5 = arith.constant 0.000000e+00 : f32
    %6 = vector.broadcast %cst_5 : f32 to vector<32x64xf32>
    %7 = arith.maximumf %5, %6 : vector<32x64xf32>
    %c0_6 = arith.constant 0 : index
    %c0_7 = arith.constant 0 : index
    %8 = vector.load %arg4[%c0_6, %c0_7] : memref<32x64xf32, #tpu.memory_space<vmem>>, vector<32x64xf32>
    tpu.vector_store %arg4[%c0_6, %c0_7], %7 {strides = array<i32>} : memref<32x64xf32, #tpu.memory_space<vmem>>, vector<32x64xf32>,
    return
  }
  func.func @transform_0(%arg0: i32) -> (i32, i32) {
    %c0_i32 = arith.constant 0 : i32
    %c0_i32_0 = arith.constant 0 : i32
    return %arg0, %c0_i32 : i32, i32
  }
  func.func @transform_1(%arg0: i32) -> (i32, i32) {
    %c0_i32 = arith.constant 0 : i32
    %c0_i32_0 = arith.constant 0 : i32
    %c0_i32_1 = arith.constant 0 : i32
    return %c0_i32, %c0_i32_0 : i32, i32
  }
  func.func @transform_2(%arg0: i32) -> (i32, i32) {
    %c0_i32 = arith.constant 0 : i32
    %c0_i32_0 = arith.constant 0 : i32
    %c0_i32_1 = arith.constant 0 : i32
    return %c0_i32, %c0_i32_0 : i32, i32
  }
  func.func @transform_3(%arg0: i32) -> (i32, i32) {
    %c0_i32 = arith.constant 0 : i32
    %c0_i32_0 = arith.constant 0 : i32
    return %arg0, %c0_i32 : i32, i32
  }
}

module attributes {stable_mosaic.version = 11 : i64} {
  func.func @kernel(%arg0: i32, %arg1: memref<32x64xbf16, #tpu.memory_space<vmem>>, %arg2: memref<64x64xbf16, #tpu.memory_space<vmem>>, %arg3: memref<1x64xf32, #tpu.memory_space<vmem>>, %arg4: memref<32x64xf32, #tpu.memory_space<vmem>>) attributes {dimension_semantics = [#tpu.dimension_semantics<parallel>], iteration_bounds = array<i64: 1>, scalar_prefetch = 0 : i64, scratch_operands = 0 : i64, tpu.core_type = #tpu.core_type<tc>, window_params = [{transform_indices = @transform_0, window_bounds = array<i64: 32, 64>}, {pipeline_mode = #tpu.pipeline_mode<synchronous>, transform_indices = @transform_1, window_bounds = array<i64: 64, 64>}, {pipeline_mode = #tpu.pipeline_mode<synchronous>, transform_indices = @transform_2, window_bounds = array<i64: 1, 64>}, {transform_indices = @transform_3, window_bounds = array<i64: 32, 64>}]} {
    %c0 = arith.constant 0 : index
    %c0_0 = arith.constant 0 : index
    %0 = vector.load %arg1[%c0, %c0_0] : memref<32x64xbf16, #tpu.memory_space<vmem>>, vector<32x64xbf16>
    %c0_1 = arith.constant 0 : index
    %c0_2 = arith.constant 0 : index
    %1 = vector.load %arg2[%c0_1, %c0_2] : memref<64x64xbf16, #tpu.memory_space<vmem>>, vector<64x64xbf16>
    %cst = arith.constant dense<0.000000e+00> : vector<32x64xf32>
    %2 = tpu.matmul %0, %1, %cst {dimension_numbers = #tpu.dot_dimension_numbers<[1], [0], [0], [1], [0, 0, 1, 1], [], []>} : vector<32x64xbf16>, vector<64x64xbf16>, vector<32x64xf32> -> vector<32x64xf32>
    %c0_3 = arith.constant 0 : index
    %c0_4 = arith.constant 0 : index
    %3 = vector.load %arg3[%c0_3, %c0_4] : memref<1x64xf32, #tpu.memory_space<vmem>>, vector<1x64xf32>
    %4 = vector.broadcast %3 : vector<1x64xf32> to vector<32x64xf32>
    %5 = arith.addf %2, %4 : vector<32x64xf32>
    %c0_5 = arith.constant 0 : index
    %c0_6 = arith.constant 0 : index
    %6 = vector.load %arg4[%c0_5, %c0_6] : memref<32x64xf32, #tpu.memory_space<vmem>>, vector<32x64xf32>
    tpu.vector_store %arg4[%c0_5, %c0_6], %5 {strides = array<i32>} : memref<32x64xf32, #tpu.memory_space<vmem>>, vector<32x64xf32>,
    return
  }
  func.func @transform_0(%arg0: i32) -> (i32, i32) {
    %c0_i32 = arith.constant 0 : i32
    %c0_i32_0 = arith.constant 0 : i32
    return %arg0, %c0_i32 : i32, i32
  }
  func.func @transform_1(%arg0: i32) -> (i32, i32) {
    %c0_i32 = arith.constant 0 : i32
    %c0_i32_0 = arith.constant 0 : i32
    %c0_i32_1 = arith.constant 0 : i32
    return %c0_i32, %c0_i32_0 : i32, i32
  }
  func.func @transform_2(%arg0: i32) -> (i32, i32) {
    %c0_i32 = arith.constant 0 : i32
    %c0_i32_0 = arith.constant 0 : i32
    %c0_i32_1 = arith.constant 0 : i32
    return %c0_i32, %c0_i32_0 : i32, i32
  }
  func.func @transform_3(%arg0: i32) -> (i32, i32) {
    %c0_i32 = arith.constant 0 : i32
    %c0_i32_0 = arith.constant 0 : i32
    return %arg0, %c0_i32 : i32, i32
  }
}

module attributes {stable_mosaic.version = 11 : i64} {
  func.func @kernel(%arg0: i32, %arg1: memref<32x640xbf16, #tpu.memory_space<vmem>>, %arg2: memref<640x64xbf16, #tpu.memory_space<vmem>>, %arg3: memref<1x64xf32, #tpu.memory_space<vmem>>, %arg4: memref<32x64xf32, #tpu.memory_space<vmem>>) attributes {dimension_semantics = [#tpu.dimension_semantics<parallel>], iteration_bounds = array<i64: 1>, scalar_prefetch = 0 : i64, scratch_operands = 0 : i64, tpu.core_type = #tpu.core_type<tc>, window_params = [{transform_indices = @transform_0, window_bounds = array<i64: 32, 640>}, {pipeline_mode = #tpu.pipeline_mode<synchronous>, transform_indices = @transform_1, window_bounds = array<i64: 640, 64>}, {pipeline_mode = #tpu.pipeline_mode<synchronous>, transform_indices = @transform_2, window_bounds = array<i64: 1, 64>}, {transform_indices = @transform_3, window_bounds = array<i64: 32, 64>}]} {
    %c0 = arith.constant 0 : index
    %c0_0 = arith.constant 0 : index
    %0 = vector.load %arg1[%c0, %c0_0] : memref<32x640xbf16, #tpu.memory_space<vmem>>, vector<32x640xbf16>
    %c0_1 = arith.constant 0 : index
    %c0_2 = arith.constant 0 : index
    %1 = vector.load %arg2[%c0_1, %c0_2] : memref<640x64xbf16, #tpu.memory_space<vmem>>, vector<640x64xbf16>
    %cst = arith.constant dense<0.000000e+00> : vector<32x64xf32>
    %2 = tpu.matmul %0, %1, %cst {dimension_numbers = #tpu.dot_dimension_numbers<[1], [0], [0], [1], [0, 0, 1, 1], [], []>} : vector<32x640xbf16>, vector<640x64xbf16>, vector<32x64xf32> -> vector<32x64xf32>
    %c0_3 = arith.constant 0 : index
    %c0_4 = arith.constant 0 : index
    %3 = vector.load %arg3[%c0_3, %c0_4] : memref<1x64xf32, #tpu.memory_space<vmem>>, vector<1x64xf32>
    %4 = vector.broadcast %3 : vector<1x64xf32> to vector<32x64xf32>
    %5 = arith.addf %2, %4 : vector<32x64xf32>
    %6 = arith.negf %5 : vector<32x64xf32>
    %7 = math.exp %6 : vector<32x64xf32>
    %cst_5 = arith.constant 1.000000e+00 : f32
    %8 = vector.broadcast %cst_5 : f32 to vector<32x64xf32>
    %9 = arith.addf %8, %7 : vector<32x64xf32>
    %10 = arith.divf %8, %9 : vector<32x64xf32>
    %c0_6 = arith.constant 0 : index
    %c0_7 = arith.constant 0 : index
    %11 = vector.load %arg4[%c0_6, %c0_7] : memref<32x64xf32, #tpu.memory_space<vmem>>, vector<32x64xf32>
    tpu.vector_store %arg4[%c0_6, %c0_7], %10 {strides = array<i32>} : memref<32x64xf32, #tpu.memory_space<vmem>>, vector<32x64xf32>,
    return
  }
  func.func @transform_0(%arg0: i32) -> (i32, i32) {
    %c0_i32 = arith.constant 0 : i32
    %c0_i32_0 = arith.constant 0 : i32
    return %arg0, %c0_i32 : i32, i32
  }
  func.func @transform_1(%arg0: i32) -> (i32, i32) {
    %c0_i32 = arith.constant 0 : i32
    %c0_i32_0 = arith.constant 0 : i32
    %c0_i32_1 = arith.constant 0 : i32
    return %c0_i32, %c0_i32_0 : i32, i32
  }
  func.func @transform_2(%arg0: i32) -> (i32, i32) {
    %c0_i32 = arith.constant 0 : i32
    %c0_i32_0 = arith.constant 0 : i32
    %c0_i32_1 = arith.constant 0 : i32
    return %c0_i32, %c0_i32_0 : i32, i32
  }
  func.func @transform_3(%arg0: i32) -> (i32, i32) {
    %c0_i32 = arith.constant 0 : i32
    %c0_i32_0 = arith.constant 0 : i32
    return %arg0, %c0_i32 : i32, i32
  }
}

module attributes {stable_mosaic.version = 11 : i64} {
  func.func @kernel(%arg0: i32, %arg1: memref<32x640xbf16, #tpu.memory_space<vmem>>, %arg2: memref<640x32xbf16, #tpu.memory_space<vmem>>, %arg3: memref<1x32xf32, #tpu.memory_space<vmem>>, %arg4: memref<32x32xf32, #tpu.memory_space<vmem>>) attributes {dimension_semantics = [#tpu.dimension_semantics<parallel>], iteration_bounds = array<i64: 1>, scalar_prefetch = 0 : i64, scratch_operands = 0 : i64, tpu.core_type = #tpu.core_type<tc>, window_params = [{transform_indices = @transform_0, window_bounds = array<i64: 32, 640>}, {pipeline_mode = #tpu.pipeline_mode<synchronous>, transform_indices = @transform_1, window_bounds = array<i64: 640, 32>}, {pipeline_mode = #tpu.pipeline_mode<synchronous>, transform_indices = @transform_2, window_bounds = array<i64: 1, 32>}, {transform_indices = @transform_3, window_bounds = array<i64: 32, 32>}]} {
    %c0 = arith.constant 0 : index
    %c0_0 = arith.constant 0 : index
    %0 = vector.load %arg1[%c0, %c0_0] : memref<32x640xbf16, #tpu.memory_space<vmem>>, vector<32x640xbf16>
    %c0_1 = arith.constant 0 : index
    %c0_2 = arith.constant 0 : index
    %1 = vector.load %arg2[%c0_1, %c0_2] : memref<640x32xbf16, #tpu.memory_space<vmem>>, vector<640x32xbf16>
    %cst = arith.constant dense<0.000000e+00> : vector<32x32xf32>
    %2 = tpu.matmul %0, %1, %cst {dimension_numbers = #tpu.dot_dimension_numbers<[1], [0], [0], [1], [0, 0, 1, 1], [], []>} : vector<32x640xbf16>, vector<640x32xbf16>, vector<32x32xf32> -> vector<32x32xf32>
    %c0_3 = arith.constant 0 : index
    %c0_4 = arith.constant 0 : index
    %3 = vector.load %arg3[%c0_3, %c0_4] : memref<1x32xf32, #tpu.memory_space<vmem>>, vector<1x32xf32>
    %4 = vector.broadcast %3 : vector<1x32xf32> to vector<32x32xf32>
    %5 = arith.addf %2, %4 : vector<32x32xf32>
    %6 = math.tanh %5 : vector<32x32xf32>
    %c0_5 = arith.constant 0 : index
    %c0_6 = arith.constant 0 : index
    %7 = vector.load %arg4[%c0_5, %c0_6] : memref<32x32xf32, #tpu.memory_space<vmem>>, vector<32x32xf32>
    tpu.vector_store %arg4[%c0_5, %c0_6], %6 {strides = array<i32>} : memref<32x32xf32, #tpu.memory_space<vmem>>, vector<32x32xf32>,
    return
  }
  func.func @transform_0(%arg0: i32) -> (i32, i32) {
    %c0_i32 = arith.constant 0 : i32
    %c0_i32_0 = arith.constant 0 : i32
    return %arg0, %c0_i32 : i32, i32
  }
  func.func @transform_1(%arg0: i32) -> (i32, i32) {
    %c0_i32 = arith.constant 0 : i32
    %c0_i32_0 = arith.constant 0 : i32
    %c0_i32_1 = arith.constant 0 : i32
    return %c0_i32, %c0_i32_0 : i32, i32
  }
  func.func @transform_2(%arg0: i32) -> (i32, i32) {
    %c0_i32 = arith.constant 0 : i32
    %c0_i32_0 = arith.constant 0 : i32
    %c0_i32_1 = arith.constant 0 : i32
    return %c0_i32, %c0_i32_0 : i32, i32
  }
  func.func @transform_3(%arg0: i32) -> (i32, i32) {
    %c0_i32 = arith.constant 0 : i32
    %c0_i32_0 = arith.constant 0 : i32
    return %arg0, %c0_i32 : i32, i32
  }
}

module attributes {stable_mosaic.version = 11 : i64} {
  func.func @kernel(%arg0: i32, %arg1: memref<32x288xbf16, #tpu.memory_space<vmem>>, %arg2: memref<288x128xbf16, #tpu.memory_space<vmem>>, %arg3: memref<1x128xf32, #tpu.memory_space<vmem>>, %arg4: memref<32x128xf32, #tpu.memory_space<vmem>>) attributes {dimension_semantics = [#tpu.dimension_semantics<parallel>], iteration_bounds = array<i64: 1>, scalar_prefetch = 0 : i64, scratch_operands = 0 : i64, tpu.core_type = #tpu.core_type<tc>, window_params = [{transform_indices = @transform_0, window_bounds = array<i64: 32, 288>}, {pipeline_mode = #tpu.pipeline_mode<synchronous>, transform_indices = @transform_1, window_bounds = array<i64: 288, 128>}, {pipeline_mode = #tpu.pipeline_mode<synchronous>, transform_indices = @transform_2, window_bounds = array<i64: 1, 128>}, {transform_indices = @transform_3, window_bounds = array<i64: 32, 128>}]} {
    %c0 = arith.constant 0 : index
    %c0_0 = arith.constant 0 : index
    %0 = vector.load %arg1[%c0, %c0_0] : memref<32x288xbf16, #tpu.memory_space<vmem>>, vector<32x288xbf16>
    %c0_1 = arith.constant 0 : index
    %c0_2 = arith.constant 0 : index
    %1 = vector.load %arg2[%c0_1, %c0_2] : memref<288x128xbf16, #tpu.memory_space<vmem>>, vector<288x128xbf16>
    %cst = arith.constant dense<0.000000e+00> : vector<32x128xf32>
    %2 = tpu.matmul %0, %1, %cst {dimension_numbers = #tpu.dot_dimension_numbers<[1], [0], [0], [1], [0, 0, 1, 1], [], []>} : vector<32x288xbf16>, vector<288x128xbf16>, vector<32x128xf32> -> vector<32x128xf32>
    %c0_3 = arith.constant 0 : index
    %c0_4 = arith.constant 0 : index
    %3 = vector.load %arg3[%c0_3, %c0_4] : memref<1x128xf32, #tpu.memory_space<vmem>>, vector<1x128xf32>
    %4 = vector.broadcast %3 : vector<1x128xf32> to vector<32x128xf32>
    %5 = arith.addf %2, %4 : vector<32x128xf32>
    %cst_5 = arith.constant 0.000000e+00 : f32
    %6 = vector.broadcast %cst_5 : f32 to vector<32x128xf32>
    %7 = arith.maximumf %5, %6 : vector<32x128xf32>
    %c0_6 = arith.constant 0 : index
    %c0_7 = arith.constant 0 : index
    %8 = vector.load %arg4[%c0_6, %c0_7] : memref<32x128xf32, #tpu.memory_space<vmem>>, vector<32x128xf32>
    tpu.vector_store %arg4[%c0_6, %c0_7], %7 {strides = array<i32>} : memref<32x128xf32, #tpu.memory_space<vmem>>, vector<32x128xf32>,
    return
  }
  func.func @transform_0(%arg0: i32) -> (i32, i32) {
    %c0_i32 = arith.constant 0 : i32
    %c0_i32_0 = arith.constant 0 : i32
    return %arg0, %c0_i32 : i32, i32
  }
  func.func @transform_1(%arg0: i32) -> (i32, i32) {
    %c0_i32 = arith.constant 0 : i32
    %c0_i32_0 = arith.constant 0 : i32
    %c0_i32_1 = arith.constant 0 : i32
    return %c0_i32, %c0_i32_0 : i32, i32
  }
  func.func @transform_2(%arg0: i32) -> (i32, i32) {
    %c0_i32 = arith.constant 0 : i32
    %c0_i32_0 = arith.constant 0 : i32
    %c0_i32_1 = arith.constant 0 : i32
    return %c0_i32, %c0_i32_0 : i32, i32
  }
  func.func @transform_3(%arg0: i32) -> (i32, i32) {
    %c0_i32 = arith.constant 0 : i32
    %c0_i32_0 = arith.constant 0 : i32
    return %arg0, %c0_i32 : i32, i32
  }
}

module attributes {stable_mosaic.version = 11 : i64} {
  func.func @kernel(%arg0: i32, %arg1: memref<32x576xbf16, #tpu.memory_space<vmem>>, %arg2: memref<576x2xbf16, #tpu.memory_space<vmem>>, %arg3: memref<1x2xf32, #tpu.memory_space<vmem>>, %arg4: memref<32x2xf32, #tpu.memory_space<vmem>>) attributes {dimension_semantics = [#tpu.dimension_semantics<parallel>], iteration_bounds = array<i64: 1>, scalar_prefetch = 0 : i64, scratch_operands = 0 : i64, tpu.core_type = #tpu.core_type<tc>, window_params = [{transform_indices = @transform_0, window_bounds = array<i64: 32, 576>}, {pipeline_mode = #tpu.pipeline_mode<synchronous>, transform_indices = @transform_1, window_bounds = array<i64: 576, 2>}, {pipeline_mode = #tpu.pipeline_mode<synchronous>, transform_indices = @transform_2, window_bounds = array<i64: 1, 2>}, {transform_indices = @transform_3, window_bounds = array<i64: 32, 2>}]} {
    %c0 = arith.constant 0 : index
    %c0_0 = arith.constant 0 : index
    %0 = vector.load %arg1[%c0, %c0_0] : memref<32x576xbf16, #tpu.memory_space<vmem>>, vector<32x576xbf16>
    %c0_1 = arith.constant 0 : index
    %c0_2 = arith.constant 0 : index
    %1 = vector.load %arg2[%c0_1, %c0_2] : memref<576x2xbf16, #tpu.memory_space<vmem>>, vector<576x2xbf16>
    %cst = arith.constant dense<0.000000e+00> : vector<32x2xf32>
    %2 = tpu.matmul %0, %1, %cst {dimension_numbers = #tpu.dot_dimension_numbers<[1], [0], [0], [1], [0, 0, 1, 1], [], []>} : vector<32x576xbf16>, vector<576x2xbf16>, vector<32x2xf32> -> vector<32x2xf32>
    %c0_3 = arith.constant 0 : index
    %c0_4 = arith.constant 0 : index
    %3 = vector.load %arg3[%c0_3, %c0_4] : memref<1x2xf32, #tpu.memory_space<vmem>>, vector<1x2xf32>
    %4 = vector.broadcast %3 : vector<1x2xf32> to vector<32x2xf32>
    %5 = arith.addf %2, %4 : vector<32x2xf32>
    %c0_5 = arith.constant 0 : index
    %c0_6 = arith.constant 0 : index
    %6 = vector.load %arg4[%c0_5, %c0_6] : memref<32x2xf32, #tpu.memory_space<vmem>>, vector<32x2xf32>
    tpu.vector_store %arg4[%c0_5, %c0_6], %5 {strides = array<i32>} : memref<32x2xf32, #tpu.memory_space<vmem>>, vector<32x2xf32>,
    return
  }
  func.func @transform_0(%arg0: i32) -> (i32, i32) {
    %c0_i32 = arith.constant 0 : i32
    %c0_i32_0 = arith.constant 0 : i32
    return %arg0, %c0_i32 : i32, i32
  }
  func.func @transform_1(%arg0: i32) -> (i32, i32) {
    %c0_i32 = arith.constant 0 : i32
    %c0_i32_0 = arith.constant 0 : i32
    %c0_i32_1 = arith.constant 0 : i32
    return %c0_i32, %c0_i32_0 : i32, i32
  }
  func.func @transform_2(%arg0: i32) -> (i32, i32) {
    %c0_i32 = arith.constant 0 : i32
    %c0_i32_0 = arith.constant 0 : i32
    %c0_i32_1 = arith.constant 0 : i32
    return %c0_i32, %c0_i32_0 : i32, i32
  }
  func.func @transform_3(%arg0: i32) -> (i32, i32) {
    %c0_i32 = arith.constant 0 : i32
    %c0_i32_0 = arith.constant 0 : i32
    return %arg0, %c0_i32 : i32, i32
  }
}

module attributes {stable_mosaic.version = 11 : i64} {
  func.func @kernel(%arg0: i32, %arg1: memref<32x64xbf16, #tpu.memory_space<vmem>>, %arg2: memref<64x576xbf16, #tpu.memory_space<vmem>>, %arg3: memref<1x576xf32, #tpu.memory_space<vmem>>, %arg4: memref<32x576xf32, #tpu.memory_space<vmem>>) attributes {dimension_semantics = [#tpu.dimension_semantics<parallel>], iteration_bounds = array<i64: 1>, scalar_prefetch = 0 : i64, scratch_operands = 0 : i64, tpu.core_type = #tpu.core_type<tc>, window_params = [{transform_indices = @transform_0, window_bounds = array<i64: 32, 64>}, {pipeline_mode = #tpu.pipeline_mode<synchronous>, transform_indices = @transform_1, window_bounds = array<i64: 64, 576>}, {pipeline_mode = #tpu.pipeline_mode<synchronous>, transform_indices = @transform_2, window_bounds = array<i64: 1, 576>}, {transform_indices = @transform_3, window_bounds = array<i64: 32, 576>}]} {
    %c0 = arith.constant 0 : index
    %c0_0 = arith.constant 0 : index
    %0 = vector.load %arg1[%c0, %c0_0] : memref<32x64xbf16, #tpu.memory_space<vmem>>, vector<32x64xbf16>
    %c0_1 = arith.constant 0 : index
    %c0_2 = arith.constant 0 : index
    %1 = vector.load %arg2[%c0_1, %c0_2] : memref<64x576xbf16, #tpu.memory_space<vmem>>, vector<64x576xbf16>
    %cst = arith.constant dense<0.000000e+00> : vector<32x576xf32>
    %2 = tpu.matmul %0, %1, %cst {dimension_numbers = #tpu.dot_dimension_numbers<[1], [0], [0], [1], [0, 0, 1, 1], [], []>} : vector<32x64xbf16>, vector<64x576xbf16>, vector<32x576xf32> -> vector<32x576xf32>
    %c0_3 = arith.constant 0 : index
    %c0_4 = arith.constant 0 : index
    %3 = vector.load %arg3[%c0_3, %c0_4] : memref<1x576xf32, #tpu.memory_space<vmem>>, vector<1x576xf32>
    %4 = vector.broadcast %3 : vector<1x576xf32> to vector<32x576xf32>
    %5 = arith.addf %2, %4 : vector<32x576xf32>
    %c0_5 = arith.constant 0 : index
    %c0_6 = arith.constant 0 : index
    %6 = vector.load %arg4[%c0_5, %c0_6] : memref<32x576xf32, #tpu.memory_space<vmem>>, vector<32x576xf32>
    tpu.vector_store %arg4[%c0_5, %c0_6], %5 {strides = array<i32>} : memref<32x576xf32, #tpu.memory_space<vmem>>, vector<32x576xf32>,
    return
  }
  func.func @transform_0(%arg0: i32) -> (i32, i32) {
    %c0_i32 = arith.constant 0 : i32
    %c0_i32_0 = arith.constant 0 : i32
    return %arg0, %c0_i32 : i32, i32
  }
  func.func @transform_1(%arg0: i32) -> (i32, i32) {
    %c0_i32 = arith.constant 0 : i32
    %c0_i32_0 = arith.constant 0 : i32
    %c0_i32_1 = arith.constant 0 : i32
    return %c0_i32, %c0_i32_0 : i32, i32
  }
  func.func @transform_2(%arg0: i32) -> (i32, i32) {
    %c0_i32 = arith.constant 0 : i32
    %c0_i32_0 = arith.constant 0 : i32
    %c0_i32_1 = arith.constant 0 : i32
    return %c0_i32, %c0_i32_0 : i32, i32
  }
  func.func @transform_3(%arg0: i32) -> (i32, i32) {
    %c0_i32 = arith.constant 0 : i32
    %c0_i32_0 = arith.constant 0 : i32
    return %arg0, %c0_i32 : i32, i32
  }
}

</mosaic_0001>

<llo_original>
// kernel: raft_plus_dicl_forward.52
$region0: #{raft_plus_dicl_forward.52}
  #allocation0 [shape = 'u32[]', space=smem, size = 0x4, offset = 0x4, fixed_abs, tag = 'smem constant byte address 0x4 - core index']
  #allocation1 [shape = 'u32[72,128]{1,0:T(1,128)}', space=vmem, size = 0x9000, scoped, tag = 'internal scratch']
  %s0 = inlined_call_operand.vmem [shape: bf16[1024,152], index: 0, kind: input, shape index: {}]
  %s1 = inlined_call_operand.vmem [shape: bf16[152,32], index: 1, kind: input, shape index: {}]
  %s2 = inlined_call_operand.vmem [shape: f32[1,32], index: 2, kind: input, shape index: {}]
  %s3 = inlined_call_operand.vmem [shape: f32[1024,32], index: 3, kind: output, shape index: {}]
  %s4 = sld [smem:[#allocation0]]
  $region22: #{raft_plus_dicl_forward.52} parent=0
    _
  %s6 = ssub.s32 1, %s4
  %s7 = scalar_select 0, %s6, %s4
  // Predicated region
  $region2: #{raft_plus_dicl_forward.52} parent=0 // pred_check
    _
  $region3: #{raft_plus_dicl_forward.52} parent=0 // pred_check_branch
    %9 = sbr.rel (0) target = $region5
  $region4: #{raft_plus_dicl_forward.52} parent=0 // pred_region
    _
  $region5: #{raft_plus_dicl_forward.52} parent=0 // pred_fallthru
    _
  // Predicated region
  $region6: #{raft_plus_dicl_forward.52} parent=0 // pred_check
    _
  $region7: #{raft_plus_dicl_forward.52} parent=0 // pred_check_branch
    %11 = sbr.rel (0) target = $region9
  $region8: #{raft_plus_dicl_forward.52} parent=0 // pred_region
    _
  $region9: #{raft_plus_dicl_forward.52} parent=0 // pred_fallthru
    _
  // Predicated region
  $region10: #{raft_plus_dicl_forward.52} parent=0 // pred_check
    _
  $region11: #{raft_plus_dicl_forward.52} parent=0 // pred_check_branch
    %13 = sbr.rel (0) target = $region13
  $region12: #{raft_plus_dicl_forward.52} parent=0 // pred_region
    _
  $region13: #{raft_plus_dicl_forward.52} parent=0 // pred_fallthru
    _
  %v15 = vld [vmem:[%s0] sm:$0xff]
  %v16 = vld [vmem:[%s0 + $0x8] sm:$0xff]
  %v17 = vld [vmem:[%s0 + $0x10] sm:$0xff]
  %v18 = vld [vmem:[%s0 + $0x18] sm:$0xff]
  %v19 = vld [vmem:[%s0 + $0x20] sm:$0xff]
  %v20 = vld [vmem:[%s0 + $0x28] sm:$0xff]
  %v21 = vld [vmem:[%s0 + $0x30] sm:$0xff]
  %v22 = vld [vmem:[%s0 + $0x38] sm:$0xff]
  %v23 = vld [vmem:[%s0 + $0x40] sm:$0xff]
  %v24 = vld [vmem:[%s0 + $0x48] sm:$0xff]
  %v25 = vld [vmem:[%s0 + $0x50] sm:$0xff]
  %v26 = vld [vmem:[%s0 + $0x58] sm:$0xff]
  %v27 = vld [vmem:[%s0 + $0x60] sm:$0xff]
  %v28 = vld [vmem:[%s0 + $0x68] sm:$0xff]
  %v29 = vld [vmem:[%s0 + $0x70] sm:$0xff]
  %v30 = vld [vmem:[%s0 + $0x78] sm:$0xff]
  %v31 = vld [vmem:[%s0 + $0x80] sm:$0xff]
  %v32 = vld [vmem:[%s0 + $0x88] sm:$0xff]
  %v33 = vld [vmem:[%s0 + $0x90] sm:$0xff]
  %v34 = vld [vmem:[%s0 + $0x98] sm:$0xff]
  %v35 = vld [vmem:[%s0 + $0xa0] sm:$0xff]
  %v36 = vld [vmem:[%s0 + $0xa8] sm:$0xff]
  %v37 = vld [vmem:[%s0 + $0xb0] sm:$0xff]
  %v38 = vld [vmem:[%s0 + $0xb8] sm:$0xff]
  %v39 = vld [vmem:[%s0 + $0xc0] sm:$0xff]
  %v40 = vld [vmem:[%s0 + $0xc8] sm:$0xff]
  %v41 = vld [vmem:[%s0 + $0xd0] sm:$0xff]
  %v42 = vld [vmem:[%s0 + $0xd8] sm:$0xff]
  %v43 = vld [vmem:[%s0 + $0xe0] sm:$0xff]
  %v44 = vld [vmem:[%s0 + $0xe8] sm:$0xff]
  %v45 = vld [vmem:[%s0 + $0xf0] sm:$0xff]
  %v46 = vld [vmem:[%s0 + $0xf8] sm:$0xff]
  %v47 = vld [vmem:[%s0 + $0x100] sm:$0xff]
  %v48 = vld [vmem:[%s0 + $0x108] sm:$0xff]
  %v49 = vld [vmem:[%s0 + $0x110] sm:$0xff]
  %v50 = vld [vmem:[%s0 + $0x118] sm:$0xff]
  %v51 = vld [vmem:[%s0 + $0x120] sm:$0xff]
  %v52 = vld [vmem:[%s0 + $0x128] sm:$0xff]
  %v53 = vld [vmem:[%s0 + $0x130] sm:$0xff]
  %v54 = vld [vmem:[%s0 + $0x138] sm:$0xff]
  %v55 = vld [vmem:[%s0 + $0x140] sm:$0xff]
  %v56 = vld [vmem:[%s0 + $0x148] sm:$0xff]
  %v57 = vld [vmem:[%s0 + $0x150] sm:$0xff]
  %v58 = vld [vmem:[%s0 + $0x158] sm:$0xff]
  %v59 = vld [vmem:[%s0 + $0x160] sm:$0xff]
  %v60 = vld [vmem:[%s0 + $0x168] sm:$0xff]
  %v61 = vld [vmem:[%s0 + $0x170] sm:$0xff]
  %v62 = vld [vmem:[%s0 + $0x178] sm:$0xff]
  %v63 = vld [vmem:[%s0 + $0x180] sm:$0xff]
  %v64 = vld [vmem:[%s0 + $0x188] sm:$0xff]
  %v65 = vld [vmem:[%s0 + $0x190] sm:$0xff]
  %v66 = vld [vmem:[%s0 + $0x198] sm:$0xff]
  %v67 = vld [vmem:[%s0 + $0x1a0] sm:$0xff]
  %v68 = vld [vmem:[%s0 + $0x1a8] sm:$0xff]
  %v69 = vld [vmem:[%s0 + $0x1b0] sm:$0xff]
  %v70 = vld [vmem:[%s0 + $0x1b8] sm:$0xff]
  %v71 = vld [vmem:[%s0 + $0x1c0] sm:$0xff]
  %v72 = vld [vmem:[%s0 + $0x1c8] sm:$0xff]
  %v73 = vld [vmem:[%s0 + $0x1d0] sm:$0xff]
  %v74 = vld [vmem:[%s0 + $0x1d8] sm:$0xff]
  %v75 = vld [vmem:[%s0 + $0x1e0] sm:$0xff]
  %v76 = vld [vmem:[%s0 + $0x1e8] sm:$0xff]
  %v77 = vld [vmem:[%s0 + $0x1f0] sm:$0xff]
  %v78 = vld [vmem:[%s0 + $0x1f8] sm:$0xff]
  %v79 = vld [vmem:[%s0 + $0x200] sm:$0xff]
  %v80 = vld [vmem:[%s0 + $0x208] sm:$0xff]
  %v81 = vld [vmem:[%s0 + $0x210] sm:$0xff]
  %v82 = vld [vmem:[%s0 + $0x218] sm:$0xff]
  %v83 = vld [vmem:[%s0 + $0x220] sm:$0xff]
  %v84 = vld [vmem:[%s0 + $0x228] sm:$0xff]
  %v85 = vld [vmem:[%s0 + $0x230] sm:$0xff]
  %v86 = vld [vmem:[%s0 + $0x238] sm:$0xff]
  %v87 = vld [vmem:[%s0 + $0x240] sm:$0xff]
  %v88 = vld [vmem:[%s0 + $0x248] sm:$0xff]
  %v89 = vld [vmem:[%s0 + $0x250] sm:$0xff]
  %v90 = vld [vmem:[%s0 + $0x258] sm:$0xff]
  %v91 = vld [vmem:[%s0 + $0x260] sm:$0xff]
  %v92 = vld [vmem:[%s0 + $0x268] sm:$0xff]
  %v93 = vld [vmem:[%s0 + $0x270] sm:$0xff]
  %v94 = vld [vmem:[%s0 + $0x278] sm:$0xff]
  %v95 = vld [vmem:[%s0 + $0x280] sm:$0xff]
  %v96 = vld [vmem:[%s0 + $0x288] sm:$0xff]
  %v97 = vld [vmem:[%s0 + $0x290] sm:$0xff]
  %v98 = vld [vmem:[%s0 + $0x298] sm:$0xff]
  %v99 = vld [vmem:[%s0 + $0x2a0] sm:$0xff]
  %v100 = vld [vmem:[%s0 + $0x2a8] sm:$0xff]
  %v101 = vld [vmem:[%s0 + $0x2b0] sm:$0xff]
  %v102 = vld [vmem:[%s0 + $0x2b8] sm:$0xff]
  %v103 = vld [vmem:[%s0 + $0x2c0] sm:$0xff]
  %v104 = vld [vmem:[%s0 + $0x2c8] sm:$0xff]
  %v105 = vld [vmem:[%s0 + $0x2d0] sm:$0xff]
  %v106 = vld [vmem:[%s0 + $0x2d8] sm:$0xff]
  %v107 = vld [vmem:[%s0 + $0x2e0] sm:$0xff]
  %v108 = vld [vmem:[%s0 + $0x2e8] sm:$0xff]
  %v109 = vld [vmem:[%s0 + $0x2f0] sm:$0xff]
  %v110 = vld [vmem:[%s0 + $0x2f8] sm:$0xff]
  %v111 = vld [vmem:[%s0 + $0x300] sm:$0xff]
  %v112 = vld [vmem:[%s0 + $0x308] sm:$0xff]
  %v113 = vld [vmem:[%s0 + $0x310] sm:$0xff]
  %v114 = vld [vmem:[%s0 + $0x318] sm:$0xff]
  %v115 = vld [vmem:[%s0 + $0x320] sm:$0xff]
  %v116 = vld [vmem:[%s0 + $0x328] sm:$0xff]
  %v117 = vld [vmem:[%s0 + $0x330] sm:$0xff]
  %v118 = vld [vmem:[%s0 + $0x338] sm:$0xff]
  %v119 = vld [vmem:[%s0 + $0x340] sm:$0xff]
  %v120 = vld [vmem:[%s0 + $0x348] sm:$0xff]
  %v121 = vld [vmem:[%s0 + $0x350] sm:$0xff]
  %v122 = vld [vmem:[%s0 + $0x358] sm:$0xff]
  %v123 = vld [vmem:[%s0 + $0x360] sm:$0xff]
  %v124 = vld [vmem:[%s0 + $0x368] sm:$0xff]
  %v125 = vld [vmem:[%s0 + $0x370] sm:$0xff]
  %v126 = vld [vmem:[%s0 + $0x378] sm:$0xff]
  %v127 = vld [vmem:[%s0 + $0x380] sm:$0xff]
  %v128 = vld [vmem:[%s0 + $0x388] sm:$0xff]
  %v129 = vld [vmem:[%s0 + $0x390] sm:$0xff]
  %v130 = vld [vmem:[%s0 + $0x398] sm:$0xff]
  %v131 = vld [vmem:[%s0 + $0x3a0] sm:$0xff]
  %v132 = vld [vmem:[%s0 + $0x3a8] sm:$0xff]
  %v133 = vld [vmem:[%s0 + $0x3b0] sm:$0xff]
  %v134 = vld [vmem:[%s0 + $0x3b8] sm:$0xff]
  %v135 = vld [vmem:[%s0 + $0x3c0] sm:$0xff]
  %v136 = vld [vmem:[%s0 + $0x3c8] sm:$0xff]
  %v137 = vld [vmem:[%s0 + $0x3d0] sm:$0xff]
  %v138 = vld [vmem:[%s0 + $0x3d8] sm:$0xff]
  %v139 = vld [vmem:[%s0 + $0x3e0] sm:$0xff]
  %v140 = vld [vmem:[%s0 + $0x3e8] sm:$0xff]
  %v141 = vld [vmem:[%s0 + $0x3f0] sm:$0xff]
  %v142 = vld [vmem:[%s0 + $0x3f8] sm:$0xff]
  %v143 = vld [vmem:[%s1] sm:$0xf]
  %v144 = vld [vmem:[%s1 + $0x4] sm:$0xf]
  %v145 = vld [vmem:[%s1 + $0x8] sm:$0xf]
  %v146 = vld [vmem:[%s1 + $0xc] sm:$0xf]
  %v147 = vld [vmem:[%s1 + $0x10] sm:$0xf]
  %v148 = vld [vmem:[%s1 + $0x14] sm:$0xf]
  %v149 = vld [vmem:[%s1 + $0x18] sm:$0xf]
  %v150 = vld [vmem:[%s1 + $0x1c] sm:$0xf]
  %v151 = vld [vmem:[%s1 + $0x20] sm:$0xf]
  %v152 = vld [vmem:[%s1 + $0x24] sm:$0xf]
  %v153 = vld [vmem:[%s1 + $0x28] sm:$0xf]
  %v154 = vld [vmem:[%s1 + $0x2c] sm:$0xf]
  %v155 = vld [vmem:[%s1 + $0x30] sm:$0xf]
  %v156 = vld [vmem:[%s1 + $0x34] sm:$0xf]
  %v157 = vld [vmem:[%s1 + $0x38] sm:$0xf]
  %v158 = vld [vmem:[%s1 + $0x3c] sm:$0xf]
  %v159 = vld [vmem:[%s1 + $0x40] sm:$0xf]
  %v160 = vld [vmem:[%s1 + $0x44] sm:$0xf]
  %v161 = vld [vmem:[%s1 + $0x48] sm:$0xf]
  %v162 = vld [vmem:[%s2] sm:$0x1]
  %v164 = vperm.slane %v162, 0
  %v294 = vunpack.c.l.b16 %v15
  %v295 = vunpack.c.h.b16 %v15
  %v296 = vunpack.c.l.b16 %v16
  %v297 = vunpack.c.h.b16 %v16
  %v298 = vunpack.c.l.b16 %v17
  %v299 = vunpack.c.h.b16 %v17
  %v300 = vunpack.c.l.b16 %v18
  %v301 = vunpack.c.h.b16 %v18
  %v302 = vunpack.c.l.b16 %v19
  %v303 = vunpack.c.h.b16 %v19
  %v304 = vunpack.c.l.b16 %v20
  %v305 = vunpack.c.h.b16 %v20
  %v306 = vunpack.c.l.b16 %v21
  %v307 = vunpack.c.h.b16 %v21
  %v308 = vunpack.c.l.b16 %v22
  %v309 = vunpack.c.h.b16 %v22
  %v310 = vunpack.c.l.b16 %v23
  %v311 = vunpack.c.h.b16 %v23
  %v312 = vunpack.c.l.b16 %v24
  %v313 = vunpack.c.h.b16 %v24
  %v314 = vunpack.c.l.b16 %v25
  %v315 = vunpack.c.h.b16 %v25
  %v316 = vunpack.c.l.b16 %v26
  %v317 = vunpack.c.h.b16 %v26
  %v318 = vunpack.c.l.b16 %v27
  %v319 = vunpack.c.h.b16 %v27
  %v320 = vunpack.c.l.b16 %v28
  %v321 = vunpack.c.h.b16 %v28
  %v322 = vunpack.c.l.b16 %v29
  %v323 = vunpack.c.h.b16 %v29
  %v324 = vunpack.c.l.b16 %v30
  %v325 = vunpack.c.h.b16 %v30
  %v326 = vunpack.c.l.b16 %v31
  %v327 = vunpack.c.h.b16 %v31
  %v328 = vunpack.c.l.b16 %v32
  %v329 = vunpack.c.h.b16 %v32
  %v330 = vunpack.c.l.b16 %v33
  %v331 = vunpack.c.h.b16 %v33
  %v332 = vunpack.c.l.b16 %v34
  %v333 = vunpack.c.h.b16 %v34
  %v334 = vunpack.c.l.b16 %v35
  %v335 = vunpack.c.h.b16 %v35
  %v336 = vunpack.c.l.b16 %v36
  %v337 = vunpack.c.h.b16 %v36
  %v338 = vunpack.c.l.b16 %v37
  %v339 = vunpack.c.h.b16 %v37
  %v340 = vunpack.c.l.b16 %v38
  %v341 = vunpack.c.h.b16 %v38
  %v342 = vunpack.c.l.b16 %v39
  %v343 = vunpack.c.h.b16 %v39
  %v344 = vunpack.c.l.b16 %v40
  %v345 = vunpack.c.h.b16 %v40
  %v346 = vunpack.c.l.b16 %v41
  %v347 = vunpack.c.h.b16 %v41
  %v348 = vunpack.c.l.b16 %v42
  %v349 = vunpack.c.h.b16 %v42
  %v350 = vunpack.c.l.b16 %v43
  %v351 = vunpack.c.h.b16 %v43
  %v352 = vunpack.c.l.b16 %v44
  %v353 = vunpack.c.h.b16 %v44
  %v354 = vunpack.c.l.b16 %v45
  %v355 = vunpack.c.h.b16 %v45
  %v356 = vunpack.c.l.b16 %v46
  %v357 = vunpack.c.h.b16 %v46
  %v358 = vunpack.c.l.b16 %v47
  %v359 = vunpack.c.h.b16 %v47
  %v360 = vunpack.c.l.b16 %v48
  %v361 = vunpack.c.h.b16 %v48
  %v362 = vunpack.c.l.b16 %v49
  %v363 = vunpack.c.h.b16 %v49
  %v364 = vunpack.c.l.b16 %v50
  %v365 = vunpack.c.h.b16 %v50
  %v366 = vunpack.c.l.b16 %v51
  %v367 = vunpack.c.h.b16 %v51
  %v368 = vunpack.c.l.b16 %v52
  %v369 = vunpack.c.h.b16 %v52
  %v370 = vunpack.c.l.b16 %v53
  %v371 = vunpack.c.h.b16 %v53
  %v372 = vunpack.c.l.b16 %v54
  %v373 = vunpack.c.h.b16 %v54
  %v374 = vunpack.c.l.b16 %v55
  %v375 = vunpack.c.h.b16 %v55
  %v376 = vunpack.c.l.b16 %v56
  %v377 = vunpack.c.h.b16 %v56
  %v378 = vunpack.c.l.b16 %v57
  %v379 = vunpack.c.h.b16 %v57
  %v380 = vunpack.c.l.b16 %v58
  %v381 = vunpack.c.h.b16 %v58
  %v382 = vunpack.c.l.b16 %v59
  %v383 = vunpack.c.h.b16 %v59
  %v384 = vunpack.c.l.b16 %v60
  %v385 = vunpack.c.h.b16 %v60
  %v386 = vunpack.c.l.b16 %v61
  %v387 = vunpack.c.h.b16 %v61
  %v388 = vunpack.c.l.b16 %v62
  %v389 = vunpack.c.h.b16 %v62
  %v390 = vunpack.c.l.b16 %v63
  %v391 = vunpack.c.h.b16 %v63
  %v392 = vunpack.c.l.b16 %v64
  %v393 = vunpack.c.h.b16 %v64
  %v394 = vunpack.c.l.b16 %v65
  %v395 = vunpack.c.h.b16 %v65
  %v396 = vunpack.c.l.b16 %v66
  %v397 = vunpack.c.h.b16 %v66
  %v398 = vunpack.c.l.b16 %v67
  %v399 = vunpack.c.h.b16 %v67
  %v400 = vunpack.c.l.b16 %v68
  %v401 = vunpack.c.h.b16 %v68
  %v402 = vunpack.c.l.b16 %v69
  %v403 = vunpack.c.h.b16 %v69
  %v404 = vunpack.c.l.b16 %v70
  %v405 = vunpack.c.h.b16 %v70
  %v406 = vunpack.c.l.b16 %v71
  %v407 = vunpack.c.h.b16 %v71
  %v408 = vunpack.c.l.b16 %v72
  %v409 = vunpack.c.h.b16 %v72
  %v410 = vunpack.c.l.b16 %v73
  %v411 = vunpack.c.h.b16 %v73
  %v412 = vunpack.c.l.b16 %v74
  %v413 = vunpack.c.h.b16 %v74
  %v414 = vunpack.c.l.b16 %v75
  %v415 = vunpack.c.h.b16 %v75
  %v416 = vunpack.c.l.b16 %v76
  %v417 = vunpack.c.h.b16 %v76
  %v418 = vunpack.c.l.b16 %v77
  %v419 = vunpack.c.h.b16 %v77
  %v420 = vunpack.c.l.b16 %v78
  %v421 = vunpack.c.h.b16 %v78
  %v422 = vunpack.c.l.b16 %v79
  %v423 = vunpack.c.h.b16 %v79
  %v424 = vunpack.c.l.b16 %v80
  %v425 = vunpack.c.h.b16 %v80
  %v426 = vunpack.c.l.b16 %v81
  %v427 = vunpack.c.h.b16 %v81
  %v428 = vunpack.c.l.b16 %v82
  %v429 = vunpack.c.h.b16 %v82
  %v430 = vunpack.c.l.b16 %v83
  %v431 = vunpack.c.h.b16 %v83
  %v432 = vunpack.c.l.b16 %v84
  %v433 = vunpack.c.h.b16 %v84
  %v434 = vunpack.c.l.b16 %v85
  %v435 = vunpack.c.h.b16 %v85
  %v436 = vunpack.c.l.b16 %v86
  %v437 = vunpack.c.h.b16 %v86
  %v438 = vunpack.c.l.b16 %v87
  %v439 = vunpack.c.h.b16 %v87
  %v440 = vunpack.c.l.b16 %v88
  %v441 = vunpack.c.h.b16 %v88
  %v442 = vunpack.c.l.b16 %v89
  %v443 = vunpack.c.h.b16 %v89
  %v444 = vunpack.c.l.b16 %v90
  %v445 = vunpack.c.h.b16 %v90
  %v446 = vunpack.c.l.b16 %v91
  %v447 = vunpack.c.h.b16 %v91
  %v448 = vunpack.c.l.b16 %v92
  %v449 = vunpack.c.h.b16 %v92
  %v450 = vunpack.c.l.b16 %v93
  %v451 = vunpack.c.h.b16 %v93
  %v452 = vunpack.c.l.b16 %v94
  %v453 = vunpack.c.h.b16 %v94
  %v454 = vunpack.c.l.b16 %v95
  %v455 = vunpack.c.h.b16 %v95
  %v456 = vunpack.c.l.b16 %v96
  %v457 = vunpack.c.h.b16 %v96
  %v458 = vunpack.c.l.b16 %v97
  %v459 = vunpack.c.h.b16 %v97
  %v460 = vunpack.c.l.b16 %v98
  %v461 = vunpack.c.h.b16 %v98
  %v462 = vunpack.c.l.b16 %v99
  %v463 = vunpack.c.h.b16 %v99
  %v464 = vunpack.c.l.b16 %v100
  %v465 = vunpack.c.h.b16 %v100
  %v466 = vunpack.c.l.b16 %v101
  %v467 = vunpack.c.h.b16 %v101
  %v468 = vunpack.c.l.b16 %v102
  %v469 = vunpack.c.h.b16 %v102
  %v470 = vunpack.c.l.b16 %v103
  %v471 = vunpack.c.h.b16 %v103
  %v472 = vunpack.c.l.b16 %v104
  %v473 = vunpack.c.h.b16 %v104
  %v474 = vunpack.c.l.b16 %v105
  %v475 = vunpack.c.h.b16 %v105
  %v476 = vunpack.c.l.b16 %v106
  %v477 = vunpack.c.h.b16 %v106
  %v478 = vunpack.c.l.b16 %v107
  %v479 = vunpack.c.h.b16 %v107
  %v480 = vunpack.c.l.b16 %v108
  %v481 = vunpack.c.h.b16 %v108
  %v482 = vunpack.c.l.b16 %v109
  %v483 = vunpack.c.h.b16 %v109
  %v484 = vunpack.c.l.b16 %v110
  %v485 = vunpack.c.h.b16 %v110
  %v486 = vunpack.c.l.b16 %v111
  %v487 = vunpack.c.h.b16 %v111
  %v488 = vunpack.c.l.b16 %v112
  %v489 = vunpack.c.h.b16 %v112
  %v490 = vunpack.c.l.b16 %v113
  %v491 = vunpack.c.h.b16 %v113
  %v492 = vunpack.c.l.b16 %v114
  %v493 = vunpack.c.h.b16 %v114
  %v494 = vunpack.c.l.b16 %v115
  %v495 = vunpack.c.h.b16 %v115
  %v496 = vunpack.c.l.b16 %v116
  %v497 = vunpack.c.h.b16 %v116
  %v498 = vunpack.c.l.b16 %v117
  %v499 = vunpack.c.h.b16 %v117
  %v500 = vunpack.c.l.b16 %v118
  %v501 = vunpack.c.h.b16 %v118
  %v502 = vunpack.c.l.b16 %v119
  %v503 = vunpack.c.h.b16 %v119
  %v504 = vunpack.c.l.b16 %v120
  %v505 = vunpack.c.h.b16 %v120
  %v506 = vunpack.c.l.b16 %v121
  %v507 = vunpack.c.h.b16 %v121
  %v508 = vunpack.c.l.b16 %v122
  %v509 = vunpack.c.h.b16 %v122
  %v510 = vunpack.c.l.b16 %v123
  %v511 = vunpack.c.h.b16 %v123
  %v512 = vunpack.c.l.b16 %v124
  %v513 = vunpack.c.h.b16 %v124
  %v514 = vunpack.c.l.b16 %v125
  %v515 = vunpack.c.h.b16 %v125
  %v516 = vunpack.c.l.b16 %v126
  %v517 = vunpack.c.h.b16 %v126
  %v518 = vunpack.c.l.b16 %v127
  %v519 = vunpack.c.h.b16 %v127
  %v520 = vunpack.c.l.b16 %v128
  %v521 = vunpack.c.h.b16 %v128
  %v522 = vunpack.c.l.b16 %v129
  %v523 = vunpack.c.h.b16 %v129
  %v524 = vunpack.c.l.b16 %v130
  %v525 = vunpack.c.h.b16 %v130
  %v526 = vunpack.c.l.b16 %v131
  %v527 = vunpack.c.h.b16 %v131
  %v528 = vunpack.c.l.b16 %v132
  %v529 = vunpack.c.h.b16 %v132
  %v530 = vunpack.c.l.b16 %v133
  %v531 = vunpack.c.h.b16 %v133
  %v532 = vunpack.c.l.b16 %v134
  %v533 = vunpack.c.h.b16 %v134
  %v534 = vunpack.c.l.b16 %v135
  %v535 = vunpack.c.h.b16 %v135
  %v536 = vunpack.c.l.b16 %v136
  %v537 = vunpack.c.h.b16 %v136
  %v538 = vunpack.c.l.b16 %v137
  %v539 = vunpack.c.h.b16 %v137
  %v540 = vunpack.c.l.b16 %v138
  %v541 = vunpack.c.h.b16 %v138
  %v542 = vunpack.c.l.b16 %v139
  %v543 = vunpack.c.h.b16 %v139
  %v544 = vunpack.c.l.b16 %v140
  %v545 = vunpack.c.h.b16 %v140
  %v546 = vunpack.c.l.b16 %v141
  %v547 = vunpack.c.h.b16 %v141
  %v548 = vunpack.c.l.b16 %v142
  %v549 = vunpack.c.h.b16 %v142
  %v550 = vpack.c.b16 %v296, %v294
  %v551 = vpack.c.b16 %v297, %v295
  %v552 = vpack.c.b16 %v300, %v298
  %v553 = vpack.c.b16 %v301, %v299
  %v554 = vpack.c.b16 %v304, %v302
  %v555 = vpack.c.b16 %v305, %v303
  %v556 = vpack.c.b16 %v308, %v306
  %v557 = vpack.c.b16 %v309, %v307
  %v558 = vpack.c.b16 %v312, %v310
  %v559 = vpack.c.b16 %v313, %v311
  %v560 = vpack.c.b16 %v316, %v314
  %v561 = vpack.c.b16 %v317, %v315
  %v562 = vpack.c.b16 %v320, %v318
  %v563 = vpack.c.b16 %v321, %v319
  %v564 = vpack.c.b16 %v324, %v322
  %v565 = vpack.c.b16 %v325, %v323
  %v566 = vpack.c.b16 %v328, %v326
  %v567 = vpack.c.b16 %v329, %v327
  %v568 = vpack.c.b16 %v332, %v330
  %v569 = vpack.c.b16 %v333, %v331
  %v570 = vpack.c.b16 %v336, %v334
  %v571 = vpack.c.b16 %v337, %v335
  %v572 = vpack.c.b16 %v340, %v338
  %v573 = vpack.c.b16 %v341, %v339
  %v574 = vpack.c.b16 %v344, %v342
  %v575 = vpack.c.b16 %v345, %v343
  %v576 = vpack.c.b16 %v348, %v346
  %v577 = vpack.c.b16 %v349, %v347
  %v578 = vpack.c.b16 %v352, %v350
  %v579 = vpack.c.b16 %v353, %v351
  %v580 = vpack.c.b16 %v356, %v354
  %v581 = vpack.c.b16 %v357, %v355
  %v582 = vpack.c.b16 %v360, %v358
  %v583 = vpack.c.b16 %v361, %v359
  %v584 = vpack.c.b16 %v364, %v362
  %v585 = vpack.c.b16 %v365, %v363
  %v586 = vpack.c.b16 %v368, %v366
  %v587 = vpack.c.b16 %v369, %v367
  %v588 = vpack.c.b16 %v372, %v370
  %v589 = vpack.c.b16 %v373, %v371
  %v590 = vpack.c.b16 %v376, %v374
  %v591 = vpack.c.b16 %v377, %v375
  %v592 = vpack.c.b16 %v380, %v378
  %v593 = vpack.c.b16 %v381, %v379
  %v594 = vpack.c.b16 %v384, %v382
  %v595 = vpack.c.b16 %v385, %v383
  %v596 = vpack.c.b16 %v388, %v386
  %v597 = vpack.c.b16 %v389, %v387
  %v598 = vpack.c.b16 %v392, %v390
  %v599 = vpack.c.b16 %v393, %v391
  %v600 = vpack.c.b16 %v396, %v394
  %v601 = vpack.c.b16 %v397, %v395
  %v602 = vpack.c.b16 %v400, %v398
  %v603 = vpack.c.b16 %v401, %v399
  %v604 = vpack.c.b16 %v404, %v402
  %v605 = vpack.c.b16 %v405, %v403
  %v606 = vpack.c.b16 %v408, %v406
  %v607 = vpack.c.b16 %v409, %v407
  %v608 = vpack.c.b16 %v412, %v410
  %v609 = vpack.c.b16 %v413, %v411
  %v610 = vpack.c.b16 %v416, %v414
  %v611 = vpack.c.b16 %v417, %v415
  %v612 = vpack.c.b16 %v420, %v418
  %v613 = vpack.c.b16 %v421, %v419
  %v614 = vpack.c.b16 %v424, %v422
  %v615 = vpack.c.b16 %v425, %v423
  %v616 = vpack.c.b16 %v428, %v426
  %v617 = vpack.c.b16 %v429, %v427
  %v618 = vpack.c.b16 %v432, %v430
  %v619 = vpack.c.b16 %v433, %v431
  %v620 = vpack.c.b16 %v436, %v434
  %v621 = vpack.c.b16 %v437, %v435
  %v622 = vpack.c.b16 %v440, %v438
  %v623 = vpack.c.b16 %v441, %v439
  %v624 = vpack.c.b16 %v444, %v442
  %v625 = vpack.c.b16 %v445, %v443
  %v626 = vpack.c.b16 %v448, %v446
  %v627 = vpack.c.b16 %v449, %v447
  %v628 = vpack.c.b16 %v452, %v450
  %v629 = vpack.c.b16 %v453, %v451
  %v630 = vpack.c.b16 %v456, %v454
  %v631 = vpack.c.b16 %v457, %v455
  %v632 = vpack.c.b16 %v460, %v458
  %v633 = vpack.c.b16 %v461, %v459
  %v634 = vpack.c.b16 %v464, %v462
  %v635 = vpack.c.b16 %v465, %v463
  %v636 = vpack.c.b16 %v468, %v466
  %v637 = vpack.c.b16 %v469, %v467
  %v638 = vpack.c.b16 %v472, %v470
  %v639 = vpack.c.b16 %v473, %v471
  %v640 = vpack.c.b16 %v476, %v474
  %v641 = vpack.c.b16 %v477, %v475
  %v642 = vpack.c.b16 %v480, %v478
  %v643 = vpack.c.b16 %v481, %v479
  %v644 = vpack.c.b16 %v484, %v482
  %v645 = vpack.c.b16 %v485, %v483
  %v646 = vpack.c.b16 %v488, %v486
  %v647 = vpack.c.b16 %v489, %v487
  %v648 = vpack.c.b16 %v492, %v490
  %v649 = vpack.c.b16 %v493, %v491
  %v650 = vpack.c.b16 %v496, %v494
  %v651 = vpack.c.b16 %v497, %v495
  %v652 = vpack.c.b16 %v500, %v498
  %v653 = vpack.c.b16 %v501, %v499
  %v654 = vpack.c.b16 %v504, %v502
  %v655 = vpack.c.b16 %v505, %v503
  %v656 = vpack.c.b16 %v508, %v506
  %v657 = vpack.c.b16 %v509, %v507
  %v658 = vpack.c.b16 %v512, %v510
  %v659 = vpack.c.b16 %v513, %v511
  %v660 = vpack.c.b16 %v516, %v514
  %v661 = vpack.c.b16 %v517, %v515
  %v662 = vpack.c.b16 %v520, %v518
  %v663 = vpack.c.b16 %v521, %v519
  %v664 = vpack.c.b16 %v524, %v522
  %v665 = vpack.c.b16 %v525, %v523
  %v666 = vpack.c.b16 %v528, %v526
  %v667 = vpack.c.b16 %v529, %v527
  %v668 = vpack.c.b16 %v532, %v530
  %v669 = vpack.c.b16 %v533, %v531
  %v670 = vpack.c.b16 %v536, %v534
  %v671 = vpack.c.b16 %v537, %v535
  %v672 = vpack.c.b16 %v540, %v538
  %v673 = vpack.c.b16 %v541, %v539
  %v674 = vpack.c.b16 %v544, %v542
  %v675 = vpack.c.b16 %v545, %v543
  %v676 = vpack.c.b16 %v548, %v546
  %v677 = vpack.c.b16 %v549, %v547
  %v761 = vunpack.c.l.b16 %v143
  %v762 = vunpack.c.l.b16 %v144
  %v763 = vunpack.c.l.b16 %v145
  %v764 = vunpack.c.l.b16 %v146
  %v765 = vunpack.c.l.b16 %v147
  %v766 = vunpack.c.l.b16 %v148
  %v767 = vunpack.c.l.b16 %v149
  %v768 = vunpack.c.l.b16 %v150
  %v769 = vunpack.c.l.b16 %v151
  %v770 = vunpack.c.l.b16 %v152
  %v771 = vunpack.c.l.b16 %v153
  %v772 = vunpack.c.l.b16 %v154
  %v773 = vunpack.c.l.b16 %v155
  %v774 = vunpack.c.l.b16 %v156
  %v775 = vunpack.c.l.b16 %v157
  %v776 = vunpack.c.l.b16 %v158
  %v777 = vunpack.c.l.b16 %v159
  %v778 = vunpack.c.l.b16 %v160
  %v779 = vunpack.c.l.b16 %v161
  %v780 = vpack.c.b16 %v762, %v761
  %v781 = vpack.c.b16 %v764, %v763
  %v782 = vpack.c.b16 %v766, %v765
  %v783 = vpack.c.b16 %v768, %v767
  %v784 = vpack.c.b16 %v770, %v769
  %v785 = vpack.c.b16 %v772, %v771
  %v786 = vpack.c.b16 %v774, %v773
  %v787 = vpack.c.b16 %v776, %v775
  %v788 = vpack.c.b16 %v778, %v777
  %v789 = vpack.c.b16 %v779, %v779
  %vm799 = vcmask 195584
  %v801 = vsel %vm799, %v551, 0
  %v804 = vsel %vm799, %v553, 0
  %v807 = vsel %vm799, %v555, 0
  %v810 = vsel %vm799, %v557, 0
  %v813 = vsel %vm799, %v559, 0
  %v816 = vsel %vm799, %v561, 0
  %v819 = vsel %vm799, %v563, 0
  %v822 = vsel %vm799, %v565, 0
  %v825 = vsel %vm799, %v567, 0
  %v828 = vsel %vm799, %v569, 0
  %v831 = vsel %vm799, %v571, 0
  %v834 = vsel %vm799, %v573, 0
  %v837 = vsel %vm799, %v575, 0
  %v840 = vsel %vm799, %v577, 0
  %v843 = vsel %vm799, %v579, 0
  %v846 = vsel %vm799, %v581, 0
  %v849 = vsel %vm799, %v583, 0
  %v852 = vsel %vm799, %v585, 0
  %v855 = vsel %vm799, %v587, 0
  %v858 = vsel %vm799, %v589, 0
  %v861 = vsel %vm799, %v591, 0
  %v864 = vsel %vm799, %v593, 0
  %v867 = vsel %vm799, %v595, 0
  %v870 = vsel %vm799, %v597, 0
  %v873 = vsel %vm799, %v599, 0
  %v876 = vsel %vm799, %v601, 0
  %v879 = vsel %vm799, %v603, 0
  %v882 = vsel %vm799, %v605, 0
  %v885 = vsel %vm799, %v607, 0
  %v888 = vsel %vm799, %v609, 0
  %v891 = vsel %vm799, %v611, 0
  %v894 = vsel %vm799, %v613, 0
  %v897 = vsel %vm799, %v615, 0
  %v900 = vsel %vm799, %v617, 0
  %v903 = vsel %vm799, %v619, 0
  %v906 = vsel %vm799, %v621, 0
  %v909 = vsel %vm799, %v623, 0
  %v912 = vsel %vm799, %v625, 0
  %v915 = vsel %vm799, %v627, 0
  %v918 = vsel %vm799, %v629, 0
  %v921 = vsel %vm799, %v631, 0
  %v924 = vsel %vm799, %v633, 0
  %v927 = vsel %vm799, %v635, 0
  %v930 = vsel %vm799, %v637, 0
  %v933 = vsel %vm799, %v639, 0
  %v936 = vsel %vm799, %v641, 0
  %v939 = vsel %vm799, %v643, 0
  %v942 = vsel %vm799, %v645, 0
  %v945 = vsel %vm799, %v647, 0
  %v948 = vsel %vm799, %v649, 0
  %v951 = vsel %vm799, %v651, 0
  %v954 = vsel %vm799, %v653, 0
  %v957 = vsel %vm799, %v655, 0
  %v960 = vsel %vm799, %v657, 0
  %v963 = vsel %vm799, %v659, 0
  %v966 = vsel %vm799, %v661, 0
  %v969 = vsel %vm799, %v663, 0
  %v972 = vsel %vm799, %v665, 0
  %v975 = vsel %vm799, %v667, 0
  %v978 = vsel %vm799, %v669, 0
  %v981 = vsel %vm799, %v671, 0
  %v984 = vsel %vm799, %v673, 0
  %v987 = vsel %vm799, %v675, 0
  %v990 = vsel %vm799, %v677, 0
  %vm992 = vcmask 1043456
  %v994 = vsel %vm992, %v789, 0
  %996 = vmatpush.bf16.msra.mxu0 %v787
  %997 = vmatpush.bf16.msra.mxu0 %v786
  %998 = vmatpush.bf16.msra.mxu0 %v785
  %999 = vmatpush.bf16.msra.mxu0 %v784
  %1000 = vmatpush.bf16.msra.mxu0 %v783
  %1001 = vmatpush.bf16.msra.mxu0 %v782
  %1002 = vmatpush.bf16.msra.mxu0 %v781
  %1003 = vmatpush.bf16.msra.mxu0 %v780
  %1004 = vmatmul.bf16.gmra.mxu0 %v550
  %v1005 = vpop.f32.mrf.mxu0
  %v1006 = vadd.f32 %v164, %v1005
  %v1007 = vpop.f32.mrf.mxu0
  %v1008 = vadd.f32 %v164, %v1007
  %1009 = vmatmul.bf16.gmra.mxu0 %v552
  %v1010 = vpop.f32.mrf.mxu0
  %v1011 = vadd.f32 %v164, %v1010
  %v1012 = vpop.f32.mrf.mxu0
  %v1013 = vadd.f32 %v164, %v1012
  %1014 = vmatmul.bf16.gmra.mxu0 %v554
  %v1015 = vpop.f32.mrf.mxu0
  %v1016 = vadd.f32 %v164, %v1015
  %v1017 = vpop.f32.mrf.mxu0
  %v1018 = vadd.f32 %v164, %v1017
  %1019 = vmatmul.bf16.gmra.mxu0 %v556
  %v1020 = vpop.f32.mrf.mxu0
  %v1021 = vadd.f32 %v164, %v1020
  %v1022 = vpop.f32.mrf.mxu0
  %v1023 = vadd.f32 %v164, %v1022
  %1024 = vmatmul.bf16.gmra.mxu0 %v558
  %v1025 = vpop.f32.mrf.mxu0
  %v1026 = vadd.f32 %v164, %v1025
  %v1027 = vpop.f32.mrf.mxu0
  %v1028 = vadd.f32 %v164, %v1027
  %1029 = vmatmul.bf16.gmra.mxu0 %v560
  %v1030 = vpop.f32.mrf.mxu0
  %v1031 = vadd.f32 %v164, %v1030
  %v1032 = vpop.f32.mrf.mxu0
  %v1033 = vadd.f32 %v164, %v1032
  %1034 = vmatmul.bf16.gmra.mxu0 %v562
  %v1035 = vpop.f32.mrf.mxu0
  %v1036 = vadd.f32 %v164, %v1035
  %v1037 = vpop.f32.mrf.mxu0
  %v1038 = vadd.f32 %v164, %v1037
  %1039 = vmatmul.bf16.gmra.mxu0 %v564
  %v1040 = vpop.f32.mrf.mxu0
  %v1041 = vadd.f32 %v164, %v1040
  %v1042 = vpop.f32.mrf.mxu0
  %v1043 = vadd.f32 %v164, %v1042
  %1044 = vmatmul.bf16.gmra.mxu0 %v566
  %v1045 = vpop.f32.mrf.mxu0
  %v1046 = vadd.f32 %v164, %v1045
  %v1047 = vpop.f32.mrf.mxu0
  %v1048 = vadd.f32 %v164, %v1047
  %1049 = vmatmul.bf16.gmra.mxu0 %v568
  %v1050 = vpop.f32.mrf.mxu0
  %v1051 = vadd.f32 %v164, %v1050
  %v1052 = vpop.f32.mrf.mxu0
  %v1053 = vadd.f32 %v164, %v1052
  %1054 = vmatmul.bf16.gmra.mxu0 %v570
  %v1055 = vpop.f32.mrf.mxu0
  %v1056 = vadd.f32 %v164, %v1055
  %v1057 = vpop.f32.mrf.mxu0
  %v1058 = vadd.f32 %v164, %v1057
  %1059 = vmatmul.bf16.gmra.mxu0 %v572
  %v1060 = vpop.f32.mrf.mxu0
  %v1061 = vadd.f32 %v164, %v1060
  %v1062 = vpop.f32.mrf.mxu0
  %v1063 = vadd.f32 %v164, %v1062
  %1064 = vmatmul.bf16.gmra.mxu0 %v574
  %v1065 = vpop.f32.mrf.mxu0
  %v1066 = vadd.f32 %v164, %v1065
  %v1067 = vpop.f32.mrf.mxu0
  %v1068 = vadd.f32 %v164, %v1067
  %1069 = vmatmul.bf16.gmra.mxu0 %v576
  %v1070 = vpop.f32.mrf.mxu0
  %v1071 = vadd.f32 %v164, %v1070
  %v1072 = vpop.f32.mrf.mxu0
  %v1073 = vadd.f32 %v164, %v1072
  %1074 = vmatmul.bf16.gmra.mxu0 %v578
  %v1075 = vpop.f32.mrf.mxu0
  %v1076 = vadd.f32 %v164, %v1075
  %v1077 = vpop.f32.mrf.mxu0
  %v1078 = vadd.f32 %v164, %v1077
  %1079 = vmatmul.bf16.gmra.mxu0 %v580
  %v1080 = vpop.f32.mrf.mxu0
  %v1081 = vadd.f32 %v164, %v1080
  %v1082 = vpop.f32.mrf.mxu0
  %v1083 = vadd.f32 %v164, %v1082
  %1084 = vmatmul.bf16.gmra.mxu0 %v582
  %v1085 = vpop.f32.mrf.mxu0
  %v1086 = vadd.f32 %v164, %v1085
  %v1087 = vpop.f32.mrf.mxu0
  %v1088 = vadd.f32 %v164, %v1087
  %1089 = vmatmul.bf16.gmra.mxu0 %v584
  %v1090 = vpop.f32.mrf.mxu0
  %v1091 = vadd.f32 %v164, %v1090
  %v1092 = vpop.f32.mrf.mxu0
  %v1093 = vadd.f32 %v164, %v1092
  %1094 = vmatmul.bf16.gmra.mxu0 %v586
  %v1095 = vpop.f32.mrf.mxu0
  %v1096 = vadd.f32 %v164, %v1095
  %v1097 = vpop.f32.mrf.mxu0
  %v1098 = vadd.f32 %v164, %v1097
  %1099 = vmatmul.bf16.gmra.mxu0 %v588
  %v1100 = vpop.f32.mrf.mxu0
  %v1101 = vadd.f32 %v164, %v1100
  %v1102 = vpop.f32.mrf.mxu0
  %v1103 = vadd.f32 %v164, %v1102
  %1104 = vmatmul.bf16.gmra.mxu0 %v590
  %v1105 = vpop.f32.mrf.mxu0
  %v1106 = vadd.f32 %v164, %v1105
  %v1107 = vpop.f32.mrf.mxu0
  %v1108 = vadd.f32 %v164, %v1107
  %1109 = vmatmul.bf16.gmra.mxu0 %v592
  %v1110 = vpop.f32.mrf.mxu0
  %v1111 = vadd.f32 %v164, %v1110
  %v1112 = vpop.f32.mrf.mxu0
  %v1113 = vadd.f32 %v164, %v1112
  %1114 = vmatmul.bf16.gmra.mxu0 %v594
  %v1115 = vpop.f32.mrf.mxu0
  %v1116 = vadd.f32 %v164, %v1115
  %v1117 = vpop.f32.mrf.mxu0
  %v1118 = vadd.f32 %v164, %v1117
  %1119 = vmatmul.bf16.gmra.mxu0 %v596
  %v1120 = vpop.f32.mrf.mxu0
  %v1121 = vadd.f32 %v164, %v1120
  %v1122 = vpop.f32.mrf.mxu0
  %v1123 = vadd.f32 %v164, %v1122
  %1124 = vmatmul.bf16.gmra.mxu0 %v598
  %v1125 = vpop.f32.mrf.mxu0
  %v1126 = vadd.f32 %v164, %v1125
  %v1127 = vpop.f32.mrf.mxu0
  %v1128 = vadd.f32 %v164, %v1127
  %1129 = vmatmul.bf16.gmra.mxu0 %v600
  %v1130 = vpop.f32.mrf.mxu0
  %v1131 = vadd.f32 %v164, %v1130
  %v1132 = vpop.f32.mrf.mxu0
  %v1133 = vadd.f32 %v164, %v1132
  %1134 = vmatmul.bf16.gmra.mxu0 %v602
  %v1135 = vpop.f32.mrf.mxu0
  %v1136 = vadd.f32 %v164, %v1135
  %v1137 = vpop.f32.mrf.mxu0
  %v1138 = vadd.f32 %v164, %v1137
  %1139 = vmatmul.bf16.gmra.mxu0 %v604
  %v1140 = vpop.f32.mrf.mxu0
  %v1141 = vadd.f32 %v164, %v1140
  %v1142 = vpop.f32.mrf.mxu0
  %v1143 = vadd.f32 %v164, %v1142
  %1144 = vmatmul.bf16.gmra.mxu0 %v606
  %v1145 = vpop.f32.mrf.mxu0
  %v1146 = vadd.f32 %v164, %v1145
  %v1147 = vpop.f32.mrf.mxu0
  %v1148 = vadd.f32 %v164, %v1147
  %1149 = vmatmul.bf16.gmra.mxu0 %v608
  %v1150 = vpop.f32.mrf.mxu0
  %v1151 = vadd.f32 %v164, %v1150
  %v1152 = vpop.f32.mrf.mxu0
  %v1153 = vadd.f32 %v164, %v1152
  %1154 = vmatmul.bf16.gmra.mxu0 %v610
  %v1155 = vpop.f32.mrf.mxu0
  %v1156 = vadd.f32 %v164, %v1155
  %v1157 = vpop.f32.mrf.mxu0
  %v1158 = vadd.f32 %v164, %v1157
  %1159 = vmatmul.bf16.gmra.mxu0 %v612
  %v1160 = vpop.f32.mrf.mxu0
  %v1161 = vadd.f32 %v164, %v1160
  %v1162 = vpop.f32.mrf.mxu0
  %v1163 = vadd.f32 %v164, %v1162
  %1164 = vmatmul.bf16.gmra.mxu0 %v614
  %v1165 = vpop.f32.mrf.mxu0
  %v1166 = vadd.f32 %v164, %v1165
  %v1167 = vpop.f32.mrf.mxu0
  %v1168 = vadd.f32 %v164, %v1167
  %1169 = vmatmul.bf16.gmra.mxu0 %v616
  %v1170 = vpop.f32.mrf.mxu0
  %v1171 = vadd.f32 %v164, %v1170
  %v1172 = vpop.f32.mrf.mxu0
  %v1173 = vadd.f32 %v164, %v1172
  %1174 = vmatmul.bf16.gmra.mxu0 %v618
  %v1175 = vpop.f32.mrf.mxu0
  %v1176 = vadd.f32 %v164, %v1175
  %v1177 = vpop.f32.mrf.mxu0
  %v1178 = vadd.f32 %v164, %v1177
  %1179 = vmatmul.bf16.gmra.mxu0 %v620
  %v1180 = vpop.f32.mrf.mxu0
  %v1181 = vadd.f32 %v164, %v1180
  %v1182 = vpop.f32.mrf.mxu0
  %v1183 = vadd.f32 %v164, %v1182
  %1184 = vmatmul.bf16.gmra.mxu0 %v622
  %v1185 = vpop.f32.mrf.mxu0
  %v1186 = vadd.f32 %v164, %v1185
  %v1187 = vpop.f32.mrf.mxu0
  %v1188 = vadd.f32 %v164, %v1187
  %1189 = vmatmul.bf16.gmra.mxu0 %v624
  %v1190 = vpop.f32.mrf.mxu0
  %v1191 = vadd.f32 %v164, %v1190
  %v1192 = vpop.f32.mrf.mxu0
  %v1193 = vadd.f32 %v164, %v1192
  %1194 = vmatmul.bf16.gmra.mxu0 %v626
  %v1195 = vpop.f32.mrf.mxu0
  %v1196 = vadd.f32 %v164, %v1195
  %v1197 = vpop.f32.mrf.mxu0
  %v1198 = vadd.f32 %v164, %v1197
  %1199 = vmatmul.bf16.gmra.mxu0 %v628
  %v1200 = vpop.f32.mrf.mxu0
  %v1201 = vadd.f32 %v164, %v1200
  %v1202 = vpop.f32.mrf.mxu0
  %v1203 = vadd.f32 %v164, %v1202
  %1204 = vmatmul.bf16.gmra.mxu0 %v630
  %v1205 = vpop.f32.mrf.mxu0
  %v1206 = vadd.f32 %v164, %v1205
  %v1207 = vpop.f32.mrf.mxu0
  %v1208 = vadd.f32 %v164, %v1207
  %1209 = vmatmul.bf16.gmra.mxu0 %v632
  %v1210 = vpop.f32.mrf.mxu0
  %v1211 = vadd.f32 %v164, %v1210
  %v1212 = vpop.f32.mrf.mxu0
  %v1213 = vadd.f32 %v164, %v1212
  %1214 = vmatmul.bf16.gmra.mxu0 %v634
  %v1215 = vpop.f32.mrf.mxu0
  %v1216 = vadd.f32 %v164, %v1215
  %v1217 = vpop.f32.mrf.mxu0
  %v1218 = vadd.f32 %v164, %v1217
  %1219 = vmatmul.bf16.gmra.mxu0 %v636
  %v1220 = vpop.f32.mrf.mxu0
  %v1221 = vadd.f32 %v164, %v1220
  %v1222 = vpop.f32.mrf.mxu0
  %v1223 = vadd.f32 %v164, %v1222
  %1224 = vmatmul.bf16.gmra.mxu0 %v638
  %v1225 = vpop.f32.mrf.mxu0
  %v1226 = vadd.f32 %v164, %v1225
  %v1227 = vpop.f32.mrf.mxu0
  %v1228 = vadd.f32 %v164, %v1227
  %1229 = vmatmul.bf16.gmra.mxu0 %v640
  %v1230 = vpop.f32.mrf.mxu0
  %v1231 = vadd.f32 %v164, %v1230
  %v1232 = vpop.f32.mrf.mxu0
  %v1233 = vadd.f32 %v164, %v1232
  %1234 = vmatmul.bf16.gmra.mxu0 %v642
  %v1235 = vpop.f32.mrf.mxu0
  %v1236 = vadd.f32 %v164, %v1235
  %v1237 = vpop.f32.mrf.mxu0
  %v1238 = vadd.f32 %v164, %v1237
  %1239 = vmatmul.bf16.gmra.mxu0 %v644
  %v1240 = vpop.f32.mrf.mxu0
  %v1241 = vadd.f32 %v164, %v1240
  %v1242 = vpop.f32.mrf.mxu0
  %v1243 = vadd.f32 %v164, %v1242
  %1244 = vmatmul.bf16.gmra.mxu0 %v646
  %v1245 = vpop.f32.mrf.mxu0
  %v1246 = vadd.f32 %v164, %v1245
  %v1247 = vpop.f32.mrf.mxu0
  %v1248 = vadd.f32 %v164, %v1247
  %1249 = vmatmul.bf16.gmra.mxu0 %v648
  %v1250 = vpop.f32.mrf.mxu0
  %v1251 = vadd.f32 %v164, %v1250
  %v1252 = vpop.f32.mrf.mxu0
  %v1253 = vadd.f32 %v164, %v1252
  %1254 = vmatmul.bf16.gmra.mxu0 %v650
  %v1255 = vpop.f32.mrf.mxu0
  %v1256 = vadd.f32 %v164, %v1255
  %v1257 = vpop.f32.mrf.mxu0
  %v1258 = vadd.f32 %v164, %v1257
  %1259 = vmatmul.bf16.gmra.mxu0 %v652
  %v1260 = vpop.f32.mrf.mxu0
  %v1261 = vadd.f32 %v164, %v1260
  %v1262 = vpop.f32.mrf.mxu0
  %v1263 = vadd.f32 %v164, %v1262
  %1264 = vmatmul.bf16.gmra.mxu0 %v654
  %v1265 = vpop.f32.mrf.mxu0
  %v1266 = vadd.f32 %v164, %v1265
  %v1267 = vpop.f32.mrf.mxu0
  %v1268 = vadd.f32 %v164, %v1267
  %1269 = vmatmul.bf16.gmra.mxu0 %v656
  %v1270 = vpop.f32.mrf.mxu0
  %v1271 = vadd.f32 %v164, %v1270
  %v1272 = vpop.f32.mrf.mxu0
  %v1273 = vadd.f32 %v164, %v1272
  %1274 = vmatmul.bf16.gmra.mxu0 %v658
  %v1275 = vpop.f32.mrf.mxu0
  %v1276 = vadd.f32 %v164, %v1275
  %v1277 = vpop.f32.mrf.mxu0
  %v1278 = vadd.f32 %v164, %v1277
  %1279 = vmatmul.bf16.gmra.mxu0 %v660
  %v1280 = vpop.f32.mrf.mxu0
  %v1281 = vadd.f32 %v164, %v1280
  %v1282 = vpop.f32.mrf.mxu0
  %v1283 = vadd.f32 %v164, %v1282
  %1284 = vmatmul.bf16.gmra.mxu0 %v662
  %v1285 = vpop.f32.mrf.mxu0
  %v1286 = vadd.f32 %v164, %v1285
  %v1287 = vpop.f32.mrf.mxu0
  %v1288 = vadd.f32 %v164, %v1287
  %1289 = vmatmul.bf16.gmra.mxu0 %v664
  %v1290 = vpop.f32.mrf.mxu0
  %v1291 = vadd.f32 %v164, %v1290
  %v1292 = vpop.f32.mrf.mxu0
  %v1293 = vadd.f32 %v164, %v1292
  %1294 = vmatmul.bf16.gmra.mxu0 %v666
  %v1295 = vpop.f32.mrf.mxu0
  %v1296 = vadd.f32 %v164, %v1295
  %v1297 = vpop.f32.mrf.mxu0
  %v1298 = vadd.f32 %v164, %v1297
  %1299 = vmatmul.bf16.gmra.mxu0 %v668
  %v1300 = vpop.f32.mrf.mxu0
  %v1301 = vadd.f32 %v164, %v1300
  %v1302 = vpop.f32.mrf.mxu0
  %v1303 = vadd.f32 %v164, %v1302
  %1304 = vmatmul.bf16.gmra.mxu0 %v670
  %v1305 = vpop.f32.mrf.mxu0
  %v1306 = vadd.f32 %v164, %v1305
  %v1307 = vpop.f32.mrf.mxu0
  %v1308 = vadd.f32 %v164, %v1307
  %1309 = vmatmul.bf16.gmra.mxu0 %v672
  %v1310 = vpop.f32.mrf.mxu0
  %v1311 = vadd.f32 %v164, %v1310
  %v1312 = vpop.f32.mrf.mxu0
  %v1313 = vadd.f32 %v164, %v1312
  %1314 = vmatmul.bf16.gmra.mxu0 %v674
  %v1315 = vpop.f32.mrf.mxu0
  %v1316 = vadd.f32 %v164, %v1315
  %v1317 = vpop.f32.mrf.mxu0
  %v1318 = vadd.f32 %v164, %v1317
  %1319 = vmatmul.bf16.gmra.mxu0 %v676
  %v1320 = vpop.f32.mrf.mxu0
  %v1321 = vadd.f32 %v164, %v1320
  %v1322 = vpop.f32.mrf.mxu0
  %v1323 = vadd.f32 %v164, %v1322
  %1324 = vdwg.mxu0
  %1325 = vmatpush.bf16.msra.mxu0 0
  %1326 = vmatpush.bf16.msra.mxu0 0
  %1327 = vmatpush.bf16.msra.mxu0 0
  %1328 = vmatpush.bf16.msra.mxu0 0
  %1329 = vmatpush.bf16.msra.mxu0 0
  %1330 = vmatpush.bf16.msra.mxu0 0
  %1331 = vmatpush.bf16.msra.mxu0 %v994
  %1332 = vmatpush.bf16.msra.mxu0 %v788
  %1333 = vmatmul.bf16.gmra.mxu0 %v801
  %v1334 = vpop.f32.mrf.mxu0
  %v1335 = vadd.f32 %v1006, %v1334
  %v1336 = vpop.f32.mrf.mxu0
  %v1337 = vadd.f32 %v1008, %v1336
  %1338 = vmatmul.bf16.gmra.mxu0 %v804
  %v1339 = vpop.f32.mrf.mxu0
  %v1340 = vadd.f32 %v1011, %v1339
  %v1341 = vpop.f32.mrf.mxu0
  %v1342 = vadd.f32 %v1013, %v1341
  %1343 = vmatmul.bf16.gmra.mxu0 %v807
  %v1344 = vpop.f32.mrf.mxu0
  %v1345 = vadd.f32 %v1016, %v1344
  %v1346 = vpop.f32.mrf.mxu0
  %v1347 = vadd.f32 %v1018, %v1346
  %1348 = vmatmul.bf16.gmra.mxu0 %v810
  %v1349 = vpop.f32.mrf.mxu0
  %v1350 = vadd.f32 %v1021, %v1349
  %v1351 = vpop.f32.mrf.mxu0
  %v1352 = vadd.f32 %v1023, %v1351
  %1353 = vmatmul.bf16.gmra.mxu0 %v813
  %v1354 = vpop.f32.mrf.mxu0
  %v1355 = vadd.f32 %v1026, %v1354
  %v1356 = vpop.f32.mrf.mxu0
  %v1357 = vadd.f32 %v1028, %v1356
  %1358 = vmatmul.bf16.gmra.mxu0 %v816
  %v1359 = vpop.f32.mrf.mxu0
  %v1360 = vadd.f32 %v1031, %v1359
  %v1361 = vpop.f32.mrf.mxu0
  %v1362 = vadd.f32 %v1033, %v1361
  %1363 = vmatmul.bf16.gmra.mxu0 %v819
  %v1364 = vpop.f32.mrf.mxu0
  %v1365 = vadd.f32 %v1036, %v1364
  %v1366 = vpop.f32.mrf.mxu0
  %v1367 = vadd.f32 %v1038, %v1366
  %1368 = vmatmul.bf16.gmra.mxu0 %v822
  %v1369 = vpop.f32.mrf.mxu0
  %v1370 = vadd.f32 %v1041, %v1369
  %v1371 = vpop.f32.mrf.mxu0
  %v1372 = vadd.f32 %v1043, %v1371
  %1373 = vmatmul.bf16.gmra.mxu0 %v825
  %v1374 = vpop.f32.mrf.mxu0
  %v1375 = vadd.f32 %v1046, %v1374
  %v1376 = vpop.f32.mrf.mxu0
  %v1377 = vadd.f32 %v1048, %v1376
  %1378 = vmatmul.bf16.gmra.mxu0 %v828
  %v1379 = vpop.f32.mrf.mxu0
  %v1380 = vadd.f32 %v1051, %v1379
  %v1381 = vpop.f32.mrf.mxu0
  %v1382 = vadd.f32 %v1053, %v1381
  %1383 = vmatmul.bf16.gmra.mxu0 %v831
  %v1384 = vpop.f32.mrf.mxu0
  %v1385 = vadd.f32 %v1056, %v1384
  %v1386 = vpop.f32.mrf.mxu0
  %v1387 = vadd.f32 %v1058, %v1386
  %1388 = vmatmul.bf16.gmra.mxu0 %v834
  %v1389 = vpop.f32.mrf.mxu0
  %v1390 = vadd.f32 %v1061, %v1389
  %v1391 = vpop.f32.mrf.mxu0
  %v1392 = vadd.f32 %v1063, %v1391
  %1393 = vmatmul.bf16.gmra.mxu0 %v837
  %v1394 = vpop.f32.mrf.mxu0
  %v1395 = vadd.f32 %v1066, %v1394
  %v1396 = vpop.f32.mrf.mxu0
  %v1397 = vadd.f32 %v1068, %v1396
  %1398 = vmatmul.bf16.gmra.mxu0 %v840
  %v1399 = vpop.f32.mrf.mxu0
  %v1400 = vadd.f32 %v1071, %v1399
  %v1401 = vpop.f32.mrf.mxu0
  %v1402 = vadd.f32 %v1073, %v1401
  %1403 = vmatmul.bf16.gmra.mxu0 %v843
  %v1404 = vpop.f32.mrf.mxu0
  %v1405 = vadd.f32 %v1076, %v1404
  %v1406 = vpop.f32.mrf.mxu0
  %v1407 = vadd.f32 %v1078, %v1406
  %1408 = vmatmul.bf16.gmra.mxu0 %v846
  %v1409 = vpop.f32.mrf.mxu0
  %v1410 = vadd.f32 %v1081, %v1409
  %v1411 = vpop.f32.mrf.mxu0
  %v1412 = vadd.f32 %v1083, %v1411
  %1413 = vmatmul.bf16.gmra.mxu0 %v849
  %v1414 = vpop.f32.mrf.mxu0
  %v1415 = vadd.f32 %v1086, %v1414
  %v1416 = vpop.f32.mrf.mxu0
  %v1417 = vadd.f32 %v1088, %v1416
  %1418 = vmatmul.bf16.gmra.mxu0 %v852
  %v1419 = vpop.f32.mrf.mxu0
  %v1420 = vadd.f32 %v1091, %v1419
  %v1421 = vpop.f32.mrf.mxu0
  %v1422 = vadd.f32 %v1093, %v1421
  %1423 = vmatmul.bf16.gmra.mxu0 %v855
  %v1424 = vpop.f32.mrf.mxu0
  %v1425 = vadd.f32 %v1096, %v1424
  %v1426 = vpop.f32.mrf.mxu0
  %v1427 = vadd.f32 %v1098, %v1426
  %1428 = vmatmul.bf16.gmra.mxu0 %v858
  %v1429 = vpop.f32.mrf.mxu0
  %v1430 = vadd.f32 %v1101, %v1429
  %v1431 = vpop.f32.mrf.mxu0
  %v1432 = vadd.f32 %v1103, %v1431
  %1433 = vmatmul.bf16.gmra.mxu0 %v861
  %v1434 = vpop.f32.mrf.mxu0
  %v1435 = vadd.f32 %v1106, %v1434
  %v1436 = vpop.f32.mrf.mxu0
  %v1437 = vadd.f32 %v1108, %v1436
  %1438 = vmatmul.bf16.gmra.mxu0 %v864
  %v1439 = vpop.f32.mrf.mxu0
  %v1440 = vadd.f32 %v1111, %v1439
  %v1441 = vpop.f32.mrf.mxu0
  %v1442 = vadd.f32 %v1113, %v1441
  %1443 = vmatmul.bf16.gmra.mxu0 %v867
  %v1444 = vpop.f32.mrf.mxu0
  %v1445 = vadd.f32 %v1116, %v1444
  %v1446 = vpop.f32.mrf.mxu0
  %v1447 = vadd.f32 %v1118, %v1446
  %1448 = vmatmul.bf16.gmra.mxu0 %v870
  %v1449 = vpop.f32.mrf.mxu0
  %v1450 = vadd.f32 %v1121, %v1449
  %v1451 = vpop.f32.mrf.mxu0
  %v1452 = vadd.f32 %v1123, %v1451
  %1453 = vmatmul.bf16.gmra.mxu0 %v873
  %v1454 = vpop.f32.mrf.mxu0
  %v1455 = vadd.f32 %v1126, %v1454
  %v1456 = vpop.f32.mrf.mxu0
  %v1457 = vadd.f32 %v1128, %v1456
  %1458 = vmatmul.bf16.gmra.mxu0 %v876
  %v1459 = vpop.f32.mrf.mxu0
  %v1460 = vadd.f32 %v1131, %v1459
  %v1461 = vpop.f32.mrf.mxu0
  %v1462 = vadd.f32 %v1133, %v1461
  %1463 = vmatmul.bf16.gmra.mxu0 %v879
  %v1464 = vpop.f32.mrf.mxu0
  %v1465 = vadd.f32 %v1136, %v1464
  %v1466 = vpop.f32.mrf.mxu0
  %v1467 = vadd.f32 %v1138, %v1466
  %1468 = vmatmul.bf16.gmra.mxu0 %v882
  %v1469 = vpop.f32.mrf.mxu0
  %v1470 = vadd.f32 %v1141, %v1469
  %v1471 = vpop.f32.mrf.mxu0
  %v1472 = vadd.f32 %v1143, %v1471
  %1473 = vmatmul.bf16.gmra.mxu0 %v885
  %v1474 = vpop.f32.mrf.mxu0
  %v1475 = vadd.f32 %v1146, %v1474
  %v1476 = vpop.f32.mrf.mxu0
  %v1477 = vadd.f32 %v1148, %v1476
  %1478 = vmatmul.bf16.gmra.mxu0 %v888
  %v1479 = vpop.f32.mrf.mxu0
  %v1480 = vadd.f32 %v1151, %v1479
  %v1481 = vpop.f32.mrf.mxu0
  %v1482 = vadd.f32 %v1153, %v1481
  %1483 = vmatmul.bf16.gmra.mxu0 %v891
  %v1484 = vpop.f32.mrf.mxu0
  %v1485 = vadd.f32 %v1156, %v1484
  %v1486 = vpop.f32.mrf.mxu0
  %v1487 = vadd.f32 %v1158, %v1486
  %1488 = vmatmul.bf16.gmra.mxu0 %v894
  %v1489 = vpop.f32.mrf.mxu0
  %v1490 = vadd.f32 %v1161, %v1489
  %v1491 = vpop.f32.mrf.mxu0
  %v1492 = vadd.f32 %v1163, %v1491
  %1493 = vmatmul.bf16.gmra.mxu0 %v897
  %v1494 = vpop.f32.mrf.mxu0
  %v1495 = vadd.f32 %v1166, %v1494
  %v1496 = vpop.f32.mrf.mxu0
  %v1497 = vadd.f32 %v1168, %v1496
  %1498 = vmatmul.bf16.gmra.mxu0 %v900
  %v1499 = vpop.f32.mrf.mxu0
  %v1500 = vadd.f32 %v1171, %v1499
  %v1501 = vpop.f32.mrf.mxu0
  %v1502 = vadd.f32 %v1173, %v1501
  %1503 = vmatmul.bf16.gmra.mxu0 %v903
  %v1504 = vpop.f32.mrf.mxu0
  %v1505 = vadd.f32 %v1176, %v1504
  %v1506 = vpop.f32.mrf.mxu0
  %v1507 = vadd.f32 %v1178, %v1506
  %1508 = vmatmul.bf16.gmra.mxu0 %v906
  %v1509 = vpop.f32.mrf.mxu0
  %v1510 = vadd.f32 %v1181, %v1509
  %v1511 = vpop.f32.mrf.mxu0
  %v1512 = vadd.f32 %v1183, %v1511
  %1513 = vmatmul.bf16.gmra.mxu0 %v909
  %v1514 = vpop.f32.mrf.mxu0
  %v1515 = vadd.f32 %v1186, %v1514
  %v1516 = vpop.f32.mrf.mxu0
  %v1517 = vadd.f32 %v1188, %v1516
  %1518 = vmatmul.bf16.gmra.mxu0 %v912
  %v1519 = vpop.f32.mrf.mxu0
  %v1520 = vadd.f32 %v1191, %v1519
  %v1521 = vpop.f32.mrf.mxu0
  %v1522 = vadd.f32 %v1193, %v1521
  %1523 = vmatmul.bf16.gmra.mxu0 %v915
  %v1524 = vpop.f32.mrf.mxu0
  %v1525 = vadd.f32 %v1196, %v1524
  %v1526 = vpop.f32.mrf.mxu0
  %v1527 = vadd.f32 %v1198, %v1526
  %1528 = vmatmul.bf16.gmra.mxu0 %v918
  %v1529 = vpop.f32.mrf.mxu0
  %v1530 = vadd.f32 %v1201, %v1529
  %v1531 = vpop.f32.mrf.mxu0
  %v1532 = vadd.f32 %v1203, %v1531
  %1533 = vmatmul.bf16.gmra.mxu0 %v921
  %v1534 = vpop.f32.mrf.mxu0
  %v1535 = vadd.f32 %v1206, %v1534
  %v1536 = vpop.f32.mrf.mxu0
  %v1537 = vadd.f32 %v1208, %v1536
  %1538 = vmatmul.bf16.gmra.mxu0 %v924
  %v1539 = vpop.f32.mrf.mxu0
  %v1540 = vadd.f32 %v1211, %v1539
  %v1541 = vpop.f32.mrf.mxu0
  %v1542 = vadd.f32 %v1213, %v1541
  %1543 = vmatmul.bf16.gmra.mxu0 %v927
  %v1544 = vpop.f32.mrf.mxu0
  %v1545 = vadd.f32 %v1216, %v1544
  %v1546 = vpop.f32.mrf.mxu0
  %v1547 = vadd.f32 %v1218, %v1546
  %1548 = vmatmul.bf16.gmra.mxu0 %v930
  %v1549 = vpop.f32.mrf.mxu0
  %v1550 = vadd.f32 %v1221, %v1549
  %v1551 = vpop.f32.mrf.mxu0
  %v1552 = vadd.f32 %v1223, %v1551
  %1553 = vmatmul.bf16.gmra.mxu0 %v933
  %v1554 = vpop.f32.mrf.mxu0
  %v1555 = vadd.f32 %v1226, %v1554
  %v1556 = vpop.f32.mrf.mxu0
  %v1557 = vadd.f32 %v1228, %v1556
  %1558 = vmatmul.bf16.gmra.mxu0 %v936
  %v1559 = vpop.f32.mrf.mxu0
  %v1560 = vadd.f32 %v1231, %v1559
  %v1561 = vpop.f32.mrf.mxu0
  %v1562 = vadd.f32 %v1233, %v1561
  %1563 = vmatmul.bf16.gmra.mxu0 %v939
  %v1564 = vpop.f32.mrf.mxu0
  %v1565 = vadd.f32 %v1236, %v1564
  %v1566 = vpop.f32.mrf.mxu0
  %v1567 = vadd.f32 %v1238, %v1566
  %1568 = vmatmul.bf16.gmra.mxu0 %v942
  %v1569 = vpop.f32.mrf.mxu0
  %v1570 = vadd.f32 %v1241, %v1569
  %v1571 = vpop.f32.mrf.mxu0
  %v1572 = vadd.f32 %v1243, %v1571
  %1573 = vmatmul.bf16.gmra.mxu0 %v945
  %v1574 = vpop.f32.mrf.mxu0
  %v1575 = vadd.f32 %v1246, %v1574
  %v1576 = vpop.f32.mrf.mxu0
  %v1577 = vadd.f32 %v1248, %v1576
  %1578 = vmatmul.bf16.gmra.mxu0 %v948
  %v1579 = vpop.f32.mrf.mxu0
  %v1580 = vadd.f32 %v1251, %v1579
  %v1581 = vpop.f32.mrf.mxu0
  %v1582 = vadd.f32 %v1253, %v1581
  %1583 = vmatmul.bf16.gmra.mxu0 %v951
  %v1584 = vpop.f32.mrf.mxu0
  %v1585 = vadd.f32 %v1256, %v1584
  %v1586 = vpop.f32.mrf.mxu0
  %v1587 = vadd.f32 %v1258, %v1586
  %1588 = vmatmul.bf16.gmra.mxu0 %v954
  %v1589 = vpop.f32.mrf.mxu0
  %v1590 = vadd.f32 %v1261, %v1589
  %v1591 = vpop.f32.mrf.mxu0
  %v1592 = vadd.f32 %v1263, %v1591
  %1593 = vmatmul.bf16.gmra.mxu0 %v957
  %v1594 = vpop.f32.mrf.mxu0
  %v1595 = vadd.f32 %v1266, %v1594
  %v1596 = vpop.f32.mrf.mxu0
  %v1597 = vadd.f32 %v1268, %v1596
  %1598 = vmatmul.bf16.gmra.mxu0 %v960
  %v1599 = vpop.f32.mrf.mxu0
  %v1600 = vadd.f32 %v1271, %v1599
  %v1601 = vpop.f32.mrf.mxu0
  %v1602 = vadd.f32 %v1273, %v1601
  %1603 = vmatmul.bf16.gmra.mxu0 %v963
  %v1604 = vpop.f32.mrf.mxu0
  %v1605 = vadd.f32 %v1276, %v1604
  %v1606 = vpop.f32.mrf.mxu0
  %v1607 = vadd.f32 %v1278, %v1606
  %1608 = vmatmul.bf16.gmra.mxu0 %v966
  %v1609 = vpop.f32.mrf.mxu0
  %v1610 = vadd.f32 %v1281, %v1609
  %v1611 = vpop.f32.mrf.mxu0
  %v1612 = vadd.f32 %v1283, %v1611
  %1613 = vmatmul.bf16.gmra.mxu0 %v969
  %v1614 = vpop.f32.mrf.mxu0
  %v1615 = vadd.f32 %v1286, %v1614
  %v1616 = vpop.f32.mrf.mxu0
  %v1617 = vadd.f32 %v1288, %v1616
  %1618 = vmatmul.bf16.gmra.mxu0 %v972
  %v1619 = vpop.f32.mrf.mxu0
  %v1620 = vadd.f32 %v1291, %v1619
  %v1621 = vpop.f32.mrf.mxu0
  %v1622 = vadd.f32 %v1293, %v1621
  %1623 = vmatmul.bf16.gmra.mxu0 %v975
  %v1624 = vpop.f32.mrf.mxu0
  %v1625 = vadd.f32 %v1296, %v1624
  %v1626 = vpop.f32.mrf.mxu0
  %v1627 = vadd.f32 %v1298, %v1626
  %1628 = vmatmul.bf16.gmra.mxu0 %v978
  %v1629 = vpop.f32.mrf.mxu0
  %v1630 = vadd.f32 %v1301, %v1629
  %v1631 = vpop.f32.mrf.mxu0
  %v1632 = vadd.f32 %v1303, %v1631
  %1633 = vmatmul.bf16.gmra.mxu0 %v981
  %v1634 = vpop.f32.mrf.mxu0
  %v1635 = vadd.f32 %v1306, %v1634
  %v1636 = vpop.f32.mrf.mxu0
  %v1637 = vadd.f32 %v1308, %v1636
  %1638 = vmatmul.bf16.gmra.mxu0 %v984
  %v1639 = vpop.f32.mrf.mxu0
  %v1640 = vadd.f32 %v1311, %v1639
  %v1641 = vpop.f32.mrf.mxu0
  %v1642 = vadd.f32 %v1313, %v1641
  %1643 = vmatmul.bf16.gmra.mxu0 %v987
  %v1644 = vpop.f32.mrf.mxu0
  %v1645 = vadd.f32 %v1316, %v1644
  %v1646 = vpop.f32.mrf.mxu0
  %v1647 = vadd.f32 %v1318, %v1646
  %1648 = vmatmul.bf16.gmra.mxu0 %v990
  %v1649 = vpop.f32.mrf.mxu0
  %v1650 = vadd.f32 %v1321, %v1649
  %v1651 = vpop.f32.mrf.mxu0
  %v1652 = vadd.f32 %v1323, %v1651
  %1653 = vdwg.mxu0
  %vm1654 = vcmask 261120
  %1655 = vst.msk [vmem:[%s3] sm:$0xff] %vm1654, %v1335
  %1656 = vst.msk [vmem:[%s3 + $0x8] sm:$0xff] %vm1654, %v1337
  %1657 = vst.msk [vmem:[%s3 + $0x10] sm:$0xff] %vm1654, %v1340
  %1658 = vst.msk [vmem:[%s3 + $0x18] sm:$0xff] %vm1654, %v1342
  %1659 = vst.msk [vmem:[%s3 + $0x20] sm:$0xff] %vm1654, %v1345
  %1660 = vst.msk [vmem:[%s3 + $0x28] sm:$0xff] %vm1654, %v1347
  %1661 = vst.msk [vmem:[%s3 + $0x30] sm:$0xff] %vm1654, %v1350
  %1662 = vst.msk [vmem:[%s3 + $0x38] sm:$0xff] %vm1654, %v1352
  %1663 = vst.msk [vmem:[%s3 + $0x40] sm:$0xff] %vm1654, %v1355
  %1664 = vst.msk [vmem:[%s3 + $0x48] sm:$0xff] %vm1654, %v1357
  %1665 = vst.msk [vmem:[%s3 + $0x50] sm:$0xff] %vm1654, %v1360
  %1666 = vst.msk [vmem:[%s3 + $0x58] sm:$0xff] %vm1654, %v1362
  %1667 = vst.msk [vmem:[%s3 + $0x60] sm:$0xff] %vm1654, %v1365
  %1668 = vst.msk [vmem:[%s3 + $0x68] sm:$0xff] %vm1654, %v1367
  %1669 = vst.msk [vmem:[%s3 + $0x70] sm:$0xff] %vm1654, %v1370
  %1670 = vst.msk [vmem:[%s3 + $0x78] sm:$0xff] %vm1654, %v1372
  %1671 = vst.msk [vmem:[%s3 + $0x80] sm:$0xff] %vm1654, %v1375
  %1672 = vst.msk [vmem:[%s3 + $0x88] sm:$0xff] %vm1654, %v1377
  %1673 = vst.msk [vmem:[%s3 + $0x90] sm:$0xff] %vm1654, %v1380
  %1674 = vst.msk [vmem:[%s3 + $0x98] sm:$0xff] %vm1654, %v1382
  %1675 = vst.msk [vmem:[%s3 + $0xa0] sm:$0xff] %vm1654, %v1385
  %1676 = vst.msk [vmem:[%s3 + $0xa8] sm:$0xff] %vm1654, %v1387
  %1677 = vst.msk [vmem:[%s3 + $0xb0] sm:$0xff] %vm1654, %v1390
  %1678 = vst.msk [vmem:[%s3 + $0xb8] sm:$0xff] %vm1654, %v1392
  %1679 = vst.msk [vmem:[%s3 + $0xc0] sm:$0xff] %vm1654, %v1395
  %1680 = vst.msk [vmem:[%s3 + $0xc8] sm:$0xff] %vm1654, %v1397
  %1681 = vst.msk [vmem:[%s3 + $0xd0] sm:$0xff] %vm1654, %v1400
  %1682 = vst.msk [vmem:[%s3 + $0xd8] sm:$0xff] %vm1654, %v1402
  %1683 = vst.msk [vmem:[%s3 + $0xe0] sm:$0xff] %vm1654, %v1405
  %1684 = vst.msk [vmem:[%s3 + $0xe8] sm:$0xff] %vm1654, %v1407
  %1685 = vst.msk [vmem:[%s3 + $0xf0] sm:$0xff] %vm1654, %v1410
  %1686 = vst.msk [vmem:[%s3 + $0xf8] sm:$0xff] %vm1654, %v1412
  %1687 = vst.msk [vmem:[%s3 + $0x100] sm:$0xff] %vm1654, %v1415
  %1688 = vst.msk [vmem:[%s3 + $0x108] sm:$0xff] %vm1654, %v1417
  %1689 = vst.msk [vmem:[%s3 + $0x110] sm:$0xff] %vm1654, %v1420
  %1690 = vst.msk [vmem:[%s3 + $0x118] sm:$0xff] %vm1654, %v1422
  %1691 = vst.msk [vmem:[%s3 + $0x120] sm:$0xff] %vm1654, %v1425
  %1692 = vst.msk [vmem:[%s3 + $0x128] sm:$0xff] %vm1654, %v1427
  %1693 = vst.msk [vmem:[%s3 + $0x130] sm:$0xff] %vm1654, %v1430
  %1694 = vst.msk [vmem:[%s3 + $0x138] sm:$0xff] %vm1654, %v1432
  %1695 = vst.msk [vmem:[%s3 + $0x140] sm:$0xff] %vm1654, %v1435
  %1696 = vst.msk [vmem:[%s3 + $0x148] sm:$0xff] %vm1654, %v1437
  %1697 = vst.msk [vmem:[%s3 + $0x150] sm:$0xff] %vm1654, %v1440
  %1698 = vst.msk [vmem:[%s3 + $0x158] sm:$0xff] %vm1654, %v1442
  %1699 = vst.msk [vmem:[%s3 + $0x160] sm:$0xff] %vm1654, %v1445
  %1700 = vst.msk [vmem:[%s3 + $0x168] sm:$0xff] %vm1654, %v1447
  %1701 = vst.msk [vmem:[%s3 + $0x170] sm:$0xff] %vm1654, %v1450
  %1702 = vst.msk [vmem:[%s3 + $0x178] sm:$0xff] %vm1654, %v1452
  %1703 = vst.msk [vmem:[%s3 + $0x180] sm:$0xff] %vm1654, %v1455
  %1704 = vst.msk [vmem:[%s3 + $0x188] sm:$0xff] %vm1654, %v1457
  %1705 = vst.msk [vmem:[%s3 + $0x190] sm:$0xff] %vm1654, %v1460
  %1706 = vst.msk [vmem:[%s3 + $0x198] sm:$0xff] %vm1654, %v1462
  %1707 = vst.msk [vmem:[%s3 + $0x1a0] sm:$0xff] %vm1654, %v1465
  %1708 = vst.msk [vmem:[%s3 + $0x1a8] sm:$0xff] %vm1654, %v1467
  %1709 = vst.msk [vmem:[%s3 + $0x1b0] sm:$0xff] %vm1654, %v1470
  %1710 = vst.msk [vmem:[%s3 + $0x1b8] sm:$0xff] %vm1654, %v1472
  %1711 = vst.msk [vmem:[%s3 + $0x1c0] sm:$0xff] %vm1654, %v1475
  %1712 = vst.msk [vmem:[%s3 + $0x1c8] sm:$0xff] %vm1654, %v1477
  %1713 = vst.msk [vmem:[%s3 + $0x1d0] sm:$0xff] %vm1654, %v1480
  %1714 = vst.msk [vmem:[%s3 + $0x1d8] sm:$0xff] %vm1654, %v1482
  %1715 = vst.msk [vmem:[%s3 + $0x1e0] sm:$0xff] %vm1654, %v1485
  %1716 = vst.msk [vmem:[%s3 + $0x1e8] sm:$0xff] %vm1654, %v1487
  %1717 = vst.msk [vmem:[%s3 + $0x1f0] sm:$0xff] %vm1654, %v1490
  %1718 = vst.msk [vmem:[%s3 + $0x1f8] sm:$0xff] %vm1654, %v1492
  %1719 = vst.msk [vmem:[%s3 + $0x200] sm:$0xff] %vm1654, %v1495
  %1720 = vst.msk [vmem:[%s3 + $0x208] sm:$0xff] %vm1654, %v1497
  %1721 = vst.msk [vmem:[%s3 + $0x210] sm:$0xff] %vm1654, %v1500
  %1722 = vst.msk [vmem:[%s3 + $0x218] sm:$0xff] %vm1654, %v1502
  %1723 = vst.msk [vmem:[%s3 + $0x220] sm:$0xff] %vm1654, %v1505
  %1724 = vst.msk [vmem:[%s3 + $0x228] sm:$0xff] %vm1654, %v1507
  %1725 = vst.msk [vmem:[%s3 + $0x230] sm:$0xff] %vm1654, %v1510
  %1726 = vst.msk [vmem:[%s3 + $0x238] sm:$0xff] %vm1654, %v1512
  %1727 = vst.msk [vmem:[%s3 + $0x240] sm:$0xff] %vm1654, %v1515
  %1728 = vst.msk [vmem:[%s3 + $0x248] sm:$0xff] %vm1654, %v1517
  %1729 = vst.msk [vmem:[%s3 + $0x250] sm:$0xff] %vm1654, %v1520
  %1730 = vst.msk [vmem:[%s3 + $0x258] sm:$0xff] %vm1654, %v1522
  %1731 = vst.msk [vmem:[%s3 + $0x260] sm:$0xff] %vm1654, %v1525
  %1732 = vst.msk [vmem:[%s3 + $0x268] sm:$0xff] %vm1654, %v1527
  %1733 = vst.msk [vmem:[%s3 + $0x270] sm:$0xff] %vm1654, %v1530
  %1734 = vst.msk [vmem:[%s3 + $0x278] sm:$0xff] %vm1654, %v1532
  %1735 = vst.msk [vmem:[%s3 + $0x280] sm:$0xff] %vm1654, %v1535
  %1736 = vst.msk [vmem:[%s3 + $0x288] sm:$0xff] %vm1654, %v1537
  %1737 = vst.msk [vmem:[%s3 + $0x290] sm:$0xff] %vm1654, %v1540
  %1738 = vst.msk [vmem:[%s3 + $0x298] sm:$0xff] %vm1654, %v1542
  %1739 = vst.msk [vmem:[%s3 + $0x2a0] sm:$0xff] %vm1654, %v1545
  %1740 = vst.msk [vmem:[%s3 + $0x2a8] sm:$0xff] %vm1654, %v1547
  %1741 = vst.msk [vmem:[%s3 + $0x2b0] sm:$0xff] %vm1654, %v1550
  %1742 = vst.msk [vmem:[%s3 + $0x2b8] sm:$0xff] %vm1654, %v1552
  %1743 = vst.msk [vmem:[%s3 + $0x2c0] sm:$0xff] %vm1654, %v1555
  %1744 = vst.msk [vmem:[%s3 + $0x2c8] sm:$0xff] %vm1654, %v1557
  %1745 = vst.msk [vmem:[%s3 + $0x2d0] sm:$0xff] %vm1654, %v1560
  %1746 = vst.msk [vmem:[%s3 + $0x2d8] sm:$0xff] %vm1654, %v1562
  %1747 = vst.msk [vmem:[%s3 + $0x2e0] sm:$0xff] %vm1654, %v1565
  %1748 = vst.msk [vmem:[%s3 + $0x2e8] sm:$0xff] %vm1654, %v1567
  %1749 = vst.msk [vmem:[%s3 + $0x2f0] sm:$0xff] %vm1654, %v1570
  %1750 = vst.msk [vmem:[%s3 + $0x2f8] sm:$0xff] %vm1654, %v1572
  %1751 = vst.msk [vmem:[%s3 + $0x300] sm:$0xff] %vm1654, %v1575
  %1752 = vst.msk [vmem:[%s3 + $0x308] sm:$0xff] %vm1654, %v1577
  %1753 = vst.msk [vmem:[%s3 + $0x310] sm:$0xff] %vm1654, %v1580
  %1754 = vst.msk [vmem:[%s3 + $0x318] sm:$0xff] %vm1654, %v1582
  %1755 = vst.msk [vmem:[%s3 + $0x320] sm:$0xff] %vm1654, %v1585
  %1756 = vst.msk [vmem:[%s3 + $0x328] sm:$0xff] %vm1654, %v1587
  %1757 = vst.msk [vmem:[%s3 + $0x330] sm:$0xff] %vm1654, %v1590
  %1758 = vst.msk [vmem:[%s3 + $0x338] sm:$0xff] %vm1654, %v1592
  %1759 = vst.msk [vmem:[%s3 + $0x340] sm:$0xff] %vm1654, %v1595
  %1760 = vst.msk [vmem:[%s3 + $0x348] sm:$0xff] %vm1654, %v1597
  %1761 = vst.msk [vmem:[%s3 + $0x350] sm:$0xff] %vm1654, %v1600
  %1762 = vst.msk [vmem:[%s3 + $0x358] sm:$0xff] %vm1654, %v1602
  %1763 = vst.msk [vmem:[%s3 + $0x360] sm:$0xff] %vm1654, %v1605
  %1764 = vst.msk [vmem:[%s3 + $0x368] sm:$0xff] %vm1654, %v1607
  %1765 = vst.msk [vmem:[%s3 + $0x370] sm:$0xff] %vm1654, %v1610
  %1766 = vst.msk [vmem:[%s3 + $0x378] sm:$0xff] %vm1654, %v1612
  %1767 = vst.msk [vmem:[%s3 + $0x380] sm:$0xff] %vm1654, %v1615
  %1768 = vst.msk [vmem:[%s3 + $0x388] sm:$0xff] %vm1654, %v1617
  %1769 = vst.msk [vmem:[%s3 + $0x390] sm:$0xff] %vm1654, %v1620
  %1770 = vst.msk [vmem:[%s3 + $0x398] sm:$0xff] %vm1654, %v1622
  %1771 = vst.msk [vmem:[%s3 + $0x3a0] sm:$0xff] %vm1654, %v1625
  %1772 = vst.msk [vmem:[%s3 + $0x3a8] sm:$0xff] %vm1654, %v1627
  %1773 = vst.msk [vmem:[%s3 + $0x3b0] sm:$0xff] %vm1654, %v1630
  %1774 = vst.msk [vmem:[%s3 + $0x3b8] sm:$0xff] %vm1654, %v1632
  %1775 = vst.msk [vmem:[%s3 + $0x3c0] sm:$0xff] %vm1654, %v1635
  %1776 = vst.msk [vmem:[%s3 + $0x3c8] sm:$0xff] %vm1654, %v1637
  %1777 = vst.msk [vmem:[%s3 + $0x3d0] sm:$0xff] %vm1654, %v1640
  %1778 = vst.msk [vmem:[%s3 + $0x3d8] sm:$0xff] %vm1654, %v1642
  %1779 = vst.msk [vmem:[%s3 + $0x3e0] sm:$0xff] %vm1654, %v1645
  %1780 = vst.msk [vmem:[%s3 + $0x3e8] sm:$0xff] %vm1654, %v1647
  %1781 = vst.msk [vmem:[%s3 + $0x3f0] sm:$0xff] %vm1654, %v1650
  %1782 = vst.msk [vmem:[%s3 + $0x3f8] sm:$0xff] %vm1654, %v1652
  // Predicated region
  $region14: #{raft_plus_dicl_forward.52} parent=0 // pred_check
    _
  $region15: #{raft_plus_dicl_forward.52} parent=0 // pred_check_branch
    %1784 = sbr.rel (0) target = $region17
  $region16: #{raft_plus_dicl_forward.52} parent=0 // pred_region
    _
  $region17: #{raft_plus_dicl_forward.52} parent=0 // pred_fallthru
    _
  // Predicated region
  $region18: #{raft_plus_dicl_forward.52} parent=0 // pred_check
    _
  $region19: #{raft_plus_dicl_forward.52} parent=0 // pred_check_branch
    %1786 = sbr.rel (0) target = $region21
  $region20: #{raft_plus_dicl_forward.52} parent=0 // pred_region
    _
  $region21: #{raft_plus_dicl_forward.52} parent=0 // pred_fallthru
    _

// kernel: raft_plus_dicl_forward.53
$region0: #{raft_plus_dicl_forward.53}
  #allocation0 [shape = 'u32[]', space=smem, size = 0x4, offset = 0x4, fixed_abs, tag = 'smem constant byte address 0x4 - core index']
  #allocation1 [shape = 'u32[72,128]{1,0:T(1,128)}', space=vmem, size = 0x9000, scoped, tag = 'internal scratch']
  %s0 = inlined_call_operand.vmem [shape: bf16[256,288], index: 0, kind: input, shape index: {}]
  %s1 = inlined_call_operand.vmem [shape: bf16[288,48], index: 1, kind: input, shape index: {}]
  %s2 = inlined_call_operand.vmem [shape: f32[1,48], index: 2, kind: input, shape index: {}]
  %s3 = inlined_call_operand.vmem [shape: f32[256,48], index: 3, kind: output, shape index: {}]
  %s4 = sld [smem:[#allocation0]]
  $region22: #{raft_plus_dicl_forward.53} parent=0
    _
  %s6 = ssub.s32 1, %s4
  %s7 = scalar_select 0, %s6, %s4
  // Predicated region
  $region2: #{raft_plus_dicl_forward.53} parent=0 // pred_check
    _
  $region3: #{raft_plus_dicl_forward.53} parent=0 // pred_check_branch
    %9 = sbr.rel (0) target = $region5
  $region4: #{raft_plus_dicl_forward.53} parent=0 // pred_region
    _
  $region5: #{raft_plus_dicl_forward.53} parent=0 // pred_fallthru
    _
  // Predicated region
  $region6: #{raft_plus_dicl_forward.53} parent=0 // pred_check
    _
  $region7: #{raft_plus_dicl_forward.53} parent=0 // pred_check_branch
    %11 = sbr.rel (0) target = $region9
  $region8: #{raft_plus_dicl_forward.53} parent=0 // pred_region
    _
  $region9: #{raft_plus_dicl_forward.53} parent=0 // pred_fallthru
    _
  // Predicated region
  $region10: #{raft_plus_dicl_forward.53} parent=0 // pred_check
    _
  $region11: #{raft_plus_dicl_forward.53} parent=0 // pred_check_branch
    %13 = sbr.rel (0) target = $region13
  $region12: #{raft_plus_dicl_forward.53} parent=0 // pred_region
    _
  $region13: #{raft_plus_dicl_forward.53} parent=0 // pred_fallthru
    _
  %v15 = vld [vmem:[%s0] sm:$0xff]
  %v16 = vld [vmem:[%s0 + $0x8] sm:$0xf]
  %v17 = vld [vmem:[%s0 + $0xc] sm:$0xff]
  %v18 = vld [vmem:[%s0 + $0x14] sm:$0xf]
  %v19 = vld [vmem:[%s0 + $0x18] sm:$0xff]
  %v20 = vld [vmem:[%s0 + $0x20] sm:$0xf]
  %v21 = vld [vmem:[%s0 + $0x24] sm:$0xff]
  %v22 = vld [vmem:[%s0 + $0x2c] sm:$0xf]
  %v23 = vld [vmem:[%s0 + $0x30] sm:$0xff]
  %v24 = vld [vmem:[%s0 + $0x38] sm:$0xf]
  %v25 = vld [vmem:[%s0 + $0x3c] sm:$0xff]
  %v26 = vld [vmem:[%s0 + $0x44] sm:$0xf]
  %v27 = vld [vmem:[%s0 + $0x48] sm:$0xff]
  %v28 = vld [vmem:[%s0 + $0x50] sm:$0xf]
  %v29 = vld [vmem:[%s0 + $0x54] sm:$0xff]
  %v30 = vld [vmem:[%s0 + $0x5c] sm:$0xf]
  %v31 = vld [vmem:[%s0 + $0x60] sm:$0xff]
  %v32 = vld [vmem:[%s0 + $0x68] sm:$0xf]
  %v33 = vld [vmem:[%s0 + $0x6c] sm:$0xff]
  %v34 = vld [vmem:[%s0 + $0x74] sm:$0xf]
  %v35 = vld [vmem:[%s0 + $0x78] sm:$0xff]
  %v36 = vld [vmem:[%s0 + $0x80] sm:$0xf]
  %v37 = vld [vmem:[%s0 + $0x84] sm:$0xff]
  %v38 = vld [vmem:[%s0 + $0x8c] sm:$0xf]
  %v39 = vld [vmem:[%s0 + $0x90] sm:$0xff]
  %v40 = vld [vmem:[%s0 + $0x98] sm:$0xf]
  %v41 = vld [vmem:[%s0 + $0x9c] sm:$0xff]
  %v42 = vld [vmem:[%s0 + $0xa4] sm:$0xf]
  %v43 = vld [vmem:[%s0 + $0xa8] sm:$0xff]
  %v44 = vld [vmem:[%s0 + $0xb0] sm:$0xf]
  %v45 = vld [vmem:[%s0 + $0xb4] sm:$0xff]
  %v46 = vld [vmem:[%s0 + $0xbc] sm:$0xf]
  %v47 = vld [vmem:[%s0 + $0xc0] sm:$0xff]
  %v48 = vld [vmem:[%s0 + $0xc8] sm:$0xf]
  %v49 = vld [vmem:[%s0 + $0xcc] sm:$0xff]
  %v50 = vld [vmem:[%s0 + $0xd4] sm:$0xf]
  %v51 = vld [vmem:[%s0 + $0xd8] sm:$0xff]
  %v52 = vld [vmem:[%s0 + $0xe0] sm:$0xf]
  %v53 = vld [vmem:[%s0 + $0xe4] sm:$0xff]
  %v54 = vld [vmem:[%s0 + $0xec] sm:$0xf]
  %v55 = vld [vmem:[%s0 + $0xf0] sm:$0xff]
  %v56 = vld [vmem:[%s0 + $0xf8] sm:$0xf]
  %v57 = vld [vmem:[%s0 + $0xfc] sm:$0xff]
  %v58 = vld [vmem:[%s0 + $0x104] sm:$0xf]
  %v59 = vld [vmem:[%s0 + $0x108] sm:$0xff]
  %v60 = vld [vmem:[%s0 + $0x110] sm:$0xf]
  %v61 = vld [vmem:[%s0 + $0x114] sm:$0xff]
  %v62 = vld [vmem:[%s0 + $0x11c] sm:$0xf]
  %v63 = vld [vmem:[%s0 + $0x120] sm:$0xff]
  %v64 = vld [vmem:[%s0 + $0x128] sm:$0xf]
  %v65 = vld [vmem:[%s0 + $0x12c] sm:$0xff]
  %v66 = vld [vmem:[%s0 + $0x134] sm:$0xf]
  %v67 = vld [vmem:[%s0 + $0x138] sm:$0xff]
  %v68 = vld [vmem:[%s0 + $0x140] sm:$0xf]
  %v69 = vld [vmem:[%s0 + $0x144] sm:$0xff]
  %v70 = vld [vmem:[%s0 + $0x14c] sm:$0xf]
  %v71 = vld [vmem:[%s0 + $0x150] sm:$0xff]
  %v72 = vld [vmem:[%s0 + $0x158] sm:$0xf]
  %v73 = vld [vmem:[%s0 + $0x15c] sm:$0xff]
  %v74 = vld [vmem:[%s0 + $0x164] sm:$0xf]
  %v75 = vld [vmem:[%s0 + $0x168] sm:$0xff]
  %v76 = vld [vmem:[%s0 + $0x170] sm:$0xf]
  %v77 = vld [vmem:[%s0 + $0x174] sm:$0xff]
  %v78 = vld [vmem:[%s0 + $0x17c] sm:$0xf]
  %v79 = vld [vmem:[%s1] sm:$0xf]
  %v80 = vld [vmem:[%s1 + $0x4] sm:$0xf]
  %v81 = vld [vmem:[%s1 + $0x8] sm:$0xf]
  %v82 = vld [vmem:[%s1 + $0xc] sm:$0xf]
  %v83 = vld [vmem:[%s1 + $0x10] sm:$0xf]
  %v84 = vld [vmem:[%s1 + $0x14] sm:$0xf]
  %v85 = vld [vmem:[%s1 + $0x18] sm:$0xf]
  %v86 = vld [vmem:[%s1 + $0x1c] sm:$0xf]
  %v87 = vld [vmem:[%s1 + $0x20] sm:$0xf]
  %v88 = vld [vmem:[%s1 + $0x24] sm:$0xf]
  %v89 = vld [vmem:[%s1 + $0x28] sm:$0xf]
  %v90 = vld [vmem:[%s1 + $0x2c] sm:$0xf]
  %v91 = vld [vmem:[%s1 + $0x30] sm:$0xf]
  %v92 = vld [vmem:[%s1 + $0x34] sm:$0xf]
  %v93 = vld [vmem:[%s1 + $0x38] sm:$0xf]
  %v94 = vld [vmem:[%s1 + $0x3c] sm:$0xf]
  %v95 = vld [vmem:[%s1 + $0x40] sm:$0xf]
  %v96 = vld [vmem:[%s1 + $0x44] sm:$0xf]
  %v97 = vld [vmem:[%s1 + $0x48] sm:$0xf]
  %v98 = vld [vmem:[%s1 + $0x4c] sm:$0xf]
  %v99 = vld [vmem:[%s1 + $0x50] sm:$0xf]
  %v100 = vld [vmem:[%s1 + $0x54] sm:$0xf]
  %v101 = vld [vmem:[%s1 + $0x58] sm:$0xf]
  %v102 = vld [vmem:[%s1 + $0x5c] sm:$0xf]
  %v103 = vld [vmem:[%s1 + $0x60] sm:$0xf]
  %v104 = vld [vmem:[%s1 + $0x64] sm:$0xf]
  %v105 = vld [vmem:[%s1 + $0x68] sm:$0xf]
  %v106 = vld [vmem:[%s1 + $0x6c] sm:$0xf]
  %v107 = vld [vmem:[%s1 + $0x70] sm:$0xf]
  %v108 = vld [vmem:[%s1 + $0x74] sm:$0xf]
  %v109 = vld [vmem:[%s1 + $0x78] sm:$0xf]
  %v110 = vld [vmem:[%s1 + $0x7c] sm:$0xf]
  %v111 = vld [vmem:[%s1 + $0x80] sm:$0xf]
  %v112 = vld [vmem:[%s1 + $0x84] sm:$0xf]
  %v113 = vld [vmem:[%s1 + $0x88] sm:$0xf]
  %v114 = vld [vmem:[%s1 + $0x8c] sm:$0xf]
  %v115 = vld [vmem:[%s2] sm:$0x1]
  %v117 = vperm.slane %v115, 0
  %v183 = vunpack.c.l.b16 %v15
  %v184 = vunpack.c.h.b16 %v15
  %v185 = vunpack.c.l.b16 %v16
  %v186 = vunpack.c.l.b16 %v17
  %v187 = vunpack.c.h.b16 %v17
  %v188 = vunpack.c.l.b16 %v18
  %v189 = vunpack.c.l.b16 %v19
  %v190 = vunpack.c.h.b16 %v19
  %v191 = vunpack.c.l.b16 %v20
  %v192 = vunpack.c.l.b16 %v21
  %v193 = vunpack.c.h.b16 %v21
  %v194 = vunpack.c.l.b16 %v22
  %v195 = vunpack.c.l.b16 %v23
  %v196 = vunpack.c.h.b16 %v23
  %v197 = vunpack.c.l.b16 %v24
  %v198 = vunpack.c.l.b16 %v25
  %v199 = vunpack.c.h.b16 %v25
  %v200 = vunpack.c.l.b16 %v26
  %v201 = vunpack.c.l.b16 %v27
  %v202 = vunpack.c.h.b16 %v27
  %v203 = vunpack.c.l.b16 %v28
  %v204 = vunpack.c.l.b16 %v29
  %v205 = vunpack.c.h.b16 %v29
  %v206 = vunpack.c.l.b16 %v30
  %v207 = vunpack.c.l.b16 %v31
  %v208 = vunpack.c.h.b16 %v31
  %v209 = vunpack.c.l.b16 %v32
  %v210 = vunpack.c.l.b16 %v33
  %v211 = vunpack.c.h.b16 %v33
  %v212 = vunpack.c.l.b16 %v34
  %v213 = vunpack.c.l.b16 %v35
  %v214 = vunpack.c.h.b16 %v35
  %v215 = vunpack.c.l.b16 %v36
  %v216 = vunpack.c.l.b16 %v37
  %v217 = vunpack.c.h.b16 %v37
  %v218 = vunpack.c.l.b16 %v38
  %v219 = vunpack.c.l.b16 %v39
  %v220 = vunpack.c.h.b16 %v39
  %v221 = vunpack.c.l.b16 %v40
  %v222 = vunpack.c.l.b16 %v41
  %v223 = vunpack.c.h.b16 %v41
  %v224 = vunpack.c.l.b16 %v42
  %v225 = vunpack.c.l.b16 %v43
  %v226 = vunpack.c.h.b16 %v43
  %v227 = vunpack.c.l.b16 %v44
  %v228 = vunpack.c.l.b16 %v45
  %v229 = vunpack.c.h.b16 %v45
  %v230 = vunpack.c.l.b16 %v46
  %v231 = vunpack.c.l.b16 %v47
  %v232 = vunpack.c.h.b16 %v47
  %v233 = vunpack.c.l.b16 %v48
  %v234 = vunpack.c.l.b16 %v49
  %v235 = vunpack.c.h.b16 %v49
  %v236 = vunpack.c.l.b16 %v50
  %v237 = vunpack.c.l.b16 %v51
  %v238 = vunpack.c.h.b16 %v51
  %v239 = vunpack.c.l.b16 %v52
  %v240 = vunpack.c.l.b16 %v53
  %v241 = vunpack.c.h.b16 %v53
  %v242 = vunpack.c.l.b16 %v54
  %v243 = vunpack.c.l.b16 %v55
  %v244 = vunpack.c.h.b16 %v55
  %v245 = vunpack.c.l.b16 %v56
  %v246 = vunpack.c.l.b16 %v57
  %v247 = vunpack.c.h.b16 %v57
  %v248 = vunpack.c.l.b16 %v58
  %v249 = vunpack.c.l.b16 %v59
  %v250 = vunpack.c.h.b16 %v59
  %v251 = vunpack.c.l.b16 %v60
  %v252 = vunpack.c.l.b16 %v61
  %v253 = vunpack.c.h.b16 %v61
  %v254 = vunpack.c.l.b16 %v62
  %v255 = vunpack.c.l.b16 %v63
  %v256 = vunpack.c.h.b16 %v63
  %v257 = vunpack.c.l.b16 %v64
  %v258 = vunpack.c.l.b16 %v65
  %v259 = vunpack.c.h.b16 %v65
  %v260 = vunpack.c.l.b16 %v66
  %v261 = vunpack.c.l.b16 %v67
  %v262 = vunpack.c.h.b16 %v67
  %v263 = vunpack.c.l.b16 %v68
  %v264 = vunpack.c.l.b16 %v69
  %v265 = vunpack.c.h.b16 %v69
  %v266 = vunpack.c.l.b16 %v70
  %v267 = vunpack.c.l.b16 %v71
  %v268 = vunpack.c.h.b16 %v71
  %v269 = vunpack.c.l.b16 %v72
  %v270 = vunpack.c.l.b16 %v73
  %v271 = vunpack.c.h.b16 %v73
  %v272 = vunpack.c.l.b16 %v74
  %v273 = vunpack.c.l.b16 %v75
  %v274 = vunpack.c.h.b16 %v75
  %v275 = vunpack.c.l.b16 %v76
  %v276 = vunpack.c.l.b16 %v77
  %v277 = vunpack.c.h.b16 %v77
  %v278 = vunpack.c.l.b16 %v78
  %v279 = vpack.c.b16 %v186, %v183
  %v280 = vpack.c.b16 %v187, %v184
  %v281 = vpack.c.b16 %v188, %v185
  %v282 = vpack.c.b16 %v192, %v189
  %v283 = vpack.c.b16 %v193, %v190
  %v284 = vpack.c.b16 %v194, %v191
  %v285 = vpack.c.b16 %v198, %v195
  %v286 = vpack.c.b16 %v199, %v196
  %v287 = vpack.c.b16 %v200, %v197
  %v288 = vpack.c.b16 %v204, %v201
  %v289 = vpack.c.b16 %v205, %v202
  %v290 = vpack.c.b16 %v206, %v203
  %v291 = vpack.c.b16 %v210, %v207
  %v292 = vpack.c.b16 %v211, %v208
  %v293 = vpack.c.b16 %v212, %v209
  %v294 = vpack.c.b16 %v216, %v213
  %v295 = vpack.c.b16 %v217, %v214
  %v296 = vpack.c.b16 %v218, %v215
  %v297 = vpack.c.b16 %v222, %v219
  %v298 = vpack.c.b16 %v223, %v220
  %v299 = vpack.c.b16 %v224, %v221
  %v300 = vpack.c.b16 %v228, %v225
  %v301 = vpack.c.b16 %v229, %v226
  %v302 = vpack.c.b16 %v230, %v227
  %v303 = vpack.c.b16 %v234, %v231
  %v304 = vpack.c.b16 %v235, %v232
  %v305 = vpack.c.b16 %v236, %v233
  %v306 = vpack.c.b16 %v240, %v237
  %v307 = vpack.c.b16 %v241, %v238
  %v308 = vpack.c.b16 %v242, %v239
  %v309 = vpack.c.b16 %v246, %v243
  %v310 = vpack.c.b16 %v247, %v244
  %v311 = vpack.c.b16 %v248, %v245
  %v312 = vpack.c.b16 %v252, %v249
  %v313 = vpack.c.b16 %v253, %v250
  %v314 = vpack.c.b16 %v254, %v251
  %v315 = vpack.c.b16 %v258, %v255
  %v316 = vpack.c.b16 %v259, %v256
  %v317 = vpack.c.b16 %v260, %v257
  %v318 = vpack.c.b16 %v264, %v261
  %v319 = vpack.c.b16 %v265, %v262
  %v320 = vpack.c.b16 %v266, %v263
  %v321 = vpack.c.b16 %v270, %v267
  %v322 = vpack.c.b16 %v271, %v268
  %v323 = vpack.c.b16 %v272, %v269
  %v324 = vpack.c.b16 %v276, %v273
  %v325 = vpack.c.b16 %v277, %v274
  %v326 = vpack.c.b16 %v278, %v275
  %v395 = vunpack.c.l.b16 %v79
  %v396 = vunpack.c.l.b16 %v80
  %v397 = vunpack.c.l.b16 %v81
  %v398 = vunpack.c.l.b16 %v82
  %v399 = vunpack.c.l.b16 %v83
  %v400 = vunpack.c.l.b16 %v84
  %v401 = vunpack.c.l.b16 %v85
  %v402 = vunpack.c.l.b16 %v86
  %v403 = vunpack.c.l.b16 %v87
  %v404 = vunpack.c.l.b16 %v88
  %v405 = vunpack.c.l.b16 %v89
  %v406 = vunpack.c.l.b16 %v90
  %v407 = vunpack.c.l.b16 %v91
  %v408 = vunpack.c.l.b16 %v92
  %v409 = vunpack.c.l.b16 %v93
  %v410 = vunpack.c.l.b16 %v94
  %v411 = vunpack.c.l.b16 %v95
  %v412 = vunpack.c.l.b16 %v96
  %v413 = vunpack.c.l.b16 %v97
  %v414 = vunpack.c.l.b16 %v98
  %v415 = vunpack.c.l.b16 %v99
  %v416 = vunpack.c.l.b16 %v100
  %v417 = vunpack.c.l.b16 %v101
  %v418 = vunpack.c.l.b16 %v102
  %v419 = vunpack.c.l.b16 %v103
  %v420 = vunpack.c.l.b16 %v104
  %v421 = vunpack.c.l.b16 %v105
  %v422 = vunpack.c.l.b16 %v106
  %v423 = vunpack.c.l.b16 %v107
  %v424 = vunpack.c.l.b16 %v108
  %v425 = vunpack.c.l.b16 %v109
  %v426 = vunpack.c.l.b16 %v110
  %v427 = vunpack.c.l.b16 %v111
  %v428 = vunpack.c.l.b16 %v112
  %v429 = vunpack.c.l.b16 %v113
  %v430 = vunpack.c.l.b16 %v114
  %v431 = vpack.c.b16 %v396, %v395
  %v432 = vpack.c.b16 %v398, %v397
  %v433 = vpack.c.b16 %v400, %v399
  %v434 = vpack.c.b16 %v402, %v401
  %v435 = vpack.c.b16 %v404, %v403
  %v436 = vpack.c.b16 %v406, %v405
  %v437 = vpack.c.b16 %v408, %v407
  %v438 = vpack.c.b16 %v410, %v409
  %v439 = vpack.c.b16 %v412, %v411
  %v440 = vpack.c.b16 %v414, %v413
  %v441 = vpack.c.b16 %v416, %v415
  %v442 = vpack.c.b16 %v418, %v417
  %v443 = vpack.c.b16 %v420, %v419
  %v444 = vpack.c.b16 %v422, %v421
  %v445 = vpack.c.b16 %v424, %v423
  %v446 = vpack.c.b16 %v426, %v425
  %v447 = vpack.c.b16 %v428, %v427
  %v448 = vpack.c.b16 %v430, %v429
  %vm467 = vcmask 261120
  %v469 = vsel %vm467, %v281, 0
  %v472 = vsel %vm467, %v284, 0
  %v475 = vsel %vm467, %v287, 0
  %v478 = vsel %vm467, %v290, 0
  %v481 = vsel %vm467, %v293, 0
  %v484 = vsel %vm467, %v296, 0
  %v487 = vsel %vm467, %v299, 0
  %v490 = vsel %vm467, %v302, 0
  %v493 = vsel %vm467, %v305, 0
  %v496 = vsel %vm467, %v308, 0
  %v499 = vsel %vm467, %v311, 0
  %v502 = vsel %vm467, %v314, 0
  %v505 = vsel %vm467, %v317, 0
  %v508 = vsel %vm467, %v320, 0
  %v511 = vsel %vm467, %v323, 0
  %v514 = vsel %vm467, %v326, 0
  %516 = vmatpush.bf16.msra.mxu0 %v438
  %517 = vmatpush.bf16.msra.mxu0 %v437
  %518 = vmatpush.bf16.msra.mxu0 %v436
  %519 = vmatpush.bf16.msra.mxu0 %v435
  %520 = vmatpush.bf16.msra.mxu0 %v434
  %521 = vmatpush.bf16.msra.mxu0 %v433
  %522 = vmatpush.bf16.msra.mxu0 %v432
  %523 = vmatpush.bf16.msra.mxu0 %v431
  %524 = vmatmul.bf16.gmra.mxu0 %v279
  %v525 = vpop.f32.mrf.mxu0
  %v526 = vadd.f32 %v117, %v525
  %v527 = vpop.f32.mrf.mxu0
  %v528 = vadd.f32 %v117, %v527
  %529 = vmatmul.bf16.gmra.mxu0 %v282
  %v530 = vpop.f32.mrf.mxu0
  %v531 = vadd.f32 %v117, %v530
  %v532 = vpop.f32.mrf.mxu0
  %v533 = vadd.f32 %v117, %v532
  %534 = vmatmul.bf16.gmra.mxu0 %v285
  %v535 = vpop.f32.mrf.mxu0
  %v536 = vadd.f32 %v117, %v535
  %v537 = vpop.f32.mrf.mxu0
  %v538 = vadd.f32 %v117, %v537
  %539 = vmatmul.bf16.gmra.mxu0 %v288
  %v540 = vpop.f32.mrf.mxu0
  %v541 = vadd.f32 %v117, %v540
  %v542 = vpop.f32.mrf.mxu0
  %v543 = vadd.f32 %v117, %v542
  %544 = vmatmul.bf16.gmra.mxu0 %v291
  %v545 = vpop.f32.mrf.mxu0
  %v546 = vadd.f32 %v117, %v545
  %v547 = vpop.f32.mrf.mxu0
  %v548 = vadd.f32 %v117, %v547
  %549 = vmatmul.bf16.gmra.mxu0 %v294
  %v550 = vpop.f32.mrf.mxu0
  %v551 = vadd.f32 %v117, %v550
  %v552 = vpop.f32.mrf.mxu0
  %v553 = vadd.f32 %v117, %v552
  %554 = vmatmul.bf16.gmra.mxu0 %v297
  %v555 = vpop.f32.mrf.mxu0
  %v556 = vadd.f32 %v117, %v555
  %v557 = vpop.f32.mrf.mxu0
  %v558 = vadd.f32 %v117, %v557
  %559 = vmatmul.bf16.gmra.mxu0 %v300
  %v560 = vpop.f32.mrf.mxu0
  %v561 = vadd.f32 %v117, %v560
  %v562 = vpop.f32.mrf.mxu0
  %v563 = vadd.f32 %v117, %v562
  %564 = vmatmul.bf16.gmra.mxu0 %v303
  %v565 = vpop.f32.mrf.mxu0
  %v566 = vadd.f32 %v117, %v565
  %v567 = vpop.f32.mrf.mxu0
  %v568 = vadd.f32 %v117, %v567
  %569 = vmatmul.bf16.gmra.mxu0 %v306
  %v570 = vpop.f32.mrf.mxu0
  %v571 = vadd.f32 %v117, %v570
  %v572 = vpop.f32.mrf.mxu0
  %v573 = vadd.f32 %v117, %v572
  %574 = vmatmul.bf16.gmra.mxu0 %v309
  %v575 = vpop.f32.mrf.mxu0
  %v576 = vadd.f32 %v117, %v575
  %v577 = vpop.f32.mrf.mxu0
  %v578 = vadd.f32 %v117, %v577
  %579 = vmatmul.bf16.gmra.mxu0 %v312
  %v580 = vpop.f32.mrf.mxu0
  %v581 = vadd.f32 %v117, %v580
  %v582 = vpop.f32.mrf.mxu0
  %v583 = vadd.f32 %v117, %v582
  %584 = vmatmul.bf16.gmra.mxu0 %v315
  %v585 = vpop.f32.mrf.mxu0
  %v586 = vadd.f32 %v117, %v585
  %v587 = vpop.f32.mrf.mxu0
  %v588 = vadd.f32 %v117, %v587
  %589 = vmatmul.bf16.gmra.mxu0 %v318
  %v590 = vpop.f32.mrf.mxu0
  %v591 = vadd.f32 %v117, %v590
  %v592 = vpop.f32.mrf.mxu0
  %v593 = vadd.f32 %v117, %v592
  %594 = vmatmul.bf16.gmra.mxu0 %v321
  %v595 = vpop.f32.mrf.mxu0
  %v596 = vadd.f32 %v117, %v595
  %v597 = vpop.f32.mrf.mxu0
  %v598 = vadd.f32 %v117, %v597
  %599 = vmatmul.bf16.gmra.mxu0 %v324
  %v600 = vpop.f32.mrf.mxu0
  %v601 = vadd.f32 %v117, %v600
  %v602 = vpop.f32.mrf.mxu0
  %v603 = vadd.f32 %v117, %v602
  %604 = vdwg.mxu0
  %605 = vmatpush.bf16.msra.mxu0 %v446
  %606 = vmatpush.bf16.msra.mxu0 %v445
  %607 = vmatpush.bf16.msra.mxu0 %v444
  %608 = vmatpush.bf16.msra.mxu0 %v443
  %609 = vmatpush.bf16.msra.mxu0 %v442
  %610 = vmatpush.bf16.msra.mxu0 %v441
  %611 = vmatpush.bf16.msra.mxu0 %v440
  %612 = vmatpush.bf16.msra.mxu0 %v439
  %613 = vmatmul.bf16.gmra.mxu0 %v280
  %v614 = vpop.f32.mrf.mxu0
  %v615 = vadd.f32 %v526, %v614
  %v616 = vpop.f32.mrf.mxu0
  %v617 = vadd.f32 %v528, %v616
  %618 = vmatmul.bf16.gmra.mxu0 %v283
  %v619 = vpop.f32.mrf.mxu0
  %v620 = vadd.f32 %v531, %v619
  %v621 = vpop.f32.mrf.mxu0
  %v622 = vadd.f32 %v533, %v621
  %623 = vmatmul.bf16.gmra.mxu0 %v286
  %v624 = vpop.f32.mrf.mxu0
  %v625 = vadd.f32 %v536, %v624
  %v626 = vpop.f32.mrf.mxu0
  %v627 = vadd.f32 %v538, %v626
  %628 = vmatmul.bf16.gmra.mxu0 %v289
  %v629 = vpop.f32.mrf.mxu0
  %v630 = vadd.f32 %v541, %v629
  %v631 = vpop.f32.mrf.mxu0
  %v632 = vadd.f32 %v543, %v631
  %633 = vmatmul.bf16.gmra.mxu0 %v292
  %v634 = vpop.f32.mrf.mxu0
  %v635 = vadd.f32 %v546, %v634
  %v636 = vpop.f32.mrf.mxu0
  %v637 = vadd.f32 %v548, %v636
  %638 = vmatmul.bf16.gmra.mxu0 %v295
  %v639 = vpop.f32.mrf.mxu0
  %v640 = vadd.f32 %v551, %v639
  %v641 = vpop.f32.mrf.mxu0
  %v642 = vadd.f32 %v553, %v641
  %643 = vmatmul.bf16.gmra.mxu0 %v298
  %v644 = vpop.f32.mrf.mxu0
  %v645 = vadd.f32 %v556, %v644
  %v646 = vpop.f32.mrf.mxu0
  %v647 = vadd.f32 %v558, %v646
  %648 = vmatmul.bf16.gmra.mxu0 %v301
  %v649 = vpop.f32.mrf.mxu0
  %v650 = vadd.f32 %v561, %v649
  %v651 = vpop.f32.mrf.mxu0
  %v652 = vadd.f32 %v563, %v651
  %653 = vmatmul.bf16.gmra.mxu0 %v304
  %v654 = vpop.f32.mrf.mxu0
  %v655 = vadd.f32 %v566, %v654
  %v656 = vpop.f32.mrf.mxu0
  %v657 = vadd.f32 %v568, %v656
  %658 = vmatmul.bf16.gmra.mxu0 %v307
  %v659 = vpop.f32.mrf.mxu0
  %v660 = vadd.f32 %v571, %v659
  %v661 = vpop.f32.mrf.mxu0
  %v662 = vadd.f32 %v573, %v661
  %663 = vmatmul.bf16.gmra.mxu0 %v310
  %v664 = vpop.f32.mrf.mxu0
  %v665 = vadd.f32 %v576, %v664
  %v666 = vpop.f32.mrf.mxu0
  %v667 = vadd.f32 %v578, %v666
  %668 = vmatmul.bf16.gmra.mxu0 %v313
  %v669 = vpop.f32.mrf.mxu0
  %v670 = vadd.f32 %v581, %v669
  %v671 = vpop.f32.mrf.mxu0
  %v672 = vadd.f32 %v583, %v671
  %673 = vmatmul.bf16.gmra.mxu0 %v316
  %v674 = vpop.f32.mrf.mxu0
  %v675 = vadd.f32 %v586, %v674
  %v676 = vpop.f32.mrf.mxu0
  %v677 = vadd.f32 %v588, %v676
  %678 = vmatmul.bf16.gmra.mxu0 %v319
  %v679 = vpop.f32.mrf.mxu0
  %v680 = vadd.f32 %v591, %v679
  %v681 = vpop.f32.mrf.mxu0
  %v682 = vadd.f32 %v593, %v681
  %683 = vmatmul.bf16.gmra.mxu0 %v322
  %v684 = vpop.f32.mrf.mxu0
  %v685 = vadd.f32 %v596, %v684
  %v686 = vpop.f32.mrf.mxu0
  %v687 = vadd.f32 %v598, %v686
  %688 = vmatmul.bf16.gmra.mxu0 %v325
  %v689 = vpop.f32.mrf.mxu0
  %v690 = vadd.f32 %v601, %v689
  %v691 = vpop.f32.mrf.mxu0
  %v692 = vadd.f32 %v603, %v691
  %693 = vdwg.mxu0
  %694 = vmatpush.bf16.msra.mxu0 0
  %695 = vmatpush.bf16.msra.mxu0 0
  %696 = vmatpush.bf16.msra.mxu0 0
  %697 = vmatpush.bf16.msra.mxu0 0
  %698 = vmatpush.bf16.msra.mxu0 0
  %699 = vmatpush.bf16.msra.mxu0 0
  %700 = vmatpush.bf16.msra.mxu0 %v448
  %701 = vmatpush.bf16.msra.mxu0 %v447
  %702 = vmatmul.bf16.gmra.mxu0 %v469
  %v703 = vpop.f32.mrf.mxu0
  %v704 = vadd.f32 %v615, %v703
  %v705 = vpop.f32.mrf.mxu0
  %v706 = vadd.f32 %v617, %v705
  %707 = vmatmul.bf16.gmra.mxu0 %v472
  %v708 = vpop.f32.mrf.mxu0
  %v709 = vadd.f32 %v620, %v708
  %v710 = vpop.f32.mrf.mxu0
  %v711 = vadd.f32 %v622, %v710
  %712 = vmatmul.bf16.gmra.mxu0 %v475
  %v713 = vpop.f32.mrf.mxu0
  %v714 = vadd.f32 %v625, %v713
  %v715 = vpop.f32.mrf.mxu0
  %v716 = vadd.f32 %v627, %v715
  %717 = vmatmul.bf16.gmra.mxu0 %v478
  %v718 = vpop.f32.mrf.mxu0
  %v719 = vadd.f32 %v630, %v718
  %v720 = vpop.f32.mrf.mxu0
  %v721 = vadd.f32 %v632, %v720
  %722 = vmatmul.bf16.gmra.mxu0 %v481
  %v723 = vpop.f32.mrf.mxu0
  %v724 = vadd.f32 %v635, %v723
  %v725 = vpop.f32.mrf.mxu0
  %v726 = vadd.f32 %v637, %v725
  %727 = vmatmul.bf16.gmra.mxu0 %v484
  %v728 = vpop.f32.mrf.mxu0
  %v729 = vadd.f32 %v640, %v728
  %v730 = vpop.f32.mrf.mxu0
  %v731 = vadd.f32 %v642, %v730
  %732 = vmatmul.bf16.gmra.mxu0 %v487
  %v733 = vpop.f32.mrf.mxu0
  %v734 = vadd.f32 %v645, %v733
  %v735 = vpop.f32.mrf.mxu0
  %v736 = vadd.f32 %v647, %v735
  %737 = vmatmul.bf16.gmra.mxu0 %v490
  %v738 = vpop.f32.mrf.mxu0
  %v739 = vadd.f32 %v650, %v738
  %v740 = vpop.f32.mrf.mxu0
  %v741 = vadd.f32 %v652, %v740
  %742 = vmatmul.bf16.gmra.mxu0 %v493
  %v743 = vpop.f32.mrf.mxu0
  %v744 = vadd.f32 %v655, %v743
  %v745 = vpop.f32.mrf.mxu0
  %v746 = vadd.f32 %v657, %v745
  %747 = vmatmul.bf16.gmra.mxu0 %v496
  %v748 = vpop.f32.mrf.mxu0
  %v749 = vadd.f32 %v660, %v748
  %v750 = vpop.f32.mrf.mxu0
  %v751 = vadd.f32 %v662, %v750
  %752 = vmatmul.bf16.gmra.mxu0 %v499
  %v753 = vpop.f32.mrf.mxu0
  %v754 = vadd.f32 %v665, %v753
  %v755 = vpop.f32.mrf.mxu0
  %v756 = vadd.f32 %v667, %v755
  %757 = vmatmul.bf16.gmra.mxu0 %v502
  %v758 = vpop.f32.mrf.mxu0
  %v759 = vadd.f32 %v670, %v758
  %v760 = vpop.f32.mrf.mxu0
  %v761 = vadd.f32 %v672, %v760
  %762 = vmatmul.bf16.gmra.mxu0 %v505
  %v763 = vpop.f32.mrf.mxu0
  %v764 = vadd.f32 %v675, %v763
  %v765 = vpop.f32.mrf.mxu0
  %v766 = vadd.f32 %v677, %v765
  %767 = vmatmul.bf16.gmra.mxu0 %v508
  %v768 = vpop.f32.mrf.mxu0
  %v769 = vadd.f32 %v680, %v768
  %v770 = vpop.f32.mrf.mxu0
  %v771 = vadd.f32 %v682, %v770
  %772 = vmatmul.bf16.gmra.mxu0 %v511
  %v773 = vpop.f32.mrf.mxu0
  %v774 = vadd.f32 %v685, %v773
  %v775 = vpop.f32.mrf.mxu0
  %v776 = vadd.f32 %v687, %v775
  %777 = vmatmul.bf16.gmra.mxu0 %v514
  %v778 = vpop.f32.mrf.mxu0
  %v779 = vadd.f32 %v690, %v778
  %v780 = vpop.f32.mrf.mxu0
  %v781 = vadd.f32 %v692, %v780
  %782 = vdwg.mxu0
  %vm783 = vcmask 392192
  %784 = vst.msk [vmem:[%s3] sm:$0xff] %vm783, %v704
  %785 = vst.msk [vmem:[%s3 + $0x8] sm:$0xff] %vm783, %v706
  %786 = vst.msk [vmem:[%s3 + $0x10] sm:$0xff] %vm783, %v709
  %787 = vst.msk [vmem:[%s3 + $0x18] sm:$0xff] %vm783, %v711
  %788 = vst.msk [vmem:[%s3 + $0x20] sm:$0xff] %vm783, %v714
  %789 = vst.msk [vmem:[%s3 + $0x28] sm:$0xff] %vm783, %v716
  %790 = vst.msk [vmem:[%s3 + $0x30] sm:$0xff] %vm783, %v719
  %791 = vst.msk [vmem:[%s3 + $0x38] sm:$0xff] %vm783, %v721
  %792 = vst.msk [vmem:[%s3 + $0x40] sm:$0xff] %vm783, %v724
  %793 = vst.msk [vmem:[%s3 + $0x48] sm:$0xff] %vm783, %v726
  %794 = vst.msk [vmem:[%s3 + $0x50] sm:$0xff] %vm783, %v729
  %795 = vst.msk [vmem:[%s3 + $0x58] sm:$0xff] %vm783, %v731
  %796 = vst.msk [vmem:[%s3 + $0x60] sm:$0xff] %vm783, %v734
  %797 = vst.msk [vmem:[%s3 + $0x68] sm:$0xff] %vm783, %v736
  %798 = vst.msk [vmem:[%s3 + $0x70] sm:$0xff] %vm783, %v739
  %799 = vst.msk [vmem:[%s3 + $0x78] sm:$0xff] %vm783, %v741
  %800 = vst.msk [vmem:[%s3 + $0x80] sm:$0xff] %vm783, %v744
  %801 = vst.msk [vmem:[%s3 + $0x88] sm:$0xff] %vm783, %v746
  %802 = vst.msk [vmem:[%s3 + $0x90] sm:$0xff] %vm783, %v749
  %803 = vst.msk [vmem:[%s3 + $0x98] sm:$0xff] %vm783, %v751
  %804 = vst.msk [vmem:[%s3 + $0xa0] sm:$0xff] %vm783, %v754
  %805 = vst.msk [vmem:[%s3 + $0xa8] sm:$0xff] %vm783, %v756
  %806 = vst.msk [vmem:[%s3 + $0xb0] sm:$0xff] %vm783, %v759
  %807 = vst.msk [vmem:[%s3 + $0xb8] sm:$0xff] %vm783, %v761
  %808 = vst.msk [vmem:[%s3 + $0xc0] sm:$0xff] %vm783, %v764
  %809 = vst.msk [vmem:[%s3 + $0xc8] sm:$0xff] %vm783, %v766
  %810 = vst.msk [vmem:[%s3 + $0xd0] sm:$0xff] %vm783, %v769
  %811 = vst.msk [vmem:[%s3 + $0xd8] sm:$0xff] %vm783, %v771
  %812 = vst.msk [vmem:[%s3 + $0xe0] sm:$0xff] %vm783, %v774
  %813 = vst.msk [vmem:[%s3 + $0xe8] sm:$0xff] %vm783, %v776
  %814 = vst.msk [vmem:[%s3 + $0xf0] sm:$0xff] %vm783, %v779
  %815 = vst.msk [vmem:[%s3 + $0xf8] sm:$0xff] %vm783, %v781
  // Predicated region
  $region14: #{raft_plus_dicl_forward.53} parent=0 // pred_check
    _
  $region15: #{raft_plus_dicl_forward.53} parent=0 // pred_check_branch
    %817 = sbr.rel (0) target = $region17
  $region16: #{raft_plus_dicl_forward.53} parent=0 // pred_region
    _
  $region17: #{raft_plus_dicl_forward.53} parent=0 // pred_fallthru
    _
  // Predicated region
  $region18: #{raft_plus_dicl_forward.53} parent=0 // pred_check
    _
  $region19: #{raft_plus_dicl_forward.53} parent=0 // pred_check_branch
    %819 = sbr.rel (0) target = $region21
  $region20: #{raft_plus_dicl_forward.53} parent=0 // pred_region
    _
  $region21: #{raft_plus_dicl_forward.53} parent=0 // pred_fallthru
    _

// kernel: raft_plus_dicl_forward.54
$region0: #{raft_plus_dicl_forward.54}
  #allocation0 [shape = 'u32[]', space=smem, size = 0x4, offset = 0x4, fixed_abs, tag = 'smem constant byte address 0x4 - core index']
  #allocation1 [shape = 'u32[72,128]{1,0:T(1,128)}', space=vmem, size = 0x9000, scoped, tag = 'internal scratch']
  %s0 = inlined_call_operand.vmem [shape: bf16[64,432], index: 0, kind: input, shape index: {}]
  %s1 = inlined_call_operand.vmem [shape: bf16[432,64], index: 1, kind: input, shape index: {}]
  %s2 = inlined_call_operand.vmem [shape: f32[1,64], index: 2, kind: input, shape index: {}]
  %s3 = inlined_call_operand.vmem [shape: f32[64,64], index: 3, kind: output, shape index: {}]
  %s4 = sld [smem:[#allocation0]]
  $region22: #{raft_plus_dicl_forward.54} parent=0
    _
  %s6 = ssub.s32 1, %s4
  %s7 = scalar_select 0, %s6, %s4
  // Predicated region
  $region2: #{raft_plus_dicl_forward.54} parent=0 // pred_check
    _
  $region3: #{raft_plus_dicl_forward.54} parent=0 // pred_check_branch
    %9 = sbr.rel (0) target = $region5
  $region4: #{raft_plus_dicl_forward.54} parent=0 // pred_region
    _
  $region5: #{raft_plus_dicl_forward.54} parent=0 // pred_fallthru
    _
  // Predicated region
  $region6: #{raft_plus_dicl_forward.54} parent=0 // pred_check
    _
  $region7: #{raft_plus_dicl_forward.54} parent=0 // pred_check_branch
    %11 = sbr.rel (0) target = $region9
  $region8: #{raft_plus_dicl_forward.54} parent=0 // pred_region
    _
  $region9: #{raft_plus_dicl_forward.54} parent=0 // pred_fallthru
    _
  // Predicated region
  $region10: #{raft_plus_dicl_forward.54} parent=0 // pred_check
    _
  $region11: #{raft_plus_dicl_forward.54} parent=0 // pred_check_branch
    %13 = sbr.rel (0) target = $region13
  $region12: #{raft_plus_dicl_forward.54} parent=0 // pred_region
    _
  $region13: #{raft_plus_dicl_forward.54} parent=0 // pred_fallthru
    _
  %v15 = vld [vmem:[%s0] sm:$0xff]
  %v16 = vld [vmem:[%s0 + $0x8] sm:$0xff]
  %v17 = vld [vmem:[%s0 + $0x10] sm:$0xff]
  %v18 = vld [vmem:[%s0 + $0x18] sm:$0xff]
  %v19 = vld [vmem:[%s0 + $0x20] sm:$0xff]
  %v20 = vld [vmem:[%s0 + $0x28] sm:$0xff]
  %v21 = vld [vmem:[%s0 + $0x30] sm:$0xff]
  %v22 = vld [vmem:[%s0 + $0x38] sm:$0xff]
  %v23 = vld [vmem:[%s0 + $0x40] sm:$0xff]
  %v24 = vld [vmem:[%s0 + $0x48] sm:$0xff]
  %v25 = vld [vmem:[%s0 + $0x50] sm:$0xff]
  %v26 = vld [vmem:[%s0 + $0x58] sm:$0xff]
  %v27 = vld [vmem:[%s0 + $0x60] sm:$0xff]
  %v28 = vld [vmem:[%s0 + $0x68] sm:$0xff]
  %v29 = vld [vmem:[%s0 + $0x70] sm:$0xff]
  %v30 = vld [vmem:[%s0 + $0x78] sm:$0xff]
  %v31 = vld [vmem:[%s1] sm:$0xf]
  %v32 = vld [vmem:[%s1 + $0x4] sm:$0xf]
  %v33 = vld [vmem:[%s1 + $0x8] sm:$0xf]
  %v34 = vld [vmem:[%s1 + $0xc] sm:$0xf]
  %v35 = vld [vmem:[%s1 + $0x10] sm:$0xf]
  %v36 = vld [vmem:[%s1 + $0x14] sm:$0xf]
  %v37 = vld [vmem:[%s1 + $0x18] sm:$0xf]
  %v38 = vld [vmem:[%s1 + $0x1c] sm:$0xf]
  %v39 = vld [vmem:[%s1 + $0x20] sm:$0xf]
  %v40 = vld [vmem:[%s1 + $0x24] sm:$0xf]
  %v41 = vld [vmem:[%s1 + $0x28] sm:$0xf]
  %v42 = vld [vmem:[%s1 + $0x2c] sm:$0xf]
  %v43 = vld [vmem:[%s1 + $0x30] sm:$0xf]
  %v44 = vld [vmem:[%s1 + $0x34] sm:$0xf]
  %v45 = vld [vmem:[%s1 + $0x38] sm:$0xf]
  %v46 = vld [vmem:[%s1 + $0x3c] sm:$0xf]
  %v47 = vld [vmem:[%s1 + $0x40] sm:$0xf]
  %v48 = vld [vmem:[%s1 + $0x44] sm:$0xf]
  %v49 = vld [vmem:[%s1 + $0x48] sm:$0xf]
  %v50 = vld [vmem:[%s1 + $0x4c] sm:$0xf]
  %v51 = vld [vmem:[%s1 + $0x50] sm:$0xf]
  %v52 = vld [vmem:[%s1 + $0x54] sm:$0xf]
  %v53 = vld [vmem:[%s1 + $0x58] sm:$0xf]
  %v54 = vld [vmem:[%s1 + $0x5c] sm:$0xf]
  %v55 = vld [vmem:[%s1 + $0x60] sm:$0xf]
  %v56 = vld [vmem:[%s1 + $0x64] sm:$0xf]
  %v57 = vld [vmem:[%s1 + $0x68] sm:$0xf]
  %v58 = vld [vmem:[%s1 + $0x6c] sm:$0xf]
  %v59 = vld [vmem:[%s1 + $0x70] sm:$0xf]
  %v60 = vld [vmem:[%s1 + $0x74] sm:$0xf]
  %v61 = vld [vmem:[%s1 + $0x78] sm:$0xf]
  %v62 = vld [vmem:[%s1 + $0x7c] sm:$0xf]
  %v63 = vld [vmem:[%s1 + $0x80] sm:$0xf]
  %v64 = vld [vmem:[%s1 + $0x84] sm:$0xf]
  %v65 = vld [vmem:[%s1 + $0x88] sm:$0xf]
  %v66 = vld [vmem:[%s1 + $0x8c] sm:$0xf]
  %v67 = vld [vmem:[%s1 + $0x90] sm:$0xf]
  %v68 = vld [vmem:[%s1 + $0x94] sm:$0xf]
  %v69 = vld [vmem:[%s1 + $0x98] sm:$0xf]
  %v70 = vld [vmem:[%s1 + $0x9c] sm:$0xf]
  %v71 = vld [vmem:[%s1 + $0xa0] sm:$0xf]
  %v72 = vld [vmem:[%s1 + $0xa4] sm:$0xf]
  %v73 = vld [vmem:[%s1 + $0xa8] sm:$0xf]
  %v74 = vld [vmem:[%s1 + $0xac] sm:$0xf]
  %v75 = vld [vmem:[%s1 + $0xb0] sm:$0xf]
  %v76 = vld [vmem:[%s1 + $0xb4] sm:$0xf]
  %v77 = vld [vmem:[%s1 + $0xb8] sm:$0xf]
  %v78 = vld [vmem:[%s1 + $0xbc] sm:$0xf]
  %v79 = vld [vmem:[%s1 + $0xc0] sm:$0xf]
  %v80 = vld [vmem:[%s1 + $0xc4] sm:$0xf]
  %v81 = vld [vmem:[%s1 + $0xc8] sm:$0xf]
  %v82 = vld [vmem:[%s1 + $0xcc] sm:$0xf]
  %v83 = vld [vmem:[%s1 + $0xd0] sm:$0xf]
  %v84 = vld [vmem:[%s1 + $0xd4] sm:$0xf]
  %v85 = vld [vmem:[%s2] sm:$0x1]
  %v87 = vperm.slane %v85, 0
  %v105 = vunpack.c.l.b16 %v15
  %v106 = vunpack.c.h.b16 %v15
  %v107 = vunpack.c.l.b16 %v16
  %v108 = vunpack.c.h.b16 %v16
  %v109 = vunpack.c.l.b16 %v17
  %v110 = vunpack.c.h.b16 %v17
  %v111 = vunpack.c.l.b16 %v18
  %v112 = vunpack.c.h.b16 %v18
  %v113 = vunpack.c.l.b16 %v19
  %v114 = vunpack.c.h.b16 %v19
  %v115 = vunpack.c.l.b16 %v20
  %v116 = vunpack.c.h.b16 %v20
  %v117 = vunpack.c.l.b16 %v21
  %v118 = vunpack.c.h.b16 %v21
  %v119 = vunpack.c.l.b16 %v22
  %v120 = vunpack.c.h.b16 %v22
  %v121 = vunpack.c.l.b16 %v23
  %v122 = vunpack.c.h.b16 %v23
  %v123 = vunpack.c.l.b16 %v24
  %v124 = vunpack.c.h.b16 %v24
  %v125 = vunpack.c.l.b16 %v25
  %v126 = vunpack.c.h.b16 %v25
  %v127 = vunpack.c.l.b16 %v26
  %v128 = vunpack.c.h.b16 %v26
  %v129 = vunpack.c.l.b16 %v27
  %v130 = vunpack.c.h.b16 %v27
  %v131 = vunpack.c.l.b16 %v28
  %v132 = vunpack.c.h.b16 %v28
  %v133 = vunpack.c.l.b16 %v29
  %v134 = vunpack.c.h.b16 %v29
  %v135 = vunpack.c.l.b16 %v30
  %v136 = vunpack.c.h.b16 %v30
  %v137 = vpack.c.b16 %v109, %v105
  %v138 = vpack.c.b16 %v110, %v106
  %v139 = vpack.c.b16 %v111, %v107
  %v140 = vpack.c.b16 %v112, %v108
  %v141 = vpack.c.b16 %v117, %v113
  %v142 = vpack.c.b16 %v118, %v114
  %v143 = vpack.c.b16 %v119, %v115
  %v144 = vpack.c.b16 %v120, %v116
  %v145 = vpack.c.b16 %v125, %v121
  %v146 = vpack.c.b16 %v126, %v122
  %v147 = vpack.c.b16 %v127, %v123
  %v148 = vpack.c.b16 %v128, %v124
  %v149 = vpack.c.b16 %v133, %v129
  %v150 = vpack.c.b16 %v134, %v130
  %v151 = vpack.c.b16 %v135, %v131
  %v152 = vpack.c.b16 %v136, %v132
  %v219 = vunpack.c.l.b16 %v31
  %v220 = vunpack.c.l.b16 %v32
  %v221 = vunpack.c.l.b16 %v33
  %v222 = vunpack.c.l.b16 %v34
  %v223 = vunpack.c.l.b16 %v35
  %v224 = vunpack.c.l.b16 %v36
  %v225 = vunpack.c.l.b16 %v37
  %v226 = vunpack.c.l.b16 %v38
  %v227 = vunpack.c.l.b16 %v39
  %v228 = vunpack.c.l.b16 %v40
  %v229 = vunpack.c.l.b16 %v41
  %v230 = vunpack.c.l.b16 %v42
  %v231 = vunpack.c.l.b16 %v43
  %v232 = vunpack.c.l.b16 %v44
  %v233 = vunpack.c.l.b16 %v45
  %v234 = vunpack.c.l.b16 %v46
  %v235 = vunpack.c.l.b16 %v47
  %v236 = vunpack.c.l.b16 %v48
  %v237 = vunpack.c.l.b16 %v49
  %v238 = vunpack.c.l.b16 %v50
  %v239 = vunpack.c.l.b16 %v51
  %v240 = vunpack.c.l.b16 %v52
  %v241 = vunpack.c.l.b16 %v53
  %v242 = vunpack.c.l.b16 %v54
  %v243 = vunpack.c.l.b16 %v55
  %v244 = vunpack.c.l.b16 %v56
  %v245 = vunpack.c.l.b16 %v57
  %v246 = vunpack.c.l.b16 %v58
  %v247 = vunpack.c.l.b16 %v59
  %v248 = vunpack.c.l.b16 %v60
  %v249 = vunpack.c.l.b16 %v61
  %v250 = vunpack.c.l.b16 %v62
  %v251 = vunpack.c.l.b16 %v63
  %v252 = vunpack.c.l.b16 %v64
  %v253 = vunpack.c.l.b16 %v65
  %v254 = vunpack.c.l.b16 %v66
  %v255 = vunpack.c.l.b16 %v67
  %v256 = vunpack.c.l.b16 %v68
  %v257 = vunpack.c.l.b16 %v69
  %v258 = vunpack.c.l.b16 %v70
  %v259 = vunpack.c.l.b16 %v71
  %v260 = vunpack.c.l.b16 %v72
  %v261 = vunpack.c.l.b16 %v73
  %v262 = vunpack.c.l.b16 %v74
  %v263 = vunpack.c.l.b16 %v75
  %v264 = vunpack.c.l.b16 %v76
  %v265 = vunpack.c.l.b16 %v77
  %v266 = vunpack.c.l.b16 %v78
  %v267 = vunpack.c.l.b16 %v79
  %v268 = vunpack.c.l.b16 %v80
  %v269 = vunpack.c.l.b16 %v81
  %v270 = vunpack.c.l.b16 %v82
  %v271 = vunpack.c.l.b16 %v83
  %v272 = vunpack.c.l.b16 %v84
  %v273 = vpack.c.b16 %v220, %v219
  %v274 = vpack.c.b16 %v222, %v221
  %v275 = vpack.c.b16 %v224, %v223
  %v276 = vpack.c.b16 %v226, %v225
  %v277 = vpack.c.b16 %v228, %v227
  %v278 = vpack.c.b16 %v230, %v229
  %v279 = vpack.c.b16 %v232, %v231
  %v280 = vpack.c.b16 %v234, %v233
  %v281 = vpack.c.b16 %v236, %v235
  %v282 = vpack.c.b16 %v238, %v237
  %v283 = vpack.c.b16 %v240, %v239
  %v284 = vpack.c.b16 %v242, %v241
  %v285 = vpack.c.b16 %v244, %v243
  %v286 = vpack.c.b16 %v246, %v245
  %v287 = vpack.c.b16 %v248, %v247
  %v288 = vpack.c.b16 %v250, %v249
  %v289 = vpack.c.b16 %v252, %v251
  %v290 = vpack.c.b16 %v254, %v253
  %v291 = vpack.c.b16 %v256, %v255
  %v292 = vpack.c.b16 %v258, %v257
  %v293 = vpack.c.b16 %v260, %v259
  %v294 = vpack.c.b16 %v262, %v261
  %v295 = vpack.c.b16 %v264, %v263
  %v296 = vpack.c.b16 %v266, %v265
  %v297 = vpack.c.b16 %v268, %v267
  %v298 = vpack.c.b16 %v270, %v269
  %v299 = vpack.c.b16 %v272, %v271
  %vm327 = vcmask 392192
  %v329 = vsel %vm327, %v140, 0
  %v332 = vsel %vm327, %v144, 0
  %v335 = vsel %vm327, %v148, 0
  %v338 = vsel %vm327, %v152, 0
  %340 = vmatpush.bf16.msra.mxu0 %v280
  %341 = vmatpush.bf16.msra.mxu0 %v279
  %342 = vmatpush.bf16.msra.mxu0 %v278
  %343 = vmatpush.bf16.msra.mxu0 %v277
  %344 = vmatpush.bf16.msra.mxu0 %v276
  %345 = vmatpush.bf16.msra.mxu0 %v275
  %346 = vmatpush.bf16.msra.mxu0 %v274
  %347 = vmatpush.bf16.msra.mxu0 %v273
  %348 = vmatmul.bf16.gmra.mxu0 %v137
  %v349 = vpop.f32.mrf.mxu0
  %v350 = vadd.f32 %v87, %v349
  %v351 = vpop.f32.mrf.mxu0
  %v352 = vadd.f32 %v87, %v351
  %353 = vmatmul.bf16.gmra.mxu0 %v141
  %v354 = vpop.f32.mrf.mxu0
  %v355 = vadd.f32 %v87, %v354
  %v356 = vpop.f32.mrf.mxu0
  %v357 = vadd.f32 %v87, %v356
  %358 = vmatmul.bf16.gmra.mxu0 %v145
  %v359 = vpop.f32.mrf.mxu0
  %v360 = vadd.f32 %v87, %v359
  %v361 = vpop.f32.mrf.mxu0
  %v362 = vadd.f32 %v87, %v361
  %363 = vmatmul.bf16.gmra.mxu0 %v149
  %v364 = vpop.f32.mrf.mxu0
  %v365 = vadd.f32 %v87, %v364
  %v366 = vpop.f32.mrf.mxu0
  %v367 = vadd.f32 %v87, %v366
  %368 = vdwg.mxu0
  %369 = vmatpush.bf16.msra.mxu0 %v288
  %370 = vmatpush.bf16.msra.mxu0 %v287
  %371 = vmatpush.bf16.msra.mxu0 %v286
  %372 = vmatpush.bf16.msra.mxu0 %v285
  %373 = vmatpush.bf16.msra.mxu0 %v284
  %374 = vmatpush.bf16.msra.mxu0 %v283
  %375 = vmatpush.bf16.msra.mxu0 %v282
  %376 = vmatpush.bf16.msra.mxu0 %v281
  %377 = vmatmul.bf16.gmra.mxu0 %v138
  %v378 = vpop.f32.mrf.mxu0
  %v379 = vadd.f32 %v350, %v378
  %v380 = vpop.f32.mrf.mxu0
  %v381 = vadd.f32 %v352, %v380
  %382 = vmatmul.bf16.gmra.mxu0 %v142
  %v383 = vpop.f32.mrf.mxu0
  %v384 = vadd.f32 %v355, %v383
  %v385 = vpop.f32.mrf.mxu0
  %v386 = vadd.f32 %v357, %v385
  %387 = vmatmul.bf16.gmra.mxu0 %v146
  %v388 = vpop.f32.mrf.mxu0
  %v389 = vadd.f32 %v360, %v388
  %v390 = vpop.f32.mrf.mxu0
  %v391 = vadd.f32 %v362, %v390
  %392 = vmatmul.bf16.gmra.mxu0 %v150
  %v393 = vpop.f32.mrf.mxu0
  %v394 = vadd.f32 %v365, %v393
  %v395 = vpop.f32.mrf.mxu0
  %v396 = vadd.f32 %v367, %v395
  %397 = vdwg.mxu0
  %398 = vmatpush.bf16.msra.mxu0 %v296
  %399 = vmatpush.bf16.msra.mxu0 %v295
  %400 = vmatpush.bf16.msra.mxu0 %v294
  %401 = vmatpush.bf16.msra.mxu0 %v293
  %402 = vmatpush.bf16.msra.mxu0 %v292
  %403 = vmatpush.bf16.msra.mxu0 %v291
  %404 = vmatpush.bf16.msra.mxu0 %v290
  %405 = vmatpush.bf16.msra.mxu0 %v289
  %406 = vmatmul.bf16.gmra.mxu0 %v139
  %v407 = vpop.f32.mrf.mxu0
  %v408 = vadd.f32 %v379, %v407
  %v409 = vpop.f32.mrf.mxu0
  %v410 = vadd.f32 %v381, %v409
  %411 = vmatmul.bf16.gmra.mxu0 %v143
  %v412 = vpop.f32.mrf.mxu0
  %v413 = vadd.f32 %v384, %v412
  %v414 = vpop.f32.mrf.mxu0
  %v415 = vadd.f32 %v386, %v414
  %416 = vmatmul.bf16.gmra.mxu0 %v147
  %v417 = vpop.f32.mrf.mxu0
  %v418 = vadd.f32 %v389, %v417
  %v419 = vpop.f32.mrf.mxu0
  %v420 = vadd.f32 %v391, %v419
  %421 = vmatmul.bf16.gmra.mxu0 %v151
  %v422 = vpop.f32.mrf.mxu0
  %v423 = vadd.f32 %v394, %v422
  %v424 = vpop.f32.mrf.mxu0
  %v425 = vadd.f32 %v396, %v424
  %426 = vdwg.mxu0
  %427 = vmatpush.bf16.msra.mxu0 0
  %428 = vmatpush.bf16.msra.mxu0 0
  %429 = vmatpush.bf16.msra.mxu0 0
  %430 = vmatpush.bf16.msra.mxu0 0
  %431 = vmatpush.bf16.msra.mxu0 0
  %432 = vmatpush.bf16.msra.mxu0 %v299
  %433 = vmatpush.bf16.msra.mxu0 %v298
  %434 = vmatpush.bf16.msra.mxu0 %v297
  %435 = vmatmul.bf16.gmra.mxu0 %v329
  %v436 = vpop.f32.mrf.mxu0
  %v437 = vadd.f32 %v408, %v436
  %v438 = vpop.f32.mrf.mxu0
  %v439 = vadd.f32 %v410, %v438
  %440 = vmatmul.bf16.gmra.mxu0 %v332
  %v441 = vpop.f32.mrf.mxu0
  %v442 = vadd.f32 %v413, %v441
  %v443 = vpop.f32.mrf.mxu0
  %v444 = vadd.f32 %v415, %v443
  %445 = vmatmul.bf16.gmra.mxu0 %v335
  %v446 = vpop.f32.mrf.mxu0
  %v447 = vadd.f32 %v418, %v446
  %v448 = vpop.f32.mrf.mxu0
  %v449 = vadd.f32 %v420, %v448
  %450 = vmatmul.bf16.gmra.mxu0 %v338
  %v451 = vpop.f32.mrf.mxu0
  %v452 = vadd.f32 %v423, %v451
  %v453 = vpop.f32.mrf.mxu0
  %v454 = vadd.f32 %v425, %v453
  %455 = vdwg.mxu0
  %vm456 = vcmask 523264
  %457 = vst.msk [vmem:[%s3] sm:$0xff] %vm456, %v437
  %458 = vst.msk [vmem:[%s3 + $0x8] sm:$0xff] %vm456, %v439
  %459 = vst.msk [vmem:[%s3 + $0x10] sm:$0xff] %vm456, %v442
  %460 = vst.msk [vmem:[%s3 + $0x18] sm:$0xff] %vm456, %v444
  %461 = vst.msk [vmem:[%s3 + $0x20] sm:$0xff] %vm456, %v447
  %462 = vst.msk [vmem:[%s3 + $0x28] sm:$0xff] %vm456, %v449
  %463 = vst.msk [vmem:[%s3 + $0x30] sm:$0xff] %vm456, %v452
  %464 = vst.msk [vmem:[%s3 + $0x38] sm:$0xff] %vm456, %v454
  // Predicated region
  $region14: #{raft_plus_dicl_forward.54} parent=0 // pred_check
    _
  $region15: #{raft_plus_dicl_forward.54} parent=0 // pred_check_branch
    %466 = sbr.rel (0) target = $region17
  $region16: #{raft_plus_dicl_forward.54} parent=0 // pred_region
    _
  $region17: #{raft_plus_dicl_forward.54} parent=0 // pred_fallthru
    _
  // Predicated region
  $region18: #{raft_plus_dicl_forward.54} parent=0 // pred_check
    _
  $region19: #{raft_plus_dicl_forward.54} parent=0 // pred_check_branch
    %468 = sbr.rel (0) target = $region21
  $region20: #{raft_plus_dicl_forward.54} parent=0 // pred_region
    _
  $region21: #{raft_plus_dicl_forward.54} parent=0 // pred_fallthru
    _

// kernel: raft_plus_dicl_forward.55
$region0: #{raft_plus_dicl_forward.55}
  #allocation0 [shape = 'u32[]', space=smem, size = 0x4, offset = 0x4, fixed_abs, tag = 'smem constant byte address 0x4 - core index']
  #allocation1 [shape = 'u32[72,128]{1,0:T(1,128)}', space=vmem, size = 0x9000, scoped, tag = 'internal scratch']
  %s0 = inlined_call_operand.vmem [shape: bf16[64,64], index: 0, kind: input, shape index: {}]
  %s1 = inlined_call_operand.vmem [shape: bf16[64,16], index: 1, kind: input, shape index: {}]
  %s2 = inlined_call_operand.vmem [shape: f32[1,16], index: 2, kind: input, shape index: {}]
  %s3 = inlined_call_operand.vmem [shape: f32[64,16], index: 3, kind: output, shape index: {}]
  %s4 = sld [smem:[#allocation0]]
  $region22: #{raft_plus_dicl_forward.55} parent=0
    _
  %s6 = ssub.s32 1, %s4
  %s7 = scalar_select 0, %s6, %s4
  // Predicated region
  $region2: #{raft_plus_dicl_forward.55} parent=0 // pred_check
    _
  $region3: #{raft_plus_dicl_forward.55} parent=0 // pred_check_branch
    %9 = sbr.rel (0) target = $region5
  $region4: #{raft_plus_dicl_forward.55} parent=0 // pred_region
    _
  $region5: #{raft_plus_dicl_forward.55} parent=0 // pred_fallthru
    _
  // Predicated region
  $region6: #{raft_plus_dicl_forward.55} parent=0 // pred_check
    _
  $region7: #{raft_plus_dicl_forward.55} parent=0 // pred_check_branch
    %11 = sbr.rel (0) target = $region9
  $region8: #{raft_plus_dicl_forward.55} parent=0 // pred_region
    _
  $region9: #{raft_plus_dicl_forward.55} parent=0 // pred_fallthru
    _
  // Predicated region
  $region10: #{raft_plus_dicl_forward.55} parent=0 // pred_check
    _
  $region11: #{raft_plus_dicl_forward.55} parent=0 // pred_check_branch
    %13 = sbr.rel (0) target = $region13
  $region12: #{raft_plus_dicl_forward.55} parent=0 // pred_region
    _
  $region13: #{raft_plus_dicl_forward.55} parent=0 // pred_fallthru
    _
  %v15 = vld [vmem:[%s0] sm:$0xf]
  %v16 = vld [vmem:[%s0 + $0x4] sm:$0xf]
  %v17 = vld [vmem:[%s0 + $0x8] sm:$0xf]
  %v18 = vld [vmem:[%s0 + $0xc] sm:$0xf]
  %v19 = vld [vmem:[%s0 + $0x10] sm:$0xf]
  %v20 = vld [vmem:[%s0 + $0x14] sm:$0xf]
  %v21 = vld [vmem:[%s0 + $0x18] sm:$0xf]
  %v22 = vld [vmem:[%s0 + $0x1c] sm:$0xf]
  %v23 = vld [vmem:[%s1] sm:$0xf]
  %v24 = vld [vmem:[%s1 + $0x4] sm:$0xf]
  %v25 = vld [vmem:[%s1 + $0x8] sm:$0xf]
  %v26 = vld [vmem:[%s1 + $0xc] sm:$0xf]
  %v27 = vld [vmem:[%s1 + $0x10] sm:$0xf]
  %v28 = vld [vmem:[%s1 + $0x14] sm:$0xf]
  %v29 = vld [vmem:[%s1 + $0x18] sm:$0xf]
  %v30 = vld [vmem:[%s1 + $0x1c] sm:$0xf]
  %v31 = vld [vmem:[%s2] sm:$0x1]
  %v33 = vperm.slane %v31, 0
  %v43 = vunpack.c.l.b16 %v15
  %v44 = vunpack.c.l.b16 %v16
  %v45 = vunpack.c.l.b16 %v17
  %v46 = vunpack.c.l.b16 %v18
  %v47 = vunpack.c.l.b16 %v19
  %v48 = vunpack.c.l.b16 %v20
  %v49 = vunpack.c.l.b16 %v21
  %v50 = vunpack.c.l.b16 %v22
  %v51 = vpack.c.b16 %v44, %v43
  %v52 = vpack.c.b16 %v46, %v45
  %v53 = vpack.c.b16 %v48, %v47
  %v54 = vpack.c.b16 %v50, %v49
  %v63 = vunpack.c.l.b16 %v23
  %v64 = vunpack.c.l.b16 %v24
  %v65 = vunpack.c.l.b16 %v25
  %v66 = vunpack.c.l.b16 %v26
  %v67 = vunpack.c.l.b16 %v27
  %v68 = vunpack.c.l.b16 %v28
  %v69 = vunpack.c.l.b16 %v29
  %v70 = vunpack.c.l.b16 %v30
  %v71 = vpack.c.b16 %v64, %v63
  %v72 = vpack.c.b16 %v66, %v65
  %v73 = vpack.c.b16 %v68, %v67
  %v74 = vpack.c.b16 %v70, %v69
  %vm79 = vcmask 523264
  %v81 = vsel %vm79, %v51, 0
  %v84 = vsel %vm79, %v52, 0
  %v87 = vsel %vm79, %v53, 0
  %v90 = vsel %vm79, %v54, 0
  %92 = vmatpush.bf16.msra.mxu0 0
  %93 = vmatpush.bf16.msra.mxu0 0
  %94 = vmatpush.bf16.msra.mxu0 0
  %95 = vmatpush.bf16.msra.mxu0 0
  %96 = vmatpush.bf16.msra.mxu0 %v74
  %97 = vmatpush.bf16.msra.mxu0 %v73
  %98 = vmatpush.bf16.msra.mxu0 %v72
  %99 = vmatpush.bf16.msra.mxu0 %v71
  %100 = vmatmul.bf16.gmra.mxu0 %v81
  %v101 = vpop.f32.mrf.mxu0
  %v102 = vadd.f32 %v33, %v101
  %v103 = vpop.f32.mrf.mxu0
  %v104 = vadd.f32 %v33, %v103
  %105 = vmatmul.bf16.gmra.mxu0 %v84
  %v106 = vpop.f32.mrf.mxu0
  %v107 = vadd.f32 %v33, %v106
  %v108 = vpop.f32.mrf.mxu0
  %v109 = vadd.f32 %v33, %v108
  %110 = vmatmul.bf16.gmra.mxu0 %v87
  %v111 = vpop.f32.mrf.mxu0
  %v112 = vadd.f32 %v33, %v111
  %v113 = vpop.f32.mrf.mxu0
  %v114 = vadd.f32 %v33, %v113
  %115 = vmatmul.bf16.gmra.mxu0 %v90
  %v116 = vpop.f32.mrf.mxu0
  %v117 = vadd.f32 %v33, %v116
  %v118 = vpop.f32.mrf.mxu0
  %v119 = vadd.f32 %v33, %v118
  %120 = vdwg.mxu0
  %vm121 = vcmask 130048
  %122 = vst.msk [vmem:[%s3] sm:$0xff] %vm121, %v102
  %123 = vst.msk [vmem:[%s3 + $0x8] sm:$0xff] %vm121, %v104
  %124 = vst.msk [vmem:[%s3 + $0x10] sm:$0xff] %vm121, %v107
  %125 = vst.msk [vmem:[%s3 + $0x18] sm:$0xff] %vm121, %v109
  %126 = vst.msk [vmem:[%s3 + $0x20] sm:$0xff] %vm121, %v112
  %127 = vst.msk [vmem:[%s3 + $0x28] sm:$0xff] %vm121, %v114
  %128 = vst.msk [vmem:[%s3 + $0x30] sm:$0xff] %vm121, %v117
  %129 = vst.msk [vmem:[%s3 + $0x38] sm:$0xff] %vm121, %v119
  // Predicated region
  $region14: #{raft_plus_dicl_forward.55} parent=0 // pred_check
    _
  $region15: #{raft_plus_dicl_forward.55} parent=0 // pred_check_branch
    %131 = sbr.rel (0) target = $region17
  $region16: #{raft_plus_dicl_forward.55} parent=0 // pred_region
    _
  $region17: #{raft_plus_dicl_forward.55} parent=0 // pred_fallthru
    _
  // Predicated region
  $region18: #{raft_plus_dicl_forward.55} parent=0 // pred_check
    _
  $region19: #{raft_plus_dicl_forward.55} parent=0 // pred_check_branch
    %133 = sbr.rel (0) target = $region21
  $region20: #{raft_plus_dicl_forward.55} parent=0 // pred_region
    _
  $region21: #{raft_plus_dicl_forward.55} parent=0 // pred_fallthru
    _

// kernel: raft_plus_dicl_forward.61
$region0: #{raft_plus_dicl_forward.61}
  #allocation0 [shape = 'u32[]', space=smem, size = 0x4, offset = 0x4, fixed_abs, tag = 'smem constant byte address 0x4 - core index']
  #allocation1 [shape = 'u32[72,128]{1,0:T(1,128)}', space=vmem, size = 0x9000, scoped, tag = 'internal scratch']
  %s0 = inlined_call_operand.vmem [shape: bf16[1568,144], index: 0, kind: input, shape index: {}]
  %s1 = inlined_call_operand.vmem [shape: bf16[144,64], index: 1, kind: input, shape index: {}]
  %s2 = inlined_call_operand.vmem [shape: f32[1,64], index: 2, kind: input, shape index: {}]
  %s3 = inlined_call_operand.vmem [shape: f32[1568,64], index: 3, kind: output, shape index: {}]
  %s4 = sld [smem:[#allocation0]]
  $region45: #{raft_plus_dicl_forward.61} parent=0
    _
  %s6 = ssub.s32 1, %s4
  %s7 = scalar_select 0, %s6, %s4
  loop: start=0, step=1, limit=9
  $region2: #{raft_plus_dicl_forward.61} parent=0 // loop_pre_header
    _
  $region3: #{raft_plus_dicl_forward.61} parent=0 // loop_header
    %s9 = sphi 0, %s13
    %p10 = scmp.ge.s32.totalorder %s9, 9
    %s19 = sphi 0, %s21
    %s22 = sphi 0, %s19
    %s23 = sphi 0, %s22
    %s39 = sphi 0, %s23
    %s43 = sphi 0, %s43
    %s45 = sphi 0, %s43
    %s46 = sphi 0, %s45
    %s60 = sphi 0, %s46
    %s64 = sphi 0, %s64
    %s66 = sphi 0, %s64
    %s67 = sphi 0, %s66
    %s81 = sphi 0, %s67
    %s87 = sphi 0, %s89
    %s90 = sphi 0, %s87
    %s91 = sphi 0, %s90
    %s107 = sphi 0, %s91
  $region4: #{raft_plus_dicl_forward.61} parent=0 // loop_header_branch
    %12 = sbr.rel (%p10) target = $region8
  $region5: #{raft_plus_dicl_forward.61} parent=0 // loop_body
    %s14 = ssub.s32 %s9, 1
    %s15 = ssub.s32 %s9, 2
    %s16 = sadd.s32 %s9, 1
    %s17 = ssub.s32 %s9, %s16
    %p18 = scmp.eq.s32.totalorder %s17, 0
    %s20 = sadd.s32 %s19, 1
    %s21 = scalar_select %p18, %s19, %s20
    %p24 = pneg %p18
    %p25 = scmp.eq.s32.totalorder %s9, 6
    %p26 = por %p24, %p25
    %p27 = scmp.ne.s32.totalorder %s19, %s22
    %p28 = scmp.eq.s32.totalorder %s9, 0
    %p29 = por %p27, %p28
    %p30 = scmp.ne.s32.totalorder %s19, %s22
    %p31 = scmp.eq.s32.totalorder %s14, 6
    %p32 = por %p30, %p31
    %p33 = scmp.ne.s32.totalorder %s22, %s23
    %p34 = scmp.eq.s32.totalorder %s14, 0
    %p35 = por %p33, %p34
    %p36 = scmp.ne.s32.totalorder %s22, %s23
    %p37 = scmp.eq.s32.totalorder %s15, 6
    %p38 = por %p36, %p37
    %p40 = scmp.ne.s32.totalorder %s23, %s39
    %p41 = scmp.eq.s32.totalorder %s15, 0
    %p42 = por %p40, %p41
    %s44 = sadd.s32 %s43, 1
    %p47 = scmp.eq.s32.totalorder %s9, 6
    %p48 = scmp.ne.s32.totalorder %s43, %s45
    %p49 = scmp.eq.s32.totalorder %s9, 0
    %p50 = por %p48, %p49
    %p51 = scmp.ne.s32.totalorder %s43, %s45
    %p52 = scmp.eq.s32.totalorder %s14, 6
    %p53 = por %p51, %p52
    %p54 = scmp.ne.s32.totalorder %s45, %s46
    %p55 = scmp.eq.s32.totalorder %s14, 0
    %p56 = por %p54, %p55
    %p57 = scmp.ne.s32.totalorder %s45, %s46
    %p58 = scmp.eq.s32.totalorder %s15, 6
    %p59 = por %p57, %p58
    %p61 = scmp.ne.s32.totalorder %s46, %s60
    %p62 = scmp.eq.s32.totalorder %s15, 0
    %p63 = por %p61, %p62
    %s65 = sadd.s32 %s64, 1
    %p68 = scmp.eq.s32.totalorder %s9, 6
    %p69 = scmp.ne.s32.totalorder %s64, %s66
    %p70 = scmp.eq.s32.totalorder %s9, 0
    %p71 = por %p69, %p70
    %p72 = scmp.ne.s32.totalorder %s64, %s66
    %p73 = scmp.eq.s32.totalorder %s14, 6
    %p74 = por %p72, %p73
    %p75 = scmp.ne.s32.totalorder %s66, %s67
    %p76 = scmp.eq.s32.totalorder %s14, 0
    %p77 = por %p75, %p76
    %p78 = scmp.ne.s32.totalorder %s66, %s67
    %p79 = scmp.eq.s32.totalorder %s15, 6
    %p80 = por %p78, %p79
    %p82 = scmp.ne.s32.totalorder %s67, %s81
    %p83 = scmp.eq.s32.totalorder %s15, 0
    %p84 = por %p82, %p83
    %s85 = ssub.s32 %s9, %s16
    %p86 = scmp.eq.s32.totalorder %s85, 0
    %s88 = sadd.s32 %s87, 1
    %s89 = scalar_select %p86, %s87, %s88
    %p92 = pneg %p86
    %p93 = scmp.eq.s32.totalorder %s9, 6
    %p94 = por %p92, %p93
    %p95 = scmp.ne.s32.totalorder %s87, %s90
    %p96 = scmp.eq.s32.totalorder %s9, 0
    %p97 = por %p95, %p96
    %p98 = scmp.ne.s32.totalorder %s87, %s90
    %p99 = scmp.eq.s32.totalorder %s14, 6
    %p100 = por %p98, %p99
    %p101 = scmp.ne.s32.totalorder %s90, %s91
    %p102 = scmp.eq.s32.totalorder %s14, 0
    %p103 = por %p101, %p102
    %p104 = scmp.ne.s32.totalorder %s90, %s91
    %p105 = scmp.eq.s32.totalorder %s15, 6
    %p106 = por %p104, %p105
    %p108 = scmp.ne.s32.totalorder %s91, %s107
    %p109 = scmp.eq.s32.totalorder %s15, 0
    %p110 = por %p108, %p109
    %p111 = scmp.le.s32.totalorder 1, %s9
    %p112 = scmp.lt.s32.totalorder %s9, 8
    %p113 = pnand %p111, %p112
    %p114 = pneg %p113
    // Predicated region
    $region9: #{raft_plus_dicl_forward.61} parent=5 // pred_check
      _
    $region10: #{raft_plus_dicl_forward.61} parent=5 // pred_check_branch
      %116 = sbr.rel (%p113) target = $region12
    $region11: #{raft_plus_dicl_forward.61} parent=5 // pred_region
      %s117 = ssub.s32 %s9, 1
      // Predicated region
      $region13: #{raft_plus_dicl_forward.61} parent=11 // pred_check
        %p118 = pneg %p56
      $region14: #{raft_plus_dicl_forward.61} parent=11 // pred_check_branch
        %120 = sbr.rel (%p118) target = $region16
      $region15: #{raft_plus_dicl_forward.61} parent=11 // pred_region
        _
      $region16: #{raft_plus_dicl_forward.61} parent=11 // pred_fallthru
        _
      // Predicated region
      $region17: #{raft_plus_dicl_forward.61} parent=11 // pred_check
        %p121 = pneg %p77
      $region18: #{raft_plus_dicl_forward.61} parent=11 // pred_check_branch
        %123 = sbr.rel (%p121) target = $region20
      $region19: #{raft_plus_dicl_forward.61} parent=11 // pred_region
        _
      $region20: #{raft_plus_dicl_forward.61} parent=11 // pred_fallthru
        _
    $region12: #{raft_plus_dicl_forward.61} parent=5 // pred_fallthru
      _
    %p124 = scmp.lt.s32.totalorder %s9, 7
    // Predicated region
    $region21: #{raft_plus_dicl_forward.61} parent=5 // pred_check
      %p125 = pneg %p124
    $region22: #{raft_plus_dicl_forward.61} parent=5 // pred_check_branch
      %127 = sbr.rel (%p125) target = $region24
    $region23: #{raft_plus_dicl_forward.61} parent=5 // pred_region
      // Predicated region
      $region25: #{raft_plus_dicl_forward.61} parent=23 // pred_check
        %p128 = pneg %p29
      $region26: #{raft_plus_dicl_forward.61} parent=23 // pred_check_branch
        %130 = sbr.rel (%p128) target = $region28
      $region27: #{raft_plus_dicl_forward.61} parent=23 // pred_region
        %s131 = smul.u32 28, %s9
        %p132 = scmp.lt.s32.totalorder %s131, 195
        %s133 = scalar_select %p132, %s131, 195
        %s134 = smul.addr %s133, 2
        %s135 = smul.addr %s134, 4
        %s136 = scalar_lea.vmem %s0, %s135
        %s137 = smul.u32 28, %s9
      $region28: #{raft_plus_dicl_forward.61} parent=23 // pred_fallthru
        _
    $region24: #{raft_plus_dicl_forward.61} parent=5 // pred_fallthru
      _
    %p138 = scmp.le.s32.totalorder 1, %s9
    %p139 = scmp.lt.s32.totalorder %s9, 8
    %p140 = pnand %p138, %p139
    %p141 = pneg %p140
    // Predicated region
    $region29: #{raft_plus_dicl_forward.61} parent=5 // pred_check
      _
    $region30: #{raft_plus_dicl_forward.61} parent=5 // pred_check_branch
      %143 = sbr.rel (%p140) target = $region32
    $region31: #{raft_plus_dicl_forward.61} parent=5 // pred_region
      %s144 = ssub.s32 %s9, 1
      %s145 = smul.u32 28, %s14
      %p146 = scmp.lt.s32.totalorder %s145, 195
      %s147 = scalar_select %p146, %s145, 195
      %s148 = smul.addr %s147, 2
      %s149 = smul.addr %s148, 4
      %s150 = scalar_lea.vmem %s0, %s149
      %p151 = pneg %p35
      %p152 = pneg %p32
      %p153 = pneg %p56
      %p154 = pneg %p53
      %p155 = pneg %p77
      %p156 = pneg %p74
      %p157 = pneg %p103
      %p158 = pneg %p100
      %s159 = smul.u32 28, %s14
      %p160 = scmp.lt.s32.totalorder %s159, 195
      %s161 = scalar_select %p160, %s159, 195
      %s162 = smul.addr %s161, 8
      %s163 = scalar_lea.vmem %s3, %s162
      %s164 = smul.u32 28, %s14
      %p165 = scmp.lt.s32.totalorder %s164, 195
      %s166 = scalar_select %p165, %s164, 195
      %s167 = smul.addr %s166, 2
      %s168 = smul.addr %s167, 4
      %s169 = scalar_lea.vmem %s0, %s168
      %s170 = smul.u32 28, %s14
      %s171 = smul.u32 28, %s14
      %p172 = scmp.lt.s32.totalorder %s171, 195
      %s173 = scalar_select %p172, %s171, 195
      %s174 = smul.addr %s173, 8
      %s175 = scalar_lea.vmem %s3, %s174
      %s176 = smul.u32 28, %s14
      %v178 = vld [vmem:[%s169] sm:$0xff]
      %v179 = vld [vmem:[%s169 + $0x8] sm:$0xff]
      %v180 = vld [vmem:[%s169 + $0x10] sm:$0xff]
      %v181 = vld [vmem:[%s169 + $0x18] sm:$0xff]
      %v182 = vld [vmem:[%s169 + $0x20] sm:$0xff]
      %v183 = vld [vmem:[%s169 + $0x28] sm:$0xff]
      %v184 = vld [vmem:[%s169 + $0x30] sm:$0xff]
      %v185 = vld [vmem:[%s169 + $0x38] sm:$0xff]
      %v186 = vld [vmem:[%s169 + $0x40] sm:$0xff]
      %v187 = vld [vmem:[%s169 + $0x48] sm:$0xff]
      %v188 = vld [vmem:[%s169 + $0x50] sm:$0xff]
      %v189 = vld [vmem:[%s169 + $0x58] sm:$0xff]
      %v190 = vld [vmem:[%s169 + $0x60] sm:$0xff]
      %v191 = vld [vmem:[%s169 + $0x68] sm:$0xff]
      %v192 = vld [vmem:[%s169 + $0x70] sm:$0xff]
      %v193 = vld [vmem:[%s169 + $0x78] sm:$0xff]
      %v194 = vld [vmem:[%s169 + $0x80] sm:$0xff]
      %v195 = vld [vmem:[%s169 + $0x88] sm:$0xff]
      %v196 = vld [vmem:[%s169 + $0x90] sm:$0xff]
      %v197 = vld [vmem:[%s169 + $0x98] sm:$0xff]
      %v198 = vld [vmem:[%s169 + $0xa0] sm:$0xff]
      %v199 = vld [vmem:[%s169 + $0xa8] sm:$0xff]
      %v200 = vld [vmem:[%s169 + $0xb0] sm:$0xff]
      %v201 = vld [vmem:[%s169 + $0xb8] sm:$0xff]
      %v202 = vld [vmem:[%s169 + $0xc0] sm:$0xff]
      %v203 = vld [vmem:[%s169 + $0xc8] sm:$0xff]
      %v204 = vld [vmem:[%s169 + $0xd0] sm:$0xff]
      %v205 = vld [vmem:[%s169 + $0xd8] sm:$0xff]
      %v206 = vld [vmem:[%s1] sm:$0xf]
      %v207 = vld [vmem:[%s1 + $0x4] sm:$0xf]
      %v208 = vld [vmem:[%s1 + $0x8] sm:$0xf]
      %v209 = vld [vmem:[%s1 + $0xc] sm:$0xf]
      %v210 = vld [vmem:[%s1 + $0x10] sm:$0xf]
      %v211 = vld [vmem:[%s1 + $0x14] sm:$0xf]
      %v212 = vld [vmem:[%s1 + $0x18] sm:$0xf]
      %v213 = vld [vmem:[%s1 + $0x1c] sm:$0xf]
      %v214 = vld [vmem:[%s1 + $0x20] sm:$0xf]
      %v215 = vld [vmem:[%s1 + $0x24] sm:$0xf]
      %v216 = vld [vmem:[%s1 + $0x28] sm:$0xf]
      %v217 = vld [vmem:[%s1 + $0x2c] sm:$0xf]
      %v218 = vld [vmem:[%s1 + $0x30] sm:$0xf]
      %v219 = vld [vmem:[%s1 + $0x34] sm:$0xf]
      %v220 = vld [vmem:[%s1 + $0x38] sm:$0xf]
      %v221 = vld [vmem:[%s1 + $0x3c] sm:$0xf]
      %v222 = vld [vmem:[%s1 + $0x40] sm:$0xf]
      %v223 = vld [vmem:[%s1 + $0x44] sm:$0xf]
      %v224 = vld [vmem:[%s2] sm:$0x1]
      %v226 = vperm.slane %v224, 0
      %v256 = vunpack.c.l.b16 %v178
      %v257 = vunpack.c.h.b16 %v178
      %v258 = vunpack.c.l.b16 %v179
      %v259 = vunpack.c.h.b16 %v179
      %v260 = vunpack.c.l.b16 %v180
      %v261 = vunpack.c.h.b16 %v180
      %v262 = vunpack.c.l.b16 %v181
      %v263 = vunpack.c.h.b16 %v181
      %v264 = vunpack.c.l.b16 %v182
      %v265 = vunpack.c.h.b16 %v182
      %v266 = vunpack.c.l.b16 %v183
      %v267 = vunpack.c.h.b16 %v183
      %v268 = vunpack.c.l.b16 %v184
      %v269 = vunpack.c.h.b16 %v184
      %v270 = vunpack.c.l.b16 %v185
      %v271 = vunpack.c.h.b16 %v185
      %v272 = vunpack.c.l.b16 %v186
      %v273 = vunpack.c.h.b16 %v186
      %v274 = vunpack.c.l.b16 %v187
      %v275 = vunpack.c.h.b16 %v187
      %v276 = vunpack.c.l.b16 %v188
      %v277 = vunpack.c.h.b16 %v188
      %v278 = vunpack.c.l.b16 %v189
      %v279 = vunpack.c.h.b16 %v189
      %v280 = vunpack.c.l.b16 %v190
      %v281 = vunpack.c.h.b16 %v190
      %v282 = vunpack.c.l.b16 %v191
      %v283 = vunpack.c.h.b16 %v191
      %v284 = vunpack.c.l.b16 %v192
      %v285 = vunpack.c.h.b16 %v192
      %v286 = vunpack.c.l.b16 %v193
      %v287 = vunpack.c.h.b16 %v193
      %v288 = vunpack.c.l.b16 %v194
      %v289 = vunpack.c.h.b16 %v194
      %v290 = vunpack.c.l.b16 %v195
      %v291 = vunpack.c.h.b16 %v195
      %v292 = vunpack.c.l.b16 %v196
      %v293 = vunpack.c.h.b16 %v196
      %v294 = vunpack.c.l.b16 %v197
      %v295 = vunpack.c.h.b16 %v197
      %v296 = vunpack.c.l.b16 %v198
      %v297 = vunpack.c.h.b16 %v198
      %v298 = vunpack.c.l.b16 %v199
      %v299 = vunpack.c.h.b16 %v199
      %v300 = vunpack.c.l.b16 %v200
      %v301 = vunpack.c.h.b16 %v200
      %v302 = vunpack.c.l.b16 %v201
      %v303 = vunpack.c.h.b16 %v201
      %v304 = vunpack.c.l.b16 %v202
      %v305 = vunpack.c.h.b16 %v202
      %v306 = vunpack.c.l.b16 %v203
      %v307 = vunpack.c.h.b16 %v203
      %v308 = vunpack.c.l.b16 %v204
      %v309 = vunpack.c.h.b16 %v204
      %v310 = vunpack.c.l.b16 %v205
      %v311 = vunpack.c.h.b16 %v205
      %v312 = vpack.c.b16 %v258, %v256
      %v313 = vpack.c.b16 %v259, %v257
      %v314 = vpack.c.b16 %v262, %v260
      %v315 = vpack.c.b16 %v263, %v261
      %v316 = vpack.c.b16 %v266, %v264
      %v317 = vpack.c.b16 %v267, %v265
      %v318 = vpack.c.b16 %v270, %v268
      %v319 = vpack.c.b16 %v271, %v269
      %v320 = vpack.c.b16 %v274, %v272
      %v321 = vpack.c.b16 %v275, %v273
      %v322 = vpack.c.b16 %v278, %v276
      %v323 = vpack.c.b16 %v279, %v277
      %v324 = vpack.c.b16 %v282, %v280
      %v325 = vpack.c.b16 %v283, %v281
      %v326 = vpack.c.b16 %v286, %v284
      %v327 = vpack.c.b16 %v287, %v285
      %v328 = vpack.c.b16 %v290, %v288
      %v329 = vpack.c.b16 %v291, %v289
      %v330 = vpack.c.b16 %v294, %v292
      %v331 = vpack.c.b16 %v295, %v293
      %v332 = vpack.c.b16 %v298, %v296
      %v333 = vpack.c.b16 %v299, %v297
      %v334 = vpack.c.b16 %v302, %v300
      %v335 = vpack.c.b16 %v303, %v301
      %v336 = vpack.c.b16 %v306, %v304
      %v337 = vpack.c.b16 %v307, %v305
      %v338 = vpack.c.b16 %v310, %v308
      %v339 = vpack.c.b16 %v311, %v309
      %v372 = vunpack.c.l.b16 %v206
      %v373 = vunpack.c.l.b16 %v207
      %v374 = vunpack.c.l.b16 %v208
      %v375 = vunpack.c.l.b16 %v209
      %v376 = vunpack.c.l.b16 %v210
      %v377 = vunpack.c.l.b16 %v211
      %v378 = vunpack.c.l.b16 %v212
      %v379 = vunpack.c.l.b16 %v213
      %v380 = vunpack.c.l.b16 %v214
      %v381 = vunpack.c.l.b16 %v215
      %v382 = vunpack.c.l.b16 %v216
      %v383 = vunpack.c.l.b16 %v217
      %v384 = vunpack.c.l.b16 %v218
      %v385 = vunpack.c.l.b16 %v219
      %v386 = vunpack.c.l.b16 %v220
      %v387 = vunpack.c.l.b16 %v221
      %v388 = vunpack.c.l.b16 %v222
      %v389 = vunpack.c.l.b16 %v223
      %v390 = vpack.c.b16 %v373, %v372
      %v391 = vpack.c.b16 %v375, %v374
      %v392 = vpack.c.b16 %v377, %v376
      %v393 = vpack.c.b16 %v379, %v378
      %v394 = vpack.c.b16 %v381, %v380
      %v395 = vpack.c.b16 %v383, %v382
      %v396 = vpack.c.b16 %v385, %v384
      %v397 = vpack.c.b16 %v387, %v386
      %v398 = vpack.c.b16 %v389, %v388
      %vm408 = vcmask 130048
      %v410 = vsel %vm408, %v313, 0
      %v413 = vsel %vm408, %v315, 0
      %v416 = vsel %vm408, %v317, 0
      %v419 = vsel %vm408, %v319, 0
      %v422 = vsel %vm408, %v321, 0
      %v425 = vsel %vm408, %v323, 0
      %v428 = vsel %vm408, %v325, 0
      %v431 = vsel %vm408, %v327, 0
      %v434 = vsel %vm408, %v329, 0
      %v437 = vsel %vm408, %v331, 0
      %v440 = vsel %vm408, %v333, 0
      %v443 = vsel %vm408, %v335, 0
      %v446 = vsel %vm408, %v337, 0
      %v449 = vsel %vm408, %v339, 0
      %451 = vmatpush.bf16.msra.mxu0 %v397
      %452 = vmatpush.bf16.msra.mxu0 %v396
      %453 = vmatpush.bf16.msra.mxu0 %v395
      %454 = vmatpush.bf16.msra.mxu0 %v394
      %455 = vmatpush.bf16.msra.mxu0 %v393
      %456 = vmatpush.bf16.msra.mxu0 %v392
      %457 = vmatpush.bf16.msra.mxu0 %v391
      %458 = vmatpush.bf16.msra.mxu0 %v390
      %459 = vmatmul.bf16.gmra.mxu0 %v312
      %v460 = vpop.f32.mrf.mxu0
      %v461 = vadd.f32 %v226, %v460
      %v462 = vpop.f32.mrf.mxu0
      %v463 = vadd.f32 %v226, %v462
      %464 = vmatmul.bf16.gmra.mxu0 %v314
      %v465 = vpop.f32.mrf.mxu0
      %v466 = vadd.f32 %v226, %v465
      %v467 = vpop.f32.mrf.mxu0
      %v468 = vadd.f32 %v226, %v467
      %469 = vmatmul.bf16.gmra.mxu0 %v316
      %v470 = vpop.f32.mrf.mxu0
      %v471 = vadd.f32 %v226, %v470
      %v472 = vpop.f32.mrf.mxu0
      %v473 = vadd.f32 %v226, %v472
      %474 = vmatmul.bf16.gmra.mxu0 %v318
      %v475 = vpop.f32.mrf.mxu0
      %v476 = vadd.f32 %v226, %v475
      %v477 = vpop.f32.mrf.mxu0
      %v478 = vadd.f32 %v226, %v477
      %479 = vmatmul.bf16.gmra.mxu0 %v320
      %v480 = vpop.f32.mrf.mxu0
      %v481 = vadd.f32 %v226, %v480
      %v482 = vpop.f32.mrf.mxu0
      %v483 = vadd.f32 %v226, %v482
      %484 = vmatmul.bf16.gmra.mxu0 %v322
      %v485 = vpop.f32.mrf.mxu0
      %v486 = vadd.f32 %v226, %v485
      %v487 = vpop.f32.mrf.mxu0
      %v488 = vadd.f32 %v226, %v487
      %489 = vmatmul.bf16.gmra.mxu0 %v324
      %v490 = vpop.f32.mrf.mxu0
      %v491 = vadd.f32 %v226, %v490
      %v492 = vpop.f32.mrf.mxu0
      %v493 = vadd.f32 %v226, %v492
      %494 = vmatmul.bf16.gmra.mxu0 %v326
      %v495 = vpop.f32.mrf.mxu0
      %v496 = vadd.f32 %v226, %v495
      %v497 = vpop.f32.mrf.mxu0
      %v498 = vadd.f32 %v226, %v497
      %499 = vmatmul.bf16.gmra.mxu0 %v328
      %v500 = vpop.f32.mrf.mxu0
      %v501 = vadd.f32 %v226, %v500
      %v502 = vpop.f32.mrf.mxu0
      %v503 = vadd.f32 %v226, %v502
      %504 = vmatmul.bf16.gmra.mxu0 %v330
      %v505 = vpop.f32.mrf.mxu0
      %v506 = vadd.f32 %v226, %v505
      %v507 = vpop.f32.mrf.mxu0
      %v508 = vadd.f32 %v226, %v507
      %509 = vmatmul.bf16.gmra.mxu0 %v332
      %v510 = vpop.f32.mrf.mxu0
      %v511 = vadd.f32 %v226, %v510
      %v512 = vpop.f32.mrf.mxu0
      %v513 = vadd.f32 %v226, %v512
      %514 = vmatmul.bf16.gmra.mxu0 %v334
      %v515 = vpop.f32.mrf.mxu0
      %v516 = vadd.f32 %v226, %v515
      %v517 = vpop.f32.mrf.mxu0
      %v518 = vadd.f32 %v226, %v517
      %519 = vmatmul.bf16.gmra.mxu0 %v336
      %v520 = vpop.f32.mrf.mxu0
      %v521 = vadd.f32 %v226, %v520
      %v522 = vpop.f32.mrf.mxu0
      %v523 = vadd.f32 %v226, %v522
      %524 = vmatmul.bf16.gmra.mxu0 %v338
      %v525 = vpop.f32.mrf.mxu0
      %v526 = vadd.f32 %v226, %v525
      %v527 = vpop.f32.mrf.mxu0
      %v528 = vadd.f32 %v226, %v527
      %529 = vdwg.mxu0
      %530 = vmatpush.bf16.msra.mxu0 0
      %531 = vmatpush.bf16.msra.mxu0 0
      %532 = vmatpush.bf16.msra.mxu0 0
      %533 = vmatpush.bf16.msra.mxu0 0
      %534 = vmatpush.bf16.msra.mxu0 0
      %535 = vmatpush.bf16.msra.mxu0 0
      %536 = vmatpush.bf16.msra.mxu0 0
      %537 = vmatpush.bf16.msra.mxu0 %v398
      %538 = vmatmul.bf16.gmra.mxu0 %v410
      %v539 = vpop.f32.mrf.mxu0
      %v540 = vadd.f32 %v461, %v539
      %v541 = vpop.f32.mrf.mxu0
      %v542 = vadd.f32 %v463, %v541
      %543 = vmatmul.bf16.gmra.mxu0 %v413
      %v544 = vpop.f32.mrf.mxu0
      %v545 = vadd.f32 %v466, %v544
      %v546 = vpop.f32.mrf.mxu0
      %v547 = vadd.f32 %v468, %v546
      %548 = vmatmul.bf16.gmra.mxu0 %v416
      %v549 = vpop.f32.mrf.mxu0
      %v550 = vadd.f32 %v471, %v549
      %v551 = vpop.f32.mrf.mxu0
      %v552 = vadd.f32 %v473, %v551
      %553 = vmatmul.bf16.gmra.mxu0 %v419
      %v554 = vpop.f32.mrf.mxu0
      %v555 = vadd.f32 %v476, %v554
      %v556 = vpop.f32.mrf.mxu0
      %v557 = vadd.f32 %v478, %v556
      %558 = vmatmul.bf16.gmra.mxu0 %v422
      %v559 = vpop.f32.mrf.mxu0
      %v560 = vadd.f32 %v481, %v559
      %v561 = vpop.f32.mrf.mxu0
      %v562 = vadd.f32 %v483, %v561
      %563 = vmatmul.bf16.gmra.mxu0 %v425
      %v564 = vpop.f32.mrf.mxu0
      %v565 = vadd.f32 %v486, %v564
      %v566 = vpop.f32.mrf.mxu0
      %v567 = vadd.f32 %v488, %v566
      %568 = vmatmul.bf16.gmra.mxu0 %v428
      %v569 = vpop.f32.mrf.mxu0
      %v570 = vadd.f32 %v491, %v569
      %v571 = vpop.f32.mrf.mxu0
      %v572 = vadd.f32 %v493, %v571
      %573 = vmatmul.bf16.gmra.mxu0 %v431
      %v574 = vpop.f32.mrf.mxu0
      %v575 = vadd.f32 %v496, %v574
      %v576 = vpop.f32.mrf.mxu0
      %v577 = vadd.f32 %v498, %v576
      %578 = vmatmul.bf16.gmra.mxu0 %v434
      %v579 = vpop.f32.mrf.mxu0
      %v580 = vadd.f32 %v501, %v579
      %v581 = vpop.f32.mrf.mxu0
      %v582 = vadd.f32 %v503, %v581
      %583 = vmatmul.bf16.gmra.mxu0 %v437
      %v584 = vpop.f32.mrf.mxu0
      %v585 = vadd.f32 %v506, %v584
      %v586 = vpop.f32.mrf.mxu0
      %v587 = vadd.f32 %v508, %v586
      %588 = vmatmul.bf16.gmra.mxu0 %v440
      %v589 = vpop.f32.mrf.mxu0
      %v590 = vadd.f32 %v511, %v589
      %v591 = vpop.f32.mrf.mxu0
      %v592 = vadd.f32 %v513, %v591
      %593 = vmatmul.bf16.gmra.mxu0 %v443
      %v594 = vpop.f32.mrf.mxu0
      %v595 = vadd.f32 %v516, %v594
      %v596 = vpop.f32.mrf.mxu0
      %v597 = vadd.f32 %v518, %v596
      %598 = vmatmul.bf16.gmra.mxu0 %v446
      %v599 = vpop.f32.mrf.mxu0
      %v600 = vadd.f32 %v521, %v599
      %v601 = vpop.f32.mrf.mxu0
      %v602 = vadd.f32 %v523, %v601
      %603 = vmatmul.bf16.gmra.mxu0 %v449
      %v604 = vpop.f32.mrf.mxu0
      %v605 = vadd.f32 %v526, %v604
      %v606 = vpop.f32.mrf.mxu0
      %v607 = vadd.f32 %v528, %v606
      %608 = vdwg.mxu0
      %vm609 = vcmask 523264
      %610 = vst.msk [vmem:[%s175] sm:$0xff] %vm609, %v540
      %611 = vst.msk [vmem:[%s175 + $0x8] sm:$0xff] %vm609, %v542
      %612 = vst.msk [vmem:[%s175 + $0x10] sm:$0xff] %vm609, %v545
      %613 = vst.msk [vmem:[%s175 + $0x18] sm:$0xff] %vm609, %v547
      %614 = vst.msk [vmem:[%s175 + $0x20] sm:$0xff] %vm609, %v550
      %615 = vst.msk [vmem:[%s175 + $0x28] sm:$0xff] %vm609, %v552
      %616 = vst.msk [vmem:[%s175 + $0x30] sm:$0xff] %vm609, %v555
      %617 = vst.msk [vmem:[%s175 + $0x38] sm:$0xff] %vm609, %v557
      %618 = vst.msk [vmem:[%s175 + $0x40] sm:$0xff] %vm609, %v560
      %619 = vst.msk [vmem:[%s175 + $0x48] sm:$0xff] %vm609, %v562
      %620 = vst.msk [vmem:[%s175 + $0x50] sm:$0xff] %vm609, %v565
      %621 = vst.msk [vmem:[%s175 + $0x58] sm:$0xff] %vm609, %v567
      %622 = vst.msk [vmem:[%s175 + $0x60] sm:$0xff] %vm609, %v570
      %623 = vst.msk [vmem:[%s175 + $0x68] sm:$0xff] %vm609, %v572
      %624 = vst.msk [vmem:[%s175 + $0x70] sm:$0xff] %vm609, %v575
      %625 = vst.msk [vmem:[%s175 + $0x78] sm:$0xff] %vm609, %v577
      %626 = vst.msk [vmem:[%s175 + $0x80] sm:$0xff] %vm609, %v580
      %627 = vst.msk [vmem:[%s175 + $0x88] sm:$0xff] %vm609, %v582
      %628 = vst.msk [vmem:[%s175 + $0x90] sm:$0xff] %vm609, %v585
      %629 = vst.msk [vmem:[%s175 + $0x98] sm:$0xff] %vm609, %v587
      %630 = vst.msk [vmem:[%s175 + $0xa0] sm:$0xff] %vm609, %v590
      %631 = vst.msk [vmem:[%s175 + $0xa8] sm:$0xff] %vm609, %v592
      %632 = vst.msk [vmem:[%s175 + $0xb0] sm:$0xff] %vm609, %v595
      %633 = vst.msk [vmem:[%s175 + $0xb8] sm:$0xff] %vm609, %v597
      %634 = vst.msk [vmem:[%s175 + $0xc0] sm:$0xff] %vm609, %v600
      %635 = vst.msk [vmem:[%s175 + $0xc8] sm:$0xff] %vm609, %v602
      %636 = vst.msk [vmem:[%s175 + $0xd0] sm:$0xff] %vm609, %v605
      %637 = vst.msk [vmem:[%s175 + $0xd8] sm:$0xff] %vm609, %v607
      %s638 = smul.u32 28, %s14
      %p639 = scmp.lt.s32.totalorder %s638, 195
      %s640 = scalar_select %p639, %s638, 195
      %s641 = smul.addr %s640, 8
      %s642 = scalar_lea.vmem %s3, %s641
      // Predicated region
      $region33: #{raft_plus_dicl_forward.61} parent=31 // pred_check
        %p643 = pneg %p100
      $region34: #{raft_plus_dicl_forward.61} parent=31 // pred_check_branch
        %645 = sbr.rel (%p643) target = $region36
      $region35: #{raft_plus_dicl_forward.61} parent=31 // pred_region
        %s646 = smul.u32 28, %s14
      $region36: #{raft_plus_dicl_forward.61} parent=31 // pred_fallthru
        _
    $region32: #{raft_plus_dicl_forward.61} parent=5 // pred_fallthru
      _
    %p647 = scmp.le.s32.totalorder 2, %s9
    // Predicated region
    $region37: #{raft_plus_dicl_forward.61} parent=5 // pred_check
      %p648 = pneg %p647
    $region38: #{raft_plus_dicl_forward.61} parent=5 // pred_check_branch
      %650 = sbr.rel (%p648) target = $region40
    $region39: #{raft_plus_dicl_forward.61} parent=5 // pred_region
      %s651 = ssub.s32 %s9, 2
      // Predicated region
      $region41: #{raft_plus_dicl_forward.61} parent=39 // pred_check
        %p652 = pneg %p106
      $region42: #{raft_plus_dicl_forward.61} parent=39 // pred_check_branch
        %654 = sbr.rel (%p652) target = $region44
      $region43: #{raft_plus_dicl_forward.61} parent=39 // pred_region
        %s655 = smul.u32 28, %s15
        %p656 = scmp.lt.s32.totalorder %s655, 195
        %s657 = scalar_select %p656, %s655, 195
        %s658 = smul.addr %s657, 8
        %s659 = scalar_lea.vmem %s3, %s658
      $region44: #{raft_plus_dicl_forward.61} parent=39 // pred_fallthru
        _
    $region40: #{raft_plus_dicl_forward.61} parent=5 // pred_fallthru
      _
  $region6: #{raft_plus_dicl_forward.61} parent=0 // loop_footer
    %s13 = sadd.s32 1, %s9
  $region7: #{raft_plus_dicl_forward.61} parent=0 // loop_footer_branch
    %8 = sbr.rel target = $region3
  $region8: #{raft_plus_dicl_forward.61} parent=0 // loop_exit
    _

// kernel: raft_plus_dicl_forward.60
$region0: #{raft_plus_dicl_forward.60}
  #allocation0 [shape = 'u32[]', space=smem, size = 0x4, offset = 0x4, fixed_abs, tag = 'smem constant byte address 0x4 - core index']
  #allocation1 [shape = 'u32[72,128]{1,0:T(1,128)}', space=vmem, size = 0x9000, scoped, tag = 'internal scratch']
  %s0 = inlined_call_operand.vmem [shape: bf16[32,144], index: 0, kind: input, shape index: {}]
  %s1 = inlined_call_operand.vmem [shape: bf16[144,64], index: 1, kind: input, shape index: {}]
  %s2 = inlined_call_operand.vmem [shape: f32[1,64], index: 2, kind: input, shape index: {}]
  %s3 = inlined_call_operand.vmem [shape: f32[32,64], index: 3, kind: output, shape index: {}]
  %s4 = sld [smem:[#allocation0]]
  $region22: #{raft_plus_dicl_forward.60} parent=0
    _
  %s6 = ssub.s32 1, %s4
  %s7 = scalar_select 0, %s6, %s4
  // Predicated region
  $region2: #{raft_plus_dicl_forward.60} parent=0 // pred_check
    _
  $region3: #{raft_plus_dicl_forward.60} parent=0 // pred_check_branch
    %9 = sbr.rel (0) target = $region5
  $region4: #{raft_plus_dicl_forward.60} parent=0 // pred_region
    _
  $region5: #{raft_plus_dicl_forward.60} parent=0 // pred_fallthru
    _
  // Predicated region
  $region6: #{raft_plus_dicl_forward.60} parent=0 // pred_check
    _
  $region7: #{raft_plus_dicl_forward.60} parent=0 // pred_check_branch
    %11 = sbr.rel (0) target = $region9
  $region8: #{raft_plus_dicl_forward.60} parent=0 // pred_region
    _
  $region9: #{raft_plus_dicl_forward.60} parent=0 // pred_fallthru
    _
  // Predicated region
  $region10: #{raft_plus_dicl_forward.60} parent=0 // pred_check
    _
  $region11: #{raft_plus_dicl_forward.60} parent=0 // pred_check_branch
    %13 = sbr.rel (0) target = $region13
  $region12: #{raft_plus_dicl_forward.60} parent=0 // pred_region
    _
  $region13: #{raft_plus_dicl_forward.60} parent=0 // pred_fallthru
    _
  %v15 = vld [vmem:[%s0] sm:$0xff]
  %v16 = vld [vmem:[%s0 + $0x8] sm:$0xff]
  %v17 = vld [vmem:[%s0 + $0x10] sm:$0xff]
  %v18 = vld [vmem:[%s0 + $0x18] sm:$0xff]
  %v19 = vld [vmem:[%s1] sm:$0xf]
  %v20 = vld [vmem:[%s1 + $0x4] sm:$0xf]
  %v21 = vld [vmem:[%s1 + $0x8] sm:$0xf]
  %v22 = vld [vmem:[%s1 + $0xc] sm:$0xf]
  %v23 = vld [vmem:[%s1 + $0x10] sm:$0xf]
  %v24 = vld [vmem:[%s1 + $0x14] sm:$0xf]
  %v25 = vld [vmem:[%s1 + $0x18] sm:$0xf]
  %v26 = vld [vmem:[%s1 + $0x1c] sm:$0xf]
  %v27 = vld [vmem:[%s1 + $0x20] sm:$0xf]
  %v28 = vld [vmem:[%s1 + $0x24] sm:$0xf]
  %v29 = vld [vmem:[%s1 + $0x28] sm:$0xf]
  %v30 = vld [vmem:[%s1 + $0x2c] sm:$0xf]
  %v31 = vld [vmem:[%s1 + $0x30] sm:$0xf]
  %v32 = vld [vmem:[%s1 + $0x34] sm:$0xf]
  %v33 = vld [vmem:[%s1 + $0x38] sm:$0xf]
  %v34 = vld [vmem:[%s1 + $0x3c] sm:$0xf]
  %v35 = vld [vmem:[%s1 + $0x40] sm:$0xf]
  %v36 = vld [vmem:[%s1 + $0x44] sm:$0xf]
  %v37 = vld [vmem:[%s2] sm:$0x1]
  %v39 = vperm.slane %v37, 0
  %v45 = vunpack.c.l.b16 %v15
  %v46 = vunpack.c.h.b16 %v15
  %v47 = vunpack.c.l.b16 %v16
  %v48 = vunpack.c.h.b16 %v16
  %v49 = vunpack.c.l.b16 %v17
  %v50 = vunpack.c.h.b16 %v17
  %v51 = vunpack.c.l.b16 %v18
  %v52 = vunpack.c.h.b16 %v18
  %v53 = vpack.c.b16 %v47, %v45
  %v54 = vpack.c.b16 %v48, %v46
  %v55 = vpack.c.b16 %v51, %v49
  %v56 = vpack.c.b16 %v52, %v50
  %v77 = vunpack.c.l.b16 %v19
  %v78 = vunpack.c.l.b16 %v20
  %v79 = vunpack.c.l.b16 %v21
  %v80 = vunpack.c.l.b16 %v22
  %v81 = vunpack.c.l.b16 %v23
  %v82 = vunpack.c.l.b16 %v24
  %v83 = vunpack.c.l.b16 %v25
  %v84 = vunpack.c.l.b16 %v26
  %v85 = vunpack.c.l.b16 %v27
  %v86 = vunpack.c.l.b16 %v28
  %v87 = vunpack.c.l.b16 %v29
  %v88 = vunpack.c.l.b16 %v30
  %v89 = vunpack.c.l.b16 %v31
  %v90 = vunpack.c.l.b16 %v32
  %v91 = vunpack.c.l.b16 %v33
  %v92 = vunpack.c.l.b16 %v34
  %v93 = vunpack.c.l.b16 %v35
  %v94 = vunpack.c.l.b16 %v36
  %v95 = vpack.c.b16 %v78, %v77
  %v96 = vpack.c.b16 %v80, %v79
  %v97 = vpack.c.b16 %v82, %v81
  %v98 = vpack.c.b16 %v84, %v83
  %v99 = vpack.c.b16 %v86, %v85
  %v100 = vpack.c.b16 %v88, %v87
  %v101 = vpack.c.b16 %v90, %v89
  %v102 = vpack.c.b16 %v92, %v91
  %v103 = vpack.c.b16 %v94, %v93
  %vm113 = vcmask 130048
  %v115 = vsel %vm113, %v54, 0
  %v118 = vsel %vm113, %v56, 0
  %120 = vmatpush.bf16.msra.mxu0 %v102
  %121 = vmatpush.bf16.msra.mxu0 %v101
  %122 = vmatpush.bf16.msra.mxu0 %v100
  %123 = vmatpush.bf16.msra.mxu0 %v99
  %124 = vmatpush.bf16.msra.mxu0 %v98
  %125 = vmatpush.bf16.msra.mxu0 %v97
  %126 = vmatpush.bf16.msra.mxu0 %v96
  %127 = vmatpush.bf16.msra.mxu0 %v95
  %128 = vmatmul.bf16.gmra.mxu0 %v53
  %v129 = vpop.f32.mrf.mxu0
  %v130 = vadd.f32 %v39, %v129
  %v131 = vpop.f32.mrf.mxu0
  %v132 = vadd.f32 %v39, %v131
  %133 = vmatmul.bf16.gmra.mxu0 %v55
  %v134 = vpop.f32.mrf.mxu0
  %v135 = vadd.f32 %v39, %v134
  %v136 = vpop.f32.mrf.mxu0
  %v137 = vadd.f32 %v39, %v136
  %138 = vdwg.mxu0
  %139 = vmatpush.bf16.msra.mxu0 0
  %140 = vmatpush.bf16.msra.mxu0 0
  %141 = vmatpush.bf16.msra.mxu0 0
  %142 = vmatpush.bf16.msra.mxu0 0
  %143 = vmatpush.bf16.msra.mxu0 0
  %144 = vmatpush.bf16.msra.mxu0 0
  %145 = vmatpush.bf16.msra.mxu0 0
  %146 = vmatpush.bf16.msra.mxu0 %v103
  %147 = vmatmul.bf16.gmra.mxu0 %v115
  %v148 = vpop.f32.mrf.mxu0
  %v149 = vadd.f32 %v130, %v148
  %v150 = vpop.f32.mrf.mxu0
  %v151 = vadd.f32 %v132, %v150
  %152 = vmatmul.bf16.gmra.mxu0 %v118
  %v153 = vpop.f32.mrf.mxu0
  %v154 = vadd.f32 %v135, %v153
  %v155 = vpop.f32.mrf.mxu0
  %v156 = vadd.f32 %v137, %v155
  %157 = vdwg.mxu0
  %vm158 = vcmask 523264
  %159 = vst.msk [vmem:[%s3] sm:$0xff] %vm158, %v149
  %160 = vst.msk [vmem:[%s3 + $0x8] sm:$0xff] %vm158, %v151
  %161 = vst.msk [vmem:[%s3 + $0x10] sm:$0xff] %vm158, %v154
  %162 = vst.msk [vmem:[%s3 + $0x18] sm:$0xff] %vm158, %v156
  // Predicated region
  $region14: #{raft_plus_dicl_forward.60} parent=0 // pred_check
    _
  $region15: #{raft_plus_dicl_forward.60} parent=0 // pred_check_branch
    %164 = sbr.rel (0) target = $region17
  $region16: #{raft_plus_dicl_forward.60} parent=0 // pred_region
    _
  $region17: #{raft_plus_dicl_forward.60} parent=0 // pred_fallthru
    _
  // Predicated region
  $region18: #{raft_plus_dicl_forward.60} parent=0 // pred_check
    _
  $region19: #{raft_plus_dicl_forward.60} parent=0 // pred_check_branch
    %166 = sbr.rel (0) target = $region21
  $region20: #{raft_plus_dicl_forward.60} parent=0 // pred_region
    _
  $region21: #{raft_plus_dicl_forward.60} parent=0 // pred_fallthru
    _

// kernel: raft_plus_dicl_forward.62
$region0: #{raft_plus_dicl_forward.62}
  #allocation0 [shape = 'u32[]', space=smem, size = 0x4, offset = 0x4, fixed_abs, tag = 'smem constant byte address 0x4 - core index']
  #allocation1 [shape = 'u32[72,128]{1,0:T(1,128)}', space=vmem, size = 0x9000, scoped, tag = 'internal scratch']
  %s0 = inlined_call_operand.vmem [shape: bf16[1568,576], index: 0, kind: input, shape index: {}]
  %s1 = inlined_call_operand.vmem [shape: bf16[576,32], index: 1, kind: input, shape index: {}]
  %s2 = inlined_call_operand.vmem [shape: f32[1,32], index: 2, kind: input, shape index: {}]
  %s3 = inlined_call_operand.vmem [shape: f32[1568,32], index: 3, kind: output, shape index: {}]
  %s4 = sld [smem:[#allocation0]]
  $region45: #{raft_plus_dicl_forward.62} parent=0
    _
  %s6 = ssub.s32 1, %s4
  %s7 = scalar_select 0, %s6, %s4
  loop: start=0, step=1, limit=9
  $region2: #{raft_plus_dicl_forward.62} parent=0 // loop_pre_header
    _
  $region3: #{raft_plus_dicl_forward.62} parent=0 // loop_header
    %s9 = sphi 0, %s13
    %p10 = scmp.ge.s32.totalorder %s9, 9
    %s19 = sphi 0, %s21
    %s22 = sphi 0, %s19
    %s23 = sphi 0, %s22
    %s39 = sphi 0, %s23
    %s43 = sphi 0, %s43
    %s45 = sphi 0, %s43
    %s46 = sphi 0, %s45
    %s60 = sphi 0, %s46
    %s64 = sphi 0, %s64
    %s66 = sphi 0, %s64
    %s67 = sphi 0, %s66
    %s81 = sphi 0, %s67
    %s87 = sphi 0, %s89
    %s90 = sphi 0, %s87
    %s91 = sphi 0, %s90
    %s107 = sphi 0, %s91
  $region4: #{raft_plus_dicl_forward.62} parent=0 // loop_header_branch
    %12 = sbr.rel (%p10) target = $region8
  $region5: #{raft_plus_dicl_forward.62} parent=0 // loop_body
    %s14 = ssub.s32 %s9, 1
    %s15 = ssub.s32 %s9, 2
    %s16 = sadd.s32 %s9, 1
    %s17 = ssub.s32 %s9, %s16
    %p18 = scmp.eq.s32.totalorder %s17, 0
    %s20 = sadd.s32 %s19, 1
    %s21 = scalar_select %p18, %s19, %s20
    %p24 = pneg %p18
    %p25 = scmp.eq.s32.totalorder %s9, 6
    %p26 = por %p24, %p25
    %p27 = scmp.ne.s32.totalorder %s19, %s22
    %p28 = scmp.eq.s32.totalorder %s9, 0
    %p29 = por %p27, %p28
    %p30 = scmp.ne.s32.totalorder %s19, %s22
    %p31 = scmp.eq.s32.totalorder %s14, 6
    %p32 = por %p30, %p31
    %p33 = scmp.ne.s32.totalorder %s22, %s23
    %p34 = scmp.eq.s32.totalorder %s14, 0
    %p35 = por %p33, %p34
    %p36 = scmp.ne.s32.totalorder %s22, %s23
    %p37 = scmp.eq.s32.totalorder %s15, 6
    %p38 = por %p36, %p37
    %p40 = scmp.ne.s32.totalorder %s23, %s39
    %p41 = scmp.eq.s32.totalorder %s15, 0
    %p42 = por %p40, %p41
    %s44 = sadd.s32 %s43, 1
    %p47 = scmp.eq.s32.totalorder %s9, 6
    %p48 = scmp.ne.s32.totalorder %s43, %s45
    %p49 = scmp.eq.s32.totalorder %s9, 0
    %p50 = por %p48, %p49
    %p51 = scmp.ne.s32.totalorder %s43, %s45
    %p52 = scmp.eq.s32.totalorder %s14, 6
    %p53 = por %p51, %p52
    %p54 = scmp.ne.s32.totalorder %s45, %s46
    %p55 = scmp.eq.s32.totalorder %s14, 0
    %p56 = por %p54, %p55
    %p57 = scmp.ne.s32.totalorder %s45, %s46
    %p58 = scmp.eq.s32.totalorder %s15, 6
    %p59 = por %p57, %p58
    %p61 = scmp.ne.s32.totalorder %s46, %s60
    %p62 = scmp.eq.s32.totalorder %s15, 0
    %p63 = por %p61, %p62
    %s65 = sadd.s32 %s64, 1
    %p68 = scmp.eq.s32.totalorder %s9, 6
    %p69 = scmp.ne.s32.totalorder %s64, %s66
    %p70 = scmp.eq.s32.totalorder %s9, 0
    %p71 = por %p69, %p70
    %p72 = scmp.ne.s32.totalorder %s64, %s66
    %p73 = scmp.eq.s32.totalorder %s14, 6
    %p74 = por %p72, %p73
    %p75 = scmp.ne.s32.totalorder %s66, %s67
    %p76 = scmp.eq.s32.totalorder %s14, 0
    %p77 = por %p75, %p76
    %p78 = scmp.ne.s32.totalorder %s66, %s67
    %p79 = scmp.eq.s32.totalorder %s15, 6
    %p80 = por %p78, %p79
    %p82 = scmp.ne.s32.totalorder %s67, %s81
    %p83 = scmp.eq.s32.totalorder %s15, 0
    %p84 = por %p82, %p83
    %s85 = ssub.s32 %s9, %s16
    %p86 = scmp.eq.s32.totalorder %s85, 0
    %s88 = sadd.s32 %s87, 1
    %s89 = scalar_select %p86, %s87, %s88
    %p92 = pneg %p86
    %p93 = scmp.eq.s32.totalorder %s9, 6
    %p94 = por %p92, %p93
    %p95 = scmp.ne.s32.totalorder %s87, %s90
    %p96 = scmp.eq.s32.totalorder %s9, 0
    %p97 = por %p95, %p96
    %p98 = scmp.ne.s32.totalorder %s87, %s90
    %p99 = scmp.eq.s32.totalorder %s14, 6
    %p100 = por %p98, %p99
    %p101 = scmp.ne.s32.totalorder %s90, %s91
    %p102 = scmp.eq.s32.totalorder %s14, 0
    %p103 = por %p101, %p102
    %p104 = scmp.ne.s32.totalorder %s90, %s91
    %p105 = scmp.eq.s32.totalorder %s15, 6
    %p106 = por %p104, %p105
    %p108 = scmp.ne.s32.totalorder %s91, %s107
    %p109 = scmp.eq.s32.totalorder %s15, 0
    %p110 = por %p108, %p109
    %p111 = scmp.le.s32.totalorder 1, %s9
    %p112 = scmp.lt.s32.totalorder %s9, 8
    %p113 = pnand %p111, %p112
    %p114 = pneg %p113
    // Predicated region
    $region9: #{raft_plus_dicl_forward.62} parent=5 // pred_check
      _
    $region10: #{raft_plus_dicl_forward.62} parent=5 // pred_check_branch
      %116 = sbr.rel (%p113) target = $region12
    $region11: #{raft_plus_dicl_forward.62} parent=5 // pred_region
      %s117 = ssub.s32 %s9, 1
      // Predicated region
      $region13: #{raft_plus_dicl_forward.62} parent=11 // pred_check
        %p118 = pneg %p56
      $region14: #{raft_plus_dicl_forward.62} parent=11 // pred_check_branch
        %120 = sbr.rel (%p118) target = $region16
      $region15: #{raft_plus_dicl_forward.62} parent=11 // pred_region
        _
      $region16: #{raft_plus_dicl_forward.62} parent=11 // pred_fallthru
        _
      // Predicated region
      $region17: #{raft_plus_dicl_forward.62} parent=11 // pred_check
        %p121 = pneg %p77
      $region18: #{raft_plus_dicl_forward.62} parent=11 // pred_check_branch
        %123 = sbr.rel (%p121) target = $region20
      $region19: #{raft_plus_dicl_forward.62} parent=11 // pred_region
        _
      $region20: #{raft_plus_dicl_forward.62} parent=11 // pred_fallthru
        _
    $region12: #{raft_plus_dicl_forward.62} parent=5 // pred_fallthru
      _
    %p124 = scmp.lt.s32.totalorder %s9, 7
    // Predicated region
    $region21: #{raft_plus_dicl_forward.62} parent=5 // pred_check
      %p125 = pneg %p124
    $region22: #{raft_plus_dicl_forward.62} parent=5 // pred_check_branch
      %127 = sbr.rel (%p125) target = $region24
    $region23: #{raft_plus_dicl_forward.62} parent=5 // pred_region
      // Predicated region
      $region25: #{raft_plus_dicl_forward.62} parent=23 // pred_check
        %p128 = pneg %p29
      $region26: #{raft_plus_dicl_forward.62} parent=23 // pred_check_branch
        %130 = sbr.rel (%p128) target = $region28
      $region27: #{raft_plus_dicl_forward.62} parent=23 // pred_region
        %s131 = smul.u32 28, %s9
        %p132 = scmp.lt.s32.totalorder %s131, 195
        %s133 = scalar_select %p132, %s131, 195
        %s134 = smul.addr %s133, 5
        %s135 = smul.addr %s134, 4
        %s136 = scalar_lea.vmem %s0, %s135
        %s137 = smul.u32 28, %s9
      $region28: #{raft_plus_dicl_forward.62} parent=23 // pred_fallthru
        _
    $region24: #{raft_plus_dicl_forward.62} parent=5 // pred_fallthru
      _
    %p138 = scmp.le.s32.totalorder 1, %s9
    %p139 = scmp.lt.s32.totalorder %s9, 8
    %p140 = pnand %p138, %p139
    %p141 = pneg %p140
    // Predicated region
    $region29: #{raft_plus_dicl_forward.62} parent=5 // pred_check
      _
    $region30: #{raft_plus_dicl_forward.62} parent=5 // pred_check_branch
      %143 = sbr.rel (%p140) target = $region32
    $region31: #{raft_plus_dicl_forward.62} parent=5 // pred_region
      %s144 = ssub.s32 %s9, 1
      %s145 = smul.u32 28, %s14
      %p146 = scmp.lt.s32.totalorder %s145, 195
      %s147 = scalar_select %p146, %s145, 195
      %s148 = smul.addr %s147, 5
      %s149 = smul.addr %s148, 4
      %s150 = scalar_lea.vmem %s0, %s149
      %p151 = pneg %p35
      %p152 = pneg %p32
      %p153 = pneg %p56
      %p154 = pneg %p53
      %p155 = pneg %p77
      %p156 = pneg %p74
      %p157 = pneg %p103
      %p158 = pneg %p100
      %s159 = smul.u32 28, %s14
      %p160 = scmp.lt.s32.totalorder %s159, 195
      %s161 = scalar_select %p160, %s159, 195
      %s162 = smul.addr %s161, 8
      %s163 = scalar_lea.vmem %s3, %s162
      %s164 = smul.u32 28, %s14
      %p165 = scmp.lt.s32.totalorder %s164, 195
      %s166 = scalar_select %p165, %s164, 195
      %s167 = smul.addr %s166, 5
      %s168 = smul.addr %s167, 4
      %s169 = scalar_lea.vmem %s0, %s168
      %s170 = smul.u32 28, %s14
      %s171 = smul.u32 28, %s14
      %p172 = scmp.lt.s32.totalorder %s171, 195
      %s173 = scalar_select %p172, %s171, 195
      %s174 = smul.addr %s173, 8
      %s175 = scalar_lea.vmem %s3, %s174
      %s176 = smul.u32 28, %s14
      %v178 = vld [vmem:[%s169] sm:$0xff]
      %v179 = vld [vmem:[%s169 + $0x8] sm:$0xff]
      %v180 = vld [vmem:[%s169 + $0x10] sm:$0xf]
      %v181 = vld [vmem:[%s169 + $0x14] sm:$0xff]
      %v182 = vld [vmem:[%s169 + $0x1c] sm:$0xff]
      %v183 = vld [vmem:[%s169 + $0x24] sm:$0xf]
      %v184 = vld [vmem:[%s169 + $0x28] sm:$0xff]
      %v185 = vld [vmem:[%s169 + $0x30] sm:$0xff]
      %v186 = vld [vmem:[%s169 + $0x38] sm:$0xf]
      %v187 = vld [vmem:[%s169 + $0x3c] sm:$0xff]
      %v188 = vld [vmem:[%s169 + $0x44] sm:$0xff]
      %v189 = vld [vmem:[%s169 + $0x4c] sm:$0xf]
      %v190 = vld [vmem:[%s169 + $0x50] sm:$0xff]
      %v191 = vld [vmem:[%s169 + $0x58] sm:$0xff]
      %v192 = vld [vmem:[%s169 + $0x60] sm:$0xf]
      %v193 = vld [vmem:[%s169 + $0x64] sm:$0xff]
      %v194 = vld [vmem:[%s169 + $0x6c] sm:$0xff]
      %v195 = vld [vmem:[%s169 + $0x74] sm:$0xf]
      %v196 = vld [vmem:[%s169 + $0x78] sm:$0xff]
      %v197 = vld [vmem:[%s169 + $0x80] sm:$0xff]
      %v198 = vld [vmem:[%s169 + $0x88] sm:$0xf]
      %v199 = vld [vmem:[%s169 + $0x8c] sm:$0xff]
      %v200 = vld [vmem:[%s169 + $0x94] sm:$0xff]
      %v201 = vld [vmem:[%s169 + $0x9c] sm:$0xf]
      %v202 = vld [vmem:[%s169 + $0xa0] sm:$0xff]
      %v203 = vld [vmem:[%s169 + $0xa8] sm:$0xff]
      %v204 = vld [vmem:[%s169 + $0xb0] sm:$0xf]
      %v205 = vld [vmem:[%s169 + $0xb4] sm:$0xff]
      %v206 = vld [vmem:[%s169 + $0xbc] sm:$0xff]
      %v207 = vld [vmem:[%s169 + $0xc4] sm:$0xf]
      %v208 = vld [vmem:[%s169 + $0xc8] sm:$0xff]
      %v209 = vld [vmem:[%s169 + $0xd0] sm:$0xff]
      %v210 = vld [vmem:[%s169 + $0xd8] sm:$0xf]
      %v211 = vld [vmem:[%s169 + $0xdc] sm:$0xff]
      %v212 = vld [vmem:[%s169 + $0xe4] sm:$0xff]
      %v213 = vld [vmem:[%s169 + $0xec] sm:$0xf]
      %v214 = vld [vmem:[%s169 + $0xf0] sm:$0xff]
      %v215 = vld [vmem:[%s169 + $0xf8] sm:$0xff]
      %v216 = vld [vmem:[%s169 + $0x100] sm:$0xf]
      %v217 = vld [vmem:[%s169 + $0x104] sm:$0xff]
      %v218 = vld [vmem:[%s169 + $0x10c] sm:$0xff]
      %v219 = vld [vmem:[%s169 + $0x114] sm:$0xf]
      %v220 = vld [vmem:[%s169 + $0x118] sm:$0xff]
      %v221 = vld [vmem:[%s169 + $0x120] sm:$0xff]
      %v222 = vld [vmem:[%s169 + $0x128] sm:$0xf]
      %v223 = vld [vmem:[%s169 + $0x12c] sm:$0xff]
      %v224 = vld [vmem:[%s169 + $0x134] sm:$0xff]
      %v225 = vld [vmem:[%s169 + $0x13c] sm:$0xf]
      %v226 = vld [vmem:[%s169 + $0x140] sm:$0xff]
      %v227 = vld [vmem:[%s169 + $0x148] sm:$0xff]
      %v228 = vld [vmem:[%s169 + $0x150] sm:$0xf]
      %v229 = vld [vmem:[%s169 + $0x154] sm:$0xff]
      %v230 = vld [vmem:[%s169 + $0x15c] sm:$0xff]
      %v231 = vld [vmem:[%s169 + $0x164] sm:$0xf]
      %v232 = vld [vmem:[%s169 + $0x168] sm:$0xff]
      %v233 = vld [vmem:[%s169 + $0x170] sm:$0xff]
      %v234 = vld [vmem:[%s169 + $0x178] sm:$0xf]
      %v235 = vld [vmem:[%s169 + $0x17c] sm:$0xff]
      %v236 = vld [vmem:[%s169 + $0x184] sm:$0xff]
      %v237 = vld [vmem:[%s169 + $0x18c] sm:$0xf]
      %v238 = vld [vmem:[%s169 + $0x190] sm:$0xff]
      %v239 = vld [vmem:[%s169 + $0x198] sm:$0xff]
      %v240 = vld [vmem:[%s169 + $0x1a0] sm:$0xf]
      %v241 = vld [vmem:[%s169 + $0x1a4] sm:$0xff]
      %v242 = vld [vmem:[%s169 + $0x1ac] sm:$0xff]
      %v243 = vld [vmem:[%s169 + $0x1b4] sm:$0xf]
      %v244 = vld [vmem:[%s169 + $0x1b8] sm:$0xff]
      %v245 = vld [vmem:[%s169 + $0x1c0] sm:$0xff]
      %v246 = vld [vmem:[%s169 + $0x1c8] sm:$0xf]
      %v247 = vld [vmem:[%s169 + $0x1cc] sm:$0xff]
      %v248 = vld [vmem:[%s169 + $0x1d4] sm:$0xff]
      %v249 = vld [vmem:[%s169 + $0x1dc] sm:$0xf]
      %v250 = vld [vmem:[%s169 + $0x1e0] sm:$0xff]
      %v251 = vld [vmem:[%s169 + $0x1e8] sm:$0xff]
      %v252 = vld [vmem:[%s169 + $0x1f0] sm:$0xf]
      %v253 = vld [vmem:[%s169 + $0x1f4] sm:$0xff]
      %v254 = vld [vmem:[%s169 + $0x1fc] sm:$0xff]
      %v255 = vld [vmem:[%s169 + $0x204] sm:$0xf]
      %v256 = vld [vmem:[%s169 + $0x208] sm:$0xff]
      %v257 = vld [vmem:[%s169 + $0x210] sm:$0xff]
      %v258 = vld [vmem:[%s169 + $0x218] sm:$0xf]
      %v259 = vld [vmem:[%s169 + $0x21c] sm:$0xff]
      %v260 = vld [vmem:[%s169 + $0x224] sm:$0xff]
      %v261 = vld [vmem:[%s169 + $0x22c] sm:$0xf]
      %v262 = vld [vmem:[%s1] sm:$0xf]
      %v263 = vld [vmem:[%s1 + $0x4] sm:$0xf]
      %v264 = vld [vmem:[%s1 + $0x8] sm:$0xf]
      %v265 = vld [vmem:[%s1 + $0xc] sm:$0xf]
      %v266 = vld [vmem:[%s1 + $0x10] sm:$0xf]
      %v267 = vld [vmem:[%s1 + $0x14] sm:$0xf]
      %v268 = vld [vmem:[%s1 + $0x18] sm:$0xf]
      %v269 = vld [vmem:[%s1 + $0x1c] sm:$0xf]
      %v270 = vld [vmem:[%s1 + $0x20] sm:$0xf]
      %v271 = vld [vmem:[%s1 + $0x24] sm:$0xf]
      %v272 = vld [vmem:[%s1 + $0x28] sm:$0xf]
      %v273 = vld [vmem:[%s1 + $0x2c] sm:$0xf]
      %v274 = vld [vmem:[%s1 + $0x30] sm:$0xf]
      %v275 = vld [vmem:[%s1 + $0x34] sm:$0xf]
      %v276 = vld [vmem:[%s1 + $0x38] sm:$0xf]
      %v277 = vld [vmem:[%s1 + $0x3c] sm:$0xf]
      %v278 = vld [vmem:[%s1 + $0x40] sm:$0xf]
      %v279 = vld [vmem:[%s1 + $0x44] sm:$0xf]
      %v280 = vld [vmem:[%s1 + $0x48] sm:$0xf]
      %v281 = vld [vmem:[%s1 + $0x4c] sm:$0xf]
      %v282 = vld [vmem:[%s1 + $0x50] sm:$0xf]
      %v283 = vld [vmem:[%s1 + $0x54] sm:$0xf]
      %v284 = vld [vmem:[%s1 + $0x58] sm:$0xf]
      %v285 = vld [vmem:[%s1 + $0x5c] sm:$0xf]
      %v286 = vld [vmem:[%s1 + $0x60] sm:$0xf]
      %v287 = vld [vmem:[%s1 + $0x64] sm:$0xf]
      %v288 = vld [vmem:[%s1 + $0x68] sm:$0xf]
      %v289 = vld [vmem:[%s1 + $0x6c] sm:$0xf]
      %v290 = vld [vmem:[%s1 + $0x70] sm:$0xf]
      %v291 = vld [vmem:[%s1 + $0x74] sm:$0xf]
      %v292 = vld [vmem:[%s1 + $0x78] sm:$0xf]
      %v293 = vld [vmem:[%s1 + $0x7c] sm:$0xf]
      %v294 = vld [vmem:[%s1 + $0x80] sm:$0xf]
      %v295 = vld [vmem:[%s1 + $0x84] sm:$0xf]
      %v296 = vld [vmem:[%s1 + $0x88] sm:$0xf]
      %v297 = vld [vmem:[%s1 + $0x8c] sm:$0xf]
      %v298 = vld [vmem:[%s1 + $0x90] sm:$0xf]
      %v299 = vld [vmem:[%s1 + $0x94] sm:$0xf]
      %v300 = vld [vmem:[%s1 + $0x98] sm:$0xf]
      %v301 = vld [vmem:[%s1 + $0x9c] sm:$0xf]
      %v302 = vld [vmem:[%s1 + $0xa0] sm:$0xf]
      %v303 = vld [vmem:[%s1 + $0xa4] sm:$0xf]
      %v304 = vld [vmem:[%s1 + $0xa8] sm:$0xf]
      %v305 = vld [vmem:[%s1 + $0xac] sm:$0xf]
      %v306 = vld [vmem:[%s1 + $0xb0] sm:$0xf]
      %v307 = vld [vmem:[%s1 + $0xb4] sm:$0xf]
      %v308 = vld [vmem:[%s1 + $0xb8] sm:$0xf]
      %v309 = vld [vmem:[%s1 + $0xbc] sm:$0xf]
      %v310 = vld [vmem:[%s1 + $0xc0] sm:$0xf]
      %v311 = vld [vmem:[%s1 + $0xc4] sm:$0xf]
      %v312 = vld [vmem:[%s1 + $0xc8] sm:$0xf]
      %v313 = vld [vmem:[%s1 + $0xcc] sm:$0xf]
      %v314 = vld [vmem:[%s1 + $0xd0] sm:$0xf]
      %v315 = vld [vmem:[%s1 + $0xd4] sm:$0xf]
      %v316 = vld [vmem:[%s1 + $0xd8] sm:$0xf]
      %v317 = vld [vmem:[%s1 + $0xdc] sm:$0xf]
      %v318 = vld [vmem:[%s1 + $0xe0] sm:$0xf]
      %v319 = vld [vmem:[%s1 + $0xe4] sm:$0xf]
      %v320 = vld [vmem:[%s1 + $0xe8] sm:$0xf]
      %v321 = vld [vmem:[%s1 + $0xec] sm:$0xf]
      %v322 = vld [vmem:[%s1 + $0xf0] sm:$0xf]
      %v323 = vld [vmem:[%s1 + $0xf4] sm:$0xf]
      %v324 = vld [vmem:[%s1 + $0xf8] sm:$0xf]
      %v325 = vld [vmem:[%s1 + $0xfc] sm:$0xf]
      %v326 = vld [vmem:[%s1 + $0x100] sm:$0xf]
      %v327 = vld [vmem:[%s1 + $0x104] sm:$0xf]
      %v328 = vld [vmem:[%s1 + $0x108] sm:$0xf]
      %v329 = vld [vmem:[%s1 + $0x10c] sm:$0xf]
      %v330 = vld [vmem:[%s1 + $0x110] sm:$0xf]
      %v331 = vld [vmem:[%s1 + $0x114] sm:$0xf]
      %v332 = vld [vmem:[%s1 + $0x118] sm:$0xf]
      %v333 = vld [vmem:[%s1 + $0x11c] sm:$0xf]
      %v334 = vld [vmem:[%s2] sm:$0x1]
      %v336 = vperm.slane %v334, 0
      %v422 = vunpack.c.l.b16 %v178
      %v423 = vunpack.c.h.b16 %v178
      %v424 = vunpack.c.l.b16 %v179
      %v425 = vunpack.c.h.b16 %v179
      %v426 = vunpack.c.l.b16 %v180
      %v427 = vunpack.c.l.b16 %v181
      %v428 = vunpack.c.h.b16 %v181
      %v429 = vunpack.c.l.b16 %v182
      %v430 = vunpack.c.h.b16 %v182
      %v431 = vunpack.c.l.b16 %v183
      %v432 = vunpack.c.l.b16 %v184
      %v433 = vunpack.c.h.b16 %v184
      %v434 = vunpack.c.l.b16 %v185
      %v435 = vunpack.c.h.b16 %v185
      %v436 = vunpack.c.l.b16 %v186
      %v437 = vunpack.c.l.b16 %v187
      %v438 = vunpack.c.h.b16 %v187
      %v439 = vunpack.c.l.b16 %v188
      %v440 = vunpack.c.h.b16 %v188
      %v441 = vunpack.c.l.b16 %v189
      %v442 = vunpack.c.l.b16 %v190
      %v443 = vunpack.c.h.b16 %v190
      %v444 = vunpack.c.l.b16 %v191
      %v445 = vunpack.c.h.b16 %v191
      %v446 = vunpack.c.l.b16 %v192
      %v447 = vunpack.c.l.b16 %v193
      %v448 = vunpack.c.h.b16 %v193
      %v449 = vunpack.c.l.b16 %v194
      %v450 = vunpack.c.h.b16 %v194
      %v451 = vunpack.c.l.b16 %v195
      %v452 = vunpack.c.l.b16 %v196
      %v453 = vunpack.c.h.b16 %v196
      %v454 = vunpack.c.l.b16 %v197
      %v455 = vunpack.c.h.b16 %v197
      %v456 = vunpack.c.l.b16 %v198
      %v457 = vunpack.c.l.b16 %v199
      %v458 = vunpack.c.h.b16 %v199
      %v459 = vunpack.c.l.b16 %v200
      %v460 = vunpack.c.h.b16 %v200
      %v461 = vunpack.c.l.b16 %v201
      %v462 = vunpack.c.l.b16 %v202
      %v463 = vunpack.c.h.b16 %v202
      %v464 = vunpack.c.l.b16 %v203
      %v465 = vunpack.c.h.b16 %v203
      %v466 = vunpack.c.l.b16 %v204
      %v467 = vunpack.c.l.b16 %v205
      %v468 = vunpack.c.h.b16 %v205
      %v469 = vunpack.c.l.b16 %v206
      %v470 = vunpack.c.h.b16 %v206
      %v471 = vunpack.c.l.b16 %v207
      %v472 = vunpack.c.l.b16 %v208
      %v473 = vunpack.c.h.b16 %v208
      %v474 = vunpack.c.l.b16 %v209
      %v475 = vunpack.c.h.b16 %v209
      %v476 = vunpack.c.l.b16 %v210
      %v477 = vunpack.c.l.b16 %v211
      %v478 = vunpack.c.h.b16 %v211
      %v479 = vunpack.c.l.b16 %v212
      %v480 = vunpack.c.h.b16 %v212
      %v481 = vunpack.c.l.b16 %v213
      %v482 = vunpack.c.l.b16 %v214
      %v483 = vunpack.c.h.b16 %v214
      %v484 = vunpack.c.l.b16 %v215
      %v485 = vunpack.c.h.b16 %v215
      %v486 = vunpack.c.l.b16 %v216
      %v487 = vunpack.c.l.b16 %v217
      %v488 = vunpack.c.h.b16 %v217
      %v489 = vunpack.c.l.b16 %v218
      %v490 = vunpack.c.h.b16 %v218
      %v491 = vunpack.c.l.b16 %v219
      %v492 = vunpack.c.l.b16 %v220
      %v493 = vunpack.c.h.b16 %v220
      %v494 = vunpack.c.l.b16 %v221
      %v495 = vunpack.c.h.b16 %v221
      %v496 = vunpack.c.l.b16 %v222
      %v497 = vunpack.c.l.b16 %v223
      %v498 = vunpack.c.h.b16 %v223
      %v499 = vunpack.c.l.b16 %v224
      %v500 = vunpack.c.h.b16 %v224
      %v501 = vunpack.c.l.b16 %v225
      %v502 = vunpack.c.l.b16 %v226
      %v503 = vunpack.c.h.b16 %v226
      %v504 = vunpack.c.l.b16 %v227
      %v505 = vunpack.c.h.b16 %v227
      %v506 = vunpack.c.l.b16 %v228
      %v507 = vunpack.c.l.b16 %v229
      %v508 = vunpack.c.h.b16 %v229
      %v509 = vunpack.c.l.b16 %v230
      %v510 = vunpack.c.h.b16 %v230
      %v511 = vunpack.c.l.b16 %v231
      %v512 = vunpack.c.l.b16 %v232
      %v513 = vunpack.c.h.b16 %v232
      %v514 = vunpack.c.l.b16 %v233
      %v515 = vunpack.c.h.b16 %v233
      %v516 = vunpack.c.l.b16 %v234
      %v517 = vunpack.c.l.b16 %v235
      %v518 = vunpack.c.h.b16 %v235
      %v519 = vunpack.c.l.b16 %v236
      %v520 = vunpack.c.h.b16 %v236
      %v521 = vunpack.c.l.b16 %v237
      %v522 = vunpack.c.l.b16 %v238
      %v523 = vunpack.c.h.b16 %v238
      %v524 = vunpack.c.l.b16 %v239
      %v525 = vunpack.c.h.b16 %v239
      %v526 = vunpack.c.l.b16 %v240
      %v527 = vunpack.c.l.b16 %v241
      %v528 = vunpack.c.h.b16 %v241
      %v529 = vunpack.c.l.b16 %v242
      %v530 = vunpack.c.h.b16 %v242
      %v531 = vunpack.c.l.b16 %v243
      %v532 = vunpack.c.l.b16 %v244
      %v533 = vunpack.c.h.b16 %v244
      %v534 = vunpack.c.l.b16 %v245
      %v535 = vunpack.c.h.b16 %v245
      %v536 = vunpack.c.l.b16 %v246
      %v537 = vunpack.c.l.b16 %v247
      %v538 = vunpack.c.h.b16 %v247
      %v539 = vunpack.c.l.b16 %v248
      %v540 = vunpack.c.h.b16 %v248
      %v541 = vunpack.c.l.b16 %v249
      %v542 = vunpack.c.l.b16 %v250
      %v543 = vunpack.c.h.b16 %v250
      %v544 = vunpack.c.l.b16 %v251
      %v545 = vunpack.c.h.b16 %v251
      %v546 = vunpack.c.l.b16 %v252
      %v547 = vunpack.c.l.b16 %v253
      %v548 = vunpack.c.h.b16 %v253
      %v549 = vunpack.c.l.b16 %v254
      %v550 = vunpack.c.h.b16 %v254
      %v551 = vunpack.c.l.b16 %v255
      %v552 = vunpack.c.l.b16 %v256
      %v553 = vunpack.c.h.b16 %v256
      %v554 = vunpack.c.l.b16 %v257
      %v555 = vunpack.c.h.b16 %v257
      %v556 = vunpack.c.l.b16 %v258
      %v557 = vunpack.c.l.b16 %v259
      %v558 = vunpack.c.h.b16 %v259
      %v559 = vunpack.c.l.b16 %v260
      %v560 = vunpack.c.h.b16 %v260
      %v561 = vunpack.c.l.b16 %v261
      %v562 = vpack.c.b16 %v427, %v422
      %v563 = vpack.c.b16 %v428, %v423
      %v564 = vpack.c.b16 %v429, %v424
      %v565 = vpack.c.b16 %v430, %v425
      %v566 = vpack.c.b16 %v431, %v426
      %v567 = vpack.c.b16 %v437, %v432
      %v568 = vpack.c.b16 %v438, %v433
      %v569 = vpack.c.b16 %v439, %v434
      %v570 = vpack.c.b16 %v440, %v435
      %v571 = vpack.c.b16 %v441, %v436
      %v572 = vpack.c.b16 %v447, %v442
      %v573 = vpack.c.b16 %v448, %v443
      %v574 = vpack.c.b16 %v449, %v444
      %v575 = vpack.c.b16 %v450, %v445
      %v576 = vpack.c.b16 %v451, %v446
      %v577 = vpack.c.b16 %v457, %v452
      %v578 = vpack.c.b16 %v458, %v453
      %v579 = vpack.c.b16 %v459, %v454
      %v580 = vpack.c.b16 %v460, %v455
      %v581 = vpack.c.b16 %v461, %v456
      %v582 = vpack.c.b16 %v467, %v462
      %v583 = vpack.c.b16 %v468, %v463
      %v584 = vpack.c.b16 %v469, %v464
      %v585 = vpack.c.b16 %v470, %v465
      %v586 = vpack.c.b16 %v471, %v466
      %v587 = vpack.c.b16 %v477, %v472
      %v588 = vpack.c.b16 %v478, %v473
      %v589 = vpack.c.b16 %v479, %v474
      %v590 = vpack.c.b16 %v480, %v475
      %v591 = vpack.c.b16 %v481, %v476
      %v592 = vpack.c.b16 %v487, %v482
      %v593 = vpack.c.b16 %v488, %v483
      %v594 = vpack.c.b16 %v489, %v484
      %v595 = vpack.c.b16 %v490, %v485
      %v596 = vpack.c.b16 %v491, %v486
      %v597 = vpack.c.b16 %v497, %v492
      %v598 = vpack.c.b16 %v498, %v493
      %v599 = vpack.c.b16 %v499, %v494
      %v600 = vpack.c.b16 %v500, %v495
      %v601 = vpack.c.b16 %v501, %v496
      %v602 = vpack.c.b16 %v507, %v502
      %v603 = vpack.c.b16 %v508, %v503
      %v604 = vpack.c.b16 %v509, %v504
      %v605 = vpack.c.b16 %v510, %v505
      %v606 = vpack.c.b16 %v511, %v506
      %v607 = vpack.c.b16 %v517, %v512
      %v608 = vpack.c.b16 %v518, %v513
      %v609 = vpack.c.b16 %v519, %v514
      %v610 = vpack.c.b16 %v520, %v515
      %v611 = vpack.c.b16 %v521, %v516
      %v612 = vpack.c.b16 %v527, %v522
      %v613 = vpack.c.b16 %v528, %v523
      %v614 = vpack.c.b16 %v529, %v524
      %v615 = vpack.c.b16 %v530, %v525
      %v616 = vpack.c.b16 %v531, %v526
      %v617 = vpack.c.b16 %v537, %v532
      %v618 = vpack.c.b16 %v538, %v533
      %v619 = vpack.c.b16 %v539, %v534
      %v620 = vpack.c.b16 %v540, %v535
      %v621 = vpack.c.b16 %v541, %v536
      %v622 = vpack.c.b16 %v547, %v542
      %v623 = vpack.c.b16 %v548, %v543
      %v624 = vpack.c.b16 %v549, %v544
      %v625 = vpack.c.b16 %v550, %v545
      %v626 = vpack.c.b16 %v551, %v546
      %v627 = vpack.c.b16 %v557, %v552
      %v628 = vpack.c.b16 %v558, %v553
      %v629 = vpack.c.b16 %v559, %v554
      %v630 = vpack.c.b16 %v560, %v555
      %v631 = vpack.c.b16 %v561, %v556
      %v760 = vunpack.c.l.b16 %v262
      %v761 = vunpack.c.l.b16 %v263
      %v762 = vunpack.c.l.b16 %v264
      %v763 = vunpack.c.l.b16 %v265
      %v764 = vunpack.c.l.b16 %v266
      %v765 = vunpack.c.l.b16 %v267
      %v766 = vunpack.c.l.b16 %v268
      %v767 = vunpack.c.l.b16 %v269
      %v768 = vunpack.c.l.b16 %v270
      %v769 = vunpack.c.l.b16 %v271
      %v770 = vunpack.c.l.b16 %v272
      %v771 = vunpack.c.l.b16 %v273
      %v772 = vunpack.c.l.b16 %v274
      %v773 = vunpack.c.l.b16 %v275
      %v774 = vunpack.c.l.b16 %v276
      %v775 = vunpack.c.l.b16 %v277
      %v776 = vunpack.c.l.b16 %v278
      %v777 = vunpack.c.l.b16 %v279
      %v778 = vunpack.c.l.b16 %v280
      %v779 = vunpack.c.l.b16 %v281
      %v780 = vunpack.c.l.b16 %v282
      %v781 = vunpack.c.l.b16 %v283
      %v782 = vunpack.c.l.b16 %v284
      %v783 = vunpack.c.l.b16 %v285
      %v784 = vunpack.c.l.b16 %v286
      %v785 = vunpack.c.l.b16 %v287
      %v786 = vunpack.c.l.b16 %v288
      %v787 = vunpack.c.l.b16 %v289
      %v788 = vunpack.c.l.b16 %v290
      %v789 = vunpack.c.l.b16 %v291
      %v790 = vunpack.c.l.b16 %v292
      %v791 = vunpack.c.l.b16 %v293
      %v792 = vunpack.c.l.b16 %v294
      %v793 = vunpack.c.l.b16 %v295
      %v794 = vunpack.c.l.b16 %v296
      %v795 = vunpack.c.l.b16 %v297
      %v796 = vunpack.c.l.b16 %v298
      %v797 = vunpack.c.l.b16 %v299
      %v798 = vunpack.c.l.b16 %v300
      %v799 = vunpack.c.l.b16 %v301
      %v800 = vunpack.c.l.b16 %v302
      %v801 = vunpack.c.l.b16 %v303
      %v802 = vunpack.c.l.b16 %v304
      %v803 = vunpack.c.l.b16 %v305
      %v804 = vunpack.c.l.b16 %v306
      %v805 = vunpack.c.l.b16 %v307
      %v806 = vunpack.c.l.b16 %v308
      %v807 = vunpack.c.l.b16 %v309
      %v808 = vunpack.c.l.b16 %v310
      %v809 = vunpack.c.l.b16 %v311
      %v810 = vunpack.c.l.b16 %v312
      %v811 = vunpack.c.l.b16 %v313
      %v812 = vunpack.c.l.b16 %v314
      %v813 = vunpack.c.l.b16 %v315
      %v814 = vunpack.c.l.b16 %v316
      %v815 = vunpack.c.l.b16 %v317
      %v816 = vunpack.c.l.b16 %v318
      %v817 = vunpack.c.l.b16 %v319
      %v818 = vunpack.c.l.b16 %v320
      %v819 = vunpack.c.l.b16 %v321
      %v820 = vunpack.c.l.b16 %v322
      %v821 = vunpack.c.l.b16 %v323
      %v822 = vunpack.c.l.b16 %v324
      %v823 = vunpack.c.l.b16 %v325
      %v824 = vunpack.c.l.b16 %v326
      %v825 = vunpack.c.l.b16 %v327
      %v826 = vunpack.c.l.b16 %v328
      %v827 = vunpack.c.l.b16 %v329
      %v828 = vunpack.c.l.b16 %v330
      %v829 = vunpack.c.l.b16 %v331
      %v830 = vunpack.c.l.b16 %v332
      %v831 = vunpack.c.l.b16 %v333
      %v832 = vpack.c.b16 %v761, %v760
      %v833 = vpack.c.b16 %v763, %v762
      %v834 = vpack.c.b16 %v765, %v764
      %v835 = vpack.c.b16 %v767, %v766
      %v836 = vpack.c.b16 %v769, %v768
      %v837 = vpack.c.b16 %v771, %v770
      %v838 = vpack.c.b16 %v773, %v772
      %v839 = vpack.c.b16 %v775, %v774
      %v840 = vpack.c.b16 %v777, %v776
      %v841 = vpack.c.b16 %v779, %v778
      %v842 = vpack.c.b16 %v781, %v780
      %v843 = vpack.c.b16 %v783, %v782
      %v844 = vpack.c.b16 %v785, %v784
      %v845 = vpack.c.b16 %v787, %v786
      %v846 = vpack.c.b16 %v789, %v788
      %v847 = vpack.c.b16 %v791, %v790
      %v848 = vpack.c.b16 %v793, %v792
      %v849 = vpack.c.b16 %v795, %v794
      %v850 = vpack.c.b16 %v797, %v796
      %v851 = vpack.c.b16 %v799, %v798
      %v852 = vpack.c.b16 %v801, %v800
      %v853 = vpack.c.b16 %v803, %v802
      %v854 = vpack.c.b16 %v805, %v804
      %v855 = vpack.c.b16 %v807, %v806
      %v856 = vpack.c.b16 %v809, %v808
      %v857 = vpack.c.b16 %v811, %v810
      %v858 = vpack.c.b16 %v813, %v812
      %v859 = vpack.c.b16 %v815, %v814
      %v860 = vpack.c.b16 %v817, %v816
      %v861 = vpack.c.b16 %v819, %v818
      %v862 = vpack.c.b16 %v821, %v820
      %v863 = vpack.c.b16 %v823, %v822
      %v864 = vpack.c.b16 %v825, %v824
      %v865 = vpack.c.b16 %v827, %v826
      %v866 = vpack.c.b16 %v829, %v828
      %v867 = vpack.c.b16 %v831, %v830
      %vm904 = vcmask 523264
      %v906 = vsel %vm904, %v566, 0
      %v909 = vsel %vm904, %v571, 0
      %v912 = vsel %vm904, %v576, 0
      %v915 = vsel %vm904, %v581, 0
      %v918 = vsel %vm904, %v586, 0
      %v921 = vsel %vm904, %v591, 0
      %v924 = vsel %vm904, %v596, 0
      %v927 = vsel %vm904, %v601, 0
      %v930 = vsel %vm904, %v606, 0
      %v933 = vsel %vm904, %v611, 0
      %v936 = vsel %vm904, %v616, 0
      %v939 = vsel %vm904, %v621, 0
      %v942 = vsel %vm904, %v626, 0
      %v945 = vsel %vm904, %v631, 0
      %947 = vmatpush.bf16.msra.mxu0 %v839
      %948 = vmatpush.bf16.msra.mxu0 %v838
      %949 = vmatpush.bf16.msra.mxu0 %v837
      %950 = vmatpush.bf16.msra.mxu0 %v836
      %951 = vmatpush.bf16.msra.mxu0 %v835
      %952 = vmatpush.bf16.msra.mxu0 %v834
      %953 = vmatpush.bf16.msra.mxu0 %v833
      %954 = vmatpush.bf16.msra.mxu0 %v832
      %955 = vmatmul.bf16.gmra.mxu0 %v562
      %v956 = vpop.f32.mrf.mxu0
      %v957 = vadd.f32 %v336, %v956
      %v958 = vpop.f32.mrf.mxu0
      %v959 = vadd.f32 %v336, %v958
      %960 = vmatmul.bf16.gmra.mxu0 %v567
      %v961 = vpop.f32.mrf.mxu0
      %v962 = vadd.f32 %v336, %v961
      %v963 = vpop.f32.mrf.mxu0
      %v964 = vadd.f32 %v336, %v963
      %965 = vmatmul.bf16.gmra.mxu0 %v572
      %v966 = vpop.f32.mrf.mxu0
      %v967 = vadd.f32 %v336, %v966
      %v968 = vpop.f32.mrf.mxu0
      %v969 = vadd.f32 %v336, %v968
      %970 = vmatmul.bf16.gmra.mxu0 %v577
      %v971 = vpop.f32.mrf.mxu0
      %v972 = vadd.f32 %v336, %v971
      %v973 = vpop.f32.mrf.mxu0
      %v974 = vadd.f32 %v336, %v973
      %975 = vmatmul.bf16.gmra.mxu0 %v582
      %v976 = vpop.f32.mrf.mxu0
      %v977 = vadd.f32 %v336, %v976
      %v978 = vpop.f32.mrf.mxu0
      %v979 = vadd.f32 %v336, %v978
      %980 = vmatmul.bf16.gmra.mxu0 %v587
      %v981 = vpop.f32.mrf.mxu0
      %v982 = vadd.f32 %v336, %v981
      %v983 = vpop.f32.mrf.mxu0
      %v984 = vadd.f32 %v336, %v983
      %985 = vmatmul.bf16.gmra.mxu0 %v592
      %v986 = vpop.f32.mrf.mxu0
      %v987 = vadd.f32 %v336, %v986
      %v988 = vpop.f32.mrf.mxu0
      %v989 = vadd.f32 %v336, %v988
      %990 = vmatmul.bf16.gmra.mxu0 %v597
      %v991 = vpop.f32.mrf.mxu0
      %v992 = vadd.f32 %v336, %v991
      %v993 = vpop.f32.mrf.mxu0
      %v994 = vadd.f32 %v336, %v993
      %995 = vmatmul.bf16.gmra.mxu0 %v602
      %v996 = vpop.f32.mrf.mxu0
      %v997 = vadd.f32 %v336, %v996
      %v998 = vpop.f32.mrf.mxu0
      %v999 = vadd.f32 %v336, %v998
      %1000 = vmatmul.bf16.gmra.mxu0 %v607
      %v1001 = vpop.f32.mrf.mxu0
      %v1002 = vadd.f32 %v336, %v1001
      %v1003 = vpop.f32.mrf.mxu0
      %v1004 = vadd.f32 %v336, %v1003
      %1005 = vmatmul.bf16.gmra.mxu0 %v612
      %v1006 = vpop.f32.mrf.mxu0
      %v1007 = vadd.f32 %v336, %v1006
      %v1008 = vpop.f32.mrf.mxu0
      %v1009 = vadd.f32 %v336, %v1008
      %1010 = vmatmul.bf16.gmra.mxu0 %v617
      %v1011 = vpop.f32.mrf.mxu0
      %v1012 = vadd.f32 %v336, %v1011
      %v1013 = vpop.f32.mrf.mxu0
      %v1014 = vadd.f32 %v336, %v1013
      %1015 = vmatmul.bf16.gmra.mxu0 %v622
      %v1016 = vpop.f32.mrf.mxu0
      %v1017 = vadd.f32 %v336, %v1016
      %v1018 = vpop.f32.mrf.mxu0
      %v1019 = vadd.f32 %v336, %v1018
      %1020 = vmatmul.bf16.gmra.mxu0 %v627
      %v1021 = vpop.f32.mrf.mxu0
      %v1022 = vadd.f32 %v336, %v1021
      %v1023 = vpop.f32.mrf.mxu0
      %v1024 = vadd.f32 %v336, %v1023
      %1025 = vdwg.mxu0
      %1026 = vmatpush.bf16.msra.mxu0 %v847
      %1027 = vmatpush.bf16.msra.mxu0 %v846
      %1028 = vmatpush.bf16.msra.mxu0 %v845
      %1029 = vmatpush.bf16.msra.mxu0 %v844
      %1030 = vmatpush.bf16.msra.mxu0 %v843
      %1031 = vmatpush.bf16.msra.mxu0 %v842
      %1032 = vmatpush.bf16.msra.mxu0 %v841
      %1033 = vmatpush.bf16.msra.mxu0 %v840
      %1034 = vmatmul.bf16.gmra.mxu0 %v563
      %v1035 = vpop.f32.mrf.mxu0
      %v1036 = vadd.f32 %v957, %v1035
      %v1037 = vpop.f32.mrf.mxu0
      %v1038 = vadd.f32 %v959, %v1037
      %1039 = vmatmul.bf16.gmra.mxu0 %v568
      %v1040 = vpop.f32.mrf.mxu0
      %v1041 = vadd.f32 %v962, %v1040
      %v1042 = vpop.f32.mrf.mxu0
      %v1043 = vadd.f32 %v964, %v1042
      %1044 = vmatmul.bf16.gmra.mxu0 %v573
      %v1045 = vpop.f32.mrf.mxu0
      %v1046 = vadd.f32 %v967, %v1045
      %v1047 = vpop.f32.mrf.mxu0
      %v1048 = vadd.f32 %v969, %v1047
      %1049 = vmatmul.bf16.gmra.mxu0 %v578
      %v1050 = vpop.f32.mrf.mxu0
      %v1051 = vadd.f32 %v972, %v1050
      %v1052 = vpop.f32.mrf.mxu0
      %v1053 = vadd.f32 %v974, %v1052
      %1054 = vmatmul.bf16.gmra.mxu0 %v583
      %v1055 = vpop.f32.mrf.mxu0
      %v1056 = vadd.f32 %v977, %v1055
      %v1057 = vpop.f32.mrf.mxu0
      %v1058 = vadd.f32 %v979, %v1057
      %1059 = vmatmul.bf16.gmra.mxu0 %v588
      %v1060 = vpop.f32.mrf.mxu0
      %v1061 = vadd.f32 %v982, %v1060
      %v1062 = vpop.f32.mrf.mxu0
      %v1063 = vadd.f32 %v984, %v1062
      %1064 = vmatmul.bf16.gmra.mxu0 %v593
      %v1065 = vpop.f32.mrf.mxu0
      %v1066 = vadd.f32 %v987, %v1065
      %v1067 = vpop.f32.mrf.mxu0
      %v1068 = vadd.f32 %v989, %v1067
      %1069 = vmatmul.bf16.gmra.mxu0 %v598
      %v1070 = vpop.f32.mrf.mxu0
      %v1071 = vadd.f32 %v992, %v1070
      %v1072 = vpop.f32.mrf.mxu0
      %v1073 = vadd.f32 %v994, %v1072
      %1074 = vmatmul.bf16.gmra.mxu0 %v603
      %v1075 = vpop.f32.mrf.mxu0
      %v1076 = vadd.f32 %v997, %v1075
      %v1077 = vpop.f32.mrf.mxu0
      %v1078 = vadd.f32 %v999, %v1077
      %1079 = vmatmul.bf16.gmra.mxu0 %v608
      %v1080 = vpop.f32.mrf.mxu0
      %v1081 = vadd.f32 %v1002, %v1080
      %v1082 = vpop.f32.mrf.mxu0
      %v1083 = vadd.f32 %v1004, %v1082
      %1084 = vmatmul.bf16.gmra.mxu0 %v613
      %v1085 = vpop.f32.mrf.mxu0
      %v1086 = vadd.f32 %v1007, %v1085
      %v1087 = vpop.f32.mrf.mxu0
      %v1088 = vadd.f32 %v1009, %v1087
      %1089 = vmatmul.bf16.gmra.mxu0 %v618
      %v1090 = vpop.f32.mrf.mxu0
      %v1091 = vadd.f32 %v1012, %v1090
      %v1092 = vpop.f32.mrf.mxu0
      %v1093 = vadd.f32 %v1014, %v1092
      %1094 = vmatmul.bf16.gmra.mxu0 %v623
      %v1095 = vpop.f32.mrf.mxu0
      %v1096 = vadd.f32 %v1017, %v1095
      %v1097 = vpop.f32.mrf.mxu0
      %v1098 = vadd.f32 %v1019, %v1097
      %1099 = vmatmul.bf16.gmra.mxu0 %v628
      %v1100 = vpop.f32.mrf.mxu0
      %v1101 = vadd.f32 %v1022, %v1100
      %v1102 = vpop.f32.mrf.mxu0
      %v1103 = vadd.f32 %v1024, %v1102
      %1104 = vdwg.mxu0
      %1105 = vmatpush.bf16.msra.mxu0 %v855
      %1106 = vmatpush.bf16.msra.mxu0 %v854
      %1107 = vmatpush.bf16.msra.mxu0 %v853
      %1108 = vmatpush.bf16.msra.mxu0 %v852
      %1109 = vmatpush.bf16.msra.mxu0 %v851
      %1110 = vmatpush.bf16.msra.mxu0 %v850
      %1111 = vmatpush.bf16.msra.mxu0 %v849
      %1112 = vmatpush.bf16.msra.mxu0 %v848
      %1113 = vmatmul.bf16.gmra.mxu0 %v564
      %v1114 = vpop.f32.mrf.mxu0
      %v1115 = vadd.f32 %v1036, %v1114
      %v1116 = vpop.f32.mrf.mxu0
      %v1117 = vadd.f32 %v1038, %v1116
      %1118 = vmatmul.bf16.gmra.mxu0 %v569
      %v1119 = vpop.f32.mrf.mxu0
      %v1120 = vadd.f32 %v1041, %v1119
      %v1121 = vpop.f32.mrf.mxu0
      %v1122 = vadd.f32 %v1043, %v1121
      %1123 = vmatmul.bf16.gmra.mxu0 %v574
      %v1124 = vpop.f32.mrf.mxu0
      %v1125 = vadd.f32 %v1046, %v1124
      %v1126 = vpop.f32.mrf.mxu0
      %v1127 = vadd.f32 %v1048, %v1126
      %1128 = vmatmul.bf16.gmra.mxu0 %v579
      %v1129 = vpop.f32.mrf.mxu0
      %v1130 = vadd.f32 %v1051, %v1129
      %v1131 = vpop.f32.mrf.mxu0
      %v1132 = vadd.f32 %v1053, %v1131
      %1133 = vmatmul.bf16.gmra.mxu0 %v584
      %v1134 = vpop.f32.mrf.mxu0
      %v1135 = vadd.f32 %v1056, %v1134
      %v1136 = vpop.f32.mrf.mxu0
      %v1137 = vadd.f32 %v1058, %v1136
      %1138 = vmatmul.bf16.gmra.mxu0 %v589
      %v1139 = vpop.f32.mrf.mxu0
      %v1140 = vadd.f32 %v1061, %v1139
      %v1141 = vpop.f32.mrf.mxu0
      %v1142 = vadd.f32 %v1063, %v1141
      %1143 = vmatmul.bf16.gmra.mxu0 %v594
      %v1144 = vpop.f32.mrf.mxu0
      %v1145 = vadd.f32 %v1066, %v1144
      %v1146 = vpop.f32.mrf.mxu0
      %v1147 = vadd.f32 %v1068, %v1146
      %1148 = vmatmul.bf16.gmra.mxu0 %v599
      %v1149 = vpop.f32.mrf.mxu0
      %v1150 = vadd.f32 %v1071, %v1149
      %v1151 = vpop.f32.mrf.mxu0
      %v1152 = vadd.f32 %v1073, %v1151
      %1153 = vmatmul.bf16.gmra.mxu0 %v604
      %v1154 = vpop.f32.mrf.mxu0
      %v1155 = vadd.f32 %v1076, %v1154
      %v1156 = vpop.f32.mrf.mxu0
      %v1157 = vadd.f32 %v1078, %v1156
      %1158 = vmatmul.bf16.gmra.mxu0 %v609
      %v1159 = vpop.f32.mrf.mxu0
      %v1160 = vadd.f32 %v1081, %v1159
      %v1161 = vpop.f32.mrf.mxu0
      %v1162 = vadd.f32 %v1083, %v1161
      %1163 = vmatmul.bf16.gmra.mxu0 %v614
      %v1164 = vpop.f32.mrf.mxu0
      %v1165 = vadd.f32 %v1086, %v1164
      %v1166 = vpop.f32.mrf.mxu0
      %v1167 = vadd.f32 %v1088, %v1166
      %1168 = vmatmul.bf16.gmra.mxu0 %v619
      %v1169 = vpop.f32.mrf.mxu0
      %v1170 = vadd.f32 %v1091, %v1169
      %v1171 = vpop.f32.mrf.mxu0
      %v1172 = vadd.f32 %v1093, %v1171
      %1173 = vmatmul.bf16.gmra.mxu0 %v624
      %v1174 = vpop.f32.mrf.mxu0
      %v1175 = vadd.f32 %v1096, %v1174
      %v1176 = vpop.f32.mrf.mxu0
      %v1177 = vadd.f32 %v1098, %v1176
      %1178 = vmatmul.bf16.gmra.mxu0 %v629
      %v1179 = vpop.f32.mrf.mxu0
      %v1180 = vadd.f32 %v1101, %v1179
      %v1181 = vpop.f32.mrf.mxu0
      %v1182 = vadd.f32 %v1103, %v1181
      %1183 = vdwg.mxu0
      %1184 = vmatpush.bf16.msra.mxu0 %v863
      %1185 = vmatpush.bf16.msra.mxu0 %v862
      %1186 = vmatpush.bf16.msra.mxu0 %v861
      %1187 = vmatpush.bf16.msra.mxu0 %v860
      %1188 = vmatpush.bf16.msra.mxu0 %v859
      %1189 = vmatpush.bf16.msra.mxu0 %v858
      %1190 = vmatpush.bf16.msra.mxu0 %v857
      %1191 = vmatpush.bf16.msra.mxu0 %v856
      %1192 = vmatmul.bf16.gmra.mxu0 %v565
      %v1193 = vpop.f32.mrf.mxu0
      %v1194 = vadd.f32 %v1115, %v1193
      %v1195 = vpop.f32.mrf.mxu0
      %v1196 = vadd.f32 %v1117, %v1195
      %1197 = vmatmul.bf16.gmra.mxu0 %v570
      %v1198 = vpop.f32.mrf.mxu0
      %v1199 = vadd.f32 %v1120, %v1198
      %v1200 = vpop.f32.mrf.mxu0
      %v1201 = vadd.f32 %v1122, %v1200
      %1202 = vmatmul.bf16.gmra.mxu0 %v575
      %v1203 = vpop.f32.mrf.mxu0
      %v1204 = vadd.f32 %v1125, %v1203
      %v1205 = vpop.f32.mrf.mxu0
      %v1206 = vadd.f32 %v1127, %v1205
      %1207 = vmatmul.bf16.gmra.mxu0 %v580
      %v1208 = vpop.f32.mrf.mxu0
      %v1209 = vadd.f32 %v1130, %v1208
      %v1210 = vpop.f32.mrf.mxu0
      %v1211 = vadd.f32 %v1132, %v1210
      %1212 = vmatmul.bf16.gmra.mxu0 %v585
      %v1213 = vpop.f32.mrf.mxu0
      %v1214 = vadd.f32 %v1135, %v1213
      %v1215 = vpop.f32.mrf.mxu0
      %v1216 = vadd.f32 %v1137, %v1215
      %1217 = vmatmul.bf16.gmra.mxu0 %v590
      %v1218 = vpop.f32.mrf.mxu0
      %v1219 = vadd.f32 %v1140, %v1218
      %v1220 = vpop.f32.mrf.mxu0
      %v1221 = vadd.f32 %v1142, %v1220
      %1222 = vmatmul.bf16.gmra.mxu0 %v595
      %v1223 = vpop.f32.mrf.mxu0
      %v1224 = vadd.f32 %v1145, %v1223
      %v1225 = vpop.f32.mrf.mxu0
      %v1226 = vadd.f32 %v1147, %v1225
      %1227 = vmatmul.bf16.gmra.mxu0 %v600
      %v1228 = vpop.f32.mrf.mxu0
      %v1229 = vadd.f32 %v1150, %v1228
      %v1230 = vpop.f32.mrf.mxu0
      %v1231 = vadd.f32 %v1152, %v1230
      %1232 = vmatmul.bf16.gmra.mxu0 %v605
      %v1233 = vpop.f32.mrf.mxu0
      %v1234 = vadd.f32 %v1155, %v1233
      %v1235 = vpop.f32.mrf.mxu0
      %v1236 = vadd.f32 %v1157, %v1235
      %1237 = vmatmul.bf16.gmra.mxu0 %v610
      %v1238 = vpop.f32.mrf.mxu0
      %v1239 = vadd.f32 %v1160, %v1238
      %v1240 = vpop.f32.mrf.mxu0
      %v1241 = vadd.f32 %v1162, %v1240
      %1242 = vmatmul.bf16.gmra.mxu0 %v615
      %v1243 = vpop.f32.mrf.mxu0
      %v1244 = vadd.f32 %v1165, %v1243
      %v1245 = vpop.f32.mrf.mxu0
      %v1246 = vadd.f32 %v1167, %v1245
      %1247 = vmatmul.bf16.gmra.mxu0 %v620
      %v1248 = vpop.f32.mrf.mxu0
      %v1249 = vadd.f32 %v1170, %v1248
      %v1250 = vpop.f32.mrf.mxu0
      %v1251 = vadd.f32 %v1172, %v1250
      %1252 = vmatmul.bf16.gmra.mxu0 %v625
      %v1253 = vpop.f32.mrf.mxu0
      %v1254 = vadd.f32 %v1175, %v1253
      %v1255 = vpop.f32.mrf.mxu0
      %v1256 = vadd.f32 %v1177, %v1255
      %1257 = vmatmul.bf16.gmra.mxu0 %v630
      %v1258 = vpop.f32.mrf.mxu0
      %v1259 = vadd.f32 %v1180, %v1258
      %v1260 = vpop.f32.mrf.mxu0
      %v1261 = vadd.f32 %v1182, %v1260
      %1262 = vdwg.mxu0
      %1263 = vmatpush.bf16.msra.mxu0 0
      %1264 = vmatpush.bf16.msra.mxu0 0
      %1265 = vmatpush.bf16.msra.mxu0 0
      %1266 = vmatpush.bf16.msra.mxu0 0
      %1267 = vmatpush.bf16.msra.mxu0 %v867
      %1268 = vmatpush.bf16.msra.mxu0 %v866
      %1269 = vmatpush.bf16.msra.mxu0 %v865
      %1270 = vmatpush.bf16.msra.mxu0 %v864
      %1271 = vmatmul.bf16.gmra.mxu0 %v906
      %v1272 = vpop.f32.mrf.mxu0
      %v1273 = vadd.f32 %v1194, %v1272
      %v1274 = vpop.f32.mrf.mxu0
      %v1275 = vadd.f32 %v1196, %v1274
      %1276 = vmatmul.bf16.gmra.mxu0 %v909
      %v1277 = vpop.f32.mrf.mxu0
      %v1278 = vadd.f32 %v1199, %v1277
      %v1279 = vpop.f32.mrf.mxu0
      %v1280 = vadd.f32 %v1201, %v1279
      %1281 = vmatmul.bf16.gmra.mxu0 %v912
      %v1282 = vpop.f32.mrf.mxu0
      %v1283 = vadd.f32 %v1204, %v1282
      %v1284 = vpop.f32.mrf.mxu0
      %v1285 = vadd.f32 %v1206, %v1284
      %1286 = vmatmul.bf16.gmra.mxu0 %v915
      %v1287 = vpop.f32.mrf.mxu0
      %v1288 = vadd.f32 %v1209, %v1287
      %v1289 = vpop.f32.mrf.mxu0
      %v1290 = vadd.f32 %v1211, %v1289
      %1291 = vmatmul.bf16.gmra.mxu0 %v918
      %v1292 = vpop.f32.mrf.mxu0
      %v1293 = vadd.f32 %v1214, %v1292
      %v1294 = vpop.f32.mrf.mxu0
      %v1295 = vadd.f32 %v1216, %v1294
      %1296 = vmatmul.bf16.gmra.mxu0 %v921
      %v1297 = vpop.f32.mrf.mxu0
      %v1298 = vadd.f32 %v1219, %v1297
      %v1299 = vpop.f32.mrf.mxu0
      %v1300 = vadd.f32 %v1221, %v1299
      %1301 = vmatmul.bf16.gmra.mxu0 %v924
      %v1302 = vpop.f32.mrf.mxu0
      %v1303 = vadd.f32 %v1224, %v1302
      %v1304 = vpop.f32.mrf.mxu0
      %v1305 = vadd.f32 %v1226, %v1304
      %1306 = vmatmul.bf16.gmra.mxu0 %v927
      %v1307 = vpop.f32.mrf.mxu0
      %v1308 = vadd.f32 %v1229, %v1307
      %v1309 = vpop.f32.mrf.mxu0
      %v1310 = vadd.f32 %v1231, %v1309
      %1311 = vmatmul.bf16.gmra.mxu0 %v930
      %v1312 = vpop.f32.mrf.mxu0
      %v1313 = vadd.f32 %v1234, %v1312
      %v1314 = vpop.f32.mrf.mxu0
      %v1315 = vadd.f32 %v1236, %v1314
      %1316 = vmatmul.bf16.gmra.mxu0 %v933
      %v1317 = vpop.f32.mrf.mxu0
      %v1318 = vadd.f32 %v1239, %v1317
      %v1319 = vpop.f32.mrf.mxu0
      %v1320 = vadd.f32 %v1241, %v1319
      %1321 = vmatmul.bf16.gmra.mxu0 %v936
      %v1322 = vpop.f32.mrf.mxu0
      %v1323 = vadd.f32 %v1244, %v1322
      %v1324 = vpop.f32.mrf.mxu0
      %v1325 = vadd.f32 %v1246, %v1324
      %1326 = vmatmul.bf16.gmra.mxu0 %v939
      %v1327 = vpop.f32.mrf.mxu0
      %v1328 = vadd.f32 %v1249, %v1327
      %v1329 = vpop.f32.mrf.mxu0
      %v1330 = vadd.f32 %v1251, %v1329
      %1331 = vmatmul.bf16.gmra.mxu0 %v942
      %v1332 = vpop.f32.mrf.mxu0
      %v1333 = vadd.f32 %v1254, %v1332
      %v1334 = vpop.f32.mrf.mxu0
      %v1335 = vadd.f32 %v1256, %v1334
      %1336 = vmatmul.bf16.gmra.mxu0 %v945
      %v1337 = vpop.f32.mrf.mxu0
      %v1338 = vadd.f32 %v1259, %v1337
      %v1339 = vpop.f32.mrf.mxu0
      %v1340 = vadd.f32 %v1261, %v1339
      %1341 = vdwg.mxu0
      %v1342 = vmax.f32 %v1273, 0.0
      %v1343 = vmax.f32 %v1275, 0.0
      %v1344 = vmax.f32 %v1278, 0.0
      %v1345 = vmax.f32 %v1280, 0.0
      %v1346 = vmax.f32 %v1283, 0.0
      %v1347 = vmax.f32 %v1285, 0.0
      %v1348 = vmax.f32 %v1288, 0.0
      %v1349 = vmax.f32 %v1290, 0.0
      %v1350 = vmax.f32 %v1293, 0.0
      %v1351 = vmax.f32 %v1295, 0.0
      %v1352 = vmax.f32 %v1298, 0.0
      %v1353 = vmax.f32 %v1300, 0.0
      %v1354 = vmax.f32 %v1303, 0.0
      %v1355 = vmax.f32 %v1305, 0.0
      %v1356 = vmax.f32 %v1308, 0.0
      %v1357 = vmax.f32 %v1310, 0.0
      %v1358 = vmax.f32 %v1313, 0.0
      %v1359 = vmax.f32 %v1315, 0.0
      %v1360 = vmax.f32 %v1318, 0.0
      %v1361 = vmax.f32 %v1320, 0.0
      %v1362 = vmax.f32 %v1323, 0.0
      %v1363 = vmax.f32 %v1325, 0.0
      %v1364 = vmax.f32 %v1328, 0.0
      %v1365 = vmax.f32 %v1330, 0.0
      %v1366 = vmax.f32 %v1333, 0.0
      %v1367 = vmax.f32 %v1335, 0.0
      %v1368 = vmax.f32 %v1338, 0.0
      %v1369 = vmax.f32 %v1340, 0.0
      %vm1370 = vcmask 261120
      %1371 = vst.msk [vmem:[%s175] sm:$0xff] %vm1370, %v1342
      %1372 = vst.msk [vmem:[%s175 + $0x8] sm:$0xff] %vm1370, %v1343
      %1373 = vst.msk [vmem:[%s175 + $0x10] sm:$0xff] %vm1370, %v1344
      %1374 = vst.msk [vmem:[%s175 + $0x18] sm:$0xff] %vm1370, %v1345
      %1375 = vst.msk [vmem:[%s175 + $0x20] sm:$0xff] %vm1370, %v1346
      %1376 = vst.msk [vmem:[%s175 + $0x28] sm:$0xff] %vm1370, %v1347
      %1377 = vst.msk [vmem:[%s175 + $0x30] sm:$0xff] %vm1370, %v1348
      %1378 = vst.msk [vmem:[%s175 + $0x38] sm:$0xff] %vm1370, %v1349
      %1379 = vst.msk [vmem:[%s175 + $0x40] sm:$0xff] %vm1370, %v1350
      %1380 = vst.msk [vmem:[%s175 + $0x48] sm:$0xff] %vm1370, %v1351
      %1381 = vst.msk [vmem:[%s175 + $0x50] sm:$0xff] %vm1370, %v1352
      %1382 = vst.msk [vmem:[%s175 + $0x58] sm:$0xff] %vm1370, %v1353
      %1383 = vst.msk [vmem:[%s175 + $0x60] sm:$0xff] %vm1370, %v1354
      %1384 = vst.msk [vmem:[%s175 + $0x68] sm:$0xff] %vm1370, %v1355
      %1385 = vst.msk [vmem:[%s175 + $0x70] sm:$0xff] %vm1370, %v1356
      %1386 = vst.msk [vmem:[%s175 + $0x78] sm:$0xff] %vm1370, %v1357
      %1387 = vst.msk [vmem:[%s175 + $0x80] sm:$0xff] %vm1370, %v1358
      %1388 = vst.msk [vmem:[%s175 + $0x88] sm:$0xff] %vm1370, %v1359
      %1389 = vst.msk [vmem:[%s175 + $0x90] sm:$0xff] %vm1370, %v1360
      %1390 = vst.msk [vmem:[%s175 + $0x98] sm:$0xff] %vm1370, %v1361
      %1391 = vst.msk [vmem:[%s175 + $0xa0] sm:$0xff] %vm1370, %v1362
      %1392 = vst.msk [vmem:[%s175 + $0xa8] sm:$0xff] %vm1370, %v1363
      %1393 = vst.msk [vmem:[%s175 + $0xb0] sm:$0xff] %vm1370, %v1364
      %1394 = vst.msk [vmem:[%s175 + $0xb8] sm:$0xff] %vm1370, %v1365
      %1395 = vst.msk [vmem:[%s175 + $0xc0] sm:$0xff] %vm1370, %v1366
      %1396 = vst.msk [vmem:[%s175 + $0xc8] sm:$0xff] %vm1370, %v1367
      %1397 = vst.msk [vmem:[%s175 + $0xd0] sm:$0xff] %vm1370, %v1368
      %1398 = vst.msk [vmem:[%s175 + $0xd8] sm:$0xff] %vm1370, %v1369
      %s1399 = smul.u32 28, %s14
      %p1400 = scmp.lt.s32.totalorder %s1399, 195
      %s1401 = scalar_select %p1400, %s1399, 195
      %s1402 = smul.addr %s1401, 8
      %s1403 = scalar_lea.vmem %s3, %s1402
      // Predicated region
      $region33: #{raft_plus_dicl_forward.62} parent=31 // pred_check
        %p1404 = pneg %p100
      $region34: #{raft_plus_dicl_forward.62} parent=31 // pred_check_branch
        %1406 = sbr.rel (%p1404) target = $region36
      $region35: #{raft_plus_dicl_forward.62} parent=31 // pred_region
        %s1407 = smul.u32 28, %s14
      $region36: #{raft_plus_dicl_forward.62} parent=31 // pred_fallthru
        _
    $region32: #{raft_plus_dicl_forward.62} parent=5 // pred_fallthru
      _
    %p1408 = scmp.le.s32.totalorder 2, %s9
    // Predicated region
    $region37: #{raft_plus_dicl_forward.62} parent=5 // pred_check
      %p1409 = pneg %p1408
    $region38: #{raft_plus_dicl_forward.62} parent=5 // pred_check_branch
      %1411 = sbr.rel (%p1409) target = $region40
    $region39: #{raft_plus_dicl_forward.62} parent=5 // pred_region
      %s1412 = ssub.s32 %s9, 2
      // Predicated region
      $region41: #{raft_plus_dicl_forward.62} parent=39 // pred_check
        %p1413 = pneg %p106
      $region42: #{raft_plus_dicl_forward.62} parent=39 // pred_check_branch
        %1415 = sbr.rel (%p1413) target = $region44
      $region43: #{raft_plus_dicl_forward.62} parent=39 // pred_region
        %s1416 = smul.u32 28, %s15
        %p1417 = scmp.lt.s32.totalorder %s1416, 195
        %s1418 = scalar_select %p1417, %s1416, 195
        %s1419 = smul.addr %s1418, 8
        %s1420 = scalar_lea.vmem %s3, %s1419
      $region44: #{raft_plus_dicl_forward.62} parent=39 // pred_fallthru
        _
    $region40: #{raft_plus_dicl_forward.62} parent=5 // pred_fallthru
      _
  $region6: #{raft_plus_dicl_forward.62} parent=0 // loop_footer
    %s13 = sadd.s32 1, %s9
  $region7: #{raft_plus_dicl_forward.62} parent=0 // loop_footer_branch
    %8 = sbr.rel target = $region3
  $region8: #{raft_plus_dicl_forward.62} parent=0 // loop_exit
    _

// kernel: raft_plus_dicl_forward.63
$region0: #{raft_plus_dicl_forward.63}
  #allocation0 [shape = 'u32[]', space=smem, size = 0x4, offset = 0x4, fixed_abs, tag = 'smem constant byte address 0x4 - core index']
  #allocation1 [shape = 'u32[72,128]{1,0:T(1,128)}', space=vmem, size = 0x9000, scoped, tag = 'internal scratch']
  #allocation2 [shape = 'f32[1,1]{1,0:T(1,128)S(1)}', space=vmem, size = 0x200, scoped, tag = 'scoped memory for raft_plus_dicl_forward.63']
  %s0 = inlined_call_operand.vmem [shape: bf16[1568,288], index: 0, kind: input, shape index: {}]
  %s1 = inlined_call_operand.vmem [shape: bf16[288,1], index: 1, kind: input, shape index: {}]
  %s2 = inlined_call_operand.<no memory space> [shape: f32[1,1], index: 2, kind: input, shape index: {}]
  %s3 = inlined_call_operand.vmem [shape: f32[1568,1], index: 3, kind: output, shape index: {}]
  %s4 = sld [smem:[#allocation0]]
  $region45: #{raft_plus_dicl_forward.63} parent=0
    _
  %s6 = ssub.s32 1, %s4
  %s7 = scalar_select 0, %s6, %s4
  %v8 = vstv %s2
  %9 = vst [vmem:[#allocation2] sm:$0x1] %v8
  loop: start=0, step=1, limit=9
  $region2: #{raft_plus_dicl_forward.63} parent=0 // loop_pre_header
    _
  $region3: #{raft_plus_dicl_forward.63} parent=0 // loop_header
    %s11 = sphi 0, %s15
    %p12 = scmp.ge.s32.totalorder %s11, 9
    %s21 = sphi 0, %s23
    %s24 = sphi 0, %s21
    %s25 = sphi 0, %s24
    %s41 = sphi 0, %s25
    %s45 = sphi 0, %s45
    %s47 = sphi 0, %s45
    %s48 = sphi 0, %s47
    %s62 = sphi 0, %s48
    %s66 = sphi 0, %s66
    %s68 = sphi 0, %s66
    %s69 = sphi 0, %s68
    %s83 = sphi 0, %s69
    %s89 = sphi 0, %s91
    %s92 = sphi 0, %s89
    %s93 = sphi 0, %s92
    %s109 = sphi 0, %s93
  $region4: #{raft_plus_dicl_forward.63} parent=0 // loop_header_branch
    %14 = sbr.rel (%p12) target = $region8
  $region5: #{raft_plus_dicl_forward.63} parent=0 // loop_body
    %s16 = ssub.s32 %s11, 1
    %s17 = ssub.s32 %s11, 2
    %s18 = sadd.s32 %s11, 1
    %s19 = ssub.s32 %s11, %s18
    %p20 = scmp.eq.s32.totalorder %s19, 0
    %s22 = sadd.s32 %s21, 1
    %s23 = scalar_select %p20, %s21, %s22
    %p26 = pneg %p20
    %p27 = scmp.eq.s32.totalorder %s11, 6
    %p28 = por %p26, %p27
    %p29 = scmp.ne.s32.totalorder %s21, %s24
    %p30 = scmp.eq.s32.totalorder %s11, 0
    %p31 = por %p29, %p30
    %p32 = scmp.ne.s32.totalorder %s21, %s24
    %p33 = scmp.eq.s32.totalorder %s16, 6
    %p34 = por %p32, %p33
    %p35 = scmp.ne.s32.totalorder %s24, %s25
    %p36 = scmp.eq.s32.totalorder %s16, 0
    %p37 = por %p35, %p36
    %p38 = scmp.ne.s32.totalorder %s24, %s25
    %p39 = scmp.eq.s32.totalorder %s17, 6
    %p40 = por %p38, %p39
    %p42 = scmp.ne.s32.totalorder %s25, %s41
    %p43 = scmp.eq.s32.totalorder %s17, 0
    %p44 = por %p42, %p43
    %s46 = sadd.s32 %s45, 1
    %p49 = scmp.eq.s32.totalorder %s11, 6
    %p50 = scmp.ne.s32.totalorder %s45, %s47
    %p51 = scmp.eq.s32.totalorder %s11, 0
    %p52 = por %p50, %p51
    %p53 = scmp.ne.s32.totalorder %s45, %s47
    %p54 = scmp.eq.s32.totalorder %s16, 6
    %p55 = por %p53, %p54
    %p56 = scmp.ne.s32.totalorder %s47, %s48
    %p57 = scmp.eq.s32.totalorder %s16, 0
    %p58 = por %p56, %p57
    %p59 = scmp.ne.s32.totalorder %s47, %s48
    %p60 = scmp.eq.s32.totalorder %s17, 6
    %p61 = por %p59, %p60
    %p63 = scmp.ne.s32.totalorder %s48, %s62
    %p64 = scmp.eq.s32.totalorder %s17, 0
    %p65 = por %p63, %p64
    %s67 = sadd.s32 %s66, 1
    %p70 = scmp.eq.s32.totalorder %s11, 6
    %p71 = scmp.ne.s32.totalorder %s66, %s68
    %p72 = scmp.eq.s32.totalorder %s11, 0
    %p73 = por %p71, %p72
    %p74 = scmp.ne.s32.totalorder %s66, %s68
    %p75 = scmp.eq.s32.totalorder %s16, 6
    %p76 = por %p74, %p75
    %p77 = scmp.ne.s32.totalorder %s68, %s69
    %p78 = scmp.eq.s32.totalorder %s16, 0
    %p79 = por %p77, %p78
    %p80 = scmp.ne.s32.totalorder %s68, %s69
    %p81 = scmp.eq.s32.totalorder %s17, 6
    %p82 = por %p80, %p81
    %p84 = scmp.ne.s32.totalorder %s69, %s83
    %p85 = scmp.eq.s32.totalorder %s17, 0
    %p86 = por %p84, %p85
    %s87 = ssub.s32 %s11, %s18
    %p88 = scmp.eq.s32.totalorder %s87, 0
    %s90 = sadd.s32 %s89, 1
    %s91 = scalar_select %p88, %s89, %s90
    %p94 = pneg %p88
    %p95 = scmp.eq.s32.totalorder %s11, 6
    %p96 = por %p94, %p95
    %p97 = scmp.ne.s32.totalorder %s89, %s92
    %p98 = scmp.eq.s32.totalorder %s11, 0
    %p99 = por %p97, %p98
    %p100 = scmp.ne.s32.totalorder %s89, %s92
    %p101 = scmp.eq.s32.totalorder %s16, 6
    %p102 = por %p100, %p101
    %p103 = scmp.ne.s32.totalorder %s92, %s93
    %p104 = scmp.eq.s32.totalorder %s16, 0
    %p105 = por %p103, %p104
    %p106 = scmp.ne.s32.totalorder %s92, %s93
    %p107 = scmp.eq.s32.totalorder %s17, 6
    %p108 = por %p106, %p107
    %p110 = scmp.ne.s32.totalorder %s93, %s109
    %p111 = scmp.eq.s32.totalorder %s17, 0
    %p112 = por %p110, %p111
    %p113 = scmp.le.s32.totalorder 1, %s11
    %p114 = scmp.lt.s32.totalorder %s11, 8
    %p115 = pnand %p113, %p114
    %p116 = pneg %p115
    // Predicated region
    $region9: #{raft_plus_dicl_forward.63} parent=5 // pred_check
      _
    $region10: #{raft_plus_dicl_forward.63} parent=5 // pred_check_branch
      %118 = sbr.rel (%p115) target = $region12
    $region11: #{raft_plus_dicl_forward.63} parent=5 // pred_region
      %s119 = ssub.s32 %s11, 1
      // Predicated region
      $region13: #{raft_plus_dicl_forward.63} parent=11 // pred_check
        %p120 = pneg %p58
      $region14: #{raft_plus_dicl_forward.63} parent=11 // pred_check_branch
        %122 = sbr.rel (%p120) target = $region16
      $region15: #{raft_plus_dicl_forward.63} parent=11 // pred_region
        _
      $region16: #{raft_plus_dicl_forward.63} parent=11 // pred_fallthru
        _
      // Predicated region
      $region17: #{raft_plus_dicl_forward.63} parent=11 // pred_check
        %p123 = pneg %p79
      $region18: #{raft_plus_dicl_forward.63} parent=11 // pred_check_branch
        %125 = sbr.rel (%p123) target = $region20
      $region19: #{raft_plus_dicl_forward.63} parent=11 // pred_region
        _
      $region20: #{raft_plus_dicl_forward.63} parent=11 // pred_fallthru
        _
    $region12: #{raft_plus_dicl_forward.63} parent=5 // pred_fallthru
      _
    %p126 = scmp.lt.s32.totalorder %s11, 7
    // Predicated region
    $region21: #{raft_plus_dicl_forward.63} parent=5 // pred_check
      %p127 = pneg %p126
    $region22: #{raft_plus_dicl_forward.63} parent=5 // pred_check_branch
      %129 = sbr.rel (%p127) target = $region24
    $region23: #{raft_plus_dicl_forward.63} parent=5 // pred_region
      // Predicated region
      $region25: #{raft_plus_dicl_forward.63} parent=23 // pred_check
        %p130 = pneg %p31
      $region26: #{raft_plus_dicl_forward.63} parent=23 // pred_check_branch
        %132 = sbr.rel (%p130) target = $region28
      $region27: #{raft_plus_dicl_forward.63} parent=23 // pred_region
        %s133 = smul.u32 28, %s11
        %p134 = scmp.lt.s32.totalorder %s133, 195
        %s135 = scalar_select %p134, %s133, 195
        %s136 = smul.addr %s135, 3
        %s137 = smul.addr %s136, 4
        %s138 = scalar_lea.vmem %s0, %s137
        %s139 = smul.u32 28, %s11
      $region28: #{raft_plus_dicl_forward.63} parent=23 // pred_fallthru
        _
    $region24: #{raft_plus_dicl_forward.63} parent=5 // pred_fallthru
      _
    %p140 = scmp.le.s32.totalorder 1, %s11
    %p141 = scmp.lt.s32.totalorder %s11, 8
    %p142 = pnand %p140, %p141
    %p143 = pneg %p142
    // Predicated region
    $region29: #{raft_plus_dicl_forward.63} parent=5 // pred_check
      _
    $region30: #{raft_plus_dicl_forward.63} parent=5 // pred_check_branch
      %145 = sbr.rel (%p142) target = $region32
    $region31: #{raft_plus_dicl_forward.63} parent=5 // pred_region
      %s146 = ssub.s32 %s11, 1
      %s147 = smul.u32 28, %s16
      %p148 = scmp.lt.s32.totalorder %s147, 195
      %s149 = scalar_select %p148, %s147, 195
      %s150 = smul.addr %s149, 3
      %s151 = smul.addr %s150, 4
      %s152 = scalar_lea.vmem %s0, %s151
      %p153 = pneg %p37
      %p154 = pneg %p34
      %p155 = pneg %p58
      %p156 = pneg %p55
      %p157 = pneg %p79
      %p158 = pneg %p76
      %p159 = pneg %p105
      %p160 = pneg %p102
      %s161 = smul.u32 28, %s16
      %p162 = scmp.lt.s32.totalorder %s161, 195
      %s163 = scalar_select %p162, %s161, 195
      %s164 = smul.addr %s163, 8
      %s165 = scalar_lea.vmem %s3, %s164
      %s166 = smul.u32 28, %s16
      %p167 = scmp.lt.s32.totalorder %s166, 195
      %s168 = scalar_select %p167, %s166, 195
      %s169 = smul.addr %s168, 3
      %s170 = smul.addr %s169, 4
      %s171 = scalar_lea.vmem %s0, %s170
      %s172 = smul.u32 28, %s16
      %s173 = smul.u32 28, %s16
      %p174 = scmp.lt.s32.totalorder %s173, 195
      %s175 = scalar_select %p174, %s173, 195
      %s176 = smul.addr %s175, 8
      %s177 = scalar_lea.vmem %s3, %s176
      %s178 = smul.u32 28, %s16
      %v180 = vld [vmem:[%s171] sm:$0xff]
      %v181 = vld [vmem:[%s171 + $0x8] sm:$0xf]
      %v182 = vld [vmem:[%s171 + $0xc] sm:$0xff]
      %v183 = vld [vmem:[%s171 + $0x14] sm:$0xf]
      %v184 = vld [vmem:[%s171 + $0x18] sm:$0xff]
      %v185 = vld [vmem:[%s171 + $0x20] sm:$0xf]
      %v186 = vld [vmem:[%s171 + $0x24] sm:$0xff]
      %v187 = vld [vmem:[%s171 + $0x2c] sm:$0xf]
      %v188 = vld [vmem:[%s171 + $0x30] sm:$0xff]
      %v189 = vld [vmem:[%s171 + $0x38] sm:$0xf]
      %v190 = vld [vmem:[%s171 + $0x3c] sm:$0xff]
      %v191 = vld [vmem:[%s171 + $0x44] sm:$0xf]
      %v192 = vld [vmem:[%s171 + $0x48] sm:$0xff]
      %v193 = vld [vmem:[%s171 + $0x50] sm:$0xf]
      %v194 = vld [vmem:[%s171 + $0x54] sm:$0xff]
      %v195 = vld [vmem:[%s171 + $0x5c] sm:$0xf]
      %v196 = vld [vmem:[%s171 + $0x60] sm:$0xff]
      %v197 = vld [vmem:[%s171 + $0x68] sm:$0xf]
      %v198 = vld [vmem:[%s171 + $0x6c] sm:$0xff]
      %v199 = vld [vmem:[%s171 + $0x74] sm:$0xf]
      %v200 = vld [vmem:[%s171 + $0x78] sm:$0xff]
      %v201 = vld [vmem:[%s171 + $0x80] sm:$0xf]
      %v202 = vld [vmem:[%s171 + $0x84] sm:$0xff]
      %v203 = vld [vmem:[%s171 + $0x8c] sm:$0xf]
      %v204 = vld [vmem:[%s171 + $0x90] sm:$0xff]
      %v205 = vld [vmem:[%s171 + $0x98] sm:$0xf]
      %v206 = vld [vmem:[%s171 + $0x9c] sm:$0xff]
      %v207 = vld [vmem:[%s171 + $0xa4] sm:$0xf]
      %v208 = vld [vmem:[%s171 + $0xa8] sm:$0xff]
      %v209 = vld [vmem:[%s171 + $0xb0] sm:$0xf]
      %v210 = vld [vmem:[%s171 + $0xb4] sm:$0xff]
      %v211 = vld [vmem:[%s171 + $0xbc] sm:$0xf]
      %v212 = vld [vmem:[%s171 + $0xc0] sm:$0xff]
      %v213 = vld [vmem:[%s171 + $0xc8] sm:$0xf]
      %v214 = vld [vmem:[%s171 + $0xcc] sm:$0xff]
      %v215 = vld [vmem:[%s171 + $0xd4] sm:$0xf]
      %v216 = vld [vmem:[%s171 + $0xd8] sm:$0xff]
      %v217 = vld [vmem:[%s171 + $0xe0] sm:$0xf]
      %v218 = vld [vmem:[%s171 + $0xe4] sm:$0xff]
      %v219 = vld [vmem:[%s171 + $0xec] sm:$0xf]
      %v220 = vld [vmem:[%s171 + $0xf0] sm:$0xff]
      %v221 = vld [vmem:[%s171 + $0xf8] sm:$0xf]
      %v222 = vld [vmem:[%s171 + $0xfc] sm:$0xff]
      %v223 = vld [vmem:[%s171 + $0x104] sm:$0xf]
      %v224 = vld [vmem:[%s171 + $0x108] sm:$0xff]
      %v225 = vld [vmem:[%s171 + $0x110] sm:$0xf]
      %v226 = vld [vmem:[%s171 + $0x114] sm:$0xff]
      %v227 = vld [vmem:[%s171 + $0x11c] sm:$0xf]
      %v228 = vld [vmem:[%s171 + $0x120] sm:$0xff]
      %v229 = vld [vmem:[%s171 + $0x128] sm:$0xf]
      %v230 = vld [vmem:[%s171 + $0x12c] sm:$0xff]
      %v231 = vld [vmem:[%s171 + $0x134] sm:$0xf]
      %v232 = vld [vmem:[%s171 + $0x138] sm:$0xff]
      %v233 = vld [vmem:[%s171 + $0x140] sm:$0xf]
      %v234 = vld [vmem:[%s171 + $0x144] sm:$0xff]
      %v235 = vld [vmem:[%s171 + $0x14c] sm:$0xf]
      %v236 = vld [vmem:[%s1] sm:$0xf]
      %v237 = vld [vmem:[%s1 + $0x4] sm:$0xf]
      %v238 = vld [vmem:[%s1 + $0x8] sm:$0xf]
      %v239 = vld [vmem:[%s1 + $0xc] sm:$0xf]
      %v240 = vld [vmem:[%s1 + $0x10] sm:$0xf]
      %v241 = vld [vmem:[%s1 + $0x14] sm:$0xf]
      %v242 = vld [vmem:[%s1 + $0x18] sm:$0xf]
      %v243 = vld [vmem:[%s1 + $0x1c] sm:$0xf]
      %v244 = vld [vmem:[%s1 + $0x20] sm:$0xf]
      %v245 = vld [vmem:[%s1 + $0x24] sm:$0xf]
      %v246 = vld [vmem:[%s1 + $0x28] sm:$0xf]
      %v247 = vld [vmem:[%s1 + $0x2c] sm:$0xf]
      %v248 = vld [vmem:[%s1 + $0x30] sm:$0xf]
      %v249 = vld [vmem:[%s1 + $0x34] sm:$0xf]
      %v250 = vld [vmem:[%s1 + $0x38] sm:$0xf]
      %v251 = vld [vmem:[%s1 + $0x3c] sm:$0xf]
      %v252 = vld [vmem:[%s1 + $0x40] sm:$0xf]
      %v253 = vld [vmem:[%s1 + $0x44] sm:$0xf]
      %v254 = vld [vmem:[%s1 + $0x48] sm:$0xf]
      %v255 = vld [vmem:[%s1 + $0x4c] sm:$0xf]
      %v256 = vld [vmem:[%s1 + $0x50] sm:$0xf]
      %v257 = vld [vmem:[%s1 + $0x54] sm:$0xf]
      %v258 = vld [vmem:[%s1 + $0x58] sm:$0xf]
      %v259 = vld [vmem:[%s1 + $0x5c] sm:$0xf]
      %v260 = vld [vmem:[%s1 + $0x60] sm:$0xf]
      %v261 = vld [vmem:[%s1 + $0x64] sm:$0xf]
      %v262 = vld [vmem:[%s1 + $0x68] sm:$0xf]
      %v263 = vld [vmem:[%s1 + $0x6c] sm:$0xf]
      %v264 = vld [vmem:[%s1 + $0x70] sm:$0xf]
      %v265 = vld [vmem:[%s1 + $0x74] sm:$0xf]
      %v266 = vld [vmem:[%s1 + $0x78] sm:$0xf]
      %v267 = vld [vmem:[%s1 + $0x7c] sm:$0xf]
      %v268 = vld [vmem:[%s1 + $0x80] sm:$0xf]
      %v269 = vld [vmem:[%s1 + $0x84] sm:$0xf]
      %v270 = vld [vmem:[%s1 + $0x88] sm:$0xf]
      %v271 = vld [vmem:[%s1 + $0x8c] sm:$0xf]
      %v272 = vld [vmem:[#allocation2] sm:$0x1]
      %v274 = vperm.slane %v272, 0
      %v332 = vunpack.c.l.b16 %v180
      %v333 = vunpack.c.h.b16 %v180
      %v334 = vunpack.c.l.b16 %v181
      %v335 = vunpack.c.l.b16 %v182
      %v336 = vunpack.c.h.b16 %v182
      %v337 = vunpack.c.l.b16 %v183
      %v338 = vunpack.c.l.b16 %v184
      %v339 = vunpack.c.h.b16 %v184
      %v340 = vunpack.c.l.b16 %v185
      %v341 = vunpack.c.l.b16 %v186
      %v342 = vunpack.c.h.b16 %v186
      %v343 = vunpack.c.l.b16 %v187
      %v344 = vunpack.c.l.b16 %v188
      %v345 = vunpack.c.h.b16 %v188
      %v346 = vunpack.c.l.b16 %v189
      %v347 = vunpack.c.l.b16 %v190
      %v348 = vunpack.c.h.b16 %v190
      %v349 = vunpack.c.l.b16 %v191
      %v350 = vunpack.c.l.b16 %v192
      %v351 = vunpack.c.h.b16 %v192
      %v352 = vunpack.c.l.b16 %v193
      %v353 = vunpack.c.l.b16 %v194
      %v354 = vunpack.c.h.b16 %v194
      %v355 = vunpack.c.l.b16 %v195
      %v356 = vunpack.c.l.b16 %v196
      %v357 = vunpack.c.h.b16 %v196
      %v358 = vunpack.c.l.b16 %v197
      %v359 = vunpack.c.l.b16 %v198
      %v360 = vunpack.c.h.b16 %v198
      %v361 = vunpack.c.l.b16 %v199
      %v362 = vunpack.c.l.b16 %v200
      %v363 = vunpack.c.h.b16 %v200
      %v364 = vunpack.c.l.b16 %v201
      %v365 = vunpack.c.l.b16 %v202
      %v366 = vunpack.c.h.b16 %v202
      %v367 = vunpack.c.l.b16 %v203
      %v368 = vunpack.c.l.b16 %v204
      %v369 = vunpack.c.h.b16 %v204
      %v370 = vunpack.c.l.b16 %v205
      %v371 = vunpack.c.l.b16 %v206
      %v372 = vunpack.c.h.b16 %v206
      %v373 = vunpack.c.l.b16 %v207
      %v374 = vunpack.c.l.b16 %v208
      %v375 = vunpack.c.h.b16 %v208
      %v376 = vunpack.c.l.b16 %v209
      %v377 = vunpack.c.l.b16 %v210
      %v378 = vunpack.c.h.b16 %v210
      %v379 = vunpack.c.l.b16 %v211
      %v380 = vunpack.c.l.b16 %v212
      %v381 = vunpack.c.h.b16 %v212
      %v382 = vunpack.c.l.b16 %v213
      %v383 = vunpack.c.l.b16 %v214
      %v384 = vunpack.c.h.b16 %v214
      %v385 = vunpack.c.l.b16 %v215
      %v386 = vunpack.c.l.b16 %v216
      %v387 = vunpack.c.h.b16 %v216
      %v388 = vunpack.c.l.b16 %v217
      %v389 = vunpack.c.l.b16 %v218
      %v390 = vunpack.c.h.b16 %v218
      %v391 = vunpack.c.l.b16 %v219
      %v392 = vunpack.c.l.b16 %v220
      %v393 = vunpack.c.h.b16 %v220
      %v394 = vunpack.c.l.b16 %v221
      %v395 = vunpack.c.l.b16 %v222
      %v396 = vunpack.c.h.b16 %v222
      %v397 = vunpack.c.l.b16 %v223
      %v398 = vunpack.c.l.b16 %v224
      %v399 = vunpack.c.h.b16 %v224
      %v400 = vunpack.c.l.b16 %v225
      %v401 = vunpack.c.l.b16 %v226
      %v402 = vunpack.c.h.b16 %v226
      %v403 = vunpack.c.l.b16 %v227
      %v404 = vunpack.c.l.b16 %v228
      %v405 = vunpack.c.h.b16 %v228
      %v406 = vunpack.c.l.b16 %v229
      %v407 = vunpack.c.l.b16 %v230
      %v408 = vunpack.c.h.b16 %v230
      %v409 = vunpack.c.l.b16 %v231
      %v410 = vunpack.c.l.b16 %v232
      %v411 = vunpack.c.h.b16 %v232
      %v412 = vunpack.c.l.b16 %v233
      %v413 = vunpack.c.l.b16 %v234
      %v414 = vunpack.c.h.b16 %v234
      %v415 = vunpack.c.l.b16 %v235
      %v416 = vpack.c.b16 %v335, %v332
      %v417 = vpack.c.b16 %v336, %v333
      %v418 = vpack.c.b16 %v337, %v334
      %v419 = vpack.c.b16 %v341, %v338
      %v420 = vpack.c.b16 %v342, %v339
      %v421 = vpack.c.b16 %v343, %v340
      %v422 = vpack.c.b16 %v347, %v344
      %v423 = vpack.c.b16 %v348, %v345
      %v424 = vpack.c.b16 %v349, %v346
      %v425 = vpack.c.b16 %v353, %v350
      %v426 = vpack.c.b16 %v354, %v351
      %v427 = vpack.c.b16 %v355, %v352
      %v428 = vpack.c.b16 %v359, %v356
      %v429 = vpack.c.b16 %v360, %v357
      %v430 = vpack.c.b16 %v361, %v358
      %v431 = vpack.c.b16 %v365, %v362
      %v432 = vpack.c.b16 %v366, %v363
      %v433 = vpack.c.b16 %v367, %v364
      %v434 = vpack.c.b16 %v371, %v368
      %v435 = vpack.c.b16 %v372, %v369
      %v436 = vpack.c.b16 %v373, %v370
      %v437 = vpack.c.b16 %v377, %v374
      %v438 = vpack.c.b16 %v378, %v375
      %v439 = vpack.c.b16 %v379, %v376
      %v440 = vpack.c.b16 %v383, %v380
      %v441 = vpack.c.b16 %v384, %v381
      %v442 = vpack.c.b16 %v385, %v382
      %v443 = vpack.c.b16 %v389, %v386
      %v444 = vpack.c.b16 %v390, %v387
      %v445 = vpack.c.b16 %v391, %v388
      %v446 = vpack.c.b16 %v395, %v392
      %v447 = vpack.c.b16 %v396, %v393
      %v448 = vpack.c.b16 %v397, %v394
      %v449 = vpack.c.b16 %v401, %v398
      %v450 = vpack.c.b16 %v402, %v399
      %v451 = vpack.c.b16 %v403, %v400
      %v452 = vpack.c.b16 %v407, %v404
      %v453 = vpack.c.b16 %v408, %v405
      %v454 = vpack.c.b16 %v409, %v406
      %v455 = vpack.c.b16 %v413, %v410
      %v456 = vpack.c.b16 %v414, %v411
      %v457 = vpack.c.b16 %v415, %v412
      %v522 = vunpack.c.l.b16 %v236
      %v523 = vunpack.c.l.b16 %v237
      %v524 = vunpack.c.l.b16 %v238
      %v525 = vunpack.c.l.b16 %v239
      %v526 = vunpack.c.l.b16 %v240
      %v527 = vunpack.c.l.b16 %v241
      %v528 = vunpack.c.l.b16 %v242
      %v529 = vunpack.c.l.b16 %v243
      %v530 = vunpack.c.l.b16 %v244
      %v531 = vunpack.c.l.b16 %v245
      %v532 = vunpack.c.l.b16 %v246
      %v533 = vunpack.c.l.b16 %v247
      %v534 = vunpack.c.l.b16 %v248
      %v535 = vunpack.c.l.b16 %v249
      %v536 = vunpack.c.l.b16 %v250
      %v537 = vunpack.c.l.b16 %v251
      %v538 = vunpack.c.l.b16 %v252
      %v539 = vunpack.c.l.b16 %v253
      %v540 = vunpack.c.l.b16 %v254
      %v541 = vunpack.c.l.b16 %v255
      %v542 = vunpack.c.l.b16 %v256
      %v543 = vunpack.c.l.b16 %v257
      %v544 = vunpack.c.l.b16 %v258
      %v545 = vunpack.c.l.b16 %v259
      %v546 = vunpack.c.l.b16 %v260
      %v547 = vunpack.c.l.b16 %v261
      %v548 = vunpack.c.l.b16 %v262
      %v549 = vunpack.c.l.b16 %v263
      %v550 = vunpack.c.l.b16 %v264
      %v551 = vunpack.c.l.b16 %v265
      %v552 = vunpack.c.l.b16 %v266
      %v553 = vunpack.c.l.b16 %v267
      %v554 = vunpack.c.l.b16 %v268
      %v555 = vunpack.c.l.b16 %v269
      %v556 = vunpack.c.l.b16 %v270
      %v557 = vunpack.c.l.b16 %v271
      %v558 = vpack.c.b16 %v523, %v522
      %v559 = vpack.c.b16 %v525, %v524
      %v560 = vpack.c.b16 %v527, %v526
      %v561 = vpack.c.b16 %v529, %v528
      %v562 = vpack.c.b16 %v531, %v530
      %v563 = vpack.c.b16 %v533, %v532
      %v564 = vpack.c.b16 %v535, %v534
      %v565 = vpack.c.b16 %v537, %v536
      %v566 = vpack.c.b16 %v539, %v538
      %v567 = vpack.c.b16 %v541, %v540
      %v568 = vpack.c.b16 %v543, %v542
      %v569 = vpack.c.b16 %v545, %v544
      %v570 = vpack.c.b16 %v547, %v546
      %v571 = vpack.c.b16 %v549, %v548
      %v572 = vpack.c.b16 %v551, %v550
      %v573 = vpack.c.b16 %v553, %v552
      %v574 = vpack.c.b16 %v555, %v554
      %v575 = vpack.c.b16 %v557, %v556
      %vm594 = vcmask 261120
      %v596 = vsel %vm594, %v418, 0
      %v599 = vsel %vm594, %v421, 0
      %v602 = vsel %vm594, %v424, 0
      %v605 = vsel %vm594, %v427, 0
      %v608 = vsel %vm594, %v430, 0
      %v611 = vsel %vm594, %v433, 0
      %v614 = vsel %vm594, %v436, 0
      %v617 = vsel %vm594, %v439, 0
      %v620 = vsel %vm594, %v442, 0
      %v623 = vsel %vm594, %v445, 0
      %v626 = vsel %vm594, %v448, 0
      %v629 = vsel %vm594, %v451, 0
      %v632 = vsel %vm594, %v454, 0
      %v635 = vsel %vm594, %v457, 0
      %637 = vmatpush.bf16.msra.mxu0 %v565
      %638 = vmatpush.bf16.msra.mxu0 %v564
      %639 = vmatpush.bf16.msra.mxu0 %v563
      %640 = vmatpush.bf16.msra.mxu0 %v562
      %641 = vmatpush.bf16.msra.mxu0 %v561
      %642 = vmatpush.bf16.msra.mxu0 %v560
      %643 = vmatpush.bf16.msra.mxu0 %v559
      %644 = vmatpush.bf16.msra.mxu0 %v558
      %645 = vmatmul.bf16.gmra.mxu0 %v416
      %v646 = vpop.f32.mrf.mxu0
      %v647 = vadd.f32 %v274, %v646
      %v648 = vpop.f32.mrf.mxu0
      %v649 = vadd.f32 %v274, %v648
      %650 = vmatmul.bf16.gmra.mxu0 %v419
      %v651 = vpop.f32.mrf.mxu0
      %v652 = vadd.f32 %v274, %v651
      %v653 = vpop.f32.mrf.mxu0
      %v654 = vadd.f32 %v274, %v653
      %655 = vmatmul.bf16.gmra.mxu0 %v422
      %v656 = vpop.f32.mrf.mxu0
      %v657 = vadd.f32 %v274, %v656
      %v658 = vpop.f32.mrf.mxu0
      %v659 = vadd.f32 %v274, %v658
      %660 = vmatmul.bf16.gmra.mxu0 %v425
      %v661 = vpop.f32.mrf.mxu0
      %v662 = vadd.f32 %v274, %v661
      %v663 = vpop.f32.mrf.mxu0
      %v664 = vadd.f32 %v274, %v663
      %665 = vmatmul.bf16.gmra.mxu0 %v428
      %v666 = vpop.f32.mrf.mxu0
      %v667 = vadd.f32 %v274, %v666
      %v668 = vpop.f32.mrf.mxu0
      %v669 = vadd.f32 %v274, %v668
      %670 = vmatmul.bf16.gmra.mxu0 %v431
      %v671 = vpop.f32.mrf.mxu0
      %v672 = vadd.f32 %v274, %v671
      %v673 = vpop.f32.mrf.mxu0
      %v674 = vadd.f32 %v274, %v673
      %675 = vmatmul.bf16.gmra.mxu0 %v434
      %v676 = vpop.f32.mrf.mxu0
      %v677 = vadd.f32 %v274, %v676
      %v678 = vpop.f32.mrf.mxu0
      %v679 = vadd.f32 %v274, %v678
      %680 = vmatmul.bf16.gmra.mxu0 %v437
      %v681 = vpop.f32.mrf.mxu0
      %v682 = vadd.f32 %v274, %v681
      %v683 = vpop.f32.mrf.mxu0
      %v684 = vadd.f32 %v274, %v683
      %685 = vmatmul.bf16.gmra.mxu0 %v440
      %v686 = vpop.f32.mrf.mxu0
      %v687 = vadd.f32 %v274, %v686
      %v688 = vpop.f32.mrf.mxu0
      %v689 = vadd.f32 %v274, %v688
      %690 = vmatmul.bf16.gmra.mxu0 %v443
      %v691 = vpop.f32.mrf.mxu0
      %v692 = vadd.f32 %v274, %v691
      %v693 = vpop.f32.mrf.mxu0
      %v694 = vadd.f32 %v274, %v693
      %695 = vmatmul.bf16.gmra.mxu0 %v446
      %v696 = vpop.f32.mrf.mxu0
      %v697 = vadd.f32 %v274, %v696
      %v698 = vpop.f32.mrf.mxu0
      %v699 = vadd.f32 %v274, %v698
      %700 = vmatmul.bf16.gmra.mxu0 %v449
      %v701 = vpop.f32.mrf.mxu0
      %v702 = vadd.f32 %v274, %v701
      %v703 = vpop.f32.mrf.mxu0
      %v704 = vadd.f32 %v274, %v703
      %705 = vmatmul.bf16.gmra.mxu0 %v452
      %v706 = vpop.f32.mrf.mxu0
      %v707 = vadd.f32 %v274, %v706
      %v708 = vpop.f32.mrf.mxu0
      %v709 = vadd.f32 %v274, %v708
      %710 = vmatmul.bf16.gmra.mxu0 %v455
      %v711 = vpop.f32.mrf.mxu0
      %v712 = vadd.f32 %v274, %v711
      %v713 = vpop.f32.mrf.mxu0
      %v714 = vadd.f32 %v274, %v713
      %715 = vdwg.mxu0
      %716 = vmatpush.bf16.msra.mxu0 %v573
      %717 = vmatpush.bf16.msra.mxu0 %v572
      %718 = vmatpush.bf16.msra.mxu0 %v571
      %719 = vmatpush.bf16.msra.mxu0 %v570
      %720 = vmatpush.bf16.msra.mxu0 %v569
      %721 = vmatpush.bf16.msra.mxu0 %v568
      %722 = vmatpush.bf16.msra.mxu0 %v567
      %723 = vmatpush.bf16.msra.mxu0 %v566
      %724 = vmatmul.bf16.gmra.mxu0 %v417
      %v725 = vpop.f32.mrf.mxu0
      %v726 = vadd.f32 %v647, %v725
      %v727 = vpop.f32.mrf.mxu0
      %v728 = vadd.f32 %v649, %v727
      %729 = vmatmul.bf16.gmra.mxu0 %v420
      %v730 = vpop.f32.mrf.mxu0
      %v731 = vadd.f32 %v652, %v730
      %v732 = vpop.f32.mrf.mxu0
      %v733 = vadd.f32 %v654, %v732
      %734 = vmatmul.bf16.gmra.mxu0 %v423
      %v735 = vpop.f32.mrf.mxu0
      %v736 = vadd.f32 %v657, %v735
      %v737 = vpop.f32.mrf.mxu0
      %v738 = vadd.f32 %v659, %v737
      %739 = vmatmul.bf16.gmra.mxu0 %v426
      %v740 = vpop.f32.mrf.mxu0
      %v741 = vadd.f32 %v662, %v740
      %v742 = vpop.f32.mrf.mxu0
      %v743 = vadd.f32 %v664, %v742
      %744 = vmatmul.bf16.gmra.mxu0 %v429
      %v745 = vpop.f32.mrf.mxu0
      %v746 = vadd.f32 %v667, %v745
      %v747 = vpop.f32.mrf.mxu0
      %v748 = vadd.f32 %v669, %v747
      %749 = vmatmul.bf16.gmra.mxu0 %v432
      %v750 = vpop.f32.mrf.mxu0
      %v751 = vadd.f32 %v672, %v750
      %v752 = vpop.f32.mrf.mxu0
      %v753 = vadd.f32 %v674, %v752
      %754 = vmatmul.bf16.gmra.mxu0 %v435
      %v755 = vpop.f32.mrf.mxu0
      %v756 = vadd.f32 %v677, %v755
      %v757 = vpop.f32.mrf.mxu0
      %v758 = vadd.f32 %v679, %v757
      %759 = vmatmul.bf16.gmra.mxu0 %v438
      %v760 = vpop.f32.mrf.mxu0
      %v761 = vadd.f32 %v682, %v760
      %v762 = vpop.f32.mrf.mxu0
      %v763 = vadd.f32 %v684, %v762
      %764 = vmatmul.bf16.gmra.mxu0 %v441
      %v765 = vpop.f32.mrf.mxu0
      %v766 = vadd.f32 %v687, %v765
      %v767 = vpop.f32.mrf.mxu0
      %v768 = vadd.f32 %v689, %v767
      %769 = vmatmul.bf16.gmra.mxu0 %v444
      %v770 = vpop.f32.mrf.mxu0
      %v771 = vadd.f32 %v692, %v770
      %v772 = vpop.f32.mrf.mxu0
      %v773 = vadd.f32 %v694, %v772
      %774 = vmatmul.bf16.gmra.mxu0 %v447
      %v775 = vpop.f32.mrf.mxu0
      %v776 = vadd.f32 %v697, %v775
      %v777 = vpop.f32.mrf.mxu0
      %v778 = vadd.f32 %v699, %v777
      %779 = vmatmul.bf16.gmra.mxu0 %v450
      %v780 = vpop.f32.mrf.mxu0
      %v781 = vadd.f32 %v702, %v780
      %v782 = vpop.f32.mrf.mxu0
      %v783 = vadd.f32 %v704, %v782
      %784 = vmatmul.bf16.gmra.mxu0 %v453
      %v785 = vpop.f32.mrf.mxu0
      %v786 = vadd.f32 %v707, %v785
      %v787 = vpop.f32.mrf.mxu0
      %v788 = vadd.f32 %v709, %v787
      %789 = vmatmul.bf16.gmra.mxu0 %v456
      %v790 = vpop.f32.mrf.mxu0
      %v791 = vadd.f32 %v712, %v790
      %v792 = vpop.f32.mrf.mxu0
      %v793 = vadd.f32 %v714, %v792
      %794 = vdwg.mxu0
      %795 = vmatpush.bf16.msra.mxu0 0
      %796 = vmatpush.bf16.msra.mxu0 0
      %797 = vmatpush.bf16.msra.mxu0 0
      %798 = vmatpush.bf16.msra.mxu0 0
      %799 = vmatpush.bf16.msra.mxu0 0
      %800 = vmatpush.bf16.msra.mxu0 0
      %801 = vmatpush.bf16.msra.mxu0 %v575
      %802 = vmatpush.bf16.msra.mxu0 %v574
      %803 = vmatmul.bf16.gmra.mxu0 %v596
      %v804 = vpop.f32.mrf.mxu0
      %v805 = vadd.f32 %v726, %v804
      %v806 = vpop.f32.mrf.mxu0
      %v807 = vadd.f32 %v728, %v806
      %808 = vmatmul.bf16.gmra.mxu0 %v599
      %v809 = vpop.f32.mrf.mxu0
      %v810 = vadd.f32 %v731, %v809
      %v811 = vpop.f32.mrf.mxu0
      %v812 = vadd.f32 %v733, %v811
      %813 = vmatmul.bf16.gmra.mxu0 %v602
      %v814 = vpop.f32.mrf.mxu0
      %v815 = vadd.f32 %v736, %v814
      %v816 = vpop.f32.mrf.mxu0
      %v817 = vadd.f32 %v738, %v816
      %818 = vmatmul.bf16.gmra.mxu0 %v605
      %v819 = vpop.f32.mrf.mxu0
      %v820 = vadd.f32 %v741, %v819
      %v821 = vpop.f32.mrf.mxu0
      %v822 = vadd.f32 %v743, %v821
      %823 = vmatmul.bf16.gmra.mxu0 %v608
      %v824 = vpop.f32.mrf.mxu0
      %v825 = vadd.f32 %v746, %v824
      %v826 = vpop.f32.mrf.mxu0
      %v827 = vadd.f32 %v748, %v826
      %828 = vmatmul.bf16.gmra.mxu0 %v611
      %v829 = vpop.f32.mrf.mxu0
      %v830 = vadd.f32 %v751, %v829
      %v831 = vpop.f32.mrf.mxu0
      %v832 = vadd.f32 %v753, %v831
      %833 = vmatmul.bf16.gmra.mxu0 %v614
      %v834 = vpop.f32.mrf.mxu0
      %v835 = vadd.f32 %v756, %v834
      %v836 = vpop.f32.mrf.mxu0
      %v837 = vadd.f32 %v758, %v836
      %838 = vmatmul.bf16.gmra.mxu0 %v617
      %v839 = vpop.f32.mrf.mxu0
      %v840 = vadd.f32 %v761, %v839
      %v841 = vpop.f32.mrf.mxu0
      %v842 = vadd.f32 %v763, %v841
      %843 = vmatmul.bf16.gmra.mxu0 %v620
      %v844 = vpop.f32.mrf.mxu0
      %v845 = vadd.f32 %v766, %v844
      %v846 = vpop.f32.mrf.mxu0
      %v847 = vadd.f32 %v768, %v846
      %848 = vmatmul.bf16.gmra.mxu0 %v623
      %v849 = vpop.f32.mrf.mxu0
      %v850 = vadd.f32 %v771, %v849
      %v851 = vpop.f32.mrf.mxu0
      %v852 = vadd.f32 %v773, %v851
      %853 = vmatmul.bf16.gmra.mxu0 %v626
      %v854 = vpop.f32.mrf.mxu0
      %v855 = vadd.f32 %v776, %v854
      %v856 = vpop.f32.mrf.mxu0
      %v857 = vadd.f32 %v778, %v856
      %858 = vmatmul.bf16.gmra.mxu0 %v629
      %v859 = vpop.f32.mrf.mxu0
      %v860 = vadd.f32 %v781, %v859
      %v861 = vpop.f32.mrf.mxu0
      %v862 = vadd.f32 %v783, %v861
      %863 = vmatmul.bf16.gmra.mxu0 %v632
      %v864 = vpop.f32.mrf.mxu0
      %v865 = vadd.f32 %v786, %v864
      %v866 = vpop.f32.mrf.mxu0
      %v867 = vadd.f32 %v788, %v866
      %868 = vmatmul.bf16.gmra.mxu0 %v635
      %v869 = vpop.f32.mrf.mxu0
      %v870 = vadd.f32 %v791, %v869
      %v871 = vpop.f32.mrf.mxu0
      %v872 = vadd.f32 %v793, %v871
      %873 = vdwg.mxu0
      %vm874 = vcmask 7168
      %875 = vst.msk [vmem:[%s177] sm:$0xff] %vm874, %v805
      %876 = vst.msk [vmem:[%s177 + $0x8] sm:$0xff] %vm874, %v807
      %877 = vst.msk [vmem:[%s177 + $0x10] sm:$0xff] %vm874, %v810
      %878 = vst.msk [vmem:[%s177 + $0x18] sm:$0xff] %vm874, %v812
      %879 = vst.msk [vmem:[%s177 + $0x20] sm:$0xff] %vm874, %v815
      %880 = vst.msk [vmem:[%s177 + $0x28] sm:$0xff] %vm874, %v817
      %881 = vst.msk [vmem:[%s177 + $0x30] sm:$0xff] %vm874, %v820
      %882 = vst.msk [vmem:[%s177 + $0x38] sm:$0xff] %vm874, %v822
      %883 = vst.msk [vmem:[%s177 + $0x40] sm:$0xff] %vm874, %v825
      %884 = vst.msk [vmem:[%s177 + $0x48] sm:$0xff] %vm874, %v827
      %885 = vst.msk [vmem:[%s177 + $0x50] sm:$0xff] %vm874, %v830
      %886 = vst.msk [vmem:[%s177 + $0x58] sm:$0xff] %vm874, %v832
      %887 = vst.msk [vmem:[%s177 + $0x60] sm:$0xff] %vm874, %v835
      %888 = vst.msk [vmem:[%s177 + $0x68] sm:$0xff] %vm874, %v837
      %889 = vst.msk [vmem:[%s177 + $0x70] sm:$0xff] %vm874, %v840
      %890 = vst.msk [vmem:[%s177 + $0x78] sm:$0xff] %vm874, %v842
      %891 = vst.msk [vmem:[%s177 + $0x80] sm:$0xff] %vm874, %v845
      %892 = vst.msk [vmem:[%s177 + $0x88] sm:$0xff] %vm874, %v847
      %893 = vst.msk [vmem:[%s177 + $0x90] sm:$0xff] %vm874, %v850
      %894 = vst.msk [vmem:[%s177 + $0x98] sm:$0xff] %vm874, %v852
      %895 = vst.msk [vmem:[%s177 + $0xa0] sm:$0xff] %vm874, %v855
      %896 = vst.msk [vmem:[%s177 + $0xa8] sm:$0xff] %vm874, %v857
      %897 = vst.msk [vmem:[%s177 + $0xb0] sm:$0xff] %vm874, %v860
      %898 = vst.msk [vmem:[%s177 + $0xb8] sm:$0xff] %vm874, %v862
      %899 = vst.msk [vmem:[%s177 + $0xc0] sm:$0xff] %vm874, %v865
      %900 = vst.msk [vmem:[%s177 + $0xc8] sm:$0xff] %vm874, %v867
      %901 = vst.msk [vmem:[%s177 + $0xd0] sm:$0xff] %vm874, %v870
      %902 = vst.msk [vmem:[%s177 + $0xd8] sm:$0xff] %vm874, %v872
      %s903 = smul.u32 28, %s16
      %p904 = scmp.lt.s32.totalorder %s903, 195
      %s905 = scalar_select %p904, %s903, 195
      %s906 = smul.addr %s905, 8
      %s907 = scalar_lea.vmem %s3, %s906
      // Predicated region
      $region33: #{raft_plus_dicl_forward.63} parent=31 // pred_check
        %p908 = pneg %p102
      $region34: #{raft_plus_dicl_forward.63} parent=31 // pred_check_branch
        %910 = sbr.rel (%p908) target = $region36
      $region35: #{raft_plus_dicl_forward.63} parent=31 // pred_region
        %s911 = smul.u32 28, %s16
      $region36: #{raft_plus_dicl_forward.63} parent=31 // pred_fallthru
        _
    $region32: #{raft_plus_dicl_forward.63} parent=5 // pred_fallthru
      _
    %p912 = scmp.le.s32.totalorder 2, %s11
    // Predicated region
    $region37: #{raft_plus_dicl_forward.63} parent=5 // pred_check
      %p913 = pneg %p912
    $region38: #{raft_plus_dicl_forward.63} parent=5 // pred_check_branch
      %915 = sbr.rel (%p913) target = $region40
    $region39: #{raft_plus_dicl_forward.63} parent=5 // pred_region
      %s916 = ssub.s32 %s11, 2
      // Predicated region
      $region41: #{raft_plus_dicl_forward.63} parent=39 // pred_check
        %p917 = pneg %p108
      $region42: #{raft_plus_dicl_forward.63} parent=39 // pred_check_branch
        %919 = sbr.rel (%p917) target = $region44
      $region43: #{raft_plus_dicl_forward.63} parent=39 // pred_region
        %s920 = smul.u32 28, %s17
        %p921 = scmp.lt.s32.totalorder %s920, 195
        %s922 = scalar_select %p921, %s920, 195
        %s923 = smul.addr %s922, 8
        %s924 = scalar_lea.vmem %s3, %s923
      $region44: #{raft_plus_dicl_forward.63} parent=39 // pred_fallthru
        _
    $region40: #{raft_plus_dicl_forward.63} parent=5 // pred_fallthru
      _
  $region6: #{raft_plus_dicl_forward.63} parent=0 // loop_footer
    %s15 = sadd.s32 1, %s11
  $region7: #{raft_plus_dicl_forward.63} parent=0 // loop_footer_branch
    %10 = sbr.rel target = $region3
  $region8: #{raft_plus_dicl_forward.63} parent=0 // loop_exit
    _

// kernel: raft_plus_dicl_forward.64
$region0: #{raft_plus_dicl_forward.64}
  #allocation0 [shape = 'u32[]', space=smem, size = 0x4, offset = 0x4, fixed_abs, tag = 'smem constant byte address 0x4 - core index']
  #allocation1 [shape = 'u32[72,128]{1,0:T(1,128)}', space=vmem, size = 0x9000, scoped, tag = 'internal scratch']
  %s0 = inlined_call_operand.vmem [shape: bf16[32,56], index: 0, kind: input, shape index: {}]
  %s1 = inlined_call_operand.vmem [shape: bf16[56,49], index: 1, kind: input, shape index: {}]
  %s2 = inlined_call_operand.vmem [shape: f32[1,49], index: 2, kind: input, shape index: {}]
  %s3 = inlined_call_operand.vmem [shape: f32[32,49], index: 3, kind: output, shape index: {}]
  %s4 = sld [smem:[#allocation0]]
  $region22: #{raft_plus_dicl_forward.64} parent=0
    _
  %s6 = ssub.s32 1, %s4
  %s7 = scalar_select 0, %s6, %s4
  // Predicated region
  $region2: #{raft_plus_dicl_forward.64} parent=0 // pred_check
    _
  $region3: #{raft_plus_dicl_forward.64} parent=0 // pred_check_branch
    %9 = sbr.rel (0) target = $region5
  $region4: #{raft_plus_dicl_forward.64} parent=0 // pred_region
    _
  $region5: #{raft_plus_dicl_forward.64} parent=0 // pred_fallthru
    _
  // Predicated region
  $region6: #{raft_plus_dicl_forward.64} parent=0 // pred_check
    _
  $region7: #{raft_plus_dicl_forward.64} parent=0 // pred_check_branch
    %11 = sbr.rel (0) target = $region9
  $region8: #{raft_plus_dicl_forward.64} parent=0 // pred_region
    _
  $region9: #{raft_plus_dicl_forward.64} parent=0 // pred_fallthru
    _
  // Predicated region
  $region10: #{raft_plus_dicl_forward.64} parent=0 // pred_check
    _
  $region11: #{raft_plus_dicl_forward.64} parent=0 // pred_check_branch
    %13 = sbr.rel (0) target = $region13
  $region12: #{raft_plus_dicl_forward.64} parent=0 // pred_region
    _
  $region13: #{raft_plus_dicl_forward.64} parent=0 // pred_fallthru
    _
  %v15 = vld [vmem:[%s0] sm:$0xf]
  %v16 = vld [vmem:[%s0 + $0x4] sm:$0xf]
  %v17 = vld [vmem:[%s0 + $0x8] sm:$0xf]
  %v18 = vld [vmem:[%s0 + $0xc] sm:$0xf]
  %v19 = vld [vmem:[%s1] sm:$0xf]
  %v20 = vld [vmem:[%s1 + $0x4] sm:$0xf]
  %v21 = vld [vmem:[%s1 + $0x8] sm:$0xf]
  %v22 = vld [vmem:[%s1 + $0xc] sm:$0xf]
  %v23 = vld [vmem:[%s1 + $0x10] sm:$0xf]
  %v24 = vld [vmem:[%s1 + $0x14] sm:$0xf]
  %v25 = vld [vmem:[%s1 + $0x18] sm:$0xf]
  %v26 = vld [vmem:[%s2] sm:$0x1]
  %v28 = vperm.slane %v26, 0
  %v34 = vunpack.c.l.b16 %v15
  %v35 = vunpack.c.l.b16 %v16
  %v36 = vunpack.c.l.b16 %v17
  %v37 = vunpack.c.l.b16 %v18
  %v38 = vpack.c.b16 %v35, %v34
  %v39 = vpack.c.b16 %v37, %v36
  %v47 = vunpack.c.l.b16 %v19
  %v48 = vunpack.c.l.b16 %v20
  %v49 = vunpack.c.l.b16 %v21
  %v50 = vunpack.c.l.b16 %v22
  %v51 = vunpack.c.l.b16 %v23
  %v52 = vunpack.c.l.b16 %v24
  %v53 = vunpack.c.l.b16 %v25
  %v54 = vpack.c.b16 %v48, %v47
  %v55 = vpack.c.b16 %v50, %v49
  %v56 = vpack.c.b16 %v52, %v51
  %v57 = vpack.c.b16 %v53, %v53
  %vm61 = vcmask 457728
  %v63 = vsel %vm61, %v38, 0
  %v66 = vsel %vm61, %v39, 0
  %vm68 = vcmask 1043456
  %v70 = vsel %vm68, %v57, 0
  %72 = vmatpush.bf16.msra.mxu0 0
  %73 = vmatpush.bf16.msra.mxu0 0
  %74 = vmatpush.bf16.msra.mxu0 0
  %75 = vmatpush.bf16.msra.mxu0 0
  %76 = vmatpush.bf16.msra.mxu0 %v70
  %77 = vmatpush.bf16.msra.mxu0 %v56
  %78 = vmatpush.bf16.msra.mxu0 %v55
  %79 = vmatpush.bf16.msra.mxu0 %v54
  %80 = vmatmul.bf16.gmra.mxu0 %v63
  %v81 = vpop.f32.mrf.mxu0
  %v82 = vadd.f32 %v28, %v81
  %v83 = vpop.f32.mrf.mxu0
  %v84 = vadd.f32 %v28, %v83
  %85 = vmatmul.bf16.gmra.mxu0 %v66
  %v86 = vpop.f32.mrf.mxu0
  %v87 = vadd.f32 %v28, %v86
  %v88 = vpop.f32.mrf.mxu0
  %v89 = vadd.f32 %v28, %v88
  %90 = vdwg.mxu0
  %vm91 = vcmask 400384
  %92 = vst.msk [vmem:[%s3] sm:$0xff] %vm91, %v82
  %93 = vst.msk [vmem:[%s3 + $0x8] sm:$0xff] %vm91, %v84
  %94 = vst.msk [vmem:[%s3 + $0x10] sm:$0xff] %vm91, %v87
  %95 = vst.msk [vmem:[%s3 + $0x18] sm:$0xff] %vm91, %v89
  // Predicated region
  $region14: #{raft_plus_dicl_forward.64} parent=0 // pred_check
    _
  $region15: #{raft_plus_dicl_forward.64} parent=0 // pred_check_branch
    %97 = sbr.rel (0) target = $region17
  $region16: #{raft_plus_dicl_forward.64} parent=0 // pred_region
    _
  $region17: #{raft_plus_dicl_forward.64} parent=0 // pred_fallthru
    _
  // Predicated region
  $region18: #{raft_plus_dicl_forward.64} parent=0 // pred_check
    _
  $region19: #{raft_plus_dicl_forward.64} parent=0 // pred_check_branch
    %99 = sbr.rel (0) target = $region21
  $region20: #{raft_plus_dicl_forward.64} parent=0 // pred_region
    _
  $region21: #{raft_plus_dicl_forward.64} parent=0 // pred_fallthru
    _

// kernel: raft_plus_dicl_forward.70
$region0: #{raft_plus_dicl_forward.70}
  #allocation0 [shape = 'u32[]', space=smem, size = 0x4, offset = 0x4, fixed_abs, tag = 'smem constant byte address 0x4 - core index']
  #allocation1 [shape = 'u32[72,128]{1,0:T(1,128)}', space=vmem, size = 0x9000, scoped, tag = 'internal scratch']
  %s0 = inlined_call_operand.vmem [shape: bf16[32,104], index: 0, kind: input, shape index: {}]
  %s1 = inlined_call_operand.vmem [shape: bf16[104,64], index: 1, kind: input, shape index: {}]
  %s2 = inlined_call_operand.vmem [shape: f32[1,64], index: 2, kind: input, shape index: {}]
  %s3 = inlined_call_operand.vmem [shape: f32[32,64], index: 3, kind: output, shape index: {}]
  %s4 = sld [smem:[#allocation0]]
  $region22: #{raft_plus_dicl_forward.70} parent=0
    _
  %s6 = ssub.s32 1, %s4
  %s7 = scalar_select 0, %s6, %s4
  // Predicated region
  $region2: #{raft_plus_dicl_forward.70} parent=0 // pred_check
    _
  $region3: #{raft_plus_dicl_forward.70} parent=0 // pred_check_branch
    %9 = sbr.rel (0) target = $region5
  $region4: #{raft_plus_dicl_forward.70} parent=0 // pred_region
    _
  $region5: #{raft_plus_dicl_forward.70} parent=0 // pred_fallthru
    _
  // Predicated region
  $region6: #{raft_plus_dicl_forward.70} parent=0 // pred_check
    _
  $region7: #{raft_plus_dicl_forward.70} parent=0 // pred_check_branch
    %11 = sbr.rel (0) target = $region9
  $region8: #{raft_plus_dicl_forward.70} parent=0 // pred_region
    _
  $region9: #{raft_plus_dicl_forward.70} parent=0 // pred_fallthru
    _
  // Predicated region
  $region10: #{raft_plus_dicl_forward.70} parent=0 // pred_check
    _
  $region11: #{raft_plus_dicl_forward.70} parent=0 // pred_check_branch
    %13 = sbr.rel (0) target = $region13
  $region12: #{raft_plus_dicl_forward.70} parent=0 // pred_region
    _
  $region13: #{raft_plus_dicl_forward.70} parent=0 // pred_fallthru
    _
  %v15 = vld [vmem:[%s0] sm:$0xf]
  %v16 = vld [vmem:[%s0 + $0x4] sm:$0xf]
  %v17 = vld [vmem:[%s0 + $0x8] sm:$0xf]
  %v18 = vld [vmem:[%s0 + $0xc] sm:$0xf]
  %v19 = vld [vmem:[%s1] sm:$0xf]
  %v20 = vld [vmem:[%s1 + $0x4] sm:$0xf]
  %v21 = vld [vmem:[%s1 + $0x8] sm:$0xf]
  %v22 = vld [vmem:[%s1 + $0xc] sm:$0xf]
  %v23 = vld [vmem:[%s1 + $0x10] sm:$0xf]
  %v24 = vld [vmem:[%s1 + $0x14] sm:$0xf]
  %v25 = vld [vmem:[%s1 + $0x18] sm:$0xf]
  %v26 = vld [vmem:[%s1 + $0x1c] sm:$0xf]
  %v27 = vld [vmem:[%s1 + $0x20] sm:$0xf]
  %v28 = vld [vmem:[%s1 + $0x24] sm:$0xf]
  %v29 = vld [vmem:[%s1 + $0x28] sm:$0xf]
  %v30 = vld [vmem:[%s1 + $0x2c] sm:$0xf]
  %v31 = vld [vmem:[%s1 + $0x30] sm:$0xf]
  %v32 = vld [vmem:[%s2] sm:$0x1]
  %v34 = vperm.slane %v32, 0
  %v40 = vunpack.c.l.b16 %v15
  %v41 = vunpack.c.l.b16 %v16
  %v42 = vunpack.c.l.b16 %v17
  %v43 = vunpack.c.l.b16 %v18
  %v44 = vpack.c.b16 %v41, %v40
  %v45 = vpack.c.b16 %v43, %v42
  %v59 = vunpack.c.l.b16 %v19
  %v60 = vunpack.c.l.b16 %v20
  %v61 = vunpack.c.l.b16 %v21
  %v62 = vunpack.c.l.b16 %v22
  %v63 = vunpack.c.l.b16 %v23
  %v64 = vunpack.c.l.b16 %v24
  %v65 = vunpack.c.l.b16 %v25
  %v66 = vunpack.c.l.b16 %v26
  %v67 = vunpack.c.l.b16 %v27
  %v68 = vunpack.c.l.b16 %v28
  %v69 = vunpack.c.l.b16 %v29
  %v70 = vunpack.c.l.b16 %v30
  %v71 = vunpack.c.l.b16 %v31
  %v72 = vpack.c.b16 %v60, %v59
  %v73 = vpack.c.b16 %v62, %v61
  %v74 = vpack.c.b16 %v64, %v63
  %v75 = vpack.c.b16 %v66, %v65
  %v76 = vpack.c.b16 %v68, %v67
  %v77 = vpack.c.b16 %v70, %v69
  %v78 = vpack.c.b16 %v71, %v71
  %vm85 = vcmask 850944
  %v87 = vsel %vm85, %v44, 0
  %v90 = vsel %vm85, %v45, 0
  %vm92 = vcmask 1043456
  %v94 = vsel %vm92, %v78, 0
  %96 = vmatpush.bf16.msra.mxu0 0
  %97 = vmatpush.bf16.msra.mxu0 %v94
  %98 = vmatpush.bf16.msra.mxu0 %v77
  %99 = vmatpush.bf16.msra.mxu0 %v76
  %100 = vmatpush.bf16.msra.mxu0 %v75
  %101 = vmatpush.bf16.msra.mxu0 %v74
  %102 = vmatpush.bf16.msra.mxu0 %v73
  %103 = vmatpush.bf16.msra.mxu0 %v72
  %104 = vmatmul.bf16.gmra.mxu0 %v87
  %v105 = vpop.f32.mrf.mxu0
  %v106 = vadd.f32 %v34, %v105
  %v107 = vpop.f32.mrf.mxu0
  %v108 = vadd.f32 %v34, %v107
  %109 = vmatmul.bf16.gmra.mxu0 %v90
  %v110 = vpop.f32.mrf.mxu0
  %v111 = vadd.f32 %v34, %v110
  %v112 = vpop.f32.mrf.mxu0
  %v113 = vadd.f32 %v34, %v112
  %114 = vdwg.mxu0
  %v115 = vmax.f32 %v106, 0.0
  %v116 = vmax.f32 %v108, 0.0
  %v117 = vmax.f32 %v111, 0.0
  %v118 = vmax.f32 %v113, 0.0
  %vm119 = vcmask 523264
  %120 = vst.msk [vmem:[%s3] sm:$0xff] %vm119, %v115
  %121 = vst.msk [vmem:[%s3 + $0x8] sm:$0xff] %vm119, %v116
  %122 = vst.msk [vmem:[%s3 + $0x10] sm:$0xff] %vm119, %v117
  %123 = vst.msk [vmem:[%s3 + $0x18] sm:$0xff] %vm119, %v118
  // Predicated region
  $region14: #{raft_plus_dicl_forward.70} parent=0 // pred_check
    _
  $region15: #{raft_plus_dicl_forward.70} parent=0 // pred_check_branch
    %125 = sbr.rel (0) target = $region17
  $region16: #{raft_plus_dicl_forward.70} parent=0 // pred_region
    _
  $region17: #{raft_plus_dicl_forward.70} parent=0 // pred_fallthru
    _
  // Predicated region
  $region18: #{raft_plus_dicl_forward.70} parent=0 // pred_check
    _
  $region19: #{raft_plus_dicl_forward.70} parent=0 // pred_check_branch
    %127 = sbr.rel (0) target = $region21
  $region20: #{raft_plus_dicl_forward.70} parent=0 // pred_region
    _
  $region21: #{raft_plus_dicl_forward.70} parent=0 // pred_fallthru
    _

// kernel: raft_plus_dicl_forward.71
$region0: #{raft_plus_dicl_forward.71}
  #allocation0 [shape = 'u32[]', space=smem, size = 0x4, offset = 0x4, fixed_abs, tag = 'smem constant byte address 0x4 - core index']
  #allocation1 [shape = 'u32[72,128]{1,0:T(1,128)}', space=vmem, size = 0x9000, scoped, tag = 'internal scratch']
  %s0 = inlined_call_operand.vmem [shape: bf16[32,576], index: 0, kind: input, shape index: {}]
  %s1 = inlined_call_operand.vmem [shape: bf16[576,48], index: 1, kind: input, shape index: {}]
  %s2 = inlined_call_operand.vmem [shape: f32[1,48], index: 2, kind: input, shape index: {}]
  %s3 = inlined_call_operand.vmem [shape: f32[32,48], index: 3, kind: output, shape index: {}]
  %s4 = sld [smem:[#allocation0]]
  $region22: #{raft_plus_dicl_forward.71} parent=0
    _
  %s6 = ssub.s32 1, %s4
  %s7 = scalar_select 0, %s6, %s4
  // Predicated region
  $region2: #{raft_plus_dicl_forward.71} parent=0 // pred_check
    _
  $region3: #{raft_plus_dicl_forward.71} parent=0 // pred_check_branch
    %9 = sbr.rel (0) target = $region5
  $region4: #{raft_plus_dicl_forward.71} parent=0 // pred_region
    _
  $region5: #{raft_plus_dicl_forward.71} parent=0 // pred_fallthru
    _
  // Predicated region
  $region6: #{raft_plus_dicl_forward.71} parent=0 // pred_check
    _
  $region7: #{raft_plus_dicl_forward.71} parent=0 // pred_check_branch
    %11 = sbr.rel (0) target = $region9
  $region8: #{raft_plus_dicl_forward.71} parent=0 // pred_region
    _
  $region9: #{raft_plus_dicl_forward.71} parent=0 // pred_fallthru
    _
  // Predicated region
  $region10: #{raft_plus_dicl_forward.71} parent=0 // pred_check
    _
  $region11: #{raft_plus_dicl_forward.71} parent=0 // pred_check_branch
    %13 = sbr.rel (0) target = $region13
  $region12: #{raft_plus_dicl_forward.71} parent=0 // pred_region
    _
  $region13: #{raft_plus_dicl_forward.71} parent=0 // pred_fallthru
    _
  %v15 = vld [vmem:[%s0] sm:$0xff]
  %v16 = vld [vmem:[%s0 + $0x8] sm:$0xff]
  %v17 = vld [vmem:[%s0 + $0x10] sm:$0xf]
  %v18 = vld [vmem:[%s0 + $0x14] sm:$0xff]
  %v19 = vld [vmem:[%s0 + $0x1c] sm:$0xff]
  %v20 = vld [vmem:[%s0 + $0x24] sm:$0xf]
  %v21 = vld [vmem:[%s0 + $0x28] sm:$0xff]
  %v22 = vld [vmem:[%s0 + $0x30] sm:$0xff]
  %v23 = vld [vmem:[%s0 + $0x38] sm:$0xf]
  %v24 = vld [vmem:[%s0 + $0x3c] sm:$0xff]
  %v25 = vld [vmem:[%s0 + $0x44] sm:$0xff]
  %v26 = vld [vmem:[%s0 + $0x4c] sm:$0xf]
  %v27 = vld [vmem:[%s1] sm:$0xf]
  %v28 = vld [vmem:[%s1 + $0x4] sm:$0xf]
  %v29 = vld [vmem:[%s1 + $0x8] sm:$0xf]
  %v30 = vld [vmem:[%s1 + $0xc] sm:$0xf]
  %v31 = vld [vmem:[%s1 + $0x10] sm:$0xf]
  %v32 = vld [vmem:[%s1 + $0x14] sm:$0xf]
  %v33 = vld [vmem:[%s1 + $0x18] sm:$0xf]
  %v34 = vld [vmem:[%s1 + $0x1c] sm:$0xf]
  %v35 = vld [vmem:[%s1 + $0x20] sm:$0xf]
  %v36 = vld [vmem:[%s1 + $0x24] sm:$0xf]
  %v37 = vld [vmem:[%s1 + $0x28] sm:$0xf]
  %v38 = vld [vmem:[%s1 + $0x2c] sm:$0xf]
  %v39 = vld [vmem:[%s1 + $0x30] sm:$0xf]
  %v40 = vld [vmem:[%s1 + $0x34] sm:$0xf]
  %v41 = vld [vmem:[%s1 + $0x38] sm:$0xf]
  %v42 = vld [vmem:[%s1 + $0x3c] sm:$0xf]
  %v43 = vld [vmem:[%s1 + $0x40] sm:$0xf]
  %v44 = vld [vmem:[%s1 + $0x44] sm:$0xf]
  %v45 = vld [vmem:[%s1 + $0x48] sm:$0xf]
  %v46 = vld [vmem:[%s1 + $0x4c] sm:$0xf]
  %v47 = vld [vmem:[%s1 + $0x50] sm:$0xf]
  %v48 = vld [vmem:[%s1 + $0x54] sm:$0xf]
  %v49 = vld [vmem:[%s1 + $0x58] sm:$0xf]
  %v50 = vld [vmem:[%s1 + $0x5c] sm:$0xf]
  %v51 = vld [vmem:[%s1 + $0x60] sm:$0xf]
  %v52 = vld [vmem:[%s1 + $0x64] sm:$0xf]
  %v53 = vld [vmem:[%s1 + $0x68] sm:$0xf]
  %v54 = vld [vmem:[%s1 + $0x6c] sm:$0xf]
  %v55 = vld [vmem:[%s1 + $0x70] sm:$0xf]
  %v56 = vld [vmem:[%s1 + $0x74] sm:$0xf]
  %v57 = vld [vmem:[%s1 + $0x78] sm:$0xf]
  %v58 = vld [vmem:[%s1 + $0x7c] sm:$0xf]
  %v59 = vld [vmem:[%s1 + $0x80] sm:$0xf]
  %v60 = vld [vmem:[%s1 + $0x84] sm:$0xf]
  %v61 = vld [vmem:[%s1 + $0x88] sm:$0xf]
  %v62 = vld [vmem:[%s1 + $0x8c] sm:$0xf]
  %v63 = vld [vmem:[%s1 + $0x90] sm:$0xf]
  %v64 = vld [vmem:[%s1 + $0x94] sm:$0xf]
  %v65 = vld [vmem:[%s1 + $0x98] sm:$0xf]
  %v66 = vld [vmem:[%s1 + $0x9c] sm:$0xf]
  %v67 = vld [vmem:[%s1 + $0xa0] sm:$0xf]
  %v68 = vld [vmem:[%s1 + $0xa4] sm:$0xf]
  %v69 = vld [vmem:[%s1 + $0xa8] sm:$0xf]
  %v70 = vld [vmem:[%s1 + $0xac] sm:$0xf]
  %v71 = vld [vmem:[%s1 + $0xb0] sm:$0xf]
  %v72 = vld [vmem:[%s1 + $0xb4] sm:$0xf]
  %v73 = vld [vmem:[%s1 + $0xb8] sm:$0xf]
  %v74 = vld [vmem:[%s1 + $0xbc] sm:$0xf]
  %v75 = vld [vmem:[%s1 + $0xc0] sm:$0xf]
  %v76 = vld [vmem:[%s1 + $0xc4] sm:$0xf]
  %v77 = vld [vmem:[%s1 + $0xc8] sm:$0xf]
  %v78 = vld [vmem:[%s1 + $0xcc] sm:$0xf]
  %v79 = vld [vmem:[%s1 + $0xd0] sm:$0xf]
  %v80 = vld [vmem:[%s1 + $0xd4] sm:$0xf]
  %v81 = vld [vmem:[%s1 + $0xd8] sm:$0xf]
  %v82 = vld [vmem:[%s1 + $0xdc] sm:$0xf]
  %v83 = vld [vmem:[%s1 + $0xe0] sm:$0xf]
  %v84 = vld [vmem:[%s1 + $0xe4] sm:$0xf]
  %v85 = vld [vmem:[%s1 + $0xe8] sm:$0xf]
  %v86 = vld [vmem:[%s1 + $0xec] sm:$0xf]
  %v87 = vld [vmem:[%s1 + $0xf0] sm:$0xf]
  %v88 = vld [vmem:[%s1 + $0xf4] sm:$0xf]
  %v89 = vld [vmem:[%s1 + $0xf8] sm:$0xf]
  %v90 = vld [vmem:[%s1 + $0xfc] sm:$0xf]
  %v91 = vld [vmem:[%s1 + $0x100] sm:$0xf]
  %v92 = vld [vmem:[%s1 + $0x104] sm:$0xf]
  %v93 = vld [vmem:[%s1 + $0x108] sm:$0xf]
  %v94 = vld [vmem:[%s1 + $0x10c] sm:$0xf]
  %v95 = vld [vmem:[%s1 + $0x110] sm:$0xf]
  %v96 = vld [vmem:[%s1 + $0x114] sm:$0xf]
  %v97 = vld [vmem:[%s1 + $0x118] sm:$0xf]
  %v98 = vld [vmem:[%s1 + $0x11c] sm:$0xf]
  %v99 = vld [vmem:[%s2] sm:$0x1]
  %v101 = vperm.slane %v99, 0
  %v115 = vunpack.c.l.b16 %v15
  %v116 = vunpack.c.h.b16 %v15
  %v117 = vunpack.c.l.b16 %v16
  %v118 = vunpack.c.h.b16 %v16
  %v119 = vunpack.c.l.b16 %v17
  %v120 = vunpack.c.l.b16 %v18
  %v121 = vunpack.c.h.b16 %v18
  %v122 = vunpack.c.l.b16 %v19
  %v123 = vunpack.c.h.b16 %v19
  %v124 = vunpack.c.l.b16 %v20
  %v125 = vunpack.c.l.b16 %v21
  %v126 = vunpack.c.h.b16 %v21
  %v127 = vunpack.c.l.b16 %v22
  %v128 = vunpack.c.h.b16 %v22
  %v129 = vunpack.c.l.b16 %v23
  %v130 = vunpack.c.l.b16 %v24
  %v131 = vunpack.c.h.b16 %v24
  %v132 = vunpack.c.l.b16 %v25
  %v133 = vunpack.c.h.b16 %v25
  %v134 = vunpack.c.l.b16 %v26
  %v135 = vpack.c.b16 %v120, %v115
  %v136 = vpack.c.b16 %v121, %v116
  %v137 = vpack.c.b16 %v122, %v117
  %v138 = vpack.c.b16 %v123, %v118
  %v139 = vpack.c.b16 %v124, %v119
  %v140 = vpack.c.b16 %v130, %v125
  %v141 = vpack.c.b16 %v131, %v126
  %v142 = vpack.c.b16 %v132, %v127
  %v143 = vpack.c.b16 %v133, %v128
  %v144 = vpack.c.b16 %v134, %v129
  %v225 = vunpack.c.l.b16 %v27
  %v226 = vunpack.c.l.b16 %v28
  %v227 = vunpack.c.l.b16 %v29
  %v228 = vunpack.c.l.b16 %v30
  %v229 = vunpack.c.l.b16 %v31
  %v230 = vunpack.c.l.b16 %v32
  %v231 = vunpack.c.l.b16 %v33
  %v232 = vunpack.c.l.b16 %v34
  %v233 = vunpack.c.l.b16 %v35
  %v234 = vunpack.c.l.b16 %v36
  %v235 = vunpack.c.l.b16 %v37
  %v236 = vunpack.c.l.b16 %v38
  %v237 = vunpack.c.l.b16 %v39
  %v238 = vunpack.c.l.b16 %v40
  %v239 = vunpack.c.l.b16 %v41
  %v240 = vunpack.c.l.b16 %v42
  %v241 = vunpack.c.l.b16 %v43
  %v242 = vunpack.c.l.b16 %v44
  %v243 = vunpack.c.l.b16 %v45
  %v244 = vunpack.c.l.b16 %v46
  %v245 = vunpack.c.l.b16 %v47
  %v246 = vunpack.c.l.b16 %v48
  %v247 = vunpack.c.l.b16 %v49
  %v248 = vunpack.c.l.b16 %v50
  %v249 = vunpack.c.l.b16 %v51
  %v250 = vunpack.c.l.b16 %v52
  %v251 = vunpack.c.l.b16 %v53
  %v252 = vunpack.c.l.b16 %v54
  %v253 = vunpack.c.l.b16 %v55
  %v254 = vunpack.c.l.b16 %v56
  %v255 = vunpack.c.l.b16 %v57
  %v256 = vunpack.c.l.b16 %v58
  %v257 = vunpack.c.l.b16 %v59
  %v258 = vunpack.c.l.b16 %v60
  %v259 = vunpack.c.l.b16 %v61
  %v260 = vunpack.c.l.b16 %v62
  %v261 = vunpack.c.l.b16 %v63
  %v262 = vunpack.c.l.b16 %v64
  %v263 = vunpack.c.l.b16 %v65
  %v264 = vunpack.c.l.b16 %v66
  %v265 = vunpack.c.l.b16 %v67
  %v266 = vunpack.c.l.b16 %v68
  %v267 = vunpack.c.l.b16 %v69
  %v268 = vunpack.c.l.b16 %v70
  %v269 = vunpack.c.l.b16 %v71
  %v270 = vunpack.c.l.b16 %v72
  %v271 = vunpack.c.l.b16 %v73
  %v272 = vunpack.c.l.b16 %v74
  %v273 = vunpack.c.l.b16 %v75
  %v274 = vunpack.c.l.b16 %v76
  %v275 = vunpack.c.l.b16 %v77
  %v276 = vunpack.c.l.b16 %v78
  %v277 = vunpack.c.l.b16 %v79
  %v278 = vunpack.c.l.b16 %v80
  %v279 = vunpack.c.l.b16 %v81
  %v280 = vunpack.c.l.b16 %v82
  %v281 = vunpack.c.l.b16 %v83
  %v282 = vunpack.c.l.b16 %v84
  %v283 = vunpack.c.l.b16 %v85
  %v284 = vunpack.c.l.b16 %v86
  %v285 = vunpack.c.l.b16 %v87
  %v286 = vunpack.c.l.b16 %v88
  %v287 = vunpack.c.l.b16 %v89
  %v288 = vunpack.c.l.b16 %v90
  %v289 = vunpack.c.l.b16 %v91
  %v290 = vunpack.c.l.b16 %v92
  %v291 = vunpack.c.l.b16 %v93
  %v292 = vunpack.c.l.b16 %v94
  %v293 = vunpack.c.l.b16 %v95
  %v294 = vunpack.c.l.b16 %v96
  %v295 = vunpack.c.l.b16 %v97
  %v296 = vunpack.c.l.b16 %v98
  %v297 = vpack.c.b16 %v226, %v225
  %v298 = vpack.c.b16 %v228, %v227
  %v299 = vpack.c.b16 %v230, %v229
  %v300 = vpack.c.b16 %v232, %v231
  %v301 = vpack.c.b16 %v234, %v233
  %v302 = vpack.c.b16 %v236, %v235
  %v303 = vpack.c.b16 %v238, %v237
  %v304 = vpack.c.b16 %v240, %v239
  %v305 = vpack.c.b16 %v242, %v241
  %v306 = vpack.c.b16 %v244, %v243
  %v307 = vpack.c.b16 %v246, %v245
  %v308 = vpack.c.b16 %v248, %v247
  %v309 = vpack.c.b16 %v250, %v249
  %v310 = vpack.c.b16 %v252, %v251
  %v311 = vpack.c.b16 %v254, %v253
  %v312 = vpack.c.b16 %v256, %v255
  %v313 = vpack.c.b16 %v258, %v257
  %v314 = vpack.c.b16 %v260, %v259
  %v315 = vpack.c.b16 %v262, %v261
  %v316 = vpack.c.b16 %v264, %v263
  %v317 = vpack.c.b16 %v266, %v265
  %v318 = vpack.c.b16 %v268, %v267
  %v319 = vpack.c.b16 %v270, %v269
  %v320 = vpack.c.b16 %v272, %v271
  %v321 = vpack.c.b16 %v274, %v273
  %v322 = vpack.c.b16 %v276, %v275
  %v323 = vpack.c.b16 %v278, %v277
  %v324 = vpack.c.b16 %v280, %v279
  %v325 = vpack.c.b16 %v282, %v281
  %v326 = vpack.c.b16 %v284, %v283
  %v327 = vpack.c.b16 %v286, %v285
  %v328 = vpack.c.b16 %v288, %v287
  %v329 = vpack.c.b16 %v290, %v289
  %v330 = vpack.c.b16 %v292, %v291
  %v331 = vpack.c.b16 %v294, %v293
  %v332 = vpack.c.b16 %v296, %v295
  %vm369 = vcmask 523264
  %v371 = vsel %vm369, %v139, 0
  %v374 = vsel %vm369, %v144, 0
  %376 = vmatpush.bf16.msra.mxu0 %v304
  %377 = vmatpush.bf16.msra.mxu0 %v303
  %378 = vmatpush.bf16.msra.mxu0 %v302
  %379 = vmatpush.bf16.msra.mxu0 %v301
  %380 = vmatpush.bf16.msra.mxu0 %v300
  %381 = vmatpush.bf16.msra.mxu0 %v299
  %382 = vmatpush.bf16.msra.mxu0 %v298
  %383 = vmatpush.bf16.msra.mxu0 %v297
  %384 = vmatmul.bf16.gmra.mxu0 %v135
  %v385 = vpop.f32.mrf.mxu0
  %v386 = vadd.f32 %v101, %v385
  %v387 = vpop.f32.mrf.mxu0
  %v388 = vadd.f32 %v101, %v387
  %389 = vmatmul.bf16.gmra.mxu0 %v140
  %v390 = vpop.f32.mrf.mxu0
  %v391 = vadd.f32 %v101, %v390
  %v392 = vpop.f32.mrf.mxu0
  %v393 = vadd.f32 %v101, %v392
  %394 = vdwg.mxu0
  %395 = vmatpush.bf16.msra.mxu0 %v312
  %396 = vmatpush.bf16.msra.mxu0 %v311
  %397 = vmatpush.bf16.msra.mxu0 %v310
  %398 = vmatpush.bf16.msra.mxu0 %v309
  %399 = vmatpush.bf16.msra.mxu0 %v308
  %400 = vmatpush.bf16.msra.mxu0 %v307
  %401 = vmatpush.bf16.msra.mxu0 %v306
  %402 = vmatpush.bf16.msra.mxu0 %v305
  %403 = vmatmul.bf16.gmra.mxu0 %v136
  %v404 = vpop.f32.mrf.mxu0
  %v405 = vadd.f32 %v386, %v404
  %v406 = vpop.f32.mrf.mxu0
  %v407 = vadd.f32 %v388, %v406
  %408 = vmatmul.bf16.gmra.mxu0 %v141
  %v409 = vpop.f32.mrf.mxu0
  %v410 = vadd.f32 %v391, %v409
  %v411 = vpop.f32.mrf.mxu0
  %v412 = vadd.f32 %v393, %v411
  %413 = vdwg.mxu0
  %414 = vmatpush.bf16.msra.mxu0 %v320
  %415 = vmatpush.bf16.msra.mxu0 %v319
  %416 = vmatpush.bf16.msra.mxu0 %v318
  %417 = vmatpush.bf16.msra.mxu0 %v317
  %418 = vmatpush.bf16.msra.mxu0 %v316
  %419 = vmatpush.bf16.msra.mxu0 %v315
  %420 = vmatpush.bf16.msra.mxu0 %v314
  %421 = vmatpush.bf16.msra.mxu0 %v313
  %422 = vmatmul.bf16.gmra.mxu0 %v137
  %v423 = vpop.f32.mrf.mxu0
  %v424 = vadd.f32 %v405, %v423
  %v425 = vpop.f32.mrf.mxu0
  %v426 = vadd.f32 %v407, %v425
  %427 = vmatmul.bf16.gmra.mxu0 %v142
  %v428 = vpop.f32.mrf.mxu0
  %v429 = vadd.f32 %v410, %v428
  %v430 = vpop.f32.mrf.mxu0
  %v431 = vadd.f32 %v412, %v430
  %432 = vdwg.mxu0
  %433 = vmatpush.bf16.msra.mxu0 %v328
  %434 = vmatpush.bf16.msra.mxu0 %v327
  %435 = vmatpush.bf16.msra.mxu0 %v326
  %436 = vmatpush.bf16.msra.mxu0 %v325
  %437 = vmatpush.bf16.msra.mxu0 %v324
  %438 = vmatpush.bf16.msra.mxu0 %v323
  %439 = vmatpush.bf16.msra.mxu0 %v322
  %440 = vmatpush.bf16.msra.mxu0 %v321
  %441 = vmatmul.bf16.gmra.mxu0 %v138
  %v442 = vpop.f32.mrf.mxu0
  %v443 = vadd.f32 %v424, %v442
  %v444 = vpop.f32.mrf.mxu0
  %v445 = vadd.f32 %v426, %v444
  %446 = vmatmul.bf16.gmra.mxu0 %v143
  %v447 = vpop.f32.mrf.mxu0
  %v448 = vadd.f32 %v429, %v447
  %v449 = vpop.f32.mrf.mxu0
  %v450 = vadd.f32 %v431, %v449
  %451 = vdwg.mxu0
  %452 = vmatpush.bf16.msra.mxu0 0
  %453 = vmatpush.bf16.msra.mxu0 0
  %454 = vmatpush.bf16.msra.mxu0 0
  %455 = vmatpush.bf16.msra.mxu0 0
  %456 = vmatpush.bf16.msra.mxu0 %v332
  %457 = vmatpush.bf16.msra.mxu0 %v331
  %458 = vmatpush.bf16.msra.mxu0 %v330
  %459 = vmatpush.bf16.msra.mxu0 %v329
  %460 = vmatmul.bf16.gmra.mxu0 %v371
  %v461 = vpop.f32.mrf.mxu0
  %v462 = vadd.f32 %v443, %v461
  %v463 = vpop.f32.mrf.mxu0
  %v464 = vadd.f32 %v445, %v463
  %465 = vmatmul.bf16.gmra.mxu0 %v374
  %v466 = vpop.f32.mrf.mxu0
  %v467 = vadd.f32 %v448, %v466
  %v468 = vpop.f32.mrf.mxu0
  %v469 = vadd.f32 %v450, %v468
  %470 = vdwg.mxu0
  %v471 = vmax.f32 %v462, 0.0
  %v472 = vmax.f32 %v464, 0.0
  %v473 = vmax.f32 %v467, 0.0
  %v474 = vmax.f32 %v469, 0.0
  %vm475 = vcmask 392192
  %476 = vst.msk [vmem:[%s3] sm:$0xff] %vm475, %v471
  %477 = vst.msk [vmem:[%s3 + $0x8] sm:$0xff] %vm475, %v472
  %478 = vst.msk [vmem:[%s3 + $0x10] sm:$0xff] %vm475, %v473
  %479 = vst.msk [vmem:[%s3 + $0x18] sm:$0xff] %vm475, %v474
  // Predicated region
  $region14: #{raft_plus_dicl_forward.71} parent=0 // pred_check
    _
  $region15: #{raft_plus_dicl_forward.71} parent=0 // pred_check_branch
    %481 = sbr.rel (0) target = $region17
  $region16: #{raft_plus_dicl_forward.71} parent=0 // pred_region
    _
  $region17: #{raft_plus_dicl_forward.71} parent=0 // pred_fallthru
    _
  // Predicated region
  $region18: #{raft_plus_dicl_forward.71} parent=0 // pred_check
    _
  $region19: #{raft_plus_dicl_forward.71} parent=0 // pred_check_branch
    %483 = sbr.rel (0) target = $region21
  $region20: #{raft_plus_dicl_forward.71} parent=0 // pred_region
    _
  $region21: #{raft_plus_dicl_forward.71} parent=0 // pred_fallthru
    _

// kernel: raft_plus_dicl_forward.72
$region0: #{raft_plus_dicl_forward.72}
  #allocation0 [shape = 'u32[]', space=smem, size = 0x4, offset = 0x4, fixed_abs, tag = 'smem constant byte address 0x4 - core index']
  #allocation1 [shape = 'u32[72,128]{1,0:T(1,128)}', space=vmem, size = 0x9000, scoped, tag = 'internal scratch']
  %s0 = inlined_call_operand.vmem [shape: bf16[32,104], index: 0, kind: input, shape index: {}]
  %s1 = inlined_call_operand.vmem [shape: bf16[104,32], index: 1, kind: input, shape index: {}]
  %s2 = inlined_call_operand.vmem [shape: f32[1,32], index: 2, kind: input, shape index: {}]
  %s3 = inlined_call_operand.vmem [shape: f32[32,32], index: 3, kind: output, shape index: {}]
  %s4 = sld [smem:[#allocation0]]
  $region22: #{raft_plus_dicl_forward.72} parent=0
    _
  %s6 = ssub.s32 1, %s4
  %s7 = scalar_select 0, %s6, %s4
  // Predicated region
  $region2: #{raft_plus_dicl_forward.72} parent=0 // pred_check
    _
  $region3: #{raft_plus_dicl_forward.72} parent=0 // pred_check_branch
    %9 = sbr.rel (0) target = $region5
  $region4: #{raft_plus_dicl_forward.72} parent=0 // pred_region
    _
  $region5: #{raft_plus_dicl_forward.72} parent=0 // pred_fallthru
    _
  // Predicated region
  $region6: #{raft_plus_dicl_forward.72} parent=0 // pred_check
    _
  $region7: #{raft_plus_dicl_forward.72} parent=0 // pred_check_branch
    %11 = sbr.rel (0) target = $region9
  $region8: #{raft_plus_dicl_forward.72} parent=0 // pred_region
    _
  $region9: #{raft_plus_dicl_forward.72} parent=0 // pred_fallthru
    _
  // Predicated region
  $region10: #{raft_plus_dicl_forward.72} parent=0 // pred_check
    _
  $region11: #{raft_plus_dicl_forward.72} parent=0 // pred_check_branch
    %13 = sbr.rel (0) target = $region13
  $region12: #{raft_plus_dicl_forward.72} parent=0 // pred_region
    _
  $region13: #{raft_plus_dicl_forward.72} parent=0 // pred_fallthru
    _
  %v15 = vld [vmem:[%s0] sm:$0xf]
  %v16 = vld [vmem:[%s0 + $0x4] sm:$0xf]
  %v17 = vld [vmem:[%s0 + $0x8] sm:$0xf]
  %v18 = vld [vmem:[%s0 + $0xc] sm:$0xf]
  %v19 = vld [vmem:[%s1] sm:$0xf]
  %v20 = vld [vmem:[%s1 + $0x4] sm:$0xf]
  %v21 = vld [vmem:[%s1 + $0x8] sm:$0xf]
  %v22 = vld [vmem:[%s1 + $0xc] sm:$0xf]
  %v23 = vld [vmem:[%s1 + $0x10] sm:$0xf]
  %v24 = vld [vmem:[%s1 + $0x14] sm:$0xf]
  %v25 = vld [vmem:[%s1 + $0x18] sm:$0xf]
  %v26 = vld [vmem:[%s1 + $0x1c] sm:$0xf]
  %v27 = vld [vmem:[%s1 + $0x20] sm:$0xf]
  %v28 = vld [vmem:[%s1 + $0x24] sm:$0xf]
  %v29 = vld [vmem:[%s1 + $0x28] sm:$0xf]
  %v30 = vld [vmem:[%s1 + $0x2c] sm:$0xf]
  %v31 = vld [vmem:[%s1 + $0x30] sm:$0xf]
  %v32 = vld [vmem:[%s2] sm:$0x1]
  %v34 = vperm.slane %v32, 0
  %v40 = vunpack.c.l.b16 %v15
  %v41 = vunpack.c.l.b16 %v16
  %v42 = vunpack.c.l.b16 %v17
  %v43 = vunpack.c.l.b16 %v18
  %v44 = vpack.c.b16 %v41, %v40
  %v45 = vpack.c.b16 %v43, %v42
  %v59 = vunpack.c.l.b16 %v19
  %v60 = vunpack.c.l.b16 %v20
  %v61 = vunpack.c.l.b16 %v21
  %v62 = vunpack.c.l.b16 %v22
  %v63 = vunpack.c.l.b16 %v23
  %v64 = vunpack.c.l.b16 %v24
  %v65 = vunpack.c.l.b16 %v25
  %v66 = vunpack.c.l.b16 %v26
  %v67 = vunpack.c.l.b16 %v27
  %v68 = vunpack.c.l.b16 %v28
  %v69 = vunpack.c.l.b16 %v29
  %v70 = vunpack.c.l.b16 %v30
  %v71 = vunpack.c.l.b16 %v31
  %v72 = vpack.c.b16 %v60, %v59
  %v73 = vpack.c.b16 %v62, %v61
  %v74 = vpack.c.b16 %v64, %v63
  %v75 = vpack.c.b16 %v66, %v65
  %v76 = vpack.c.b16 %v68, %v67
  %v77 = vpack.c.b16 %v70, %v69
  %v78 = vpack.c.b16 %v71, %v71
  %vm85 = vcmask 850944
  %v87 = vsel %vm85, %v44, 0
  %v90 = vsel %vm85, %v45, 0
  %vm92 = vcmask 1043456
  %v94 = vsel %vm92, %v78, 0
  %96 = vmatpush.bf16.msra.mxu0 0
  %97 = vmatpush.bf16.msra.mxu0 %v94
  %98 = vmatpush.bf16.msra.mxu0 %v77
  %99 = vmatpush.bf16.msra.mxu0 %v76
  %100 = vmatpush.bf16.msra.mxu0 %v75
  %101 = vmatpush.bf16.msra.mxu0 %v74
  %102 = vmatpush.bf16.msra.mxu0 %v73
  %103 = vmatpush.bf16.msra.mxu0 %v72
  %104 = vmatmul.bf16.gmra.mxu0 %v87
  %v105 = vpop.f32.mrf.mxu0
  %v106 = vadd.f32 %v34, %v105
  %v107 = vpop.f32.mrf.mxu0
  %v108 = vadd.f32 %v34, %v107
  %109 = vmatmul.bf16.gmra.mxu0 %v90
  %v110 = vpop.f32.mrf.mxu0
  %v111 = vadd.f32 %v34, %v110
  %v112 = vpop.f32.mrf.mxu0
  %v113 = vadd.f32 %v34, %v112
  %114 = vdwg.mxu0
  %v115 = vmax.f32 %v106, 0.0
  %v116 = vmax.f32 %v108, 0.0
  %v117 = vmax.f32 %v111, 0.0
  %v118 = vmax.f32 %v113, 0.0
  %vm119 = vcmask 261120
  %120 = vst.msk [vmem:[%s3] sm:$0xff] %vm119, %v115
  %121 = vst.msk [vmem:[%s3 + $0x8] sm:$0xff] %vm119, %v116
  %122 = vst.msk [vmem:[%s3 + $0x10] sm:$0xff] %vm119, %v117
  %123 = vst.msk [vmem:[%s3 + $0x18] sm:$0xff] %vm119, %v118
  // Predicated region
  $region14: #{raft_plus_dicl_forward.72} parent=0 // pred_check
    _
  $region15: #{raft_plus_dicl_forward.72} parent=0 // pred_check_branch
    %125 = sbr.rel (0) target = $region17
  $region16: #{raft_plus_dicl_forward.72} parent=0 // pred_region
    _
  $region17: #{raft_plus_dicl_forward.72} parent=0 // pred_fallthru
    _
  // Predicated region
  $region18: #{raft_plus_dicl_forward.72} parent=0 // pred_check
    _
  $region19: #{raft_plus_dicl_forward.72} parent=0 // pred_check_branch
    %127 = sbr.rel (0) target = $region21
  $region20: #{raft_plus_dicl_forward.72} parent=0 // pred_region
    _
  $region21: #{raft_plus_dicl_forward.72} parent=0 // pred_fallthru
    _

// kernel: raft_plus_dicl_forward.73
$region0: #{raft_plus_dicl_forward.73}
  #allocation0 [shape = 'u32[]', space=smem, size = 0x4, offset = 0x4, fixed_abs, tag = 'smem constant byte address 0x4 - core index']
  #allocation1 [shape = 'u32[72,128]{1,0:T(1,128)}', space=vmem, size = 0x9000, scoped, tag = 'internal scratch']
  %s0 = inlined_call_operand.vmem [shape: bf16[32,288], index: 0, kind: input, shape index: {}]
  %s1 = inlined_call_operand.vmem [shape: bf16[288,16], index: 1, kind: input, shape index: {}]
  %s2 = inlined_call_operand.vmem [shape: f32[1,16], index: 2, kind: input, shape index: {}]
  %s3 = inlined_call_operand.vmem [shape: f32[32,16], index: 3, kind: output, shape index: {}]
  %s4 = sld [smem:[#allocation0]]
  $region22: #{raft_plus_dicl_forward.73} parent=0
    _
  %s6 = ssub.s32 1, %s4
  %s7 = scalar_select 0, %s6, %s4
  // Predicated region
  $region2: #{raft_plus_dicl_forward.73} parent=0 // pred_check
    _
  $region3: #{raft_plus_dicl_forward.73} parent=0 // pred_check_branch
    %9 = sbr.rel (0) target = $region5
  $region4: #{raft_plus_dicl_forward.73} parent=0 // pred_region
    _
  $region5: #{raft_plus_dicl_forward.73} parent=0 // pred_fallthru
    _
  // Predicated region
  $region6: #{raft_plus_dicl_forward.73} parent=0 // pred_check
    _
  $region7: #{raft_plus_dicl_forward.73} parent=0 // pred_check_branch
    %11 = sbr.rel (0) target = $region9
  $region8: #{raft_plus_dicl_forward.73} parent=0 // pred_region
    _
  $region9: #{raft_plus_dicl_forward.73} parent=0 // pred_fallthru
    _
  // Predicated region
  $region10: #{raft_plus_dicl_forward.73} parent=0 // pred_check
    _
  $region11: #{raft_plus_dicl_forward.73} parent=0 // pred_check_branch
    %13 = sbr.rel (0) target = $region13
  $region12: #{raft_plus_dicl_forward.73} parent=0 // pred_region
    _
  $region13: #{raft_plus_dicl_forward.73} parent=0 // pred_fallthru
    _
  %v15 = vld [vmem:[%s0] sm:$0xff]
  %v16 = vld [vmem:[%s0 + $0x8] sm:$0xf]
  %v17 = vld [vmem:[%s0 + $0xc] sm:$0xff]
  %v18 = vld [vmem:[%s0 + $0x14] sm:$0xf]
  %v19 = vld [vmem:[%s0 + $0x18] sm:$0xff]
  %v20 = vld [vmem:[%s0 + $0x20] sm:$0xf]
  %v21 = vld [vmem:[%s0 + $0x24] sm:$0xff]
  %v22 = vld [vmem:[%s0 + $0x2c] sm:$0xf]
  %v23 = vld [vmem:[%s1] sm:$0xf]
  %v24 = vld [vmem:[%s1 + $0x4] sm:$0xf]
  %v25 = vld [vmem:[%s1 + $0x8] sm:$0xf]
  %v26 = vld [vmem:[%s1 + $0xc] sm:$0xf]
  %v27 = vld [vmem:[%s1 + $0x10] sm:$0xf]
  %v28 = vld [vmem:[%s1 + $0x14] sm:$0xf]
  %v29 = vld [vmem:[%s1 + $0x18] sm:$0xf]
  %v30 = vld [vmem:[%s1 + $0x1c] sm:$0xf]
  %v31 = vld [vmem:[%s1 + $0x20] sm:$0xf]
  %v32 = vld [vmem:[%s1 + $0x24] sm:$0xf]
  %v33 = vld [vmem:[%s1 + $0x28] sm:$0xf]
  %v34 = vld [vmem:[%s1 + $0x2c] sm:$0xf]
  %v35 = vld [vmem:[%s1 + $0x30] sm:$0xf]
  %v36 = vld [vmem:[%s1 + $0x34] sm:$0xf]
  %v37 = vld [vmem:[%s1 + $0x38] sm:$0xf]
  %v38 = vld [vmem:[%s1 + $0x3c] sm:$0xf]
  %v39 = vld [vmem:[%s1 + $0x40] sm:$0xf]
  %v40 = vld [vmem:[%s1 + $0x44] sm:$0xf]
  %v41 = vld [vmem:[%s1 + $0x48] sm:$0xf]
  %v42 = vld [vmem:[%s1 + $0x4c] sm:$0xf]
  %v43 = vld [vmem:[%s1 + $0x50] sm:$0xf]
  %v44 = vld [vmem:[%s1 + $0x54] sm:$0xf]
  %v45 = vld [vmem:[%s1 + $0x58] sm:$0xf]
  %v46 = vld [vmem:[%s1 + $0x5c] sm:$0xf]
  %v47 = vld [vmem:[%s1 + $0x60] sm:$0xf]
  %v48 = vld [vmem:[%s1 + $0x64] sm:$0xf]
  %v49 = vld [vmem:[%s1 + $0x68] sm:$0xf]
  %v50 = vld [vmem:[%s1 + $0x6c] sm:$0xf]
  %v51 = vld [vmem:[%s1 + $0x70] sm:$0xf]
  %v52 = vld [vmem:[%s1 + $0x74] sm:$0xf]
  %v53 = vld [vmem:[%s1 + $0x78] sm:$0xf]
  %v54 = vld [vmem:[%s1 + $0x7c] sm:$0xf]
  %v55 = vld [vmem:[%s1 + $0x80] sm:$0xf]
  %v56 = vld [vmem:[%s1 + $0x84] sm:$0xf]
  %v57 = vld [vmem:[%s1 + $0x88] sm:$0xf]
  %v58 = vld [vmem:[%s1 + $0x8c] sm:$0xf]
  %v59 = vld [vmem:[%s2] sm:$0x1]
  %v61 = vperm.slane %v59, 0
  %v71 = vunpack.c.l.b16 %v15
  %v72 = vunpack.c.h.b16 %v15
  %v73 = vunpack.c.l.b16 %v16
  %v74 = vunpack.c.l.b16 %v17
  %v75 = vunpack.c.h.b16 %v17
  %v76 = vunpack.c.l.b16 %v18
  %v77 = vunpack.c.l.b16 %v19
  %v78 = vunpack.c.h.b16 %v19
  %v79 = vunpack.c.l.b16 %v20
  %v80 = vunpack.c.l.b16 %v21
  %v81 = vunpack.c.h.b16 %v21
  %v82 = vunpack.c.l.b16 %v22
  %v83 = vpack.c.b16 %v74, %v71
  %v84 = vpack.c.b16 %v75, %v72
  %v85 = vpack.c.b16 %v76, %v73
  %v86 = vpack.c.b16 %v80, %v77
  %v87 = vpack.c.b16 %v81, %v78
  %v88 = vpack.c.b16 %v82, %v79
  %v129 = vunpack.c.l.b16 %v23
  %v130 = vunpack.c.l.b16 %v24
  %v131 = vunpack.c.l.b16 %v25
  %v132 = vunpack.c.l.b16 %v26
  %v133 = vunpack.c.l.b16 %v27
  %v134 = vunpack.c.l.b16 %v28
  %v135 = vunpack.c.l.b16 %v29
  %v136 = vunpack.c.l.b16 %v30
  %v137 = vunpack.c.l.b16 %v31
  %v138 = vunpack.c.l.b16 %v32
  %v139 = vunpack.c.l.b16 %v33
  %v140 = vunpack.c.l.b16 %v34
  %v141 = vunpack.c.l.b16 %v35
  %v142 = vunpack.c.l.b16 %v36
  %v143 = vunpack.c.l.b16 %v37
  %v144 = vunpack.c.l.b16 %v38
  %v145 = vunpack.c.l.b16 %v39
  %v146 = vunpack.c.l.b16 %v40
  %v147 = vunpack.c.l.b16 %v41
  %v148 = vunpack.c.l.b16 %v42
  %v149 = vunpack.c.l.b16 %v43
  %v150 = vunpack.c.l.b16 %v44
  %v151 = vunpack.c.l.b16 %v45
  %v152 = vunpack.c.l.b16 %v46
  %v153 = vunpack.c.l.b16 %v47
  %v154 = vunpack.c.l.b16 %v48
  %v155 = vunpack.c.l.b16 %v49
  %v156 = vunpack.c.l.b16 %v50
  %v157 = vunpack.c.l.b16 %v51
  %v158 = vunpack.c.l.b16 %v52
  %v159 = vunpack.c.l.b16 %v53
  %v160 = vunpack.c.l.b16 %v54
  %v161 = vunpack.c.l.b16 %v55
  %v162 = vunpack.c.l.b16 %v56
  %v163 = vunpack.c.l.b16 %v57
  %v164 = vunpack.c.l.b16 %v58
  %v165 = vpack.c.b16 %v130, %v129
  %v166 = vpack.c.b16 %v132, %v131
  %v167 = vpack.c.b16 %v134, %v133
  %v168 = vpack.c.b16 %v136, %v135
  %v169 = vpack.c.b16 %v138, %v137
  %v170 = vpack.c.b16 %v140, %v139
  %v171 = vpack.c.b16 %v142, %v141
  %v172 = vpack.c.b16 %v144, %v143
  %v173 = vpack.c.b16 %v146, %v145
  %v174 = vpack.c.b16 %v148, %v147
  %v175 = vpack.c.b16 %v150, %v149
  %v176 = vpack.c.b16 %v152, %v151
  %v177 = vpack.c.b16 %v154, %v153
  %v178 = vpack.c.b16 %v156, %v155
  %v179 = vpack.c.b16 %v158, %v157
  %v180 = vpack.c.b16 %v160, %v159
  %v181 = vpack.c.b16 %v162, %v161
  %v182 = vpack.c.b16 %v164, %v163
  %vm201 = vcmask 261120
  %v203 = vsel %vm201, %v85, 0
  %v206 = vsel %vm201, %v88, 0
  %208 = vmatpush.bf16.msra.mxu0 %v172
  %209 = vmatpush.bf16.msra.mxu0 %v171
  %210 = vmatpush.bf16.msra.mxu0 %v170
  %211 = vmatpush.bf16.msra.mxu0 %v169
  %212 = vmatpush.bf16.msra.mxu0 %v168
  %213 = vmatpush.bf16.msra.mxu0 %v167
  %214 = vmatpush.bf16.msra.mxu0 %v166
  %215 = vmatpush.bf16.msra.mxu0 %v165
  %216 = vmatmul.bf16.gmra.mxu0 %v83
  %v217 = vpop.f32.mrf.mxu0
  %v218 = vadd.f32 %v61, %v217
  %v219 = vpop.f32.mrf.mxu0
  %v220 = vadd.f32 %v61, %v219
  %221 = vmatmul.bf16.gmra.mxu0 %v86
  %v222 = vpop.f32.mrf.mxu0
  %v223 = vadd.f32 %v61, %v222
  %v224 = vpop.f32.mrf.mxu0
  %v225 = vadd.f32 %v61, %v224
  %226 = vdwg.mxu0
  %227 = vmatpush.bf16.msra.mxu0 %v180
  %228 = vmatpush.bf16.msra.mxu0 %v179
  %229 = vmatpush.bf16.msra.mxu0 %v178
  %230 = vmatpush.bf16.msra.mxu0 %v177
  %231 = vmatpush.bf16.msra.mxu0 %v176
  %232 = vmatpush.bf16.msra.mxu0 %v175
  %233 = vmatpush.bf16.msra.mxu0 %v174
  %234 = vmatpush.bf16.msra.mxu0 %v173
  %235 = vmatmul.bf16.gmra.mxu0 %v84
  %v236 = vpop.f32.mrf.mxu0
  %v237 = vadd.f32 %v218, %v236
  %v238 = vpop.f32.mrf.mxu0
  %v239 = vadd.f32 %v220, %v238
  %240 = vmatmul.bf16.gmra.mxu0 %v87
  %v241 = vpop.f32.mrf.mxu0
  %v242 = vadd.f32 %v223, %v241
  %v243 = vpop.f32.mrf.mxu0
  %v244 = vadd.f32 %v225, %v243
  %245 = vdwg.mxu0
  %246 = vmatpush.bf16.msra.mxu0 0
  %247 = vmatpush.bf16.msra.mxu0 0
  %248 = vmatpush.bf16.msra.mxu0 0
  %249 = vmatpush.bf16.msra.mxu0 0
  %250 = vmatpush.bf16.msra.mxu0 0
  %251 = vmatpush.bf16.msra.mxu0 0
  %252 = vmatpush.bf16.msra.mxu0 %v182
  %253 = vmatpush.bf16.msra.mxu0 %v181
  %254 = vmatmul.bf16.gmra.mxu0 %v203
  %v255 = vpop.f32.mrf.mxu0
  %v256 = vadd.f32 %v237, %v255
  %v257 = vpop.f32.mrf.mxu0
  %v258 = vadd.f32 %v239, %v257
  %259 = vmatmul.bf16.gmra.mxu0 %v206
  %v260 = vpop.f32.mrf.mxu0
  %v261 = vadd.f32 %v242, %v260
  %v262 = vpop.f32.mrf.mxu0
  %v263 = vadd.f32 %v244, %v262
  %264 = vdwg.mxu0
  %v265 = vmax.f32 %v256, 0.0
  %v266 = vmax.f32 %v258, 0.0
  %v267 = vmax.f32 %v261, 0.0
  %v268 = vmax.f32 %v263, 0.0
  %vm269 = vcmask 130048
  %270 = vst.msk [vmem:[%s3] sm:$0xff] %vm269, %v265
  %271 = vst.msk [vmem:[%s3 + $0x8] sm:$0xff] %vm269, %v266
  %272 = vst.msk [vmem:[%s3 + $0x10] sm:$0xff] %vm269, %v267
  %273 = vst.msk [vmem:[%s3 + $0x18] sm:$0xff] %vm269, %v268
  // Predicated region
  $region14: #{raft_plus_dicl_forward.73} parent=0 // pred_check
    _
  $region15: #{raft_plus_dicl_forward.73} parent=0 // pred_check_branch
    %275 = sbr.rel (0) target = $region17
  $region16: #{raft_plus_dicl_forward.73} parent=0 // pred_region
    _
  $region17: #{raft_plus_dicl_forward.73} parent=0 // pred_fallthru
    _
  // Predicated region
  $region18: #{raft_plus_dicl_forward.73} parent=0 // pred_check
    _
  $region19: #{raft_plus_dicl_forward.73} parent=0 // pred_check_branch
    %277 = sbr.rel (0) target = $region21
  $region20: #{raft_plus_dicl_forward.73} parent=0 // pred_region
    _
  $region21: #{raft_plus_dicl_forward.73} parent=0 // pred_fallthru
    _

// kernel: raft_plus_dicl_forward.74
$region0: #{raft_plus_dicl_forward.74}
  #allocation0 [shape = 'u32[]', space=smem, size = 0x4, offset = 0x4, fixed_abs, tag = 'smem constant byte address 0x4 - core index']
  #allocation1 [shape = 'u32[72,128]{1,0:T(1,128)}', space=vmem, size = 0x9000, scoped, tag = 'internal scratch']
  %s0 = inlined_call_operand.vmem [shape: bf16[32,576], index: 0, kind: input, shape index: {}]
  %s1 = inlined_call_operand.vmem [shape: bf16[576,62], index: 1, kind: input, shape index: {}]
  %s2 = inlined_call_operand.vmem [shape: f32[1,62], index: 2, kind: input, shape index: {}]
  %s3 = inlined_call_operand.vmem [shape: f32[32,62], index: 3, kind: output, shape index: {}]
  %s4 = sld [smem:[#allocation0]]
  $region22: #{raft_plus_dicl_forward.74} parent=0
    _
  %s6 = ssub.s32 1, %s4
  %s7 = scalar_select 0, %s6, %s4
  // Predicated region
  $region2: #{raft_plus_dicl_forward.74} parent=0 // pred_check
    _
  $region3: #{raft_plus_dicl_forward.74} parent=0 // pred_check_branch
    %9 = sbr.rel (0) target = $region5
  $region4: #{raft_plus_dicl_forward.74} parent=0 // pred_region
    _
  $region5: #{raft_plus_dicl_forward.74} parent=0 // pred_fallthru
    _
  // Predicated region
  $region6: #{raft_plus_dicl_forward.74} parent=0 // pred_check
    _
  $region7: #{raft_plus_dicl_forward.74} parent=0 // pred_check_branch
    %11 = sbr.rel (0) target = $region9
  $region8: #{raft_plus_dicl_forward.74} parent=0 // pred_region
    _
  $region9: #{raft_plus_dicl_forward.74} parent=0 // pred_fallthru
    _
  // Predicated region
  $region10: #{raft_plus_dicl_forward.74} parent=0 // pred_check
    _
  $region11: #{raft_plus_dicl_forward.74} parent=0 // pred_check_branch
    %13 = sbr.rel (0) target = $region13
  $region12: #{raft_plus_dicl_forward.74} parent=0 // pred_region
    _
  $region13: #{raft_plus_dicl_forward.74} parent=0 // pred_fallthru
    _
  %v15 = vld [vmem:[%s0] sm:$0xff]
  %v16 = vld [vmem:[%s0 + $0x8] sm:$0xff]
  %v17 = vld [vmem:[%s0 + $0x10] sm:$0xf]
  %v18 = vld [vmem:[%s0 + $0x14] sm:$0xff]
  %v19 = vld [vmem:[%s0 + $0x1c] sm:$0xff]
  %v20 = vld [vmem:[%s0 + $0x24] sm:$0xf]
  %v21 = vld [vmem:[%s0 + $0x28] sm:$0xff]
  %v22 = vld [vmem:[%s0 + $0x30] sm:$0xff]
  %v23 = vld [vmem:[%s0 + $0x38] sm:$0xf]
  %v24 = vld [vmem:[%s0 + $0x3c] sm:$0xff]
  %v25 = vld [vmem:[%s0 + $0x44] sm:$0xff]
  %v26 = vld [vmem:[%s0 + $0x4c] sm:$0xf]
  %v27 = vld [vmem:[%s1] sm:$0xf]
  %v28 = vld [vmem:[%s1 + $0x4] sm:$0xf]
  %v29 = vld [vmem:[%s1 + $0x8] sm:$0xf]
  %v30 = vld [vmem:[%s1 + $0xc] sm:$0xf]
  %v31 = vld [vmem:[%s1 + $0x10] sm:$0xf]
  %v32 = vld [vmem:[%s1 + $0x14] sm:$0xf]
  %v33 = vld [vmem:[%s1 + $0x18] sm:$0xf]
  %v34 = vld [vmem:[%s1 + $0x1c] sm:$0xf]
  %v35 = vld [vmem:[%s1 + $0x20] sm:$0xf]
  %v36 = vld [vmem:[%s1 + $0x24] sm:$0xf]
  %v37 = vld [vmem:[%s1 + $0x28] sm:$0xf]
  %v38 = vld [vmem:[%s1 + $0x2c] sm:$0xf]
  %v39 = vld [vmem:[%s1 + $0x30] sm:$0xf]
  %v40 = vld [vmem:[%s1 + $0x34] sm:$0xf]
  %v41 = vld [vmem:[%s1 + $0x38] sm:$0xf]
  %v42 = vld [vmem:[%s1 + $0x3c] sm:$0xf]
  %v43 = vld [vmem:[%s1 + $0x40] sm:$0xf]
  %v44 = vld [vmem:[%s1 + $0x44] sm:$0xf]
  %v45 = vld [vmem:[%s1 + $0x48] sm:$0xf]
  %v46 = vld [vmem:[%s1 + $0x4c] sm:$0xf]
  %v47 = vld [vmem:[%s1 + $0x50] sm:$0xf]
  %v48 = vld [vmem:[%s1 + $0x54] sm:$0xf]
  %v49 = vld [vmem:[%s1 + $0x58] sm:$0xf]
  %v50 = vld [vmem:[%s1 + $0x5c] sm:$0xf]
  %v51 = vld [vmem:[%s1 + $0x60] sm:$0xf]
  %v52 = vld [vmem:[%s1 + $0x64] sm:$0xf]
  %v53 = vld [vmem:[%s1 + $0x68] sm:$0xf]
  %v54 = vld [vmem:[%s1 + $0x6c] sm:$0xf]
  %v55 = vld [vmem:[%s1 + $0x70] sm:$0xf]
  %v56 = vld [vmem:[%s1 + $0x74] sm:$0xf]
  %v57 = vld [vmem:[%s1 + $0x78] sm:$0xf]
  %v58 = vld [vmem:[%s1 + $0x7c] sm:$0xf]
  %v59 = vld [vmem:[%s1 + $0x80] sm:$0xf]
  %v60 = vld [vmem:[%s1 + $0x84] sm:$0xf]
  %v61 = vld [vmem:[%s1 + $0x88] sm:$0xf]
  %v62 = vld [vmem:[%s1 + $0x8c] sm:$0xf]
  %v63 = vld [vmem:[%s1 + $0x90] sm:$0xf]
  %v64 = vld [vmem:[%s1 + $0x94] sm:$0xf]
  %v65 = vld [vmem:[%s1 + $0x98] sm:$0xf]
  %v66 = vld [vmem:[%s1 + $0x9c] sm:$0xf]
  %v67 = vld [vmem:[%s1 + $0xa0] sm:$0xf]
  %v68 = vld [vmem:[%s1 + $0xa4] sm:$0xf]
  %v69 = vld [vmem:[%s1 + $0xa8] sm:$0xf]
  %v70 = vld [vmem:[%s1 + $0xac] sm:$0xf]
  %v71 = vld [vmem:[%s1 + $0xb0] sm:$0xf]
  %v72 = vld [vmem:[%s1 + $0xb4] sm:$0xf]
  %v73 = vld [vmem:[%s1 + $0xb8] sm:$0xf]
  %v74 = vld [vmem:[%s1 + $0xbc] sm:$0xf]
  %v75 = vld [vmem:[%s1 + $0xc0] sm:$0xf]
  %v76 = vld [vmem:[%s1 + $0xc4] sm:$0xf]
  %v77 = vld [vmem:[%s1 + $0xc8] sm:$0xf]
  %v78 = vld [vmem:[%s1 + $0xcc] sm:$0xf]
  %v79 = vld [vmem:[%s1 + $0xd0] sm:$0xf]
  %v80 = vld [vmem:[%s1 + $0xd4] sm:$0xf]
  %v81 = vld [vmem:[%s1 + $0xd8] sm:$0xf]
  %v82 = vld [vmem:[%s1 + $0xdc] sm:$0xf]
  %v83 = vld [vmem:[%s1 + $0xe0] sm:$0xf]
  %v84 = vld [vmem:[%s1 + $0xe4] sm:$0xf]
  %v85 = vld [vmem:[%s1 + $0xe8] sm:$0xf]
  %v86 = vld [vmem:[%s1 + $0xec] sm:$0xf]
  %v87 = vld [vmem:[%s1 + $0xf0] sm:$0xf]
  %v88 = vld [vmem:[%s1 + $0xf4] sm:$0xf]
  %v89 = vld [vmem:[%s1 + $0xf8] sm:$0xf]
  %v90 = vld [vmem:[%s1 + $0xfc] sm:$0xf]
  %v91 = vld [vmem:[%s1 + $0x100] sm:$0xf]
  %v92 = vld [vmem:[%s1 + $0x104] sm:$0xf]
  %v93 = vld [vmem:[%s1 + $0x108] sm:$0xf]
  %v94 = vld [vmem:[%s1 + $0x10c] sm:$0xf]
  %v95 = vld [vmem:[%s1 + $0x110] sm:$0xf]
  %v96 = vld [vmem:[%s1 + $0x114] sm:$0xf]
  %v97 = vld [vmem:[%s1 + $0x118] sm:$0xf]
  %v98 = vld [vmem:[%s1 + $0x11c] sm:$0xf]
  %v99 = vld [vmem:[%s2] sm:$0x1]
  %v101 = vperm.slane %v99, 0
  %v115 = vunpack.c.l.b16 %v15
  %v116 = vunpack.c.h.b16 %v15
  %v117 = vunpack.c.l.b16 %v16
  %v118 = vunpack.c.h.b16 %v16
  %v119 = vunpack.c.l.b16 %v17
  %v120 = vunpack.c.l.b16 %v18
  %v121 = vunpack.c.h.b16 %v18
  %v122 = vunpack.c.l.b16 %v19
  %v123 = vunpack.c.h.b16 %v19
  %v124 = vunpack.c.l.b16 %v20
  %v125 = vunpack.c.l.b16 %v21
  %v126 = vunpack.c.h.b16 %v21
  %v127 = vunpack.c.l.b16 %v22
  %v128 = vunpack.c.h.b16 %v22
  %v129 = vunpack.c.l.b16 %v23
  %v130 = vunpack.c.l.b16 %v24
  %v131 = vunpack.c.h.b16 %v24
  %v132 = vunpack.c.l.b16 %v25
  %v133 = vunpack.c.h.b16 %v25
  %v134 = vunpack.c.l.b16 %v26
  %v135 = vpack.c.b16 %v120, %v115
  %v136 = vpack.c.b16 %v121, %v116
  %v137 = vpack.c.b16 %v122, %v117
  %v138 = vpack.c.b16 %v123, %v118
  %v139 = vpack.c.b16 %v124, %v119
  %v140 = vpack.c.b16 %v130, %v125
  %v141 = vpack.c.b16 %v131, %v126
  %v142 = vpack.c.b16 %v132, %v127
  %v143 = vpack.c.b16 %v133, %v128
  %v144 = vpack.c.b16 %v134, %v129
  %v225 = vunpack.c.l.b16 %v27
  %v226 = vunpack.c.l.b16 %v28
  %v227 = vunpack.c.l.b16 %v29
  %v228 = vunpack.c.l.b16 %v30
  %v229 = vunpack.c.l.b16 %v31
  %v230 = vunpack.c.l.b16 %v32
  %v231 = vunpack.c.l.b16 %v33
  %v232 = vunpack.c.l.b16 %v34
  %v233 = vunpack.c.l.b16 %v35
  %v234 = vunpack.c.l.b16 %v36
  %v235 = vunpack.c.l.b16 %v37
  %v236 = vunpack.c.l.b16 %v38
  %v237 = vunpack.c.l.b16 %v39
  %v238 = vunpack.c.l.b16 %v40
  %v239 = vunpack.c.l.b16 %v41
  %v240 = vunpack.c.l.b16 %v42
  %v241 = vunpack.c.l.b16 %v43
  %v242 = vunpack.c.l.b16 %v44
  %v243 = vunpack.c.l.b16 %v45
  %v244 = vunpack.c.l.b16 %v46
  %v245 = vunpack.c.l.b16 %v47
  %v246 = vunpack.c.l.b16 %v48
  %v247 = vunpack.c.l.b16 %v49
  %v248 = vunpack.c.l.b16 %v50
  %v249 = vunpack.c.l.b16 %v51
  %v250 = vunpack.c.l.b16 %v52
  %v251 = vunpack.c.l.b16 %v53
  %v252 = vunpack.c.l.b16 %v54
  %v253 = vunpack.c.l.b16 %v55
  %v254 = vunpack.c.l.b16 %v56
  %v255 = vunpack.c.l.b16 %v57
  %v256 = vunpack.c.l.b16 %v58
  %v257 = vunpack.c.l.b16 %v59
  %v258 = vunpack.c.l.b16 %v60
  %v259 = vunpack.c.l.b16 %v61
  %v260 = vunpack.c.l.b16 %v62
  %v261 = vunpack.c.l.b16 %v63
  %v262 = vunpack.c.l.b16 %v64
  %v263 = vunpack.c.l.b16 %v65
  %v264 = vunpack.c.l.b16 %v66
  %v265 = vunpack.c.l.b16 %v67
  %v266 = vunpack.c.l.b16 %v68
  %v267 = vunpack.c.l.b16 %v69
  %v268 = vunpack.c.l.b16 %v70
  %v269 = vunpack.c.l.b16 %v71
  %v270 = vunpack.c.l.b16 %v72
  %v271 = vunpack.c.l.b16 %v73
  %v272 = vunpack.c.l.b16 %v74
  %v273 = vunpack.c.l.b16 %v75
  %v274 = vunpack.c.l.b16 %v76
  %v275 = vunpack.c.l.b16 %v77
  %v276 = vunpack.c.l.b16 %v78
  %v277 = vunpack.c.l.b16 %v79
  %v278 = vunpack.c.l.b16 %v80
  %v279 = vunpack.c.l.b16 %v81
  %v280 = vunpack.c.l.b16 %v82
  %v281 = vunpack.c.l.b16 %v83
  %v282 = vunpack.c.l.b16 %v84
  %v283 = vunpack.c.l.b16 %v85
  %v284 = vunpack.c.l.b16 %v86
  %v285 = vunpack.c.l.b16 %v87
  %v286 = vunpack.c.l.b16 %v88
  %v287 = vunpack.c.l.b16 %v89
  %v288 = vunpack.c.l.b16 %v90
  %v289 = vunpack.c.l.b16 %v91
  %v290 = vunpack.c.l.b16 %v92
  %v291 = vunpack.c.l.b16 %v93
  %v292 = vunpack.c.l.b16 %v94
  %v293 = vunpack.c.l.b16 %v95
  %v294 = vunpack.c.l.b16 %v96
  %v295 = vunpack.c.l.b16 %v97
  %v296 = vunpack.c.l.b16 %v98
  %v297 = vpack.c.b16 %v226, %v225
  %v298 = vpack.c.b16 %v228, %v227
  %v299 = vpack.c.b16 %v230, %v229
  %v300 = vpack.c.b16 %v232, %v231
  %v301 = vpack.c.b16 %v234, %v233
  %v302 = vpack.c.b16 %v236, %v235
  %v303 = vpack.c.b16 %v238, %v237
  %v304 = vpack.c.b16 %v240, %v239
  %v305 = vpack.c.b16 %v242, %v241
  %v306 = vpack.c.b16 %v244, %v243
  %v307 = vpack.c.b16 %v246, %v245
  %v308 = vpack.c.b16 %v248, %v247
  %v309 = vpack.c.b16 %v250, %v249
  %v310 = vpack.c.b16 %v252, %v251
  %v311 = vpack.c.b16 %v254, %v253
  %v312 = vpack.c.b16 %v256, %v255
  %v313 = vpack.c.b16 %v258, %v257
  %v314 = vpack.c.b16 %v260, %v259
  %v315 = vpack.c.b16 %v262, %v261
  %v316 = vpack.c.b16 %v264, %v263
  %v317 = vpack.c.b16 %v266, %v265
  %v318 = vpack.c.b16 %v268, %v267
  %v319 = vpack.c.b16 %v270, %v269
  %v320 = vpack.c.b16 %v272, %v271
  %v321 = vpack.c.b16 %v274, %v273
  %v322 = vpack.c.b16 %v276, %v275
  %v323 = vpack.c.b16 %v278, %v277
  %v324 = vpack.c.b16 %v280, %v279
  %v325 = vpack.c.b16 %v282, %v281
  %v326 = vpack.c.b16 %v284, %v283
  %v327 = vpack.c.b16 %v286, %v285
  %v328 = vpack.c.b16 %v288, %v287
  %v329 = vpack.c.b16 %v290, %v289
  %v330 = vpack.c.b16 %v292, %v291
  %v331 = vpack.c.b16 %v294, %v293
  %v332 = vpack.c.b16 %v296, %v295
  %vm369 = vcmask 523264
  %v371 = vsel %vm369, %v139, 0
  %v374 = vsel %vm369, %v144, 0
  %376 = vmatpush.bf16.msra.mxu0 %v304
  %377 = vmatpush.bf16.msra.mxu0 %v303
  %378 = vmatpush.bf16.msra.mxu0 %v302
  %379 = vmatpush.bf16.msra.mxu0 %v301
  %380 = vmatpush.bf16.msra.mxu0 %v300
  %381 = vmatpush.bf16.msra.mxu0 %v299
  %382 = vmatpush.bf16.msra.mxu0 %v298
  %383 = vmatpush.bf16.msra.mxu0 %v297
  %384 = vmatmul.bf16.gmra.mxu0 %v135
  %v385 = vpop.f32.mrf.mxu0
  %v386 = vadd.f32 %v101, %v385
  %v387 = vpop.f32.mrf.mxu0
  %v388 = vadd.f32 %v101, %v387
  %389 = vmatmul.bf16.gmra.mxu0 %v140
  %v390 = vpop.f32.mrf.mxu0
  %v391 = vadd.f32 %v101, %v390
  %v392 = vpop.f32.mrf.mxu0
  %v393 = vadd.f32 %v101, %v392
  %394 = vdwg.mxu0
  %395 = vmatpush.bf16.msra.mxu0 %v312
  %396 = vmatpush.bf16.msra.mxu0 %v311
  %397 = vmatpush.bf16.msra.mxu0 %v310
  %398 = vmatpush.bf16.msra.mxu0 %v309
  %399 = vmatpush.bf16.msra.mxu0 %v308
  %400 = vmatpush.bf16.msra.mxu0 %v307
  %401 = vmatpush.bf16.msra.mxu0 %v306
  %402 = vmatpush.bf16.msra.mxu0 %v305
  %403 = vmatmul.bf16.gmra.mxu0 %v136
  %v404 = vpop.f32.mrf.mxu0
  %v405 = vadd.f32 %v386, %v404
  %v406 = vpop.f32.mrf.mxu0
  %v407 = vadd.f32 %v388, %v406
  %408 = vmatmul.bf16.gmra.mxu0 %v141
  %v409 = vpop.f32.mrf.mxu0
  %v410 = vadd.f32 %v391, %v409
  %v411 = vpop.f32.mrf.mxu0
  %v412 = vadd.f32 %v393, %v411
  %413 = vdwg.mxu0
  %414 = vmatpush.bf16.msra.mxu0 %v320
  %415 = vmatpush.bf16.msra.mxu0 %v319
  %416 = vmatpush.bf16.msra.mxu0 %v318
  %417 = vmatpush.bf16.msra.mxu0 %v317
  %418 = vmatpush.bf16.msra.mxu0 %v316
  %419 = vmatpush.bf16.msra.mxu0 %v315
  %420 = vmatpush.bf16.msra.mxu0 %v314
  %421 = vmatpush.bf16.msra.mxu0 %v313
  %422 = vmatmul.bf16.gmra.mxu0 %v137
  %v423 = vpop.f32.mrf.mxu0
  %v424 = vadd.f32 %v405, %v423
  %v425 = vpop.f32.mrf.mxu0
  %v426 = vadd.f32 %v407, %v425
  %427 = vmatmul.bf16.gmra.mxu0 %v142
  %v428 = vpop.f32.mrf.mxu0
  %v429 = vadd.f32 %v410, %v428
  %v430 = vpop.f32.mrf.mxu0
  %v431 = vadd.f32 %v412, %v430
  %432 = vdwg.mxu0
  %433 = vmatpush.bf16.msra.mxu0 %v328
  %434 = vmatpush.bf16.msra.mxu0 %v327
  %435 = vmatpush.bf16.msra.mxu0 %v326
  %436 = vmatpush.bf16.msra.mxu0 %v325
  %437 = vmatpush.bf16.msra.mxu0 %v324
  %438 = vmatpush.bf16.msra.mxu0 %v323
  %439 = vmatpush.bf16.msra.mxu0 %v322
  %440 = vmatpush.bf16.msra.mxu0 %v321
  %441 = vmatmul.bf16.gmra.mxu0 %v138
  %v442 = vpop.f32.mrf.mxu0
  %v443 = vadd.f32 %v424, %v442
  %v444 = vpop.f32.mrf.mxu0
  %v445 = vadd.f32 %v426, %v444
  %446 = vmatmul.bf16.gmra.mxu0 %v143
  %v447 = vpop.f32.mrf.mxu0
  %v448 = vadd.f32 %v429, %v447
  %v449 = vpop.f32.mrf.mxu0
  %v450 = vadd.f32 %v431, %v449
  %451 = vdwg.mxu0
  %452 = vmatpush.bf16.msra.mxu0 0
  %453 = vmatpush.bf16.msra.mxu0 0
  %454 = vmatpush.bf16.msra.mxu0 0
  %455 = vmatpush.bf16.msra.mxu0 0
  %456 = vmatpush.bf16.msra.mxu0 %v332
  %457 = vmatpush.bf16.msra.mxu0 %v331
  %458 = vmatpush.bf16.msra.mxu0 %v330
  %459 = vmatpush.bf16.msra.mxu0 %v329
  %460 = vmatmul.bf16.gmra.mxu0 %v371
  %v461 = vpop.f32.mrf.mxu0
  %v462 = vadd.f32 %v443, %v461
  %v463 = vpop.f32.mrf.mxu0
  %v464 = vadd.f32 %v445, %v463
  %465 = vmatmul.bf16.gmra.mxu0 %v374
  %v466 = vpop.f32.mrf.mxu0
  %v467 = vadd.f32 %v448, %v466
  %v468 = vpop.f32.mrf.mxu0
  %v469 = vadd.f32 %v450, %v468
  %470 = vdwg.mxu0
  %v471 = vmax.f32 %v462, 0.0
  %v472 = vmax.f32 %v464, 0.0
  %v473 = vmax.f32 %v467, 0.0
  %v474 = vmax.f32 %v469, 0.0
  %vm475 = vcmask 506880
  %476 = vst.msk [vmem:[%s3] sm:$0xff] %vm475, %v471
  %477 = vst.msk [vmem:[%s3 + $0x8] sm:$0xff] %vm475, %v472
  %478 = vst.msk [vmem:[%s3 + $0x10] sm:$0xff] %vm475, %v473
  %479 = vst.msk [vmem:[%s3 + $0x18] sm:$0xff] %vm475, %v474
  // Predicated region
  $region14: #{raft_plus_dicl_forward.74} parent=0 // pred_check
    _
  $region15: #{raft_plus_dicl_forward.74} parent=0 // pred_check_branch
    %481 = sbr.rel (0) target = $region17
  $region16: #{raft_plus_dicl_forward.74} parent=0 // pred_region
    _
  $region17: #{raft_plus_dicl_forward.74} parent=0 // pred_fallthru
    _
  // Predicated region
  $region18: #{raft_plus_dicl_forward.74} parent=0 // pred_check
    _
  $region19: #{raft_plus_dicl_forward.74} parent=0 // pred_check_branch
    %483 = sbr.rel (0) target = $region21
  $region20: #{raft_plus_dicl_forward.74} parent=0 // pred_region
    _
  $region21: #{raft_plus_dicl_forward.74} parent=0 // pred_fallthru
    _

// kernel: raft_plus_dicl_forward.56
$region0: #{raft_plus_dicl_forward.56}
  #allocation0 [shape = 'u32[]', space=smem, size = 0x4, offset = 0x4, fixed_abs, tag = 'smem constant byte address 0x4 - core index']
  #allocation1 [shape = 'u32[72,128]{1,0:T(1,128)}', space=vmem, size = 0x9000, scoped, tag = 'internal scratch']
  %s0 = inlined_call_operand.vmem [shape: bf16[512,152], index: 0, kind: input, shape index: {}]
  %s1 = inlined_call_operand.vmem [shape: bf16[152,32], index: 1, kind: input, shape index: {}]
  %s2 = inlined_call_operand.vmem [shape: f32[1,32], index: 2, kind: input, shape index: {}]
  %s3 = inlined_call_operand.vmem [shape: f32[512,32], index: 3, kind: output, shape index: {}]
  %s4 = sld [smem:[#allocation0]]
  $region22: #{raft_plus_dicl_forward.56} parent=0
    _
  %s6 = ssub.s32 1, %s4
  %s7 = scalar_select 0, %s6, %s4
  // Predicated region
  $region2: #{raft_plus_dicl_forward.56} parent=0 // pred_check
    _
  $region3: #{raft_plus_dicl_forward.56} parent=0 // pred_check_branch
    %9 = sbr.rel (0) target = $region5
  $region4: #{raft_plus_dicl_forward.56} parent=0 // pred_region
    _
  $region5: #{raft_plus_dicl_forward.56} parent=0 // pred_fallthru
    _
  // Predicated region
  $region6: #{raft_plus_dicl_forward.56} parent=0 // pred_check
    _
  $region7: #{raft_plus_dicl_forward.56} parent=0 // pred_check_branch
    %11 = sbr.rel (0) target = $region9
  $region8: #{raft_plus_dicl_forward.56} parent=0 // pred_region
    _
  $region9: #{raft_plus_dicl_forward.56} parent=0 // pred_fallthru
    _
  // Predicated region
  $region10: #{raft_plus_dicl_forward.56} parent=0 // pred_check
    _
  $region11: #{raft_plus_dicl_forward.56} parent=0 // pred_check_branch
    %13 = sbr.rel (0) target = $region13
  $region12: #{raft_plus_dicl_forward.56} parent=0 // pred_region
    _
  $region13: #{raft_plus_dicl_forward.56} parent=0 // pred_fallthru
    _
  %v15 = vld [vmem:[%s0] sm:$0xff]
  %v16 = vld [vmem:[%s0 + $0x8] sm:$0xff]
  %v17 = vld [vmem:[%s0 + $0x10] sm:$0xff]
  %v18 = vld [vmem:[%s0 + $0x18] sm:$0xff]
  %v19 = vld [vmem:[%s0 + $0x20] sm:$0xff]
  %v20 = vld [vmem:[%s0 + $0x28] sm:$0xff]
  %v21 = vld [vmem:[%s0 + $0x30] sm:$0xff]
  %v22 = vld [vmem:[%s0 + $0x38] sm:$0xff]
  %v23 = vld [vmem:[%s0 + $0x40] sm:$0xff]
  %v24 = vld [vmem:[%s0 + $0x48] sm:$0xff]
  %v25 = vld [vmem:[%s0 + $0x50] sm:$0xff]
  %v26 = vld [vmem:[%s0 + $0x58] sm:$0xff]
  %v27 = vld [vmem:[%s0 + $0x60] sm:$0xff]
  %v28 = vld [vmem:[%s0 + $0x68] sm:$0xff]
  %v29 = vld [vmem:[%s0 + $0x70] sm:$0xff]
  %v30 = vld [vmem:[%s0 + $0x78] sm:$0xff]
  %v31 = vld [vmem:[%s0 + $0x80] sm:$0xff]
  %v32 = vld [vmem:[%s0 + $0x88] sm:$0xff]
  %v33 = vld [vmem:[%s0 + $0x90] sm:$0xff]
  %v34 = vld [vmem:[%s0 + $0x98] sm:$0xff]
  %v35 = vld [vmem:[%s0 + $0xa0] sm:$0xff]
  %v36 = vld [vmem:[%s0 + $0xa8] sm:$0xff]
  %v37 = vld [vmem:[%s0 + $0xb0] sm:$0xff]
  %v38 = vld [vmem:[%s0 + $0xb8] sm:$0xff]
  %v39 = vld [vmem:[%s0 + $0xc0] sm:$0xff]
  %v40 = vld [vmem:[%s0 + $0xc8] sm:$0xff]
  %v41 = vld [vmem:[%s0 + $0xd0] sm:$0xff]
  %v42 = vld [vmem:[%s0 + $0xd8] sm:$0xff]
  %v43 = vld [vmem:[%s0 + $0xe0] sm:$0xff]
  %v44 = vld [vmem:[%s0 + $0xe8] sm:$0xff]
  %v45 = vld [vmem:[%s0 + $0xf0] sm:$0xff]
  %v46 = vld [vmem:[%s0 + $0xf8] sm:$0xff]
  %v47 = vld [vmem:[%s0 + $0x100] sm:$0xff]
  %v48 = vld [vmem:[%s0 + $0x108] sm:$0xff]
  %v49 = vld [vmem:[%s0 + $0x110] sm:$0xff]
  %v50 = vld [vmem:[%s0 + $0x118] sm:$0xff]
  %v51 = vld [vmem:[%s0 + $0x120] sm:$0xff]
  %v52 = vld [vmem:[%s0 + $0x128] sm:$0xff]
  %v53 = vld [vmem:[%s0 + $0x130] sm:$0xff]
  %v54 = vld [vmem:[%s0 + $0x138] sm:$0xff]
  %v55 = vld [vmem:[%s0 + $0x140] sm:$0xff]
  %v56 = vld [vmem:[%s0 + $0x148] sm:$0xff]
  %v57 = vld [vmem:[%s0 + $0x150] sm:$0xff]
  %v58 = vld [vmem:[%s0 + $0x158] sm:$0xff]
  %v59 = vld [vmem:[%s0 + $0x160] sm:$0xff]
  %v60 = vld [vmem:[%s0 + $0x168] sm:$0xff]
  %v61 = vld [vmem:[%s0 + $0x170] sm:$0xff]
  %v62 = vld [vmem:[%s0 + $0x178] sm:$0xff]
  %v63 = vld [vmem:[%s0 + $0x180] sm:$0xff]
  %v64 = vld [vmem:[%s0 + $0x188] sm:$0xff]
  %v65 = vld [vmem:[%s0 + $0x190] sm:$0xff]
  %v66 = vld [vmem:[%s0 + $0x198] sm:$0xff]
  %v67 = vld [vmem:[%s0 + $0x1a0] sm:$0xff]
  %v68 = vld [vmem:[%s0 + $0x1a8] sm:$0xff]
  %v69 = vld [vmem:[%s0 + $0x1b0] sm:$0xff]
  %v70 = vld [vmem:[%s0 + $0x1b8] sm:$0xff]
  %v71 = vld [vmem:[%s0 + $0x1c0] sm:$0xff]
  %v72 = vld [vmem:[%s0 + $0x1c8] sm:$0xff]
  %v73 = vld [vmem:[%s0 + $0x1d0] sm:$0xff]
  %v74 = vld [vmem:[%s0 + $0x1d8] sm:$0xff]
  %v75 = vld [vmem:[%s0 + $0x1e0] sm:$0xff]
  %v76 = vld [vmem:[%s0 + $0x1e8] sm:$0xff]
  %v77 = vld [vmem:[%s0 + $0x1f0] sm:$0xff]
  %v78 = vld [vmem:[%s0 + $0x1f8] sm:$0xff]
  %v79 = vld [vmem:[%s1] sm:$0xf]
  %v80 = vld [vmem:[%s1 + $0x4] sm:$0xf]
  %v81 = vld [vmem:[%s1 + $0x8] sm:$0xf]
  %v82 = vld [vmem:[%s1 + $0xc] sm:$0xf]
  %v83 = vld [vmem:[%s1 + $0x10] sm:$0xf]
  %v84 = vld [vmem:[%s1 + $0x14] sm:$0xf]
  %v85 = vld [vmem:[%s1 + $0x18] sm:$0xf]
  %v86 = vld [vmem:[%s1 + $0x1c] sm:$0xf]
  %v87 = vld [vmem:[%s1 + $0x20] sm:$0xf]
  %v88 = vld [vmem:[%s1 + $0x24] sm:$0xf]
  %v89 = vld [vmem:[%s1 + $0x28] sm:$0xf]
  %v90 = vld [vmem:[%s1 + $0x2c] sm:$0xf]
  %v91 = vld [vmem:[%s1 + $0x30] sm:$0xf]
  %v92 = vld [vmem:[%s1 + $0x34] sm:$0xf]
  %v93 = vld [vmem:[%s1 + $0x38] sm:$0xf]
  %v94 = vld [vmem:[%s1 + $0x3c] sm:$0xf]
  %v95 = vld [vmem:[%s1 + $0x40] sm:$0xf]
  %v96 = vld [vmem:[%s1 + $0x44] sm:$0xf]
  %v97 = vld [vmem:[%s1 + $0x48] sm:$0xf]
  %v98 = vld [vmem:[%s2] sm:$0x1]
  %v100 = vperm.slane %v98, 0
  %v166 = vunpack.c.l.b16 %v15
  %v167 = vunpack.c.h.b16 %v15
  %v168 = vunpack.c.l.b16 %v16
  %v169 = vunpack.c.h.b16 %v16
  %v170 = vunpack.c.l.b16 %v17
  %v171 = vunpack.c.h.b16 %v17
  %v172 = vunpack.c.l.b16 %v18
  %v173 = vunpack.c.h.b16 %v18
  %v174 = vunpack.c.l.b16 %v19
  %v175 = vunpack.c.h.b16 %v19
  %v176 = vunpack.c.l.b16 %v20
  %v177 = vunpack.c.h.b16 %v20
  %v178 = vunpack.c.l.b16 %v21
  %v179 = vunpack.c.h.b16 %v21
  %v180 = vunpack.c.l.b16 %v22
  %v181 = vunpack.c.h.b16 %v22
  %v182 = vunpack.c.l.b16 %v23
  %v183 = vunpack.c.h.b16 %v23
  %v184 = vunpack.c.l.b16 %v24
  %v185 = vunpack.c.h.b16 %v24
  %v186 = vunpack.c.l.b16 %v25
  %v187 = vunpack.c.h.b16 %v25
  %v188 = vunpack.c.l.b16 %v26
  %v189 = vunpack.c.h.b16 %v26
  %v190 = vunpack.c.l.b16 %v27
  %v191 = vunpack.c.h.b16 %v27
  %v192 = vunpack.c.l.b16 %v28
  %v193 = vunpack.c.h.b16 %v28
  %v194 = vunpack.c.l.b16 %v29
  %v195 = vunpack.c.h.b16 %v29
  %v196 = vunpack.c.l.b16 %v30
  %v197 = vunpack.c.h.b16 %v30
  %v198 = vunpack.c.l.b16 %v31
  %v199 = vunpack.c.h.b16 %v31
  %v200 = vunpack.c.l.b16 %v32
  %v201 = vunpack.c.h.b16 %v32
  %v202 = vunpack.c.l.b16 %v33
  %v203 = vunpack.c.h.b16 %v33
  %v204 = vunpack.c.l.b16 %v34
  %v205 = vunpack.c.h.b16 %v34
  %v206 = vunpack.c.l.b16 %v35
  %v207 = vunpack.c.h.b16 %v35
  %v208 = vunpack.c.l.b16 %v36
  %v209 = vunpack.c.h.b16 %v36
  %v210 = vunpack.c.l.b16 %v37
  %v211 = vunpack.c.h.b16 %v37
  %v212 = vunpack.c.l.b16 %v38
  %v213 = vunpack.c.h.b16 %v38
  %v214 = vunpack.c.l.b16 %v39
  %v215 = vunpack.c.h.b16 %v39
  %v216 = vunpack.c.l.b16 %v40
  %v217 = vunpack.c.h.b16 %v40
  %v218 = vunpack.c.l.b16 %v41
  %v219 = vunpack.c.h.b16 %v41
  %v220 = vunpack.c.l.b16 %v42
  %v221 = vunpack.c.h.b16 %v42
  %v222 = vunpack.c.l.b16 %v43
  %v223 = vunpack.c.h.b16 %v43
  %v224 = vunpack.c.l.b16 %v44
  %v225 = vunpack.c.h.b16 %v44
  %v226 = vunpack.c.l.b16 %v45
  %v227 = vunpack.c.h.b16 %v45
  %v228 = vunpack.c.l.b16 %v46
  %v229 = vunpack.c.h.b16 %v46
  %v230 = vunpack.c.l.b16 %v47
  %v231 = vunpack.c.h.b16 %v47
  %v232 = vunpack.c.l.b16 %v48
  %v233 = vunpack.c.h.b16 %v48
  %v234 = vunpack.c.l.b16 %v49
  %v235 = vunpack.c.h.b16 %v49
  %v236 = vunpack.c.l.b16 %v50
  %v237 = vunpack.c.h.b16 %v50
  %v238 = vunpack.c.l.b16 %v51
  %v239 = vunpack.c.h.b16 %v51
  %v240 = vunpack.c.l.b16 %v52
  %v241 = vunpack.c.h.b16 %v52
  %v242 = vunpack.c.l.b16 %v53
  %v243 = vunpack.c.h.b16 %v53
  %v244 = vunpack.c.l.b16 %v54
  %v245 = vunpack.c.h.b16 %v54
  %v246 = vunpack.c.l.b16 %v55
  %v247 = vunpack.c.h.b16 %v55
  %v248 = vunpack.c.l.b16 %v56
  %v249 = vunpack.c.h.b16 %v56
  %v250 = vunpack.c.l.b16 %v57
  %v251 = vunpack.c.h.b16 %v57
  %v252 = vunpack.c.l.b16 %v58
  %v253 = vunpack.c.h.b16 %v58
  %v254 = vunpack.c.l.b16 %v59
  %v255 = vunpack.c.h.b16 %v59
  %v256 = vunpack.c.l.b16 %v60
  %v257 = vunpack.c.h.b16 %v60
  %v258 = vunpack.c.l.b16 %v61
  %v259 = vunpack.c.h.b16 %v61
  %v260 = vunpack.c.l.b16 %v62
  %v261 = vunpack.c.h.b16 %v62
  %v262 = vunpack.c.l.b16 %v63
  %v263 = vunpack.c.h.b16 %v63
  %v264 = vunpack.c.l.b16 %v64
  %v265 = vunpack.c.h.b16 %v64
  %v266 = vunpack.c.l.b16 %v65
  %v267 = vunpack.c.h.b16 %v65
  %v268 = vunpack.c.l.b16 %v66
  %v269 = vunpack.c.h.b16 %v66
  %v270 = vunpack.c.l.b16 %v67
  %v271 = vunpack.c.h.b16 %v67
  %v272 = vunpack.c.l.b16 %v68
  %v273 = vunpack.c.h.b16 %v68
  %v274 = vunpack.c.l.b16 %v69
  %v275 = vunpack.c.h.b16 %v69
  %v276 = vunpack.c.l.b16 %v70
  %v277 = vunpack.c.h.b16 %v70
  %v278 = vunpack.c.l.b16 %v71
  %v279 = vunpack.c.h.b16 %v71
  %v280 = vunpack.c.l.b16 %v72
  %v281 = vunpack.c.h.b16 %v72
  %v282 = vunpack.c.l.b16 %v73
  %v283 = vunpack.c.h.b16 %v73
  %v284 = vunpack.c.l.b16 %v74
  %v285 = vunpack.c.h.b16 %v74
  %v286 = vunpack.c.l.b16 %v75
  %v287 = vunpack.c.h.b16 %v75
  %v288 = vunpack.c.l.b16 %v76
  %v289 = vunpack.c.h.b16 %v76
  %v290 = vunpack.c.l.b16 %v77
  %v291 = vunpack.c.h.b16 %v77
  %v292 = vunpack.c.l.b16 %v78
  %v293 = vunpack.c.h.b16 %v78
  %v294 = vpack.c.b16 %v168, %v166
  %v295 = vpack.c.b16 %v169, %v167
  %v296 = vpack.c.b16 %v172, %v170
  %v297 = vpack.c.b16 %v173, %v171
  %v298 = vpack.c.b16 %v176, %v174
  %v299 = vpack.c.b16 %v177, %v175
  %v300 = vpack.c.b16 %v180, %v178
  %v301 = vpack.c.b16 %v181, %v179
  %v302 = vpack.c.b16 %v184, %v182
  %v303 = vpack.c.b16 %v185, %v183
  %v304 = vpack.c.b16 %v188, %v186
  %v305 = vpack.c.b16 %v189, %v187
  %v306 = vpack.c.b16 %v192, %v190
  %v307 = vpack.c.b16 %v193, %v191
  %v308 = vpack.c.b16 %v196, %v194
  %v309 = vpack.c.b16 %v197, %v195
  %v310 = vpack.c.b16 %v200, %v198
  %v311 = vpack.c.b16 %v201, %v199
  %v312 = vpack.c.b16 %v204, %v202
  %v313 = vpack.c.b16 %v205, %v203
  %v314 = vpack.c.b16 %v208, %v206
  %v315 = vpack.c.b16 %v209, %v207
  %v316 = vpack.c.b16 %v212, %v210
  %v317 = vpack.c.b16 %v213, %v211
  %v318 = vpack.c.b16 %v216, %v214
  %v319 = vpack.c.b16 %v217, %v215
  %v320 = vpack.c.b16 %v220, %v218
  %v321 = vpack.c.b16 %v221, %v219
  %v322 = vpack.c.b16 %v224, %v222
  %v323 = vpack.c.b16 %v225, %v223
  %v324 = vpack.c.b16 %v228, %v226
  %v325 = vpack.c.b16 %v229, %v227
  %v326 = vpack.c.b16 %v232, %v230
  %v327 = vpack.c.b16 %v233, %v231
  %v328 = vpack.c.b16 %v236, %v234
  %v329 = vpack.c.b16 %v237, %v235
  %v330 = vpack.c.b16 %v240, %v238
  %v331 = vpack.c.b16 %v241, %v239
  %v332 = vpack.c.b16 %v244, %v242
  %v333 = vpack.c.b16 %v245, %v243
  %v334 = vpack.c.b16 %v248, %v246
  %v335 = vpack.c.b16 %v249, %v247
  %v336 = vpack.c.b16 %v252, %v250
  %v337 = vpack.c.b16 %v253, %v251
  %v338 = vpack.c.b16 %v256, %v254
  %v339 = vpack.c.b16 %v257, %v255
  %v340 = vpack.c.b16 %v260, %v258
  %v341 = vpack.c.b16 %v261, %v259
  %v342 = vpack.c.b16 %v264, %v262
  %v343 = vpack.c.b16 %v265, %v263
  %v344 = vpack.c.b16 %v268, %v266
  %v345 = vpack.c.b16 %v269, %v267
  %v346 = vpack.c.b16 %v272, %v270
  %v347 = vpack.c.b16 %v273, %v271
  %v348 = vpack.c.b16 %v276, %v274
  %v349 = vpack.c.b16 %v277, %v275
  %v350 = vpack.c.b16 %v280, %v278
  %v351 = vpack.c.b16 %v281, %v279
  %v352 = vpack.c.b16 %v284, %v282
  %v353 = vpack.c.b16 %v285, %v283
  %v354 = vpack.c.b16 %v288, %v286
  %v355 = vpack.c.b16 %v289, %v287
  %v356 = vpack.c.b16 %v292, %v290
  %v357 = vpack.c.b16 %v293, %v291
  %v409 = vunpack.c.l.b16 %v79
  %v410 = vunpack.c.l.b16 %v80
  %v411 = vunpack.c.l.b16 %v81
  %v412 = vunpack.c.l.b16 %v82
  %v413 = vunpack.c.l.b16 %v83
  %v414 = vunpack.c.l.b16 %v84
  %v415 = vunpack.c.l.b16 %v85
  %v416 = vunpack.c.l.b16 %v86
  %v417 = vunpack.c.l.b16 %v87
  %v418 = vunpack.c.l.b16 %v88
  %v419 = vunpack.c.l.b16 %v89
  %v420 = vunpack.c.l.b16 %v90
  %v421 = vunpack.c.l.b16 %v91
  %v422 = vunpack.c.l.b16 %v92
  %v423 = vunpack.c.l.b16 %v93
  %v424 = vunpack.c.l.b16 %v94
  %v425 = vunpack.c.l.b16 %v95
  %v426 = vunpack.c.l.b16 %v96
  %v427 = vunpack.c.l.b16 %v97
  %v428 = vpack.c.b16 %v410, %v409
  %v429 = vpack.c.b16 %v412, %v411
  %v430 = vpack.c.b16 %v414, %v413
  %v431 = vpack.c.b16 %v416, %v415
  %v432 = vpack.c.b16 %v418, %v417
  %v433 = vpack.c.b16 %v420, %v419
  %v434 = vpack.c.b16 %v422, %v421
  %v435 = vpack.c.b16 %v424, %v423
  %v436 = vpack.c.b16 %v426, %v425
  %v437 = vpack.c.b16 %v427, %v427
  %vm447 = vcmask 195584
  %v449 = vsel %vm447, %v295, 0
  %v452 = vsel %vm447, %v297, 0
  %v455 = vsel %vm447, %v299, 0
  %v458 = vsel %vm447, %v301, 0
  %v461 = vsel %vm447, %v303, 0
  %v464 = vsel %vm447, %v305, 0
  %v467 = vsel %vm447, %v307, 0
  %v470 = vsel %vm447, %v309, 0
  %v473 = vsel %vm447, %v311, 0
  %v476 = vsel %vm447, %v313, 0
  %v479 = vsel %vm447, %v315, 0
  %v482 = vsel %vm447, %v317, 0
  %v485 = vsel %vm447, %v319, 0
  %v488 = vsel %vm447, %v321, 0
  %v491 = vsel %vm447, %v323, 0
  %v494 = vsel %vm447, %v325, 0
  %v497 = vsel %vm447, %v327, 0
  %v500 = vsel %vm447, %v329, 0
  %v503 = vsel %vm447, %v331, 0
  %v506 = vsel %vm447, %v333, 0
  %v509 = vsel %vm447, %v335, 0
  %v512 = vsel %vm447, %v337, 0
  %v515 = vsel %vm447, %v339, 0
  %v518 = vsel %vm447, %v341, 0
  %v521 = vsel %vm447, %v343, 0
  %v524 = vsel %vm447, %v345, 0
  %v527 = vsel %vm447, %v347, 0
  %v530 = vsel %vm447, %v349, 0
  %v533 = vsel %vm447, %v351, 0
  %v536 = vsel %vm447, %v353, 0
  %v539 = vsel %vm447, %v355, 0
  %v542 = vsel %vm447, %v357, 0
  %vm544 = vcmask 1043456
  %v546 = vsel %vm544, %v437, 0
  %548 = vmatpush.bf16.msra.mxu0 %v435
  %549 = vmatpush.bf16.msra.mxu0 %v434
  %550 = vmatpush.bf16.msra.mxu0 %v433
  %551 = vmatpush.bf16.msra.mxu0 %v432
  %552 = vmatpush.bf16.msra.mxu0 %v431
  %553 = vmatpush.bf16.msra.mxu0 %v430
  %554 = vmatpush.bf16.msra.mxu0 %v429
  %555 = vmatpush.bf16.msra.mxu0 %v428
  %556 = vmatmul.bf16.gmra.mxu0 %v294
  %v557 = vpop.f32.mrf.mxu0
  %v558 = vadd.f32 %v100, %v557
  %v559 = vpop.f32.mrf.mxu0
  %v560 = vadd.f32 %v100, %v559
  %561 = vmatmul.bf16.gmra.mxu0 %v296
  %v562 = vpop.f32.mrf.mxu0
  %v563 = vadd.f32 %v100, %v562
  %v564 = vpop.f32.mrf.mxu0
  %v565 = vadd.f32 %v100, %v564
  %566 = vmatmul.bf16.gmra.mxu0 %v298
  %v567 = vpop.f32.mrf.mxu0
  %v568 = vadd.f32 %v100, %v567
  %v569 = vpop.f32.mrf.mxu0
  %v570 = vadd.f32 %v100, %v569
  %571 = vmatmul.bf16.gmra.mxu0 %v300
  %v572 = vpop.f32.mrf.mxu0
  %v573 = vadd.f32 %v100, %v572
  %v574 = vpop.f32.mrf.mxu0
  %v575 = vadd.f32 %v100, %v574
  %576 = vmatmul.bf16.gmra.mxu0 %v302
  %v577 = vpop.f32.mrf.mxu0
  %v578 = vadd.f32 %v100, %v577
  %v579 = vpop.f32.mrf.mxu0
  %v580 = vadd.f32 %v100, %v579
  %581 = vmatmul.bf16.gmra.mxu0 %v304
  %v582 = vpop.f32.mrf.mxu0
  %v583 = vadd.f32 %v100, %v582
  %v584 = vpop.f32.mrf.mxu0
  %v585 = vadd.f32 %v100, %v584
  %586 = vmatmul.bf16.gmra.mxu0 %v306
  %v587 = vpop.f32.mrf.mxu0
  %v588 = vadd.f32 %v100, %v587
  %v589 = vpop.f32.mrf.mxu0
  %v590 = vadd.f32 %v100, %v589
  %591 = vmatmul.bf16.gmra.mxu0 %v308
  %v592 = vpop.f32.mrf.mxu0
  %v593 = vadd.f32 %v100, %v592
  %v594 = vpop.f32.mrf.mxu0
  %v595 = vadd.f32 %v100, %v594
  %596 = vmatmul.bf16.gmra.mxu0 %v310
  %v597 = vpop.f32.mrf.mxu0
  %v598 = vadd.f32 %v100, %v597
  %v599 = vpop.f32.mrf.mxu0
  %v600 = vadd.f32 %v100, %v599
  %601 = vmatmul.bf16.gmra.mxu0 %v312
  %v602 = vpop.f32.mrf.mxu0
  %v603 = vadd.f32 %v100, %v602
  %v604 = vpop.f32.mrf.mxu0
  %v605 = vadd.f32 %v100, %v604
  %606 = vmatmul.bf16.gmra.mxu0 %v314
  %v607 = vpop.f32.mrf.mxu0
  %v608 = vadd.f32 %v100, %v607
  %v609 = vpop.f32.mrf.mxu0
  %v610 = vadd.f32 %v100, %v609
  %611 = vmatmul.bf16.gmra.mxu0 %v316
  %v612 = vpop.f32.mrf.mxu0
  %v613 = vadd.f32 %v100, %v612
  %v614 = vpop.f32.mrf.mxu0
  %v615 = vadd.f32 %v100, %v614
  %616 = vmatmul.bf16.gmra.mxu0 %v318
  %v617 = vpop.f32.mrf.mxu0
  %v618 = vadd.f32 %v100, %v617
  %v619 = vpop.f32.mrf.mxu0
  %v620 = vadd.f32 %v100, %v619
  %621 = vmatmul.bf16.gmra.mxu0 %v320
  %v622 = vpop.f32.mrf.mxu0
  %v623 = vadd.f32 %v100, %v622
  %v624 = vpop.f32.mrf.mxu0
  %v625 = vadd.f32 %v100, %v624
  %626 = vmatmul.bf16.gmra.mxu0 %v322
  %v627 = vpop.f32.mrf.mxu0
  %v628 = vadd.f32 %v100, %v627
  %v629 = vpop.f32.mrf.mxu0
  %v630 = vadd.f32 %v100, %v629
  %631 = vmatmul.bf16.gmra.mxu0 %v324
  %v632 = vpop.f32.mrf.mxu0
  %v633 = vadd.f32 %v100, %v632
  %v634 = vpop.f32.mrf.mxu0
  %v635 = vadd.f32 %v100, %v634
  %636 = vmatmul.bf16.gmra.mxu0 %v326
  %v637 = vpop.f32.mrf.mxu0
  %v638 = vadd.f32 %v100, %v637
  %v639 = vpop.f32.mrf.mxu0
  %v640 = vadd.f32 %v100, %v639
  %641 = vmatmul.bf16.gmra.mxu0 %v328
  %v642 = vpop.f32.mrf.mxu0
  %v643 = vadd.f32 %v100, %v642
  %v644 = vpop.f32.mrf.mxu0
  %v645 = vadd.f32 %v100, %v644
  %646 = vmatmul.bf16.gmra.mxu0 %v330
  %v647 = vpop.f32.mrf.mxu0
  %v648 = vadd.f32 %v100, %v647
  %v649 = vpop.f32.mrf.mxu0
  %v650 = vadd.f32 %v100, %v649
  %651 = vmatmul.bf16.gmra.mxu0 %v332
  %v652 = vpop.f32.mrf.mxu0
  %v653 = vadd.f32 %v100, %v652
  %v654 = vpop.f32.mrf.mxu0
  %v655 = vadd.f32 %v100, %v654
  %656 = vmatmul.bf16.gmra.mxu0 %v334
  %v657 = vpop.f32.mrf.mxu0
  %v658 = vadd.f32 %v100, %v657
  %v659 = vpop.f32.mrf.mxu0
  %v660 = vadd.f32 %v100, %v659
  %661 = vmatmul.bf16.gmra.mxu0 %v336
  %v662 = vpop.f32.mrf.mxu0
  %v663 = vadd.f32 %v100, %v662
  %v664 = vpop.f32.mrf.mxu0
  %v665 = vadd.f32 %v100, %v664
  %666 = vmatmul.bf16.gmra.mxu0 %v338
  %v667 = vpop.f32.mrf.mxu0
  %v668 = vadd.f32 %v100, %v667
  %v669 = vpop.f32.mrf.mxu0
  %v670 = vadd.f32 %v100, %v669
  %671 = vmatmul.bf16.gmra.mxu0 %v340
  %v672 = vpop.f32.mrf.mxu0
  %v673 = vadd.f32 %v100, %v672
  %v674 = vpop.f32.mrf.mxu0
  %v675 = vadd.f32 %v100, %v674
  %676 = vmatmul.bf16.gmra.mxu0 %v342
  %v677 = vpop.f32.mrf.mxu0
  %v678 = vadd.f32 %v100, %v677
  %v679 = vpop.f32.mrf.mxu0
  %v680 = vadd.f32 %v100, %v679
  %681 = vmatmul.bf16.gmra.mxu0 %v344
  %v682 = vpop.f32.mrf.mxu0
  %v683 = vadd.f32 %v100, %v682
  %v684 = vpop.f32.mrf.mxu0
  %v685 = vadd.f32 %v100, %v684
  %686 = vmatmul.bf16.gmra.mxu0 %v346
  %v687 = vpop.f32.mrf.mxu0
  %v688 = vadd.f32 %v100, %v687
  %v689 = vpop.f32.mrf.mxu0
  %v690 = vadd.f32 %v100, %v689
  %691 = vmatmul.bf16.gmra.mxu0 %v348
  %v692 = vpop.f32.mrf.mxu0
  %v693 = vadd.f32 %v100, %v692
  %v694 = vpop.f32.mrf.mxu0
  %v695 = vadd.f32 %v100, %v694
  %696 = vmatmul.bf16.gmra.mxu0 %v350
  %v697 = vpop.f32.mrf.mxu0
  %v698 = vadd.f32 %v100, %v697
  %v699 = vpop.f32.mrf.mxu0
  %v700 = vadd.f32 %v100, %v699
  %701 = vmatmul.bf16.gmra.mxu0 %v352
  %v702 = vpop.f32.mrf.mxu0
  %v703 = vadd.f32 %v100, %v702
  %v704 = vpop.f32.mrf.mxu0
  %v705 = vadd.f32 %v100, %v704
  %706 = vmatmul.bf16.gmra.mxu0 %v354
  %v707 = vpop.f32.mrf.mxu0
  %v708 = vadd.f32 %v100, %v707
  %v709 = vpop.f32.mrf.mxu0
  %v710 = vadd.f32 %v100, %v709
  %711 = vmatmul.bf16.gmra.mxu0 %v356
  %v712 = vpop.f32.mrf.mxu0
  %v713 = vadd.f32 %v100, %v712
  %v714 = vpop.f32.mrf.mxu0
  %v715 = vadd.f32 %v100, %v714
  %716 = vdwg.mxu0
  %717 = vmatpush.bf16.msra.mxu0 0
  %718 = vmatpush.bf16.msra.mxu0 0
  %719 = vmatpush.bf16.msra.mxu0 0
  %720 = vmatpush.bf16.msra.mxu0 0
  %721 = vmatpush.bf16.msra.mxu0 0
  %722 = vmatpush.bf16.msra.mxu0 0
  %723 = vmatpush.bf16.msra.mxu0 %v546
  %724 = vmatpush.bf16.msra.mxu0 %v436
  %725 = vmatmul.bf16.gmra.mxu0 %v449
  %v726 = vpop.f32.mrf.mxu0
  %v727 = vadd.f32 %v558, %v726
  %v728 = vpop.f32.mrf.mxu0
  %v729 = vadd.f32 %v560, %v728
  %730 = vmatmul.bf16.gmra.mxu0 %v452
  %v731 = vpop.f32.mrf.mxu0
  %v732 = vadd.f32 %v563, %v731
  %v733 = vpop.f32.mrf.mxu0
  %v734 = vadd.f32 %v565, %v733
  %735 = vmatmul.bf16.gmra.mxu0 %v455
  %v736 = vpop.f32.mrf.mxu0
  %v737 = vadd.f32 %v568, %v736
  %v738 = vpop.f32.mrf.mxu0
  %v739 = vadd.f32 %v570, %v738
  %740 = vmatmul.bf16.gmra.mxu0 %v458
  %v741 = vpop.f32.mrf.mxu0
  %v742 = vadd.f32 %v573, %v741
  %v743 = vpop.f32.mrf.mxu0
  %v744 = vadd.f32 %v575, %v743
  %745 = vmatmul.bf16.gmra.mxu0 %v461
  %v746 = vpop.f32.mrf.mxu0
  %v747 = vadd.f32 %v578, %v746
  %v748 = vpop.f32.mrf.mxu0
  %v749 = vadd.f32 %v580, %v748
  %750 = vmatmul.bf16.gmra.mxu0 %v464
  %v751 = vpop.f32.mrf.mxu0
  %v752 = vadd.f32 %v583, %v751
  %v753 = vpop.f32.mrf.mxu0
  %v754 = vadd.f32 %v585, %v753
  %755 = vmatmul.bf16.gmra.mxu0 %v467
  %v756 = vpop.f32.mrf.mxu0
  %v757 = vadd.f32 %v588, %v756
  %v758 = vpop.f32.mrf.mxu0
  %v759 = vadd.f32 %v590, %v758
  %760 = vmatmul.bf16.gmra.mxu0 %v470
  %v761 = vpop.f32.mrf.mxu0
  %v762 = vadd.f32 %v593, %v761
  %v763 = vpop.f32.mrf.mxu0
  %v764 = vadd.f32 %v595, %v763
  %765 = vmatmul.bf16.gmra.mxu0 %v473
  %v766 = vpop.f32.mrf.mxu0
  %v767 = vadd.f32 %v598, %v766
  %v768 = vpop.f32.mrf.mxu0
  %v769 = vadd.f32 %v600, %v768
  %770 = vmatmul.bf16.gmra.mxu0 %v476
  %v771 = vpop.f32.mrf.mxu0
  %v772 = vadd.f32 %v603, %v771
  %v773 = vpop.f32.mrf.mxu0
  %v774 = vadd.f32 %v605, %v773
  %775 = vmatmul.bf16.gmra.mxu0 %v479
  %v776 = vpop.f32.mrf.mxu0
  %v777 = vadd.f32 %v608, %v776
  %v778 = vpop.f32.mrf.mxu0
  %v779 = vadd.f32 %v610, %v778
  %780 = vmatmul.bf16.gmra.mxu0 %v482
  %v781 = vpop.f32.mrf.mxu0
  %v782 = vadd.f32 %v613, %v781
  %v783 = vpop.f32.mrf.mxu0
  %v784 = vadd.f32 %v615, %v783
  %785 = vmatmul.bf16.gmra.mxu0 %v485
  %v786 = vpop.f32.mrf.mxu0
  %v787 = vadd.f32 %v618, %v786
  %v788 = vpop.f32.mrf.mxu0
  %v789 = vadd.f32 %v620, %v788
  %790 = vmatmul.bf16.gmra.mxu0 %v488
  %v791 = vpop.f32.mrf.mxu0
  %v792 = vadd.f32 %v623, %v791
  %v793 = vpop.f32.mrf.mxu0
  %v794 = vadd.f32 %v625, %v793
  %795 = vmatmul.bf16.gmra.mxu0 %v491
  %v796 = vpop.f32.mrf.mxu0
  %v797 = vadd.f32 %v628, %v796
  %v798 = vpop.f32.mrf.mxu0
  %v799 = vadd.f32 %v630, %v798
  %800 = vmatmul.bf16.gmra.mxu0 %v494
  %v801 = vpop.f32.mrf.mxu0
  %v802 = vadd.f32 %v633, %v801
  %v803 = vpop.f32.mrf.mxu0
  %v804 = vadd.f32 %v635, %v803
  %805 = vmatmul.bf16.gmra.mxu0 %v497
  %v806 = vpop.f32.mrf.mxu0
  %v807 = vadd.f32 %v638, %v806
  %v808 = vpop.f32.mrf.mxu0
  %v809 = vadd.f32 %v640, %v808
  %810 = vmatmul.bf16.gmra.mxu0 %v500
  %v811 = vpop.f32.mrf.mxu0
  %v812 = vadd.f32 %v643, %v811
  %v813 = vpop.f32.mrf.mxu0
  %v814 = vadd.f32 %v645, %v813
  %815 = vmatmul.bf16.gmra.mxu0 %v503
  %v816 = vpop.f32.mrf.mxu0
  %v817 = vadd.f32 %v648, %v816
  %v818 = vpop.f32.mrf.mxu0
  %v819 = vadd.f32 %v650, %v818
  %820 = vmatmul.bf16.gmra.mxu0 %v506
  %v821 = vpop.f32.mrf.mxu0
  %v822 = vadd.f32 %v653, %v821
  %v823 = vpop.f32.mrf.mxu0
  %v824 = vadd.f32 %v655, %v823
  %825 = vmatmul.bf16.gmra.mxu0 %v509
  %v826 = vpop.f32.mrf.mxu0
  %v827 = vadd.f32 %v658, %v826
  %v828 = vpop.f32.mrf.mxu0
  %v829 = vadd.f32 %v660, %v828
  %830 = vmatmul.bf16.gmra.mxu0 %v512
  %v831 = vpop.f32.mrf.mxu0
  %v832 = vadd.f32 %v663, %v831
  %v833 = vpop.f32.mrf.mxu0
  %v834 = vadd.f32 %v665, %v833
  %835 = vmatmul.bf16.gmra.mxu0 %v515
  %v836 = vpop.f32.mrf.mxu0
  %v837 = vadd.f32 %v668, %v836
  %v838 = vpop.f32.mrf.mxu0
  %v839 = vadd.f32 %v670, %v838
  %840 = vmatmul.bf16.gmra.mxu0 %v518
  %v841 = vpop.f32.mrf.mxu0
  %v842 = vadd.f32 %v673, %v841
  %v843 = vpop.f32.mrf.mxu0
  %v844 = vadd.f32 %v675, %v843
  %845 = vmatmul.bf16.gmra.mxu0 %v521
  %v846 = vpop.f32.mrf.mxu0
  %v847 = vadd.f32 %v678, %v846
  %v848 = vpop.f32.mrf.mxu0
  %v849 = vadd.f32 %v680, %v848
  %850 = vmatmul.bf16.gmra.mxu0 %v524
  %v851 = vpop.f32.mrf.mxu0
  %v852 = vadd.f32 %v683, %v851
  %v853 = vpop.f32.mrf.mxu0
  %v854 = vadd.f32 %v685, %v853
  %855 = vmatmul.bf16.gmra.mxu0 %v527
  %v856 = vpop.f32.mrf.mxu0
  %v857 = vadd.f32 %v688, %v856
  %v858 = vpop.f32.mrf.mxu0
  %v859 = vadd.f32 %v690, %v858
  %860 = vmatmul.bf16.gmra.mxu0 %v530
  %v861 = vpop.f32.mrf.mxu0
  %v862 = vadd.f32 %v693, %v861
  %v863 = vpop.f32.mrf.mxu0
  %v864 = vadd.f32 %v695, %v863
  %865 = vmatmul.bf16.gmra.mxu0 %v533
  %v866 = vpop.f32.mrf.mxu0
  %v867 = vadd.f32 %v698, %v866
  %v868 = vpop.f32.mrf.mxu0
  %v869 = vadd.f32 %v700, %v868
  %870 = vmatmul.bf16.gmra.mxu0 %v536
  %v871 = vpop.f32.mrf.mxu0
  %v872 = vadd.f32 %v703, %v871
  %v873 = vpop.f32.mrf.mxu0
  %v874 = vadd.f32 %v705, %v873
  %875 = vmatmul.bf16.gmra.mxu0 %v539
  %v876 = vpop.f32.mrf.mxu0
  %v877 = vadd.f32 %v708, %v876
  %v878 = vpop.f32.mrf.mxu0
  %v879 = vadd.f32 %v710, %v878
  %880 = vmatmul.bf16.gmra.mxu0 %v542
  %v881 = vpop.f32.mrf.mxu0
  %v882 = vadd.f32 %v713, %v881
  %v883 = vpop.f32.mrf.mxu0
  %v884 = vadd.f32 %v715, %v883
  %885 = vdwg.mxu0
  %v886 = vmax.f32 %v727, 0.0
  %v887 = vmax.f32 %v729, 0.0
  %v888 = vmax.f32 %v732, 0.0
  %v889 = vmax.f32 %v734, 0.0
  %v890 = vmax.f32 %v737, 0.0
  %v891 = vmax.f32 %v739, 0.0
  %v892 = vmax.f32 %v742, 0.0
  %v893 = vmax.f32 %v744, 0.0
  %v894 = vmax.f32 %v747, 0.0
  %v895 = vmax.f32 %v749, 0.0
  %v896 = vmax.f32 %v752, 0.0
  %v897 = vmax.f32 %v754, 0.0
  %v898 = vmax.f32 %v757, 0.0
  %v899 = vmax.f32 %v759, 0.0
  %v900 = vmax.f32 %v762, 0.0
  %v901 = vmax.f32 %v764, 0.0
  %v902 = vmax.f32 %v767, 0.0
  %v903 = vmax.f32 %v769, 0.0
  %v904 = vmax.f32 %v772, 0.0
  %v905 = vmax.f32 %v774, 0.0
  %v906 = vmax.f32 %v777, 0.0
  %v907 = vmax.f32 %v779, 0.0
  %v908 = vmax.f32 %v782, 0.0
  %v909 = vmax.f32 %v784, 0.0
  %v910 = vmax.f32 %v787, 0.0
  %v911 = vmax.f32 %v789, 0.0
  %v912 = vmax.f32 %v792, 0.0
  %v913 = vmax.f32 %v794, 0.0
  %v914 = vmax.f32 %v797, 0.0
  %v915 = vmax.f32 %v799, 0.0
  %v916 = vmax.f32 %v802, 0.0
  %v917 = vmax.f32 %v804, 0.0
  %v918 = vmax.f32 %v807, 0.0
  %v919 = vmax.f32 %v809, 0.0
  %v920 = vmax.f32 %v812, 0.0
  %v921 = vmax.f32 %v814, 0.0
  %v922 = vmax.f32 %v817, 0.0
  %v923 = vmax.f32 %v819, 0.0
  %v924 = vmax.f32 %v822, 0.0
  %v925 = vmax.f32 %v824, 0.0
  %v926 = vmax.f32 %v827, 0.0
  %v927 = vmax.f32 %v829, 0.0
  %v928 = vmax.f32 %v832, 0.0
  %v929 = vmax.f32 %v834, 0.0
  %v930 = vmax.f32 %v837, 0.0
  %v931 = vmax.f32 %v839, 0.0
  %v932 = vmax.f32 %v842, 0.0
  %v933 = vmax.f32 %v844, 0.0
  %v934 = vmax.f32 %v847, 0.0
  %v935 = vmax.f32 %v849, 0.0
  %v936 = vmax.f32 %v852, 0.0
  %v937 = vmax.f32 %v854, 0.0
  %v938 = vmax.f32 %v857, 0.0
  %v939 = vmax.f32 %v859, 0.0
  %v940 = vmax.f32 %v862, 0.0
  %v941 = vmax.f32 %v864, 0.0
  %v942 = vmax.f32 %v867, 0.0
  %v943 = vmax.f32 %v869, 0.0
  %v944 = vmax.f32 %v872, 0.0
  %v945 = vmax.f32 %v874, 0.0
  %v946 = vmax.f32 %v877, 0.0
  %v947 = vmax.f32 %v879, 0.0
  %v948 = vmax.f32 %v882, 0.0
  %v949 = vmax.f32 %v884, 0.0
  %vm950 = vcmask 261120
  %951 = vst.msk [vmem:[%s3] sm:$0xff] %vm950, %v886
  %952 = vst.msk [vmem:[%s3 + $0x8] sm:$0xff] %vm950, %v887
  %953 = vst.msk [vmem:[%s3 + $0x10] sm:$0xff] %vm950, %v888
  %954 = vst.msk [vmem:[%s3 + $0x18] sm:$0xff] %vm950, %v889
  %955 = vst.msk [vmem:[%s3 + $0x20] sm:$0xff] %vm950, %v890
  %956 = vst.msk [vmem:[%s3 + $0x28] sm:$0xff] %vm950, %v891
  %957 = vst.msk [vmem:[%s3 + $0x30] sm:$0xff] %vm950, %v892
  %958 = vst.msk [vmem:[%s3 + $0x38] sm:$0xff] %vm950, %v893
  %959 = vst.msk [vmem:[%s3 + $0x40] sm:$0xff] %vm950, %v894
  %960 = vst.msk [vmem:[%s3 + $0x48] sm:$0xff] %vm950, %v895
  %961 = vst.msk [vmem:[%s3 + $0x50] sm:$0xff] %vm950, %v896
  %962 = vst.msk [vmem:[%s3 + $0x58] sm:$0xff] %vm950, %v897
  %963 = vst.msk [vmem:[%s3 + $0x60] sm:$0xff] %vm950, %v898
  %964 = vst.msk [vmem:[%s3 + $0x68] sm:$0xff] %vm950, %v899
  %965 = vst.msk [vmem:[%s3 + $0x70] sm:$0xff] %vm950, %v900
  %966 = vst.msk [vmem:[%s3 + $0x78] sm:$0xff] %vm950, %v901
  %967 = vst.msk [vmem:[%s3 + $0x80] sm:$0xff] %vm950, %v902
  %968 = vst.msk [vmem:[%s3 + $0x88] sm:$0xff] %vm950, %v903
  %969 = vst.msk [vmem:[%s3 + $0x90] sm:$0xff] %vm950, %v904
  %970 = vst.msk [vmem:[%s3 + $0x98] sm:$0xff] %vm950, %v905
  %971 = vst.msk [vmem:[%s3 + $0xa0] sm:$0xff] %vm950, %v906
  %972 = vst.msk [vmem:[%s3 + $0xa8] sm:$0xff] %vm950, %v907
  %973 = vst.msk [vmem:[%s3 + $0xb0] sm:$0xff] %vm950, %v908
  %974 = vst.msk [vmem:[%s3 + $0xb8] sm:$0xff] %vm950, %v909
  %975 = vst.msk [vmem:[%s3 + $0xc0] sm:$0xff] %vm950, %v910
  %976 = vst.msk [vmem:[%s3 + $0xc8] sm:$0xff] %vm950, %v911
  %977 = vst.msk [vmem:[%s3 + $0xd0] sm:$0xff] %vm950, %v912
  %978 = vst.msk [vmem:[%s3 + $0xd8] sm:$0xff] %vm950, %v913
  %979 = vst.msk [vmem:[%s3 + $0xe0] sm:$0xff] %vm950, %v914
  %980 = vst.msk [vmem:[%s3 + $0xe8] sm:$0xff] %vm950, %v915
  %981 = vst.msk [vmem:[%s3 + $0xf0] sm:$0xff] %vm950, %v916
  %982 = vst.msk [vmem:[%s3 + $0xf8] sm:$0xff] %vm950, %v917
  %983 = vst.msk [vmem:[%s3 + $0x100] sm:$0xff] %vm950, %v918
  %984 = vst.msk [vmem:[%s3 + $0x108] sm:$0xff] %vm950, %v919
  %985 = vst.msk [vmem:[%s3 + $0x110] sm:$0xff] %vm950, %v920
  %986 = vst.msk [vmem:[%s3 + $0x118] sm:$0xff] %vm950, %v921
  %987 = vst.msk [vmem:[%s3 + $0x120] sm:$0xff] %vm950, %v922
  %988 = vst.msk [vmem:[%s3 + $0x128] sm:$0xff] %vm950, %v923
  %989 = vst.msk [vmem:[%s3 + $0x130] sm:$0xff] %vm950, %v924
  %990 = vst.msk [vmem:[%s3 + $0x138] sm:$0xff] %vm950, %v925
  %991 = vst.msk [vmem:[%s3 + $0x140] sm:$0xff] %vm950, %v926
  %992 = vst.msk [vmem:[%s3 + $0x148] sm:$0xff] %vm950, %v927
  %993 = vst.msk [vmem:[%s3 + $0x150] sm:$0xff] %vm950, %v928
  %994 = vst.msk [vmem:[%s3 + $0x158] sm:$0xff] %vm950, %v929
  %995 = vst.msk [vmem:[%s3 + $0x160] sm:$0xff] %vm950, %v930
  %996 = vst.msk [vmem:[%s3 + $0x168] sm:$0xff] %vm950, %v931
  %997 = vst.msk [vmem:[%s3 + $0x170] sm:$0xff] %vm950, %v932
  %998 = vst.msk [vmem:[%s3 + $0x178] sm:$0xff] %vm950, %v933
  %999 = vst.msk [vmem:[%s3 + $0x180] sm:$0xff] %vm950, %v934
  %1000 = vst.msk [vmem:[%s3 + $0x188] sm:$0xff] %vm950, %v935
  %1001 = vst.msk [vmem:[%s3 + $0x190] sm:$0xff] %vm950, %v936
  %1002 = vst.msk [vmem:[%s3 + $0x198] sm:$0xff] %vm950, %v937
  %1003 = vst.msk [vmem:[%s3 + $0x1a0] sm:$0xff] %vm950, %v938
  %1004 = vst.msk [vmem:[%s3 + $0x1a8] sm:$0xff] %vm950, %v939
  %1005 = vst.msk [vmem:[%s3 + $0x1b0] sm:$0xff] %vm950, %v940
  %1006 = vst.msk [vmem:[%s3 + $0x1b8] sm:$0xff] %vm950, %v941
  %1007 = vst.msk [vmem:[%s3 + $0x1c0] sm:$0xff] %vm950, %v942
  %1008 = vst.msk [vmem:[%s3 + $0x1c8] sm:$0xff] %vm950, %v943
  %1009 = vst.msk [vmem:[%s3 + $0x1d0] sm:$0xff] %vm950, %v944
  %1010 = vst.msk [vmem:[%s3 + $0x1d8] sm:$0xff] %vm950, %v945
  %1011 = vst.msk [vmem:[%s3 + $0x1e0] sm:$0xff] %vm950, %v946
  %1012 = vst.msk [vmem:[%s3 + $0x1e8] sm:$0xff] %vm950, %v947
  %1013 = vst.msk [vmem:[%s3 + $0x1f0] sm:$0xff] %vm950, %v948
  %1014 = vst.msk [vmem:[%s3 + $0x1f8] sm:$0xff] %vm950, %v949
  // Predicated region
  $region14: #{raft_plus_dicl_forward.56} parent=0 // pred_check
    _
  $region15: #{raft_plus_dicl_forward.56} parent=0 // pred_check_branch
    %1016 = sbr.rel (0) target = $region17
  $region16: #{raft_plus_dicl_forward.56} parent=0 // pred_region
    _
  $region17: #{raft_plus_dicl_forward.56} parent=0 // pred_fallthru
    _
  // Predicated region
  $region18: #{raft_plus_dicl_forward.56} parent=0 // pred_check
    _
  $region19: #{raft_plus_dicl_forward.56} parent=0 // pred_check_branch
    %1018 = sbr.rel (0) target = $region21
  $region20: #{raft_plus_dicl_forward.56} parent=0 // pred_region
    _
  $region21: #{raft_plus_dicl_forward.56} parent=0 // pred_fallthru
    _

// kernel: raft_plus_dicl_forward.57
$region0: #{raft_plus_dicl_forward.57}
  #allocation0 [shape = 'u32[]', space=smem, size = 0x4, offset = 0x4, fixed_abs, tag = 'smem constant byte address 0x4 - core index']
  #allocation1 [shape = 'u32[72,128]{1,0:T(1,128)}', space=vmem, size = 0x9000, scoped, tag = 'internal scratch']
  %s0 = inlined_call_operand.vmem [shape: bf16[128,288], index: 0, kind: input, shape index: {}]
  %s1 = inlined_call_operand.vmem [shape: bf16[288,48], index: 1, kind: input, shape index: {}]
  %s2 = inlined_call_operand.vmem [shape: f32[1,48], index: 2, kind: input, shape index: {}]
  %s3 = inlined_call_operand.vmem [shape: f32[128,48], index: 3, kind: output, shape index: {}]
  %s4 = sld [smem:[#allocation0]]
  $region22: #{raft_plus_dicl_forward.57} parent=0
    _
  %s6 = ssub.s32 1, %s4
  %s7 = scalar_select 0, %s6, %s4
  // Predicated region
  $region2: #{raft_plus_dicl_forward.57} parent=0 // pred_check
    _
  $region3: #{raft_plus_dicl_forward.57} parent=0 // pred_check_branch
    %9 = sbr.rel (0) target = $region5
  $region4: #{raft_plus_dicl_forward.57} parent=0 // pred_region
    _
  $region5: #{raft_plus_dicl_forward.57} parent=0 // pred_fallthru
    _
  // Predicated region
  $region6: #{raft_plus_dicl_forward.57} parent=0 // pred_check
    _
  $region7: #{raft_plus_dicl_forward.57} parent=0 // pred_check_branch
    %11 = sbr.rel (0) target = $region9
  $region8: #{raft_plus_dicl_forward.57} parent=0 // pred_region
    _
  $region9: #{raft_plus_dicl_forward.57} parent=0 // pred_fallthru
    _
  // Predicated region
  $region10: #{raft_plus_dicl_forward.57} parent=0 // pred_check
    _
  $region11: #{raft_plus_dicl_forward.57} parent=0 // pred_check_branch
    %13 = sbr.rel (0) target = $region13
  $region12: #{raft_plus_dicl_forward.57} parent=0 // pred_region
    _
  $region13: #{raft_plus_dicl_forward.57} parent=0 // pred_fallthru
    _
  %v15 = vld [vmem:[%s0] sm:$0xff]
  %v16 = vld [vmem:[%s0 + $0x8] sm:$0xf]
  %v17 = vld [vmem:[%s0 + $0xc] sm:$0xff]
  %v18 = vld [vmem:[%s0 + $0x14] sm:$0xf]
  %v19 = vld [vmem:[%s0 + $0x18] sm:$0xff]
  %v20 = vld [vmem:[%s0 + $0x20] sm:$0xf]
  %v21 = vld [vmem:[%s0 + $0x24] sm:$0xff]
  %v22 = vld [vmem:[%s0 + $0x2c] sm:$0xf]
  %v23 = vld [vmem:[%s0 + $0x30] sm:$0xff]
  %v24 = vld [vmem:[%s0 + $0x38] sm:$0xf]
  %v25 = vld [vmem:[%s0 + $0x3c] sm:$0xff]
  %v26 = vld [vmem:[%s0 + $0x44] sm:$0xf]
  %v27 = vld [vmem:[%s0 + $0x48] sm:$0xff]
  %v28 = vld [vmem:[%s0 + $0x50] sm:$0xf]
  %v29 = vld [vmem:[%s0 + $0x54] sm:$0xff]
  %v30 = vld [vmem:[%s0 + $0x5c] sm:$0xf]
  %v31 = vld [vmem:[%s0 + $0x60] sm:$0xff]
  %v32 = vld [vmem:[%s0 + $0x68] sm:$0xf]
  %v33 = vld [vmem:[%s0 + $0x6c] sm:$0xff]
  %v34 = vld [vmem:[%s0 + $0x74] sm:$0xf]
  %v35 = vld [vmem:[%s0 + $0x78] sm:$0xff]
  %v36 = vld [vmem:[%s0 + $0x80] sm:$0xf]
  %v37 = vld [vmem:[%s0 + $0x84] sm:$0xff]
  %v38 = vld [vmem:[%s0 + $0x8c] sm:$0xf]
  %v39 = vld [vmem:[%s0 + $0x90] sm:$0xff]
  %v40 = vld [vmem:[%s0 + $0x98] sm:$0xf]
  %v41 = vld [vmem:[%s0 + $0x9c] sm:$0xff]
  %v42 = vld [vmem:[%s0 + $0xa4] sm:$0xf]
  %v43 = vld [vmem:[%s0 + $0xa8] sm:$0xff]
  %v44 = vld [vmem:[%s0 + $0xb0] sm:$0xf]
  %v45 = vld [vmem:[%s0 + $0xb4] sm:$0xff]
  %v46 = vld [vmem:[%s0 + $0xbc] sm:$0xf]
  %v47 = vld [vmem:[%s1] sm:$0xf]
  %v48 = vld [vmem:[%s1 + $0x4] sm:$0xf]
  %v49 = vld [vmem:[%s1 + $0x8] sm:$0xf]
  %v50 = vld [vmem:[%s1 + $0xc] sm:$0xf]
  %v51 = vld [vmem:[%s1 + $0x10] sm:$0xf]
  %v52 = vld [vmem:[%s1 + $0x14] sm:$0xf]
  %v53 = vld [vmem:[%s1 + $0x18] sm:$0xf]
  %v54 = vld [vmem:[%s1 + $0x1c] sm:$0xf]
  %v55 = vld [vmem:[%s1 + $0x20] sm:$0xf]
  %v56 = vld [vmem:[%s1 + $0x24] sm:$0xf]
  %v57 = vld [vmem:[%s1 + $0x28] sm:$0xf]
  %v58 = vld [vmem:[%s1 + $0x2c] sm:$0xf]
  %v59 = vld [vmem:[%s1 + $0x30] sm:$0xf]
  %v60 = vld [vmem:[%s1 + $0x34] sm:$0xf]
  %v61 = vld [vmem:[%s1 + $0x38] sm:$0xf]
  %v62 = vld [vmem:[%s1 + $0x3c] sm:$0xf]
  %v63 = vld [vmem:[%s1 + $0x40] sm:$0xf]
  %v64 = vld [vmem:[%s1 + $0x44] sm:$0xf]
  %v65 = vld [vmem:[%s1 + $0x48] sm:$0xf]
  %v66 = vld [vmem:[%s1 + $0x4c] sm:$0xf]
  %v67 = vld [vmem:[%s1 + $0x50] sm:$0xf]
  %v68 = vld [vmem:[%s1 + $0x54] sm:$0xf]
  %v69 = vld [vmem:[%s1 + $0x58] sm:$0xf]
  %v70 = vld [vmem:[%s1 + $0x5c] sm:$0xf]
  %v71 = vld [vmem:[%s1 + $0x60] sm:$0xf]
  %v72 = vld [vmem:[%s1 + $0x64] sm:$0xf]
  %v73 = vld [vmem:[%s1 + $0x68] sm:$0xf]
  %v74 = vld [vmem:[%s1 + $0x6c] sm:$0xf]
  %v75 = vld [vmem:[%s1 + $0x70] sm:$0xf]
  %v76 = vld [vmem:[%s1 + $0x74] sm:$0xf]
  %v77 = vld [vmem:[%s1 + $0x78] sm:$0xf]
  %v78 = vld [vmem:[%s1 + $0x7c] sm:$0xf]
  %v79 = vld [vmem:[%s1 + $0x80] sm:$0xf]
  %v80 = vld [vmem:[%s1 + $0x84] sm:$0xf]
  %v81 = vld [vmem:[%s1 + $0x88] sm:$0xf]
  %v82 = vld [vmem:[%s1 + $0x8c] sm:$0xf]
  %v83 = vld [vmem:[%s2] sm:$0x1]
  %v85 = vperm.slane %v83, 0
  %v119 = vunpack.c.l.b16 %v15
  %v120 = vunpack.c.h.b16 %v15
  %v121 = vunpack.c.l.b16 %v16
  %v122 = vunpack.c.l.b16 %v17
  %v123 = vunpack.c.h.b16 %v17
  %v124 = vunpack.c.l.b16 %v18
  %v125 = vunpack.c.l.b16 %v19
  %v126 = vunpack.c.h.b16 %v19
  %v127 = vunpack.c.l.b16 %v20
  %v128 = vunpack.c.l.b16 %v21
  %v129 = vunpack.c.h.b16 %v21
  %v130 = vunpack.c.l.b16 %v22
  %v131 = vunpack.c.l.b16 %v23
  %v132 = vunpack.c.h.b16 %v23
  %v133 = vunpack.c.l.b16 %v24
  %v134 = vunpack.c.l.b16 %v25
  %v135 = vunpack.c.h.b16 %v25
  %v136 = vunpack.c.l.b16 %v26
  %v137 = vunpack.c.l.b16 %v27
  %v138 = vunpack.c.h.b16 %v27
  %v139 = vunpack.c.l.b16 %v28
  %v140 = vunpack.c.l.b16 %v29
  %v141 = vunpack.c.h.b16 %v29
  %v142 = vunpack.c.l.b16 %v30
  %v143 = vunpack.c.l.b16 %v31
  %v144 = vunpack.c.h.b16 %v31
  %v145 = vunpack.c.l.b16 %v32
  %v146 = vunpack.c.l.b16 %v33
  %v147 = vunpack.c.h.b16 %v33
  %v148 = vunpack.c.l.b16 %v34
  %v149 = vunpack.c.l.b16 %v35
  %v150 = vunpack.c.h.b16 %v35
  %v151 = vunpack.c.l.b16 %v36
  %v152 = vunpack.c.l.b16 %v37
  %v153 = vunpack.c.h.b16 %v37
  %v154 = vunpack.c.l.b16 %v38
  %v155 = vunpack.c.l.b16 %v39
  %v156 = vunpack.c.h.b16 %v39
  %v157 = vunpack.c.l.b16 %v40
  %v158 = vunpack.c.l.b16 %v41
  %v159 = vunpack.c.h.b16 %v41
  %v160 = vunpack.c.l.b16 %v42
  %v161 = vunpack.c.l.b16 %v43
  %v162 = vunpack.c.h.b16 %v43
  %v163 = vunpack.c.l.b16 %v44
  %v164 = vunpack.c.l.b16 %v45
  %v165 = vunpack.c.h.b16 %v45
  %v166 = vunpack.c.l.b16 %v46
  %v167 = vpack.c.b16 %v122, %v119
  %v168 = vpack.c.b16 %v123, %v120
  %v169 = vpack.c.b16 %v124, %v121
  %v170 = vpack.c.b16 %v128, %v125
  %v171 = vpack.c.b16 %v129, %v126
  %v172 = vpack.c.b16 %v130, %v127
  %v173 = vpack.c.b16 %v134, %v131
  %v174 = vpack.c.b16 %v135, %v132
  %v175 = vpack.c.b16 %v136, %v133
  %v176 = vpack.c.b16 %v140, %v137
  %v177 = vpack.c.b16 %v141, %v138
  %v178 = vpack.c.b16 %v142, %v139
  %v179 = vpack.c.b16 %v146, %v143
  %v180 = vpack.c.b16 %v147, %v144
  %v181 = vpack.c.b16 %v148, %v145
  %v182 = vpack.c.b16 %v152, %v149
  %v183 = vpack.c.b16 %v153, %v150
  %v184 = vpack.c.b16 %v154, %v151
  %v185 = vpack.c.b16 %v158, %v155
  %v186 = vpack.c.b16 %v159, %v156
  %v187 = vpack.c.b16 %v160, %v157
  %v188 = vpack.c.b16 %v164, %v161
  %v189 = vpack.c.b16 %v165, %v162
  %v190 = vpack.c.b16 %v166, %v163
  %v243 = vunpack.c.l.b16 %v47
  %v244 = vunpack.c.l.b16 %v48
  %v245 = vunpack.c.l.b16 %v49
  %v246 = vunpack.c.l.b16 %v50
  %v247 = vunpack.c.l.b16 %v51
  %v248 = vunpack.c.l.b16 %v52
  %v249 = vunpack.c.l.b16 %v53
  %v250 = vunpack.c.l.b16 %v54
  %v251 = vunpack.c.l.b16 %v55
  %v252 = vunpack.c.l.b16 %v56
  %v253 = vunpack.c.l.b16 %v57
  %v254 = vunpack.c.l.b16 %v58
  %v255 = vunpack.c.l.b16 %v59
  %v256 = vunpack.c.l.b16 %v60
  %v257 = vunpack.c.l.b16 %v61
  %v258 = vunpack.c.l.b16 %v62
  %v259 = vunpack.c.l.b16 %v63
  %v260 = vunpack.c.l.b16 %v64
  %v261 = vunpack.c.l.b16 %v65
  %v262 = vunpack.c.l.b16 %v66
  %v263 = vunpack.c.l.b16 %v67
  %v264 = vunpack.c.l.b16 %v68
  %v265 = vunpack.c.l.b16 %v69
  %v266 = vunpack.c.l.b16 %v70
  %v267 = vunpack.c.l.b16 %v71
  %v268 = vunpack.c.l.b16 %v72
  %v269 = vunpack.c.l.b16 %v73
  %v270 = vunpack.c.l.b16 %v74
  %v271 = vunpack.c.l.b16 %v75
  %v272 = vunpack.c.l.b16 %v76
  %v273 = vunpack.c.l.b16 %v77
  %v274 = vunpack.c.l.b16 %v78
  %v275 = vunpack.c.l.b16 %v79
  %v276 = vunpack.c.l.b16 %v80
  %v277 = vunpack.c.l.b16 %v81
  %v278 = vunpack.c.l.b16 %v82
  %v279 = vpack.c.b16 %v244, %v243
  %v280 = vpack.c.b16 %v246, %v245
  %v281 = vpack.c.b16 %v248, %v247
  %v282 = vpack.c.b16 %v250, %v249
  %v283 = vpack.c.b16 %v252, %v251
  %v284 = vpack.c.b16 %v254, %v253
  %v285 = vpack.c.b16 %v256, %v255
  %v286 = vpack.c.b16 %v258, %v257
  %v287 = vpack.c.b16 %v260, %v259
  %v288 = vpack.c.b16 %v262, %v261
  %v289 = vpack.c.b16 %v264, %v263
  %v290 = vpack.c.b16 %v266, %v265
  %v291 = vpack.c.b16 %v268, %v267
  %v292 = vpack.c.b16 %v270, %v269
  %v293 = vpack.c.b16 %v272, %v271
  %v294 = vpack.c.b16 %v274, %v273
  %v295 = vpack.c.b16 %v276, %v275
  %v296 = vpack.c.b16 %v278, %v277
  %vm315 = vcmask 261120
  %v317 = vsel %vm315, %v169, 0
  %v320 = vsel %vm315, %v172, 0
  %v323 = vsel %vm315, %v175, 0
  %v326 = vsel %vm315, %v178, 0
  %v329 = vsel %vm315, %v181, 0
  %v332 = vsel %vm315, %v184, 0
  %v335 = vsel %vm315, %v187, 0
  %v338 = vsel %vm315, %v190, 0
  %340 = vmatpush.bf16.msra.mxu0 %v286
  %341 = vmatpush.bf16.msra.mxu0 %v285
  %342 = vmatpush.bf16.msra.mxu0 %v284
  %343 = vmatpush.bf16.msra.mxu0 %v283
  %344 = vmatpush.bf16.msra.mxu0 %v282
  %345 = vmatpush.bf16.msra.mxu0 %v281
  %346 = vmatpush.bf16.msra.mxu0 %v280
  %347 = vmatpush.bf16.msra.mxu0 %v279
  %348 = vmatmul.bf16.gmra.mxu0 %v167
  %v349 = vpop.f32.mrf.mxu0
  %v350 = vadd.f32 %v85, %v349
  %v351 = vpop.f32.mrf.mxu0
  %v352 = vadd.f32 %v85, %v351
  %353 = vmatmul.bf16.gmra.mxu0 %v170
  %v354 = vpop.f32.mrf.mxu0
  %v355 = vadd.f32 %v85, %v354
  %v356 = vpop.f32.mrf.mxu0
  %v357 = vadd.f32 %v85, %v356
  %358 = vmatmul.bf16.gmra.mxu0 %v173
  %v359 = vpop.f32.mrf.mxu0
  %v360 = vadd.f32 %v85, %v359
  %v361 = vpop.f32.mrf.mxu0
  %v362 = vadd.f32 %v85, %v361
  %363 = vmatmul.bf16.gmra.mxu0 %v176
  %v364 = vpop.f32.mrf.mxu0
  %v365 = vadd.f32 %v85, %v364
  %v366 = vpop.f32.mrf.mxu0
  %v367 = vadd.f32 %v85, %v366
  %368 = vmatmul.bf16.gmra.mxu0 %v179
  %v369 = vpop.f32.mrf.mxu0
  %v370 = vadd.f32 %v85, %v369
  %v371 = vpop.f32.mrf.mxu0
  %v372 = vadd.f32 %v85, %v371
  %373 = vmatmul.bf16.gmra.mxu0 %v182
  %v374 = vpop.f32.mrf.mxu0
  %v375 = vadd.f32 %v85, %v374
  %v376 = vpop.f32.mrf.mxu0
  %v377 = vadd.f32 %v85, %v376
  %378 = vmatmul.bf16.gmra.mxu0 %v185
  %v379 = vpop.f32.mrf.mxu0
  %v380 = vadd.f32 %v85, %v379
  %v381 = vpop.f32.mrf.mxu0
  %v382 = vadd.f32 %v85, %v381
  %383 = vmatmul.bf16.gmra.mxu0 %v188
  %v384 = vpop.f32.mrf.mxu0
  %v385 = vadd.f32 %v85, %v384
  %v386 = vpop.f32.mrf.mxu0
  %v387 = vadd.f32 %v85, %v386
  %388 = vdwg.mxu0
  %389 = vmatpush.bf16.msra.mxu0 %v294
  %390 = vmatpush.bf16.msra.mxu0 %v293
  %391 = vmatpush.bf16.msra.mxu0 %v292
  %392 = vmatpush.bf16.msra.mxu0 %v291
  %393 = vmatpush.bf16.msra.mxu0 %v290
  %394 = vmatpush.bf16.msra.mxu0 %v289
  %395 = vmatpush.bf16.msra.mxu0 %v288
  %396 = vmatpush.bf16.msra.mxu0 %v287
  %397 = vmatmul.bf16.gmra.mxu0 %v168
  %v398 = vpop.f32.mrf.mxu0
  %v399 = vadd.f32 %v350, %v398
  %v400 = vpop.f32.mrf.mxu0
  %v401 = vadd.f32 %v352, %v400
  %402 = vmatmul.bf16.gmra.mxu0 %v171
  %v403 = vpop.f32.mrf.mxu0
  %v404 = vadd.f32 %v355, %v403
  %v405 = vpop.f32.mrf.mxu0
  %v406 = vadd.f32 %v357, %v405
  %407 = vmatmul.bf16.gmra.mxu0 %v174
  %v408 = vpop.f32.mrf.mxu0
  %v409 = vadd.f32 %v360, %v408
  %v410 = vpop.f32.mrf.mxu0
  %v411 = vadd.f32 %v362, %v410
  %412 = vmatmul.bf16.gmra.mxu0 %v177
  %v413 = vpop.f32.mrf.mxu0
  %v414 = vadd.f32 %v365, %v413
  %v415 = vpop.f32.mrf.mxu0
  %v416 = vadd.f32 %v367, %v415
  %417 = vmatmul.bf16.gmra.mxu0 %v180
  %v418 = vpop.f32.mrf.mxu0
  %v419 = vadd.f32 %v370, %v418
  %v420 = vpop.f32.mrf.mxu0
  %v421 = vadd.f32 %v372, %v420
  %422 = vmatmul.bf16.gmra.mxu0 %v183
  %v423 = vpop.f32.mrf.mxu0
  %v424 = vadd.f32 %v375, %v423
  %v425 = vpop.f32.mrf.mxu0
  %v426 = vadd.f32 %v377, %v425
  %427 = vmatmul.bf16.gmra.mxu0 %v186
  %v428 = vpop.f32.mrf.mxu0
  %v429 = vadd.f32 %v380, %v428
  %v430 = vpop.f32.mrf.mxu0
  %v431 = vadd.f32 %v382, %v430
  %432 = vmatmul.bf16.gmra.mxu0 %v189
  %v433 = vpop.f32.mrf.mxu0
  %v434 = vadd.f32 %v385, %v433
  %v435 = vpop.f32.mrf.mxu0
  %v436 = vadd.f32 %v387, %v435
  %437 = vdwg.mxu0
  %438 = vmatpush.bf16.msra.mxu0 0
  %439 = vmatpush.bf16.msra.mxu0 0
  %440 = vmatpush.bf16.msra.mxu0 0
  %441 = vmatpush.bf16.msra.mxu0 0
  %442 = vmatpush.bf16.msra.mxu0 0
  %443 = vmatpush.bf16.msra.mxu0 0
  %444 = vmatpush.bf16.msra.mxu0 %v296
  %445 = vmatpush.bf16.msra.mxu0 %v295
  %446 = vmatmul.bf16.gmra.mxu0 %v317
  %v447 = vpop.f32.mrf.mxu0
  %v448 = vadd.f32 %v399, %v447
  %v449 = vpop.f32.mrf.mxu0
  %v450 = vadd.f32 %v401, %v449
  %451 = vmatmul.bf16.gmra.mxu0 %v320
  %v452 = vpop.f32.mrf.mxu0
  %v453 = vadd.f32 %v404, %v452
  %v454 = vpop.f32.mrf.mxu0
  %v455 = vadd.f32 %v406, %v454
  %456 = vmatmul.bf16.gmra.mxu0 %v323
  %v457 = vpop.f32.mrf.mxu0
  %v458 = vadd.f32 %v409, %v457
  %v459 = vpop.f32.mrf.mxu0
  %v460 = vadd.f32 %v411, %v459
  %461 = vmatmul.bf16.gmra.mxu0 %v326
  %v462 = vpop.f32.mrf.mxu0
  %v463 = vadd.f32 %v414, %v462
  %v464 = vpop.f32.mrf.mxu0
  %v465 = vadd.f32 %v416, %v464
  %466 = vmatmul.bf16.gmra.mxu0 %v329
  %v467 = vpop.f32.mrf.mxu0
  %v468 = vadd.f32 %v419, %v467
  %v469 = vpop.f32.mrf.mxu0
  %v470 = vadd.f32 %v421, %v469
  %471 = vmatmul.bf16.gmra.mxu0 %v332
  %v472 = vpop.f32.mrf.mxu0
  %v473 = vadd.f32 %v424, %v472
  %v474 = vpop.f32.mrf.mxu0
  %v475 = vadd.f32 %v426, %v474
  %476 = vmatmul.bf16.gmra.mxu0 %v335
  %v477 = vpop.f32.mrf.mxu0
  %v478 = vadd.f32 %v429, %v477
  %v479 = vpop.f32.mrf.mxu0
  %v480 = vadd.f32 %v431, %v479
  %481 = vmatmul.bf16.gmra.mxu0 %v338
  %v482 = vpop.f32.mrf.mxu0
  %v483 = vadd.f32 %v434, %v482
  %v484 = vpop.f32.mrf.mxu0
  %v485 = vadd.f32 %v436, %v484
  %486 = vdwg.mxu0
  %v487 = vmax.f32 %v448, 0.0
  %v488 = vmax.f32 %v450, 0.0
  %v489 = vmax.f32 %v453, 0.0
  %v490 = vmax.f32 %v455, 0.0
  %v491 = vmax.f32 %v458, 0.0
  %v492 = vmax.f32 %v460, 0.0
  %v493 = vmax.f32 %v463, 0.0
  %v494 = vmax.f32 %v465, 0.0
  %v495 = vmax.f32 %v468, 0.0
  %v496 = vmax.f32 %v470, 0.0
  %v497 = vmax.f32 %v473, 0.0
  %v498 = vmax.f32 %v475, 0.0
  %v499 = vmax.f32 %v478, 0.0
  %v500 = vmax.f32 %v480, 0.0
  %v501 = vmax.f32 %v483, 0.0
  %v502 = vmax.f32 %v485, 0.0
  %vm503 = vcmask 392192
  %504 = vst.msk [vmem:[%s3] sm:$0xff] %vm503, %v487
  %505 = vst.msk [vmem:[%s3 + $0x8] sm:$0xff] %vm503, %v488
  %506 = vst.msk [vmem:[%s3 + $0x10] sm:$0xff] %vm503, %v489
  %507 = vst.msk [vmem:[%s3 + $0x18] sm:$0xff] %vm503, %v490
  %508 = vst.msk [vmem:[%s3 + $0x20] sm:$0xff] %vm503, %v491
  %509 = vst.msk [vmem:[%s3 + $0x28] sm:$0xff] %vm503, %v492
  %510 = vst.msk [vmem:[%s3 + $0x30] sm:$0xff] %vm503, %v493
  %511 = vst.msk [vmem:[%s3 + $0x38] sm:$0xff] %vm503, %v494
  %512 = vst.msk [vmem:[%s3 + $0x40] sm:$0xff] %vm503, %v495
  %513 = vst.msk [vmem:[%s3 + $0x48] sm:$0xff] %vm503, %v496
  %514 = vst.msk [vmem:[%s3 + $0x50] sm:$0xff] %vm503, %v497
  %515 = vst.msk [vmem:[%s3 + $0x58] sm:$0xff] %vm503, %v498
  %516 = vst.msk [vmem:[%s3 + $0x60] sm:$0xff] %vm503, %v499
  %517 = vst.msk [vmem:[%s3 + $0x68] sm:$0xff] %vm503, %v500
  %518 = vst.msk [vmem:[%s3 + $0x70] sm:$0xff] %vm503, %v501
  %519 = vst.msk [vmem:[%s3 + $0x78] sm:$0xff] %vm503, %v502
  // Predicated region
  $region14: #{raft_plus_dicl_forward.57} parent=0 // pred_check
    _
  $region15: #{raft_plus_dicl_forward.57} parent=0 // pred_check_branch
    %521 = sbr.rel (0) target = $region17
  $region16: #{raft_plus_dicl_forward.57} parent=0 // pred_region
    _
  $region17: #{raft_plus_dicl_forward.57} parent=0 // pred_fallthru
    _
  // Predicated region
  $region18: #{raft_plus_dicl_forward.57} parent=0 // pred_check
    _
  $region19: #{raft_plus_dicl_forward.57} parent=0 // pred_check_branch
    %523 = sbr.rel (0) target = $region21
  $region20: #{raft_plus_dicl_forward.57} parent=0 // pred_region
    _
  $region21: #{raft_plus_dicl_forward.57} parent=0 // pred_fallthru
    _

// kernel: raft_plus_dicl_forward.59
$region0: #{raft_plus_dicl_forward.59}
  #allocation0 [shape = 'u32[]', space=smem, size = 0x4, offset = 0x4, fixed_abs, tag = 'smem constant byte address 0x4 - core index']
  #allocation1 [shape = 'u32[72,128]{1,0:T(1,128)}', space=vmem, size = 0x9000, scoped, tag = 'internal scratch']
  %s0 = inlined_call_operand.vmem [shape: bf16[32,64], index: 0, kind: input, shape index: {}]
  %s1 = inlined_call_operand.vmem [shape: bf16[64,64], index: 1, kind: input, shape index: {}]
  %s2 = inlined_call_operand.vmem [shape: f32[1,64], index: 2, kind: input, shape index: {}]
  %s3 = inlined_call_operand.vmem [shape: f32[32,64], index: 3, kind: output, shape index: {}]
  %s4 = sld [smem:[#allocation0]]
  $region22: #{raft_plus_dicl_forward.59} parent=0
    _
  %s6 = ssub.s32 1, %s4
  %s7 = scalar_select 0, %s6, %s4
  // Predicated region
  $region2: #{raft_plus_dicl_forward.59} parent=0 // pred_check
    _
  $region3: #{raft_plus_dicl_forward.59} parent=0 // pred_check_branch
    %9 = sbr.rel (0) target = $region5
  $region4: #{raft_plus_dicl_forward.59} parent=0 // pred_region
    _
  $region5: #{raft_plus_dicl_forward.59} parent=0 // pred_fallthru
    _
  // Predicated region
  $region6: #{raft_plus_dicl_forward.59} parent=0 // pred_check
    _
  $region7: #{raft_plus_dicl_forward.59} parent=0 // pred_check_branch
    %11 = sbr.rel (0) target = $region9
  $region8: #{raft_plus_dicl_forward.59} parent=0 // pred_region
    _
  $region9: #{raft_plus_dicl_forward.59} parent=0 // pred_fallthru
    _
  // Predicated region
  $region10: #{raft_plus_dicl_forward.59} parent=0 // pred_check
    _
  $region11: #{raft_plus_dicl_forward.59} parent=0 // pred_check_branch
    %13 = sbr.rel (0) target = $region13
  $region12: #{raft_plus_dicl_forward.59} parent=0 // pred_region
    _
  $region13: #{raft_plus_dicl_forward.59} parent=0 // pred_fallthru
    _
  %v15 = vld [vmem:[%s0] sm:$0xf]
  %v16 = vld [vmem:[%s0 + $0x4] sm:$0xf]
  %v17 = vld [vmem:[%s0 + $0x8] sm:$0xf]
  %v18 = vld [vmem:[%s0 + $0xc] sm:$0xf]
  %v19 = vld [vmem:[%s1] sm:$0xf]
  %v20 = vld [vmem:[%s1 + $0x4] sm:$0xf]
  %v21 = vld [vmem:[%s1 + $0x8] sm:$0xf]
  %v22 = vld [vmem:[%s1 + $0xc] sm:$0xf]
  %v23 = vld [vmem:[%s1 + $0x10] sm:$0xf]
  %v24 = vld [vmem:[%s1 + $0x14] sm:$0xf]
  %v25 = vld [vmem:[%s1 + $0x18] sm:$0xf]
  %v26 = vld [vmem:[%s1 + $0x1c] sm:$0xf]
  %v27 = vld [vmem:[%s2] sm:$0x1]
  %v29 = vperm.slane %v27, 0
  %v35 = vunpack.c.l.b16 %v15
  %v36 = vunpack.c.l.b16 %v16
  %v37 = vunpack.c.l.b16 %v17
  %v38 = vunpack.c.l.b16 %v18
  %v39 = vpack.c.b16 %v36, %v35
  %v40 = vpack.c.b16 %v38, %v37
  %v49 = vunpack.c.l.b16 %v19
  %v50 = vunpack.c.l.b16 %v20
  %v51 = vunpack.c.l.b16 %v21
  %v52 = vunpack.c.l.b16 %v22
  %v53 = vunpack.c.l.b16 %v23
  %v54 = vunpack.c.l.b16 %v24
  %v55 = vunpack.c.l.b16 %v25
  %v56 = vunpack.c.l.b16 %v26
  %v57 = vpack.c.b16 %v50, %v49
  %v58 = vpack.c.b16 %v52, %v51
  %v59 = vpack.c.b16 %v54, %v53
  %v60 = vpack.c.b16 %v56, %v55
  %vm65 = vcmask 523264
  %v67 = vsel %vm65, %v39, 0
  %v70 = vsel %vm65, %v40, 0
  %72 = vmatpush.bf16.msra.mxu0 0
  %73 = vmatpush.bf16.msra.mxu0 0
  %74 = vmatpush.bf16.msra.mxu0 0
  %75 = vmatpush.bf16.msra.mxu0 0
  %76 = vmatpush.bf16.msra.mxu0 %v60
  %77 = vmatpush.bf16.msra.mxu0 %v59
  %78 = vmatpush.bf16.msra.mxu0 %v58
  %79 = vmatpush.bf16.msra.mxu0 %v57
  %80 = vmatmul.bf16.gmra.mxu0 %v67
  %v81 = vpop.f32.mrf.mxu0
  %v82 = vadd.f32 %v29, %v81
  %v83 = vpop.f32.mrf.mxu0
  %v84 = vadd.f32 %v29, %v83
  %85 = vmatmul.bf16.gmra.mxu0 %v70
  %v86 = vpop.f32.mrf.mxu0
  %v87 = vadd.f32 %v29, %v86
  %v88 = vpop.f32.mrf.mxu0
  %v89 = vadd.f32 %v29, %v88
  %90 = vdwg.mxu0
  %91 = vst.msk [vmem:[%s3] sm:$0xff] %vm65, %v82
  %92 = vst.msk [vmem:[%s3 + $0x8] sm:$0xff] %vm65, %v84
  %93 = vst.msk [vmem:[%s3 + $0x10] sm:$0xff] %vm65, %v87
  %94 = vst.msk [vmem:[%s3 + $0x18] sm:$0xff] %vm65, %v89
  // Predicated region
  $region14: #{raft_plus_dicl_forward.59} parent=0 // pred_check
    _
  $region15: #{raft_plus_dicl_forward.59} parent=0 // pred_check_branch
    %96 = sbr.rel (0) target = $region17
  $region16: #{raft_plus_dicl_forward.59} parent=0 // pred_region
    _
  $region17: #{raft_plus_dicl_forward.59} parent=0 // pred_fallthru
    _
  // Predicated region
  $region18: #{raft_plus_dicl_forward.59} parent=0 // pred_check
    _
  $region19: #{raft_plus_dicl_forward.59} parent=0 // pred_check_branch
    %98 = sbr.rel (0) target = $region21
  $region20: #{raft_plus_dicl_forward.59} parent=0 // pred_region
    _
  $region21: #{raft_plus_dicl_forward.59} parent=0 // pred_fallthru
    _

// kernel: raft_plus_dicl_forward.58
$region0: #{raft_plus_dicl_forward.58}
  #allocation0 [shape = 'u32[]', space=smem, size = 0x4, offset = 0x4, fixed_abs, tag = 'smem constant byte address 0x4 - core index']
  #allocation1 [shape = 'u32[72,128]{1,0:T(1,128)}', space=vmem, size = 0x9000, scoped, tag = 'internal scratch']
  %s0 = inlined_call_operand.vmem [shape: bf16[32,432], index: 0, kind: input, shape index: {}]
  %s1 = inlined_call_operand.vmem [shape: bf16[432,64], index: 1, kind: input, shape index: {}]
  %s2 = inlined_call_operand.vmem [shape: f32[1,64], index: 2, kind: input, shape index: {}]
  %s3 = inlined_call_operand.vmem [shape: f32[32,64], index: 3, kind: output, shape index: {}]
  %s4 = sld [smem:[#allocation0]]
  $region22: #{raft_plus_dicl_forward.58} parent=0
    _
  %s6 = ssub.s32 1, %s4
  %s7 = scalar_select 0, %s6, %s4
  // Predicated region
  $region2: #{raft_plus_dicl_forward.58} parent=0 // pred_check
    _
  $region3: #{raft_plus_dicl_forward.58} parent=0 // pred_check_branch
    %9 = sbr.rel (0) target = $region5
  $region4: #{raft_plus_dicl_forward.58} parent=0 // pred_region
    _
  $region5: #{raft_plus_dicl_forward.58} parent=0 // pred_fallthru
    _
  // Predicated region
  $region6: #{raft_plus_dicl_forward.58} parent=0 // pred_check
    _
  $region7: #{raft_plus_dicl_forward.58} parent=0 // pred_check_branch
    %11 = sbr.rel (0) target = $region9
  $region8: #{raft_plus_dicl_forward.58} parent=0 // pred_region
    _
  $region9: #{raft_plus_dicl_forward.58} parent=0 // pred_fallthru
    _
  // Predicated region
  $region10: #{raft_plus_dicl_forward.58} parent=0 // pred_check
    _
  $region11: #{raft_plus_dicl_forward.58} parent=0 // pred_check_branch
    %13 = sbr.rel (0) target = $region13
  $region12: #{raft_plus_dicl_forward.58} parent=0 // pred_region
    _
  $region13: #{raft_plus_dicl_forward.58} parent=0 // pred_fallthru
    _
  %v15 = vld [vmem:[%s0] sm:$0xff]
  %v16 = vld [vmem:[%s0 + $0x8] sm:$0xff]
  %v17 = vld [vmem:[%s0 + $0x10] sm:$0xff]
  %v18 = vld [vmem:[%s0 + $0x18] sm:$0xff]
  %v19 = vld [vmem:[%s0 + $0x20] sm:$0xff]
  %v20 = vld [vmem:[%s0 + $0x28] sm:$0xff]
  %v21 = vld [vmem:[%s0 + $0x30] sm:$0xff]
  %v22 = vld [vmem:[%s0 + $0x38] sm:$0xff]
  %v23 = vld [vmem:[%s1] sm:$0xf]
  %v24 = vld [vmem:[%s1 + $0x4] sm:$0xf]
  %v25 = vld [vmem:[%s1 + $0x8] sm:$0xf]
  %v26 = vld [vmem:[%s1 + $0xc] sm:$0xf]
  %v27 = vld [vmem:[%s1 + $0x10] sm:$0xf]
  %v28 = vld [vmem:[%s1 + $0x14] sm:$0xf]
  %v29 = vld [vmem:[%s1 + $0x18] sm:$0xf]
  %v30 = vld [vmem:[%s1 + $0x1c] sm:$0xf]
  %v31 = vld [vmem:[%s1 + $0x20] sm:$0xf]
  %v32 = vld [vmem:[%s1 + $0x24] sm:$0xf]
  %v33 = vld [vmem:[%s1 + $0x28] sm:$0xf]
  %v34 = vld [vmem:[%s1 + $0x2c] sm:$0xf]
  %v35 = vld [vmem:[%s1 + $0x30] sm:$0xf]
  %v36 = vld [vmem:[%s1 + $0x34] sm:$0xf]
  %v37 = vld [vmem:[%s1 + $0x38] sm:$0xf]
  %v38 = vld [vmem:[%s1 + $0x3c] sm:$0xf]
  %v39 = vld [vmem:[%s1 + $0x40] sm:$0xf]
  %v40 = vld [vmem:[%s1 + $0x44] sm:$0xf]
  %v41 = vld [vmem:[%s1 + $0x48] sm:$0xf]
  %v42 = vld [vmem:[%s1 + $0x4c] sm:$0xf]
  %v43 = vld [vmem:[%s1 + $0x50] sm:$0xf]
  %v44 = vld [vmem:[%s1 + $0x54] sm:$0xf]
  %v45 = vld [vmem:[%s1 + $0x58] sm:$0xf]
  %v46 = vld [vmem:[%s1 + $0x5c] sm:$0xf]
  %v47 = vld [vmem:[%s1 + $0x60] sm:$0xf]
  %v48 = vld [vmem:[%s1 + $0x64] sm:$0xf]
  %v49 = vld [vmem:[%s1 + $0x68] sm:$0xf]
  %v50 = vld [vmem:[%s1 + $0x6c] sm:$0xf]
  %v51 = vld [vmem:[%s1 + $0x70] sm:$0xf]
  %v52 = vld [vmem:[%s1 + $0x74] sm:$0xf]
  %v53 = vld [vmem:[%s1 + $0x78] sm:$0xf]
  %v54 = vld [vmem:[%s1 + $0x7c] sm:$0xf]
  %v55 = vld [vmem:[%s1 + $0x80] sm:$0xf]
  %v56 = vld [vmem:[%s1 + $0x84] sm:$0xf]
  %v57 = vld [vmem:[%s1 + $0x88] sm:$0xf]
  %v58 = vld [vmem:[%s1 + $0x8c] sm:$0xf]
  %v59 = vld [vmem:[%s1 + $0x90] sm:$0xf]
  %v60 = vld [vmem:[%s1 + $0x94] sm:$0xf]
  %v61 = vld [vmem:[%s1 + $0x98] sm:$0xf]
  %v62 = vld [vmem:[%s1 + $0x9c] sm:$0xf]
  %v63 = vld [vmem:[%s1 + $0xa0] sm:$0xf]
  %v64 = vld [vmem:[%s1 + $0xa4] sm:$0xf]
  %v65 = vld [vmem:[%s1 + $0xa8] sm:$0xf]
  %v66 = vld [vmem:[%s1 + $0xac] sm:$0xf]
  %v67 = vld [vmem:[%s1 + $0xb0] sm:$0xf]
  %v68 = vld [vmem:[%s1 + $0xb4] sm:$0xf]
  %v69 = vld [vmem:[%s1 + $0xb8] sm:$0xf]
  %v70 = vld [vmem:[%s1 + $0xbc] sm:$0xf]
  %v71 = vld [vmem:[%s1 + $0xc0] sm:$0xf]
  %v72 = vld [vmem:[%s1 + $0xc4] sm:$0xf]
  %v73 = vld [vmem:[%s1 + $0xc8] sm:$0xf]
  %v74 = vld [vmem:[%s1 + $0xcc] sm:$0xf]
  %v75 = vld [vmem:[%s1 + $0xd0] sm:$0xf]
  %v76 = vld [vmem:[%s1 + $0xd4] sm:$0xf]
  %v77 = vld [vmem:[%s2] sm:$0x1]
  %v79 = vperm.slane %v77, 0
  %v89 = vunpack.c.l.b16 %v15
  %v90 = vunpack.c.h.b16 %v15
  %v91 = vunpack.c.l.b16 %v16
  %v92 = vunpack.c.h.b16 %v16
  %v93 = vunpack.c.l.b16 %v17
  %v94 = vunpack.c.h.b16 %v17
  %v95 = vunpack.c.l.b16 %v18
  %v96 = vunpack.c.h.b16 %v18
  %v97 = vunpack.c.l.b16 %v19
  %v98 = vunpack.c.h.b16 %v19
  %v99 = vunpack.c.l.b16 %v20
  %v100 = vunpack.c.h.b16 %v20
  %v101 = vunpack.c.l.b16 %v21
  %v102 = vunpack.c.h.b16 %v21
  %v103 = vunpack.c.l.b16 %v22
  %v104 = vunpack.c.h.b16 %v22
  %v105 = vpack.c.b16 %v93, %v89
  %v106 = vpack.c.b16 %v94, %v90
  %v107 = vpack.c.b16 %v95, %v91
  %v108 = vpack.c.b16 %v96, %v92
  %v109 = vpack.c.b16 %v101, %v97
  %v110 = vpack.c.b16 %v102, %v98
  %v111 = vpack.c.b16 %v103, %v99
  %v112 = vpack.c.b16 %v104, %v100
  %v173 = vunpack.c.l.b16 %v23
  %v174 = vunpack.c.l.b16 %v24
  %v175 = vunpack.c.l.b16 %v25
  %v176 = vunpack.c.l.b16 %v26
  %v177 = vunpack.c.l.b16 %v27
  %v178 = vunpack.c.l.b16 %v28
  %v179 = vunpack.c.l.b16 %v29
  %v180 = vunpack.c.l.b16 %v30
  %v181 = vunpack.c.l.b16 %v31
  %v182 = vunpack.c.l.b16 %v32
  %v183 = vunpack.c.l.b16 %v33
  %v184 = vunpack.c.l.b16 %v34
  %v185 = vunpack.c.l.b16 %v35
  %v186 = vunpack.c.l.b16 %v36
  %v187 = vunpack.c.l.b16 %v37
  %v188 = vunpack.c.l.b16 %v38
  %v189 = vunpack.c.l.b16 %v39
  %v190 = vunpack.c.l.b16 %v40
  %v191 = vunpack.c.l.b16 %v41
  %v192 = vunpack.c.l.b16 %v42
  %v193 = vunpack.c.l.b16 %v43
  %v194 = vunpack.c.l.b16 %v44
  %v195 = vunpack.c.l.b16 %v45
  %v196 = vunpack.c.l.b16 %v46
  %v197 = vunpack.c.l.b16 %v47
  %v198 = vunpack.c.l.b16 %v48
  %v199 = vunpack.c.l.b16 %v49
  %v200 = vunpack.c.l.b16 %v50
  %v201 = vunpack.c.l.b16 %v51
  %v202 = vunpack.c.l.b16 %v52
  %v203 = vunpack.c.l.b16 %v53
  %v204 = vunpack.c.l.b16 %v54
  %v205 = vunpack.c.l.b16 %v55
  %v206 = vunpack.c.l.b16 %v56
  %v207 = vunpack.c.l.b16 %v57
  %v208 = vunpack.c.l.b16 %v58
  %v209 = vunpack.c.l.b16 %v59
  %v210 = vunpack.c.l.b16 %v60
  %v211 = vunpack.c.l.b16 %v61
  %v212 = vunpack.c.l.b16 %v62
  %v213 = vunpack.c.l.b16 %v63
  %v214 = vunpack.c.l.b16 %v64
  %v215 = vunpack.c.l.b16 %v65
  %v216 = vunpack.c.l.b16 %v66
  %v217 = vunpack.c.l.b16 %v67
  %v218 = vunpack.c.l.b16 %v68
  %v219 = vunpack.c.l.b16 %v69
  %v220 = vunpack.c.l.b16 %v70
  %v221 = vunpack.c.l.b16 %v71
  %v222 = vunpack.c.l.b16 %v72
  %v223 = vunpack.c.l.b16 %v73
  %v224 = vunpack.c.l.b16 %v74
  %v225 = vunpack.c.l.b16 %v75
  %v226 = vunpack.c.l.b16 %v76
  %v227 = vpack.c.b16 %v174, %v173
  %v228 = vpack.c.b16 %v176, %v175
  %v229 = vpack.c.b16 %v178, %v177
  %v230 = vpack.c.b16 %v180, %v179
  %v231 = vpack.c.b16 %v182, %v181
  %v232 = vpack.c.b16 %v184, %v183
  %v233 = vpack.c.b16 %v186, %v185
  %v234 = vpack.c.b16 %v188, %v187
  %v235 = vpack.c.b16 %v190, %v189
  %v236 = vpack.c.b16 %v192, %v191
  %v237 = vpack.c.b16 %v194, %v193
  %v238 = vpack.c.b16 %v196, %v195
  %v239 = vpack.c.b16 %v198, %v197
  %v240 = vpack.c.b16 %v200, %v199
  %v241 = vpack.c.b16 %v202, %v201
  %v242 = vpack.c.b16 %v204, %v203
  %v243 = vpack.c.b16 %v206, %v205
  %v244 = vpack.c.b16 %v208, %v207
  %v245 = vpack.c.b16 %v210, %v209
  %v246 = vpack.c.b16 %v212, %v211
  %v247 = vpack.c.b16 %v214, %v213
  %v248 = vpack.c.b16 %v216, %v215
  %v249 = vpack.c.b16 %v218, %v217
  %v250 = vpack.c.b16 %v220, %v219
  %v251 = vpack.c.b16 %v222, %v221
  %v252 = vpack.c.b16 %v224, %v223
  %v253 = vpack.c.b16 %v226, %v225
  %vm281 = vcmask 392192
  %v283 = vsel %vm281, %v108, 0
  %v286 = vsel %vm281, %v112, 0
  %288 = vmatpush.bf16.msra.mxu0 %v234
  %289 = vmatpush.bf16.msra.mxu0 %v233
  %290 = vmatpush.bf16.msra.mxu0 %v232
  %291 = vmatpush.bf16.msra.mxu0 %v231
  %292 = vmatpush.bf16.msra.mxu0 %v230
  %293 = vmatpush.bf16.msra.mxu0 %v229
  %294 = vmatpush.bf16.msra.mxu0 %v228
  %295 = vmatpush.bf16.msra.mxu0 %v227
  %296 = vmatmul.bf16.gmra.mxu0 %v105
  %v297 = vpop.f32.mrf.mxu0
  %v298 = vadd.f32 %v79, %v297
  %v299 = vpop.f32.mrf.mxu0
  %v300 = vadd.f32 %v79, %v299
  %301 = vmatmul.bf16.gmra.mxu0 %v109
  %v302 = vpop.f32.mrf.mxu0
  %v303 = vadd.f32 %v79, %v302
  %v304 = vpop.f32.mrf.mxu0
  %v305 = vadd.f32 %v79, %v304
  %306 = vdwg.mxu0
  %307 = vmatpush.bf16.msra.mxu0 %v242
  %308 = vmatpush.bf16.msra.mxu0 %v241
  %309 = vmatpush.bf16.msra.mxu0 %v240
  %310 = vmatpush.bf16.msra.mxu0 %v239
  %311 = vmatpush.bf16.msra.mxu0 %v238
  %312 = vmatpush.bf16.msra.mxu0 %v237
  %313 = vmatpush.bf16.msra.mxu0 %v236
  %314 = vmatpush.bf16.msra.mxu0 %v235
  %315 = vmatmul.bf16.gmra.mxu0 %v106
  %v316 = vpop.f32.mrf.mxu0
  %v317 = vadd.f32 %v298, %v316
  %v318 = vpop.f32.mrf.mxu0
  %v319 = vadd.f32 %v300, %v318
  %320 = vmatmul.bf16.gmra.mxu0 %v110
  %v321 = vpop.f32.mrf.mxu0
  %v322 = vadd.f32 %v303, %v321
  %v323 = vpop.f32.mrf.mxu0
  %v324 = vadd.f32 %v305, %v323
  %325 = vdwg.mxu0
  %326 = vmatpush.bf16.msra.mxu0 %v250
  %327 = vmatpush.bf16.msra.mxu0 %v249
  %328 = vmatpush.bf16.msra.mxu0 %v248
  %329 = vmatpush.bf16.msra.mxu0 %v247
  %330 = vmatpush.bf16.msra.mxu0 %v246
  %331 = vmatpush.bf16.msra.mxu0 %v245
  %332 = vmatpush.bf16.msra.mxu0 %v244
  %333 = vmatpush.bf16.msra.mxu0 %v243
  %334 = vmatmul.bf16.gmra.mxu0 %v107
  %v335 = vpop.f32.mrf.mxu0
  %v336 = vadd.f32 %v317, %v335
  %v337 = vpop.f32.mrf.mxu0
  %v338 = vadd.f32 %v319, %v337
  %339 = vmatmul.bf16.gmra.mxu0 %v111
  %v340 = vpop.f32.mrf.mxu0
  %v341 = vadd.f32 %v322, %v340
  %v342 = vpop.f32.mrf.mxu0
  %v343 = vadd.f32 %v324, %v342
  %344 = vdwg.mxu0
  %345 = vmatpush.bf16.msra.mxu0 0
  %346 = vmatpush.bf16.msra.mxu0 0
  %347 = vmatpush.bf16.msra.mxu0 0
  %348 = vmatpush.bf16.msra.mxu0 0
  %349 = vmatpush.bf16.msra.mxu0 0
  %350 = vmatpush.bf16.msra.mxu0 %v253
  %351 = vmatpush.bf16.msra.mxu0 %v252
  %352 = vmatpush.bf16.msra.mxu0 %v251
  %353 = vmatmul.bf16.gmra.mxu0 %v283
  %v354 = vpop.f32.mrf.mxu0
  %v355 = vadd.f32 %v336, %v354
  %v356 = vpop.f32.mrf.mxu0
  %v357 = vadd.f32 %v338, %v356
  %358 = vmatmul.bf16.gmra.mxu0 %v286
  %v359 = vpop.f32.mrf.mxu0
  %v360 = vadd.f32 %v341, %v359
  %v361 = vpop.f32.mrf.mxu0
  %v362 = vadd.f32 %v343, %v361
  %363 = vdwg.mxu0
  %v364 = vmax.f32 %v355, 0.0
  %v365 = vmax.f32 %v357, 0.0
  %v366 = vmax.f32 %v360, 0.0
  %v367 = vmax.f32 %v362, 0.0
  %vm368 = vcmask 523264
  %369 = vst.msk [vmem:[%s3] sm:$0xff] %vm368, %v364
  %370 = vst.msk [vmem:[%s3 + $0x8] sm:$0xff] %vm368, %v365
  %371 = vst.msk [vmem:[%s3 + $0x10] sm:$0xff] %vm368, %v366
  %372 = vst.msk [vmem:[%s3 + $0x18] sm:$0xff] %vm368, %v367
  // Predicated region
  $region14: #{raft_plus_dicl_forward.58} parent=0 // pred_check
    _
  $region15: #{raft_plus_dicl_forward.58} parent=0 // pred_check_branch
    %374 = sbr.rel (0) target = $region17
  $region16: #{raft_plus_dicl_forward.58} parent=0 // pred_region
    _
  $region17: #{raft_plus_dicl_forward.58} parent=0 // pred_fallthru
    _
  // Predicated region
  $region18: #{raft_plus_dicl_forward.58} parent=0 // pred_check
    _
  $region19: #{raft_plus_dicl_forward.58} parent=0 // pred_check_branch
    %376 = sbr.rel (0) target = $region21
  $region20: #{raft_plus_dicl_forward.58} parent=0 // pred_region
    _
  $region21: #{raft_plus_dicl_forward.58} parent=0 // pred_fallthru
    _

// kernel: raft_plus_dicl_forward.75
$region0: #{raft_plus_dicl_forward.75}
  #allocation0 [shape = 'u32[]', space=smem, size = 0x4, offset = 0x4, fixed_abs, tag = 'smem constant byte address 0x4 - core index']
  #allocation1 [shape = 'u32[72,128]{1,0:T(1,128)}', space=vmem, size = 0x9000, scoped, tag = 'internal scratch']
  %s0 = inlined_call_operand.vmem [shape: bf16[32,640], index: 0, kind: input, shape index: {}]
  %s1 = inlined_call_operand.vmem [shape: bf16[640,64], index: 1, kind: input, shape index: {}]
  %s2 = inlined_call_operand.vmem [shape: f32[1,64], index: 2, kind: input, shape index: {}]
  %s3 = inlined_call_operand.vmem [shape: f32[32,64], index: 3, kind: output, shape index: {}]
  %s4 = sld [smem:[#allocation0]]
  $region22: #{raft_plus_dicl_forward.75} parent=0
    _
  %s6 = ssub.s32 1, %s4
  %s7 = scalar_select 0, %s6, %s4
  // Predicated region
  $region2: #{raft_plus_dicl_forward.75} parent=0 // pred_check
    _
  $region3: #{raft_plus_dicl_forward.75} parent=0 // pred_check_branch
    %9 = sbr.rel (0) target = $region5
  $region4: #{raft_plus_dicl_forward.75} parent=0 // pred_region
    _
  $region5: #{raft_plus_dicl_forward.75} parent=0 // pred_fallthru
    _
  // Predicated region
  $region6: #{raft_plus_dicl_forward.75} parent=0 // pred_check
    _
  $region7: #{raft_plus_dicl_forward.75} parent=0 // pred_check_branch
    %11 = sbr.rel (0) target = $region9
  $region8: #{raft_plus_dicl_forward.75} parent=0 // pred_region
    _
  $region9: #{raft_plus_dicl_forward.75} parent=0 // pred_fallthru
    _
  // Predicated region
  $region10: #{raft_plus_dicl_forward.75} parent=0 // pred_check
    _
  $region11: #{raft_plus_dicl_forward.75} parent=0 // pred_check_branch
    %13 = sbr.rel (0) target = $region13
  $region12: #{raft_plus_dicl_forward.75} parent=0 // pred_region
    _
  $region13: #{raft_plus_dicl_forward.75} parent=0 // pred_fallthru
    _
  %v14 = vld [vmem:[%s0] sm:$0xff]
  %v15 = vld [vmem:[%s0 + $0x8] sm:$0xff]
  %v16 = vld [vmem:[%s0 + $0x10] sm:$0xf]
  %v17 = vld [vmem:[%s0 + $0x14] sm:$0xff]
  %v18 = vld [vmem:[%s0 + $0x1c] sm:$0xff]
  %v19 = vld [vmem:[%s0 + $0x24] sm:$0xf]
  %v20 = vld [vmem:[%s0 + $0x28] sm:$0xff]
  %v21 = vld [vmem:[%s0 + $0x30] sm:$0xff]
  %v22 = vld [vmem:[%s0 + $0x38] sm:$0xf]
  %v23 = vld [vmem:[%s0 + $0x3c] sm:$0xff]
  %v24 = vld [vmem:[%s0 + $0x44] sm:$0xff]
  %v25 = vld [vmem:[%s0 + $0x4c] sm:$0xf]
  %v26 = vld [vmem:[%s1] sm:$0xf]
  %v27 = vld [vmem:[%s1 + $0x4] sm:$0xf]
  %v28 = vld [vmem:[%s1 + $0x8] sm:$0xf]
  %v29 = vld [vmem:[%s1 + $0xc] sm:$0xf]
  %v30 = vld [vmem:[%s1 + $0x10] sm:$0xf]
  %v31 = vld [vmem:[%s1 + $0x14] sm:$0xf]
  %v32 = vld [vmem:[%s1 + $0x18] sm:$0xf]
  %v33 = vld [vmem:[%s1 + $0x1c] sm:$0xf]
  %v34 = vld [vmem:[%s1 + $0x20] sm:$0xf]
  %v35 = vld [vmem:[%s1 + $0x24] sm:$0xf]
  %v36 = vld [vmem:[%s1 + $0x28] sm:$0xf]
  %v37 = vld [vmem:[%s1 + $0x2c] sm:$0xf]
  %v38 = vld [vmem:[%s1 + $0x30] sm:$0xf]
  %v39 = vld [vmem:[%s1 + $0x34] sm:$0xf]
  %v40 = vld [vmem:[%s1 + $0x38] sm:$0xf]
  %v41 = vld [vmem:[%s1 + $0x3c] sm:$0xf]
  %v42 = vld [vmem:[%s1 + $0x40] sm:$0xf]
  %v43 = vld [vmem:[%s1 + $0x44] sm:$0xf]
  %v44 = vld [vmem:[%s1 + $0x48] sm:$0xf]
  %v45 = vld [vmem:[%s1 + $0x4c] sm:$0xf]
  %v46 = vld [vmem:[%s1 + $0x50] sm:$0xf]
  %v47 = vld [vmem:[%s1 + $0x54] sm:$0xf]
  %v48 = vld [vmem:[%s1 + $0x58] sm:$0xf]
  %v49 = vld [vmem:[%s1 + $0x5c] sm:$0xf]
  %v50 = vld [vmem:[%s1 + $0x60] sm:$0xf]
  %v51 = vld [vmem:[%s1 + $0x64] sm:$0xf]
  %v52 = vld [vmem:[%s1 + $0x68] sm:$0xf]
  %v53 = vld [vmem:[%s1 + $0x6c] sm:$0xf]
  %v54 = vld [vmem:[%s1 + $0x70] sm:$0xf]
  %v55 = vld [vmem:[%s1 + $0x74] sm:$0xf]
  %v56 = vld [vmem:[%s1 + $0x78] sm:$0xf]
  %v57 = vld [vmem:[%s1 + $0x7c] sm:$0xf]
  %v58 = vld [vmem:[%s1 + $0x80] sm:$0xf]
  %v59 = vld [vmem:[%s1 + $0x84] sm:$0xf]
  %v60 = vld [vmem:[%s1 + $0x88] sm:$0xf]
  %v61 = vld [vmem:[%s1 + $0x8c] sm:$0xf]
  %v62 = vld [vmem:[%s1 + $0x90] sm:$0xf]
  %v63 = vld [vmem:[%s1 + $0x94] sm:$0xf]
  %v64 = vld [vmem:[%s1 + $0x98] sm:$0xf]
  %v65 = vld [vmem:[%s1 + $0x9c] sm:$0xf]
  %v66 = vld [vmem:[%s1 + $0xa0] sm:$0xf]
  %v67 = vld [vmem:[%s1 + $0xa4] sm:$0xf]
  %v68 = vld [vmem:[%s1 + $0xa8] sm:$0xf]
  %v69 = vld [vmem:[%s1 + $0xac] sm:$0xf]
  %v70 = vld [vmem:[%s1 + $0xb0] sm:$0xf]
  %v71 = vld [vmem:[%s1 + $0xb4] sm:$0xf]
  %v72 = vld [vmem:[%s1 + $0xb8] sm:$0xf]
  %v73 = vld [vmem:[%s1 + $0xbc] sm:$0xf]
  %v74 = vld [vmem:[%s1 + $0xc0] sm:$0xf]
  %v75 = vld [vmem:[%s1 + $0xc4] sm:$0xf]
  %v76 = vld [vmem:[%s1 + $0xc8] sm:$0xf]
  %v77 = vld [vmem:[%s1 + $0xcc] sm:$0xf]
  %v78 = vld [vmem:[%s1 + $0xd0] sm:$0xf]
  %v79 = vld [vmem:[%s1 + $0xd4] sm:$0xf]
  %v80 = vld [vmem:[%s1 + $0xd8] sm:$0xf]
  %v81 = vld [vmem:[%s1 + $0xdc] sm:$0xf]
  %v82 = vld [vmem:[%s1 + $0xe0] sm:$0xf]
  %v83 = vld [vmem:[%s1 + $0xe4] sm:$0xf]
  %v84 = vld [vmem:[%s1 + $0xe8] sm:$0xf]
  %v85 = vld [vmem:[%s1 + $0xec] sm:$0xf]
  %v86 = vld [vmem:[%s1 + $0xf0] sm:$0xf]
  %v87 = vld [vmem:[%s1 + $0xf4] sm:$0xf]
  %v88 = vld [vmem:[%s1 + $0xf8] sm:$0xf]
  %v89 = vld [vmem:[%s1 + $0xfc] sm:$0xf]
  %v90 = vld [vmem:[%s1 + $0x100] sm:$0xf]
  %v91 = vld [vmem:[%s1 + $0x104] sm:$0xf]
  %v92 = vld [vmem:[%s1 + $0x108] sm:$0xf]
  %v93 = vld [vmem:[%s1 + $0x10c] sm:$0xf]
  %v94 = vld [vmem:[%s1 + $0x110] sm:$0xf]
  %v95 = vld [vmem:[%s1 + $0x114] sm:$0xf]
  %v96 = vld [vmem:[%s1 + $0x118] sm:$0xf]
  %v97 = vld [vmem:[%s1 + $0x11c] sm:$0xf]
  %v98 = vld [vmem:[%s1 + $0x120] sm:$0xf]
  %v99 = vld [vmem:[%s1 + $0x124] sm:$0xf]
  %v100 = vld [vmem:[%s1 + $0x128] sm:$0xf]
  %v101 = vld [vmem:[%s1 + $0x12c] sm:$0xf]
  %v102 = vld [vmem:[%s1 + $0x130] sm:$0xf]
  %v103 = vld [vmem:[%s1 + $0x134] sm:$0xf]
  %v104 = vld [vmem:[%s1 + $0x138] sm:$0xf]
  %v105 = vld [vmem:[%s1 + $0x13c] sm:$0xf]
  %v106 = vld [vmem:[%s2] sm:$0x1]
  %v108 = vperm.slane %v106, 0
  %v122 = vunpack.c.l.b16 %v14
  %v123 = vunpack.c.h.b16 %v14
  %v124 = vunpack.c.l.b16 %v15
  %v125 = vunpack.c.h.b16 %v15
  %v126 = vunpack.c.l.b16 %v16
  %v127 = vunpack.c.l.b16 %v17
  %v128 = vunpack.c.h.b16 %v17
  %v129 = vunpack.c.l.b16 %v18
  %v130 = vunpack.c.h.b16 %v18
  %v131 = vunpack.c.l.b16 %v19
  %v132 = vunpack.c.l.b16 %v20
  %v133 = vunpack.c.h.b16 %v20
  %v134 = vunpack.c.l.b16 %v21
  %v135 = vunpack.c.h.b16 %v21
  %v136 = vunpack.c.l.b16 %v22
  %v137 = vunpack.c.l.b16 %v23
  %v138 = vunpack.c.h.b16 %v23
  %v139 = vunpack.c.l.b16 %v24
  %v140 = vunpack.c.h.b16 %v24
  %v141 = vunpack.c.l.b16 %v25
  %v142 = vpack.c.b16 %v127, %v122
  %v143 = vpack.c.b16 %v128, %v123
  %v144 = vpack.c.b16 %v129, %v124
  %v145 = vpack.c.b16 %v130, %v125
  %v146 = vpack.c.b16 %v131, %v126
  %v147 = vpack.c.b16 %v137, %v132
  %v148 = vpack.c.b16 %v138, %v133
  %v149 = vpack.c.b16 %v139, %v134
  %v150 = vpack.c.b16 %v140, %v135
  %v151 = vpack.c.b16 %v141, %v136
  %v242 = vunpack.c.l.b16 %v26
  %v243 = vunpack.c.l.b16 %v27
  %v244 = vunpack.c.l.b16 %v28
  %v245 = vunpack.c.l.b16 %v29
  %v246 = vunpack.c.l.b16 %v30
  %v247 = vunpack.c.l.b16 %v31
  %v248 = vunpack.c.l.b16 %v32
  %v249 = vunpack.c.l.b16 %v33
  %v250 = vunpack.c.l.b16 %v34
  %v251 = vunpack.c.l.b16 %v35
  %v252 = vunpack.c.l.b16 %v36
  %v253 = vunpack.c.l.b16 %v37
  %v254 = vunpack.c.l.b16 %v38
  %v255 = vunpack.c.l.b16 %v39
  %v256 = vunpack.c.l.b16 %v40
  %v257 = vunpack.c.l.b16 %v41
  %v258 = vunpack.c.l.b16 %v42
  %v259 = vunpack.c.l.b16 %v43
  %v260 = vunpack.c.l.b16 %v44
  %v261 = vunpack.c.l.b16 %v45
  %v262 = vunpack.c.l.b16 %v46
  %v263 = vunpack.c.l.b16 %v47
  %v264 = vunpack.c.l.b16 %v48
  %v265 = vunpack.c.l.b16 %v49
  %v266 = vunpack.c.l.b16 %v50
  %v267 = vunpack.c.l.b16 %v51
  %v268 = vunpack.c.l.b16 %v52
  %v269 = vunpack.c.l.b16 %v53
  %v270 = vunpack.c.l.b16 %v54
  %v271 = vunpack.c.l.b16 %v55
  %v272 = vunpack.c.l.b16 %v56
  %v273 = vunpack.c.l.b16 %v57
  %v274 = vunpack.c.l.b16 %v58
  %v275 = vunpack.c.l.b16 %v59
  %v276 = vunpack.c.l.b16 %v60
  %v277 = vunpack.c.l.b16 %v61
  %v278 = vunpack.c.l.b16 %v62
  %v279 = vunpack.c.l.b16 %v63
  %v280 = vunpack.c.l.b16 %v64
  %v281 = vunpack.c.l.b16 %v65
  %v282 = vunpack.c.l.b16 %v66
  %v283 = vunpack.c.l.b16 %v67
  %v284 = vunpack.c.l.b16 %v68
  %v285 = vunpack.c.l.b16 %v69
  %v286 = vunpack.c.l.b16 %v70
  %v287 = vunpack.c.l.b16 %v71
  %v288 = vunpack.c.l.b16 %v72
  %v289 = vunpack.c.l.b16 %v73
  %v290 = vunpack.c.l.b16 %v74
  %v291 = vunpack.c.l.b16 %v75
  %v292 = vunpack.c.l.b16 %v76
  %v293 = vunpack.c.l.b16 %v77
  %v294 = vunpack.c.l.b16 %v78
  %v295 = vunpack.c.l.b16 %v79
  %v296 = vunpack.c.l.b16 %v80
  %v297 = vunpack.c.l.b16 %v81
  %v298 = vunpack.c.l.b16 %v82
  %v299 = vunpack.c.l.b16 %v83
  %v300 = vunpack.c.l.b16 %v84
  %v301 = vunpack.c.l.b16 %v85
  %v302 = vunpack.c.l.b16 %v86
  %v303 = vunpack.c.l.b16 %v87
  %v304 = vunpack.c.l.b16 %v88
  %v305 = vunpack.c.l.b16 %v89
  %v306 = vunpack.c.l.b16 %v90
  %v307 = vunpack.c.l.b16 %v91
  %v308 = vunpack.c.l.b16 %v92
  %v309 = vunpack.c.l.b16 %v93
  %v310 = vunpack.c.l.b16 %v94
  %v311 = vunpack.c.l.b16 %v95
  %v312 = vunpack.c.l.b16 %v96
  %v313 = vunpack.c.l.b16 %v97
  %v314 = vunpack.c.l.b16 %v98
  %v315 = vunpack.c.l.b16 %v99
  %v316 = vunpack.c.l.b16 %v100
  %v317 = vunpack.c.l.b16 %v101
  %v318 = vunpack.c.l.b16 %v102
  %v319 = vunpack.c.l.b16 %v103
  %v320 = vunpack.c.l.b16 %v104
  %v321 = vunpack.c.l.b16 %v105
  %v322 = vpack.c.b16 %v243, %v242
  %v323 = vpack.c.b16 %v245, %v244
  %v324 = vpack.c.b16 %v247, %v246
  %v325 = vpack.c.b16 %v249, %v248
  %v326 = vpack.c.b16 %v251, %v250
  %v327 = vpack.c.b16 %v253, %v252
  %v328 = vpack.c.b16 %v255, %v254
  %v329 = vpack.c.b16 %v257, %v256
  %v330 = vpack.c.b16 %v259, %v258
  %v331 = vpack.c.b16 %v261, %v260
  %v332 = vpack.c.b16 %v263, %v262
  %v333 = vpack.c.b16 %v265, %v264
  %v334 = vpack.c.b16 %v267, %v266
  %v335 = vpack.c.b16 %v269, %v268
  %v336 = vpack.c.b16 %v271, %v270
  %v337 = vpack.c.b16 %v273, %v272
  %v338 = vpack.c.b16 %v275, %v274
  %v339 = vpack.c.b16 %v277, %v276
  %v340 = vpack.c.b16 %v279, %v278
  %v341 = vpack.c.b16 %v281, %v280
  %v342 = vpack.c.b16 %v283, %v282
  %v343 = vpack.c.b16 %v285, %v284
  %v344 = vpack.c.b16 %v287, %v286
  %v345 = vpack.c.b16 %v289, %v288
  %v346 = vpack.c.b16 %v291, %v290
  %v347 = vpack.c.b16 %v293, %v292
  %v348 = vpack.c.b16 %v295, %v294
  %v349 = vpack.c.b16 %v297, %v296
  %v350 = vpack.c.b16 %v299, %v298
  %v351 = vpack.c.b16 %v301, %v300
  %v352 = vpack.c.b16 %v303, %v302
  %v353 = vpack.c.b16 %v305, %v304
  %v354 = vpack.c.b16 %v307, %v306
  %v355 = vpack.c.b16 %v309, %v308
  %v356 = vpack.c.b16 %v311, %v310
  %v357 = vpack.c.b16 %v313, %v312
  %v358 = vpack.c.b16 %v315, %v314
  %v359 = vpack.c.b16 %v317, %v316
  %v360 = vpack.c.b16 %v319, %v318
  %v361 = vpack.c.b16 %v321, %v320
  %402 = vmatpush.bf16.msra.mxu0 %v329
  %403 = vmatpush.bf16.msra.mxu0 %v328
  %404 = vmatpush.bf16.msra.mxu0 %v327
  %405 = vmatpush.bf16.msra.mxu0 %v326
  %406 = vmatpush.bf16.msra.mxu0 %v325
  %407 = vmatpush.bf16.msra.mxu0 %v324
  %408 = vmatpush.bf16.msra.mxu0 %v323
  %409 = vmatpush.bf16.msra.mxu0 %v322
  %410 = vmatmul.bf16.gmra.mxu0 %v142
  %v411 = vpop.f32.mrf.mxu0
  %v412 = vadd.f32 %v108, %v411
  %v413 = vpop.f32.mrf.mxu0
  %v414 = vadd.f32 %v108, %v413
  %415 = vmatmul.bf16.gmra.mxu0 %v147
  %v416 = vpop.f32.mrf.mxu0
  %v417 = vadd.f32 %v108, %v416
  %v418 = vpop.f32.mrf.mxu0
  %v419 = vadd.f32 %v108, %v418
  %420 = vdwg.mxu0
  %421 = vmatpush.bf16.msra.mxu0 %v337
  %422 = vmatpush.bf16.msra.mxu0 %v336
  %423 = vmatpush.bf16.msra.mxu0 %v335
  %424 = vmatpush.bf16.msra.mxu0 %v334
  %425 = vmatpush.bf16.msra.mxu0 %v333
  %426 = vmatpush.bf16.msra.mxu0 %v332
  %427 = vmatpush.bf16.msra.mxu0 %v331
  %428 = vmatpush.bf16.msra.mxu0 %v330
  %429 = vmatmul.bf16.gmra.mxu0 %v143
  %v430 = vpop.f32.mrf.mxu0
  %v431 = vadd.f32 %v412, %v430
  %v432 = vpop.f32.mrf.mxu0
  %v433 = vadd.f32 %v414, %v432
  %434 = vmatmul.bf16.gmra.mxu0 %v148
  %v435 = vpop.f32.mrf.mxu0
  %v436 = vadd.f32 %v417, %v435
  %v437 = vpop.f32.mrf.mxu0
  %v438 = vadd.f32 %v419, %v437
  %439 = vdwg.mxu0
  %440 = vmatpush.bf16.msra.mxu0 %v345
  %441 = vmatpush.bf16.msra.mxu0 %v344
  %442 = vmatpush.bf16.msra.mxu0 %v343
  %443 = vmatpush.bf16.msra.mxu0 %v342
  %444 = vmatpush.bf16.msra.mxu0 %v341
  %445 = vmatpush.bf16.msra.mxu0 %v340
  %446 = vmatpush.bf16.msra.mxu0 %v339
  %447 = vmatpush.bf16.msra.mxu0 %v338
  %448 = vmatmul.bf16.gmra.mxu0 %v144
  %v449 = vpop.f32.mrf.mxu0
  %v450 = vadd.f32 %v431, %v449
  %v451 = vpop.f32.mrf.mxu0
  %v452 = vadd.f32 %v433, %v451
  %453 = vmatmul.bf16.gmra.mxu0 %v149
  %v454 = vpop.f32.mrf.mxu0
  %v455 = vadd.f32 %v436, %v454
  %v456 = vpop.f32.mrf.mxu0
  %v457 = vadd.f32 %v438, %v456
  %458 = vdwg.mxu0
  %459 = vmatpush.bf16.msra.mxu0 %v353
  %460 = vmatpush.bf16.msra.mxu0 %v352
  %461 = vmatpush.bf16.msra.mxu0 %v351
  %462 = vmatpush.bf16.msra.mxu0 %v350
  %463 = vmatpush.bf16.msra.mxu0 %v349
  %464 = vmatpush.bf16.msra.mxu0 %v348
  %465 = vmatpush.bf16.msra.mxu0 %v347
  %466 = vmatpush.bf16.msra.mxu0 %v346
  %467 = vmatmul.bf16.gmra.mxu0 %v145
  %v468 = vpop.f32.mrf.mxu0
  %v469 = vadd.f32 %v450, %v468
  %v470 = vpop.f32.mrf.mxu0
  %v471 = vadd.f32 %v452, %v470
  %472 = vmatmul.bf16.gmra.mxu0 %v150
  %v473 = vpop.f32.mrf.mxu0
  %v474 = vadd.f32 %v455, %v473
  %v475 = vpop.f32.mrf.mxu0
  %v476 = vadd.f32 %v457, %v475
  %477 = vdwg.mxu0
  %478 = vmatpush.bf16.msra.mxu0 %v361
  %479 = vmatpush.bf16.msra.mxu0 %v360
  %480 = vmatpush.bf16.msra.mxu0 %v359
  %481 = vmatpush.bf16.msra.mxu0 %v358
  %482 = vmatpush.bf16.msra.mxu0 %v357
  %483 = vmatpush.bf16.msra.mxu0 %v356
  %484 = vmatpush.bf16.msra.mxu0 %v355
  %485 = vmatpush.bf16.msra.mxu0 %v354
  %486 = vmatmul.bf16.gmra.mxu0 %v146
  %v487 = vpop.f32.mrf.mxu0
  %v488 = vadd.f32 %v469, %v487
  %v489 = vpop.f32.mrf.mxu0
  %v490 = vadd.f32 %v471, %v489
  %491 = vmatmul.bf16.gmra.mxu0 %v151
  %v492 = vpop.f32.mrf.mxu0
  %v493 = vadd.f32 %v474, %v492
  %v494 = vpop.f32.mrf.mxu0
  %v495 = vadd.f32 %v476, %v494
  %496 = vdwg.mxu0
  %v497 = vxor.u32 %v488, 2147483648
  %v498 = vxor.u32 %v490, 2147483648
  %v499 = vxor.u32 %v493, 2147483648
  %v500 = vxor.u32 %v495, 2147483648
  %v501 = vmul.f32 %v497, 1.442695
  %v502 = vpow.pop %v501
  %v503 = vmul.f32 %v498, 1.442695
  %v504 = vpow.pop %v503
  %v505 = vmul.f32 %v499, 1.442695
  %v506 = vpow.pop %v505
  %v507 = vmul.f32 %v500, 1.442695
  %v508 = vpow.pop %v507
  %v509 = vadd.f32 %v502, 1.0
  %v510 = vadd.f32 %v504, 1.0
  %v511 = vadd.f32 %v506, 1.0
  %v512 = vadd.f32 %v508, 1.0
  %v513 = vrcp.pop %v509
  %v514 = vmul.f32 %v509, %v513
  %v515 = vsub.f32 1.0, %v514
  %v516 = vmul.f32 %v513, %v515
  %v517 = vadd.f32 %v513, %v516
  %vm518 = vweird.f32 %v509
  %vm519 = vweird.f32 %v513
  %vm520 = vmor %vm518, %vm519
  %v521 = vsel %vm520, %v513, %v517
  %v522 = vand.u32 2147483647, %v509
  %vm523 = vcmp.eq.f32.partialorder %v522, 8.507059e+37
  %v524 = vand.u32 %v509, 2147483648
  %v525 = vor.u32 1.1754944e-38, %v524
  %v526 = vsel %vm523, %v525, %v521
  %v527 = vmul.f32 1.0, %v526
  %v528 = vrcp.pop %v510
  %v529 = vmul.f32 %v510, %v528
  %v530 = vsub.f32 1.0, %v529
  %v531 = vmul.f32 %v528, %v530
  %v532 = vadd.f32 %v528, %v531
  %vm533 = vweird.f32 %v510
  %vm534 = vweird.f32 %v528
  %vm535 = vmor %vm533, %vm534
  %v536 = vsel %vm535, %v528, %v532
  %v537 = vand.u32 2147483647, %v510
  %vm538 = vcmp.eq.f32.partialorder %v537, 8.507059e+37
  %v539 = vand.u32 %v510, 2147483648
  %v540 = vor.u32 1.1754944e-38, %v539
  %v541 = vsel %vm538, %v540, %v536
  %v542 = vmul.f32 1.0, %v541
  %v543 = vrcp.pop %v511
  %v544 = vmul.f32 %v511, %v543
  %v545 = vsub.f32 1.0, %v544
  %v546 = vmul.f32 %v543, %v545
  %v547 = vadd.f32 %v543, %v546
  %vm548 = vweird.f32 %v511
  %vm549 = vweird.f32 %v543
  %vm550 = vmor %vm548, %vm549
  %v551 = vsel %vm550, %v543, %v547
  %v552 = vand.u32 2147483647, %v511
  %vm553 = vcmp.eq.f32.partialorder %v552, 8.507059e+37
  %v554 = vand.u32 %v511, 2147483648
  %v555 = vor.u32 1.1754944e-38, %v554
  %v556 = vsel %vm553, %v555, %v551
  %v557 = vmul.f32 1.0, %v556
  %v558 = vrcp.pop %v512
  %v559 = vmul.f32 %v512, %v558
  %v560 = vsub.f32 1.0, %v559
  %v561 = vmul.f32 %v558, %v560
  %v562 = vadd.f32 %v558, %v561
  %vm563 = vweird.f32 %v512
  %vm564 = vweird.f32 %v558
  %vm565 = vmor %vm563, %vm564
  %v566 = vsel %vm565, %v558, %v562
  %v567 = vand.u32 2147483647, %v512
  %vm568 = vcmp.eq.f32.partialorder %v567, 8.507059e+37
  %v569 = vand.u32 %v512, 2147483648
  %v570 = vor.u32 1.1754944e-38, %v569
  %v571 = vsel %vm568, %v570, %v566
  %v572 = vmul.f32 1.0, %v571
  %vm573 = vcmask 523264
  %574 = vst.msk [vmem:[%s3] sm:$0xff] %vm573, %v527
  %575 = vst.msk [vmem:[%s3 + $0x8] sm:$0xff] %vm573, %v542
  %576 = vst.msk [vmem:[%s3 + $0x10] sm:$0xff] %vm573, %v557
  %577 = vst.msk [vmem:[%s3 + $0x18] sm:$0xff] %vm573, %v572
  // Predicated region
  $region14: #{raft_plus_dicl_forward.75} parent=0 // pred_check
    _
  $region15: #{raft_plus_dicl_forward.75} parent=0 // pred_check_branch
    %579 = sbr.rel (0) target = $region17
  $region16: #{raft_plus_dicl_forward.75} parent=0 // pred_region
    _
  $region17: #{raft_plus_dicl_forward.75} parent=0 // pred_fallthru
    _
  // Predicated region
  $region18: #{raft_plus_dicl_forward.75} parent=0 // pred_check
    _
  $region19: #{raft_plus_dicl_forward.75} parent=0 // pred_check_branch
    %581 = sbr.rel (0) target = $region21
  $region20: #{raft_plus_dicl_forward.75} parent=0 // pred_region
    _
  $region21: #{raft_plus_dicl_forward.75} parent=0 // pred_fallthru
    _

// kernel: raft_plus_dicl_forward.76
$region0: #{raft_plus_dicl_forward.76}
  #allocation0 [shape = 'u32[]', space=smem, size = 0x4, offset = 0x4, fixed_abs, tag = 'smem constant byte address 0x4 - core index']
  #allocation1 [shape = 'u32[72,128]{1,0:T(1,128)}', space=vmem, size = 0x9000, scoped, tag = 'internal scratch']
  %s0 = inlined_call_operand.vmem [shape: bf16[32,640], index: 0, kind: input, shape index: {}]
  %s1 = inlined_call_operand.vmem [shape: bf16[640,32], index: 1, kind: input, shape index: {}]
  %s2 = inlined_call_operand.vmem [shape: f32[1,32], index: 2, kind: input, shape index: {}]
  %s3 = inlined_call_operand.vmem [shape: f32[32,32], index: 3, kind: output, shape index: {}]
  %s4 = sld [smem:[#allocation0]]
  $region22: #{raft_plus_dicl_forward.76} parent=0
    _
  %s6 = ssub.s32 1, %s4
  %s7 = scalar_select 0, %s6, %s4
  // Predicated region
  $region2: #{raft_plus_dicl_forward.76} parent=0 // pred_check
    _
  $region3: #{raft_plus_dicl_forward.76} parent=0 // pred_check_branch
    %9 = sbr.rel (0) target = $region5
  $region4: #{raft_plus_dicl_forward.76} parent=0 // pred_region
    _
  $region5: #{raft_plus_dicl_forward.76} parent=0 // pred_fallthru
    _
  // Predicated region
  $region6: #{raft_plus_dicl_forward.76} parent=0 // pred_check
    _
  $region7: #{raft_plus_dicl_forward.76} parent=0 // pred_check_branch
    %11 = sbr.rel (0) target = $region9
  $region8: #{raft_plus_dicl_forward.76} parent=0 // pred_region
    _
  $region9: #{raft_plus_dicl_forward.76} parent=0 // pred_fallthru
    _
  // Predicated region
  $region10: #{raft_plus_dicl_forward.76} parent=0 // pred_check
    _
  $region11: #{raft_plus_dicl_forward.76} parent=0 // pred_check_branch
    %13 = sbr.rel (0) target = $region13
  $region12: #{raft_plus_dicl_forward.76} parent=0 // pred_region
    _
  $region13: #{raft_plus_dicl_forward.76} parent=0 // pred_fallthru
    _
  %v14 = vld [vmem:[%s0] sm:$0xff]
  %v15 = vld [vmem:[%s0 + $0x8] sm:$0xff]
  %v16 = vld [vmem:[%s0 + $0x10] sm:$0xf]
  %v17 = vld [vmem:[%s0 + $0x14] sm:$0xff]
  %v18 = vld [vmem:[%s0 + $0x1c] sm:$0xff]
  %v19 = vld [vmem:[%s0 + $0x24] sm:$0xf]
  %v20 = vld [vmem:[%s0 + $0x28] sm:$0xff]
  %v21 = vld [vmem:[%s0 + $0x30] sm:$0xff]
  %v22 = vld [vmem:[%s0 + $0x38] sm:$0xf]
  %v23 = vld [vmem:[%s0 + $0x3c] sm:$0xff]
  %v24 = vld [vmem:[%s0 + $0x44] sm:$0xff]
  %v25 = vld [vmem:[%s0 + $0x4c] sm:$0xf]
  %v26 = vld [vmem:[%s1] sm:$0xf]
  %v27 = vld [vmem:[%s1 + $0x4] sm:$0xf]
  %v28 = vld [vmem:[%s1 + $0x8] sm:$0xf]
  %v29 = vld [vmem:[%s1 + $0xc] sm:$0xf]
  %v30 = vld [vmem:[%s1 + $0x10] sm:$0xf]
  %v31 = vld [vmem:[%s1 + $0x14] sm:$0xf]
  %v32 = vld [vmem:[%s1 + $0x18] sm:$0xf]
  %v33 = vld [vmem:[%s1 + $0x1c] sm:$0xf]
  %v34 = vld [vmem:[%s1 + $0x20] sm:$0xf]
  %v35 = vld [vmem:[%s1 + $0x24] sm:$0xf]
  %v36 = vld [vmem:[%s1 + $0x28] sm:$0xf]
  %v37 = vld [vmem:[%s1 + $0x2c] sm:$0xf]
  %v38 = vld [vmem:[%s1 + $0x30] sm:$0xf]
  %v39 = vld [vmem:[%s1 + $0x34] sm:$0xf]
  %v40 = vld [vmem:[%s1 + $0x38] sm:$0xf]
  %v41 = vld [vmem:[%s1 + $0x3c] sm:$0xf]
  %v42 = vld [vmem:[%s1 + $0x40] sm:$0xf]
  %v43 = vld [vmem:[%s1 + $0x44] sm:$0xf]
  %v44 = vld [vmem:[%s1 + $0x48] sm:$0xf]
  %v45 = vld [vmem:[%s1 + $0x4c] sm:$0xf]
  %v46 = vld [vmem:[%s1 + $0x50] sm:$0xf]
  %v47 = vld [vmem:[%s1 + $0x54] sm:$0xf]
  %v48 = vld [vmem:[%s1 + $0x58] sm:$0xf]
  %v49 = vld [vmem:[%s1 + $0x5c] sm:$0xf]
  %v50 = vld [vmem:[%s1 + $0x60] sm:$0xf]
  %v51 = vld [vmem:[%s1 + $0x64] sm:$0xf]
  %v52 = vld [vmem:[%s1 + $0x68] sm:$0xf]
  %v53 = vld [vmem:[%s1 + $0x6c] sm:$0xf]
  %v54 = vld [vmem:[%s1 + $0x70] sm:$0xf]
  %v55 = vld [vmem:[%s1 + $0x74] sm:$0xf]
  %v56 = vld [vmem:[%s1 + $0x78] sm:$0xf]
  %v57 = vld [vmem:[%s1 + $0x7c] sm:$0xf]
  %v58 = vld [vmem:[%s1 + $0x80] sm:$0xf]
  %v59 = vld [vmem:[%s1 + $0x84] sm:$0xf]
  %v60 = vld [vmem:[%s1 + $0x88] sm:$0xf]
  %v61 = vld [vmem:[%s1 + $0x8c] sm:$0xf]
  %v62 = vld [vmem:[%s1 + $0x90] sm:$0xf]
  %v63 = vld [vmem:[%s1 + $0x94] sm:$0xf]
  %v64 = vld [vmem:[%s1 + $0x98] sm:$0xf]
  %v65 = vld [vmem:[%s1 + $0x9c] sm:$0xf]
  %v66 = vld [vmem:[%s1 + $0xa0] sm:$0xf]
  %v67 = vld [vmem:[%s1 + $0xa4] sm:$0xf]
  %v68 = vld [vmem:[%s1 + $0xa8] sm:$0xf]
  %v69 = vld [vmem:[%s1 + $0xac] sm:$0xf]
  %v70 = vld [vmem:[%s1 + $0xb0] sm:$0xf]
  %v71 = vld [vmem:[%s1 + $0xb4] sm:$0xf]
  %v72 = vld [vmem:[%s1 + $0xb8] sm:$0xf]
  %v73 = vld [vmem:[%s1 + $0xbc] sm:$0xf]
  %v74 = vld [vmem:[%s1 + $0xc0] sm:$0xf]
  %v75 = vld [vmem:[%s1 + $0xc4] sm:$0xf]
  %v76 = vld [vmem:[%s1 + $0xc8] sm:$0xf]
  %v77 = vld [vmem:[%s1 + $0xcc] sm:$0xf]
  %v78 = vld [vmem:[%s1 + $0xd0] sm:$0xf]
  %v79 = vld [vmem:[%s1 + $0xd4] sm:$0xf]
  %v80 = vld [vmem:[%s1 + $0xd8] sm:$0xf]
  %v81 = vld [vmem:[%s1 + $0xdc] sm:$0xf]
  %v82 = vld [vmem:[%s1 + $0xe0] sm:$0xf]
  %v83 = vld [vmem:[%s1 + $0xe4] sm:$0xf]
  %v84 = vld [vmem:[%s1 + $0xe8] sm:$0xf]
  %v85 = vld [vmem:[%s1 + $0xec] sm:$0xf]
  %v86 = vld [vmem:[%s1 + $0xf0] sm:$0xf]
  %v87 = vld [vmem:[%s1 + $0xf4] sm:$0xf]
  %v88 = vld [vmem:[%s1 + $0xf8] sm:$0xf]
  %v89 = vld [vmem:[%s1 + $0xfc] sm:$0xf]
  %v90 = vld [vmem:[%s1 + $0x100] sm:$0xf]
  %v91 = vld [vmem:[%s1 + $0x104] sm:$0xf]
  %v92 = vld [vmem:[%s1 + $0x108] sm:$0xf]
  %v93 = vld [vmem:[%s1 + $0x10c] sm:$0xf]
  %v94 = vld [vmem:[%s1 + $0x110] sm:$0xf]
  %v95 = vld [vmem:[%s1 + $0x114] sm:$0xf]
  %v96 = vld [vmem:[%s1 + $0x118] sm:$0xf]
  %v97 = vld [vmem:[%s1 + $0x11c] sm:$0xf]
  %v98 = vld [vmem:[%s1 + $0x120] sm:$0xf]
  %v99 = vld [vmem:[%s1 + $0x124] sm:$0xf]
  %v100 = vld [vmem:[%s1 + $0x128] sm:$0xf]
  %v101 = vld [vmem:[%s1 + $0x12c] sm:$0xf]
  %v102 = vld [vmem:[%s1 + $0x130] sm:$0xf]
  %v103 = vld [vmem:[%s1 + $0x134] sm:$0xf]
  %v104 = vld [vmem:[%s1 + $0x138] sm:$0xf]
  %v105 = vld [vmem:[%s1 + $0x13c] sm:$0xf]
  %v106 = vld [vmem:[%s2] sm:$0x1]
  %v108 = vperm.slane %v106, 0
  %v122 = vunpack.c.l.b16 %v14
  %v123 = vunpack.c.h.b16 %v14
  %v124 = vunpack.c.l.b16 %v15
  %v125 = vunpack.c.h.b16 %v15
  %v126 = vunpack.c.l.b16 %v16
  %v127 = vunpack.c.l.b16 %v17
  %v128 = vunpack.c.h.b16 %v17
  %v129 = vunpack.c.l.b16 %v18
  %v130 = vunpack.c.h.b16 %v18
  %v131 = vunpack.c.l.b16 %v19
  %v132 = vunpack.c.l.b16 %v20
  %v133 = vunpack.c.h.b16 %v20
  %v134 = vunpack.c.l.b16 %v21
  %v135 = vunpack.c.h.b16 %v21
  %v136 = vunpack.c.l.b16 %v22
  %v137 = vunpack.c.l.b16 %v23
  %v138 = vunpack.c.h.b16 %v23
  %v139 = vunpack.c.l.b16 %v24
  %v140 = vunpack.c.h.b16 %v24
  %v141 = vunpack.c.l.b16 %v25
  %v142 = vpack.c.b16 %v127, %v122
  %v143 = vpack.c.b16 %v128, %v123
  %v144 = vpack.c.b16 %v129, %v124
  %v145 = vpack.c.b16 %v130, %v125
  %v146 = vpack.c.b16 %v131, %v126
  %v147 = vpack.c.b16 %v137, %v132
  %v148 = vpack.c.b16 %v138, %v133
  %v149 = vpack.c.b16 %v139, %v134
  %v150 = vpack.c.b16 %v140, %v135
  %v151 = vpack.c.b16 %v141, %v136
  %v242 = vunpack.c.l.b16 %v26
  %v243 = vunpack.c.l.b16 %v27
  %v244 = vunpack.c.l.b16 %v28
  %v245 = vunpack.c.l.b16 %v29
  %v246 = vunpack.c.l.b16 %v30
  %v247 = vunpack.c.l.b16 %v31
  %v248 = vunpack.c.l.b16 %v32
  %v249 = vunpack.c.l.b16 %v33
  %v250 = vunpack.c.l.b16 %v34
  %v251 = vunpack.c.l.b16 %v35
  %v252 = vunpack.c.l.b16 %v36
  %v253 = vunpack.c.l.b16 %v37
  %v254 = vunpack.c.l.b16 %v38
  %v255 = vunpack.c.l.b16 %v39
  %v256 = vunpack.c.l.b16 %v40
  %v257 = vunpack.c.l.b16 %v41
  %v258 = vunpack.c.l.b16 %v42
  %v259 = vunpack.c.l.b16 %v43
  %v260 = vunpack.c.l.b16 %v44
  %v261 = vunpack.c.l.b16 %v45
  %v262 = vunpack.c.l.b16 %v46
  %v263 = vunpack.c.l.b16 %v47
  %v264 = vunpack.c.l.b16 %v48
  %v265 = vunpack.c.l.b16 %v49
  %v266 = vunpack.c.l.b16 %v50
  %v267 = vunpack.c.l.b16 %v51
  %v268 = vunpack.c.l.b16 %v52
  %v269 = vunpack.c.l.b16 %v53
  %v270 = vunpack.c.l.b16 %v54
  %v271 = vunpack.c.l.b16 %v55
  %v272 = vunpack.c.l.b16 %v56
  %v273 = vunpack.c.l.b16 %v57
  %v274 = vunpack.c.l.b16 %v58
  %v275 = vunpack.c.l.b16 %v59
  %v276 = vunpack.c.l.b16 %v60
  %v277 = vunpack.c.l.b16 %v61
  %v278 = vunpack.c.l.b16 %v62
  %v279 = vunpack.c.l.b16 %v63
  %v280 = vunpack.c.l.b16 %v64
  %v281 = vunpack.c.l.b16 %v65
  %v282 = vunpack.c.l.b16 %v66
  %v283 = vunpack.c.l.b16 %v67
  %v284 = vunpack.c.l.b16 %v68
  %v285 = vunpack.c.l.b16 %v69
  %v286 = vunpack.c.l.b16 %v70
  %v287 = vunpack.c.l.b16 %v71
  %v288 = vunpack.c.l.b16 %v72
  %v289 = vunpack.c.l.b16 %v73
  %v290 = vunpack.c.l.b16 %v74
  %v291 = vunpack.c.l.b16 %v75
  %v292 = vunpack.c.l.b16 %v76
  %v293 = vunpack.c.l.b16 %v77
  %v294 = vunpack.c.l.b16 %v78
  %v295 = vunpack.c.l.b16 %v79
  %v296 = vunpack.c.l.b16 %v80
  %v297 = vunpack.c.l.b16 %v81
  %v298 = vunpack.c.l.b16 %v82
  %v299 = vunpack.c.l.b16 %v83
  %v300 = vunpack.c.l.b16 %v84
  %v301 = vunpack.c.l.b16 %v85
  %v302 = vunpack.c.l.b16 %v86
  %v303 = vunpack.c.l.b16 %v87
  %v304 = vunpack.c.l.b16 %v88
  %v305 = vunpack.c.l.b16 %v89
  %v306 = vunpack.c.l.b16 %v90
  %v307 = vunpack.c.l.b16 %v91
  %v308 = vunpack.c.l.b16 %v92
  %v309 = vunpack.c.l.b16 %v93
  %v310 = vunpack.c.l.b16 %v94
  %v311 = vunpack.c.l.b16 %v95
  %v312 = vunpack.c.l.b16 %v96
  %v313 = vunpack.c.l.b16 %v97
  %v314 = vunpack.c.l.b16 %v98
  %v315 = vunpack.c.l.b16 %v99
  %v316 = vunpack.c.l.b16 %v100
  %v317 = vunpack.c.l.b16 %v101
  %v318 = vunpack.c.l.b16 %v102
  %v319 = vunpack.c.l.b16 %v103
  %v320 = vunpack.c.l.b16 %v104
  %v321 = vunpack.c.l.b16 %v105
  %v322 = vpack.c.b16 %v243, %v242
  %v323 = vpack.c.b16 %v245, %v244
  %v324 = vpack.c.b16 %v247, %v246
  %v325 = vpack.c.b16 %v249, %v248
  %v326 = vpack.c.b16 %v251, %v250
  %v327 = vpack.c.b16 %v253, %v252
  %v328 = vpack.c.b16 %v255, %v254
  %v329 = vpack.c.b16 %v257, %v256
  %v330 = vpack.c.b16 %v259, %v258
  %v331 = vpack.c.b16 %v261, %v260
  %v332 = vpack.c.b16 %v263, %v262
  %v333 = vpack.c.b16 %v265, %v264
  %v334 = vpack.c.b16 %v267, %v266
  %v335 = vpack.c.b16 %v269, %v268
  %v336 = vpack.c.b16 %v271, %v270
  %v337 = vpack.c.b16 %v273, %v272
  %v338 = vpack.c.b16 %v275, %v274
  %v339 = vpack.c.b16 %v277, %v276
  %v340 = vpack.c.b16 %v279, %v278
  %v341 = vpack.c.b16 %v281, %v280
  %v342 = vpack.c.b16 %v283, %v282
  %v343 = vpack.c.b16 %v285, %v284
  %v344 = vpack.c.b16 %v287, %v286
  %v345 = vpack.c.b16 %v289, %v288
  %v346 = vpack.c.b16 %v291, %v290
  %v347 = vpack.c.b16 %v293, %v292
  %v348 = vpack.c.b16 %v295, %v294
  %v349 = vpack.c.b16 %v297, %v296
  %v350 = vpack.c.b16 %v299, %v298
  %v351 = vpack.c.b16 %v301, %v300
  %v352 = vpack.c.b16 %v303, %v302
  %v353 = vpack.c.b16 %v305, %v304
  %v354 = vpack.c.b16 %v307, %v306
  %v355 = vpack.c.b16 %v309, %v308
  %v356 = vpack.c.b16 %v311, %v310
  %v357 = vpack.c.b16 %v313, %v312
  %v358 = vpack.c.b16 %v315, %v314
  %v359 = vpack.c.b16 %v317, %v316
  %v360 = vpack.c.b16 %v319, %v318
  %v361 = vpack.c.b16 %v321, %v320
  %402 = vmatpush.bf16.msra.mxu0 %v329
  %403 = vmatpush.bf16.msra.mxu0 %v328
  %404 = vmatpush.bf16.msra.mxu0 %v327
  %405 = vmatpush.bf16.msra.mxu0 %v326
  %406 = vmatpush.bf16.msra.mxu0 %v325
  %407 = vmatpush.bf16.msra.mxu0 %v324
  %408 = vmatpush.bf16.msra.mxu0 %v323
  %409 = vmatpush.bf16.msra.mxu0 %v322
  %410 = vmatmul.bf16.gmra.mxu0 %v142
  %v411 = vpop.f32.mrf.mxu0
  %v412 = vadd.f32 %v108, %v411
  %v413 = vpop.f32.mrf.mxu0
  %v414 = vadd.f32 %v108, %v413
  %415 = vmatmul.bf16.gmra.mxu0 %v147
  %v416 = vpop.f32.mrf.mxu0
  %v417 = vadd.f32 %v108, %v416
  %v418 = vpop.f32.mrf.mxu0
  %v419 = vadd.f32 %v108, %v418
  %420 = vdwg.mxu0
  %421 = vmatpush.bf16.msra.mxu0 %v337
  %422 = vmatpush.bf16.msra.mxu0 %v336
  %423 = vmatpush.bf16.msra.mxu0 %v335
  %424 = vmatpush.bf16.msra.mxu0 %v334
  %425 = vmatpush.bf16.msra.mxu0 %v333
  %426 = vmatpush.bf16.msra.mxu0 %v332
  %427 = vmatpush.bf16.msra.mxu0 %v331
  %428 = vmatpush.bf16.msra.mxu0 %v330
  %429 = vmatmul.bf16.gmra.mxu0 %v143
  %v430 = vpop.f32.mrf.mxu0
  %v431 = vadd.f32 %v412, %v430
  %v432 = vpop.f32.mrf.mxu0
  %v433 = vadd.f32 %v414, %v432
  %434 = vmatmul.bf16.gmra.mxu0 %v148
  %v435 = vpop.f32.mrf.mxu0
  %v436 = vadd.f32 %v417, %v435
  %v437 = vpop.f32.mrf.mxu0
  %v438 = vadd.f32 %v419, %v437
  %439 = vdwg.mxu0
  %440 = vmatpush.bf16.msra.mxu0 %v345
  %441 = vmatpush.bf16.msra.mxu0 %v344
  %442 = vmatpush.bf16.msra.mxu0 %v343
  %443 = vmatpush.bf16.msra.mxu0 %v342
  %444 = vmatpush.bf16.msra.mxu0 %v341
  %445 = vmatpush.bf16.msra.mxu0 %v340
  %446 = vmatpush.bf16.msra.mxu0 %v339
  %447 = vmatpush.bf16.msra.mxu0 %v338
  %448 = vmatmul.bf16.gmra.mxu0 %v144
  %v449 = vpop.f32.mrf.mxu0
  %v450 = vadd.f32 %v431, %v449
  %v451 = vpop.f32.mrf.mxu0
  %v452 = vadd.f32 %v433, %v451
  %453 = vmatmul.bf16.gmra.mxu0 %v149
  %v454 = vpop.f32.mrf.mxu0
  %v455 = vadd.f32 %v436, %v454
  %v456 = vpop.f32.mrf.mxu0
  %v457 = vadd.f32 %v438, %v456
  %458 = vdwg.mxu0
  %459 = vmatpush.bf16.msra.mxu0 %v353
  %460 = vmatpush.bf16.msra.mxu0 %v352
  %461 = vmatpush.bf16.msra.mxu0 %v351
  %462 = vmatpush.bf16.msra.mxu0 %v350
  %463 = vmatpush.bf16.msra.mxu0 %v349
  %464 = vmatpush.bf16.msra.mxu0 %v348
  %465 = vmatpush.bf16.msra.mxu0 %v347
  %466 = vmatpush.bf16.msra.mxu0 %v346
  %467 = vmatmul.bf16.gmra.mxu0 %v145
  %v468 = vpop.f32.mrf.mxu0
  %v469 = vadd.f32 %v450, %v468
  %v470 = vpop.f32.mrf.mxu0
  %v471 = vadd.f32 %v452, %v470
  %472 = vmatmul.bf16.gmra.mxu0 %v150
  %v473 = vpop.f32.mrf.mxu0
  %v474 = vadd.f32 %v455, %v473
  %v475 = vpop.f32.mrf.mxu0
  %v476 = vadd.f32 %v457, %v475
  %477 = vdwg.mxu0
  %478 = vmatpush.bf16.msra.mxu0 %v361
  %479 = vmatpush.bf16.msra.mxu0 %v360
  %480 = vmatpush.bf16.msra.mxu0 %v359
  %481 = vmatpush.bf16.msra.mxu0 %v358
  %482 = vmatpush.bf16.msra.mxu0 %v357
  %483 = vmatpush.bf16.msra.mxu0 %v356
  %484 = vmatpush.bf16.msra.mxu0 %v355
  %485 = vmatpush.bf16.msra.mxu0 %v354
  %486 = vmatmul.bf16.gmra.mxu0 %v146
  %v487 = vpop.f32.mrf.mxu0
  %v488 = vadd.f32 %v469, %v487
  %v489 = vpop.f32.mrf.mxu0
  %v490 = vadd.f32 %v471, %v489
  %491 = vmatmul.bf16.gmra.mxu0 %v151
  %v492 = vpop.f32.mrf.mxu0
  %v493 = vadd.f32 %v474, %v492
  %v494 = vpop.f32.mrf.mxu0
  %v495 = vadd.f32 %v476, %v494
  %496 = vdwg.mxu0
  %v497 = vtanh.pop %v488
  %v498 = vtanh.pop %v490
  %v499 = vtanh.pop %v493
  %v500 = vtanh.pop %v495
  %vm501 = vcmask 261120
  %502 = vst.msk [vmem:[%s3] sm:$0xff] %vm501, %v497
  %503 = vst.msk [vmem:[%s3 + $0x8] sm:$0xff] %vm501, %v498
  %504 = vst.msk [vmem:[%s3 + $0x10] sm:$0xff] %vm501, %v499
  %505 = vst.msk [vmem:[%s3 + $0x18] sm:$0xff] %vm501, %v500
  // Predicated region
  $region14: #{raft_plus_dicl_forward.76} parent=0 // pred_check
    _
  $region15: #{raft_plus_dicl_forward.76} parent=0 // pred_check_branch
    %507 = sbr.rel (0) target = $region17
  $region16: #{raft_plus_dicl_forward.76} parent=0 // pred_region
    _
  $region17: #{raft_plus_dicl_forward.76} parent=0 // pred_fallthru
    _
  // Predicated region
  $region18: #{raft_plus_dicl_forward.76} parent=0 // pred_check
    _
  $region19: #{raft_plus_dicl_forward.76} parent=0 // pred_check_branch
    %509 = sbr.rel (0) target = $region21
  $region20: #{raft_plus_dicl_forward.76} parent=0 // pred_region
    _
  $region21: #{raft_plus_dicl_forward.76} parent=0 // pred_fallthru
    _

// kernel: raft_plus_dicl_forward.79
$region0: #{raft_plus_dicl_forward.79}
  #allocation0 [shape = 'u32[]', space=smem, size = 0x4, offset = 0x4, fixed_abs, tag = 'smem constant byte address 0x4 - core index']
  #allocation1 [shape = 'u32[72,128]{1,0:T(1,128)}', space=vmem, size = 0x9000, scoped, tag = 'internal scratch']
  %s0 = inlined_call_operand.vmem [shape: bf16[32,288], index: 0, kind: input, shape index: {}]
  %s1 = inlined_call_operand.vmem [shape: bf16[288,128], index: 1, kind: input, shape index: {}]
  %s2 = inlined_call_operand.vmem [shape: f32[1,128], index: 2, kind: input, shape index: {}]
  %s3 = inlined_call_operand.vmem [shape: f32[32,128], index: 3, kind: output, shape index: {}]
  %s4 = sld [smem:[#allocation0]]
  $region22: #{raft_plus_dicl_forward.79} parent=0
    _
  %s6 = ssub.s32 1, %s4
  %s7 = scalar_select 0, %s6, %s4
  // Predicated region
  $region2: #{raft_plus_dicl_forward.79} parent=0 // pred_check
    _
  $region3: #{raft_plus_dicl_forward.79} parent=0 // pred_check_branch
    %9 = sbr.rel (0) target = $region5
  $region4: #{raft_plus_dicl_forward.79} parent=0 // pred_region
    _
  $region5: #{raft_plus_dicl_forward.79} parent=0 // pred_fallthru
    _
  // Predicated region
  $region6: #{raft_plus_dicl_forward.79} parent=0 // pred_check
    _
  $region7: #{raft_plus_dicl_forward.79} parent=0 // pred_check_branch
    %11 = sbr.rel (0) target = $region9
  $region8: #{raft_plus_dicl_forward.79} parent=0 // pred_region
    _
  $region9: #{raft_plus_dicl_forward.79} parent=0 // pred_fallthru
    _
  // Predicated region
  $region10: #{raft_plus_dicl_forward.79} parent=0 // pred_check
    _
  $region11: #{raft_plus_dicl_forward.79} parent=0 // pred_check_branch
    %13 = sbr.rel (0) target = $region13
  $region12: #{raft_plus_dicl_forward.79} parent=0 // pred_region
    _
  $region13: #{raft_plus_dicl_forward.79} parent=0 // pred_fallthru
    _
  %v15 = vld [vmem:[%s0] sm:$0xff]
  %v16 = vld [vmem:[%s0 + $0x8] sm:$0xf]
  %v17 = vld [vmem:[%s0 + $0xc] sm:$0xff]
  %v18 = vld [vmem:[%s0 + $0x14] sm:$0xf]
  %v19 = vld [vmem:[%s0 + $0x18] sm:$0xff]
  %v20 = vld [vmem:[%s0 + $0x20] sm:$0xf]
  %v21 = vld [vmem:[%s0 + $0x24] sm:$0xff]
  %v22 = vld [vmem:[%s0 + $0x2c] sm:$0xf]
  %v23 = vld [vmem:[%s1] sm:$0xf]
  %v24 = vld [vmem:[%s1 + $0x4] sm:$0xf]
  %v25 = vld [vmem:[%s1 + $0x8] sm:$0xf]
  %v26 = vld [vmem:[%s1 + $0xc] sm:$0xf]
  %v27 = vld [vmem:[%s1 + $0x10] sm:$0xf]
  %v28 = vld [vmem:[%s1 + $0x14] sm:$0xf]
  %v29 = vld [vmem:[%s1 + $0x18] sm:$0xf]
  %v30 = vld [vmem:[%s1 + $0x1c] sm:$0xf]
  %v31 = vld [vmem:[%s1 + $0x20] sm:$0xf]
  %v32 = vld [vmem:[%s1 + $0x24] sm:$0xf]
  %v33 = vld [vmem:[%s1 + $0x28] sm:$0xf]
  %v34 = vld [vmem:[%s1 + $0x2c] sm:$0xf]
  %v35 = vld [vmem:[%s1 + $0x30] sm:$0xf]
  %v36 = vld [vmem:[%s1 + $0x34] sm:$0xf]
  %v37 = vld [vmem:[%s1 + $0x38] sm:$0xf]
  %v38 = vld [vmem:[%s1 + $0x3c] sm:$0xf]
  %v39 = vld [vmem:[%s1 + $0x40] sm:$0xf]
  %v40 = vld [vmem:[%s1 + $0x44] sm:$0xf]
  %v41 = vld [vmem:[%s1 + $0x48] sm:$0xf]
  %v42 = vld [vmem:[%s1 + $0x4c] sm:$0xf]
  %v43 = vld [vmem:[%s1 + $0x50] sm:$0xf]
  %v44 = vld [vmem:[%s1 + $0x54] sm:$0xf]
  %v45 = vld [vmem:[%s1 + $0x58] sm:$0xf]
  %v46 = vld [vmem:[%s1 + $0x5c] sm:$0xf]
  %v47 = vld [vmem:[%s1 + $0x60] sm:$0xf]
  %v48 = vld [vmem:[%s1 + $0x64] sm:$0xf]
  %v49 = vld [vmem:[%s1 + $0x68] sm:$0xf]
  %v50 = vld [vmem:[%s1 + $0x6c] sm:$0xf]
  %v51 = vld [vmem:[%s1 + $0x70] sm:$0xf]
  %v52 = vld [vmem:[%s1 + $0x74] sm:$0xf]
  %v53 = vld [vmem:[%s1 + $0x78] sm:$0xf]
  %v54 = vld [vmem:[%s1 + $0x7c] sm:$0xf]
  %v55 = vld [vmem:[%s1 + $0x80] sm:$0xf]
  %v56 = vld [vmem:[%s1 + $0x84] sm:$0xf]
  %v57 = vld [vmem:[%s1 + $0x88] sm:$0xf]
  %v58 = vld [vmem:[%s1 + $0x8c] sm:$0xf]
  %v59 = vld [vmem:[%s2] sm:$0x1]
  %v61 = vperm.slane %v59, 0
  %v71 = vunpack.c.l.b16 %v15
  %v72 = vunpack.c.h.b16 %v15
  %v73 = vunpack.c.l.b16 %v16
  %v74 = vunpack.c.l.b16 %v17
  %v75 = vunpack.c.h.b16 %v17
  %v76 = vunpack.c.l.b16 %v18
  %v77 = vunpack.c.l.b16 %v19
  %v78 = vunpack.c.h.b16 %v19
  %v79 = vunpack.c.l.b16 %v20
  %v80 = vunpack.c.l.b16 %v21
  %v81 = vunpack.c.h.b16 %v21
  %v82 = vunpack.c.l.b16 %v22
  %v83 = vpack.c.b16 %v74, %v71
  %v84 = vpack.c.b16 %v75, %v72
  %v85 = vpack.c.b16 %v76, %v73
  %v86 = vpack.c.b16 %v80, %v77
  %v87 = vpack.c.b16 %v81, %v78
  %v88 = vpack.c.b16 %v82, %v79
  %v129 = vunpack.c.l.b16 %v23
  %v130 = vunpack.c.l.b16 %v24
  %v131 = vunpack.c.l.b16 %v25
  %v132 = vunpack.c.l.b16 %v26
  %v133 = vunpack.c.l.b16 %v27
  %v134 = vunpack.c.l.b16 %v28
  %v135 = vunpack.c.l.b16 %v29
  %v136 = vunpack.c.l.b16 %v30
  %v137 = vunpack.c.l.b16 %v31
  %v138 = vunpack.c.l.b16 %v32
  %v139 = vunpack.c.l.b16 %v33
  %v140 = vunpack.c.l.b16 %v34
  %v141 = vunpack.c.l.b16 %v35
  %v142 = vunpack.c.l.b16 %v36
  %v143 = vunpack.c.l.b16 %v37
  %v144 = vunpack.c.l.b16 %v38
  %v145 = vunpack.c.l.b16 %v39
  %v146 = vunpack.c.l.b16 %v40
  %v147 = vunpack.c.l.b16 %v41
  %v148 = vunpack.c.l.b16 %v42
  %v149 = vunpack.c.l.b16 %v43
  %v150 = vunpack.c.l.b16 %v44
  %v151 = vunpack.c.l.b16 %v45
  %v152 = vunpack.c.l.b16 %v46
  %v153 = vunpack.c.l.b16 %v47
  %v154 = vunpack.c.l.b16 %v48
  %v155 = vunpack.c.l.b16 %v49
  %v156 = vunpack.c.l.b16 %v50
  %v157 = vunpack.c.l.b16 %v51
  %v158 = vunpack.c.l.b16 %v52
  %v159 = vunpack.c.l.b16 %v53
  %v160 = vunpack.c.l.b16 %v54
  %v161 = vunpack.c.l.b16 %v55
  %v162 = vunpack.c.l.b16 %v56
  %v163 = vunpack.c.l.b16 %v57
  %v164 = vunpack.c.l.b16 %v58
  %v165 = vpack.c.b16 %v130, %v129
  %v166 = vpack.c.b16 %v132, %v131
  %v167 = vpack.c.b16 %v134, %v133
  %v168 = vpack.c.b16 %v136, %v135
  %v169 = vpack.c.b16 %v138, %v137
  %v170 = vpack.c.b16 %v140, %v139
  %v171 = vpack.c.b16 %v142, %v141
  %v172 = vpack.c.b16 %v144, %v143
  %v173 = vpack.c.b16 %v146, %v145
  %v174 = vpack.c.b16 %v148, %v147
  %v175 = vpack.c.b16 %v150, %v149
  %v176 = vpack.c.b16 %v152, %v151
  %v177 = vpack.c.b16 %v154, %v153
  %v178 = vpack.c.b16 %v156, %v155
  %v179 = vpack.c.b16 %v158, %v157
  %v180 = vpack.c.b16 %v160, %v159
  %v181 = vpack.c.b16 %v162, %v161
  %v182 = vpack.c.b16 %v164, %v163
  %vm201 = vcmask 261120
  %v203 = vsel %vm201, %v85, 0
  %v206 = vsel %vm201, %v88, 0
  %208 = vmatpush.bf16.msra.mxu0 %v172
  %209 = vmatpush.bf16.msra.mxu0 %v171
  %210 = vmatpush.bf16.msra.mxu0 %v170
  %211 = vmatpush.bf16.msra.mxu0 %v169
  %212 = vmatpush.bf16.msra.mxu0 %v168
  %213 = vmatpush.bf16.msra.mxu0 %v167
  %214 = vmatpush.bf16.msra.mxu0 %v166
  %215 = vmatpush.bf16.msra.mxu0 %v165
  %216 = vmatmul.bf16.gmra.mxu0 %v83
  %v217 = vpop.f32.mrf.mxu0
  %v218 = vadd.f32 %v61, %v217
  %v219 = vpop.f32.mrf.mxu0
  %v220 = vadd.f32 %v61, %v219
  %221 = vmatmul.bf16.gmra.mxu0 %v86
  %v222 = vpop.f32.mrf.mxu0
  %v223 = vadd.f32 %v61, %v222
  %v224 = vpop.f32.mrf.mxu0
  %v225 = vadd.f32 %v61, %v224
  %226 = vdwg.mxu0
  %227 = vmatpush.bf16.msra.mxu0 %v180
  %228 = vmatpush.bf16.msra.mxu0 %v179
  %229 = vmatpush.bf16.msra.mxu0 %v178
  %230 = vmatpush.bf16.msra.mxu0 %v177
  %231 = vmatpush.bf16.msra.mxu0 %v176
  %232 = vmatpush.bf16.msra.mxu0 %v175
  %233 = vmatpush.bf16.msra.mxu0 %v174
  %234 = vmatpush.bf16.msra.mxu0 %v173
  %235 = vmatmul.bf16.gmra.mxu0 %v84
  %v236 = vpop.f32.mrf.mxu0
  %v237 = vadd.f32 %v218, %v236
  %v238 = vpop.f32.mrf.mxu0
  %v239 = vadd.f32 %v220, %v238
  %240 = vmatmul.bf16.gmra.mxu0 %v87
  %v241 = vpop.f32.mrf.mxu0
  %v242 = vadd.f32 %v223, %v241
  %v243 = vpop.f32.mrf.mxu0
  %v244 = vadd.f32 %v225, %v243
  %245 = vdwg.mxu0
  %246 = vmatpush.bf16.msra.mxu0 0
  %247 = vmatpush.bf16.msra.mxu0 0
  %248 = vmatpush.bf16.msra.mxu0 0
  %249 = vmatpush.bf16.msra.mxu0 0
  %250 = vmatpush.bf16.msra.mxu0 0
  %251 = vmatpush.bf16.msra.mxu0 0
  %252 = vmatpush.bf16.msra.mxu0 %v182
  %253 = vmatpush.bf16.msra.mxu0 %v181
  %254 = vmatmul.bf16.gmra.mxu0 %v203
  %v255 = vpop.f32.mrf.mxu0
  %v256 = vadd.f32 %v237, %v255
  %v257 = vpop.f32.mrf.mxu0
  %v258 = vadd.f32 %v239, %v257
  %259 = vmatmul.bf16.gmra.mxu0 %v206
  %v260 = vpop.f32.mrf.mxu0
  %v261 = vadd.f32 %v242, %v260
  %v262 = vpop.f32.mrf.mxu0
  %v263 = vadd.f32 %v244, %v262
  %264 = vdwg.mxu0
  %v265 = vmax.f32 %v256, 0.0
  %v266 = vmax.f32 %v258, 0.0
  %v267 = vmax.f32 %v261, 0.0
  %v268 = vmax.f32 %v263, 0.0
  %269 = vst [vmem:[%s3] sm:$0xff] %v265
  %270 = vst [vmem:[%s3 + $0x8] sm:$0xff] %v266
  %271 = vst [vmem:[%s3 + $0x10] sm:$0xff] %v267
  %272 = vst [vmem:[%s3 + $0x18] sm:$0xff] %v268
  // Predicated region
  $region14: #{raft_plus_dicl_forward.79} parent=0 // pred_check
    _
  $region15: #{raft_plus_dicl_forward.79} parent=0 // pred_check_branch
    %274 = sbr.rel (0) target = $region17
  $region16: #{raft_plus_dicl_forward.79} parent=0 // pred_region
    _
  $region17: #{raft_plus_dicl_forward.79} parent=0 // pred_fallthru
    _
  // Predicated region
  $region18: #{raft_plus_dicl_forward.79} parent=0 // pred_check
    _
  $region19: #{raft_plus_dicl_forward.79} parent=0 // pred_check_branch
    %276 = sbr.rel (0) target = $region21
  $region20: #{raft_plus_dicl_forward.79} parent=0 // pred_region
    _
  $region21: #{raft_plus_dicl_forward.79} parent=0 // pred_fallthru
    _

// kernel: raft_plus_dicl_forward.80
$region0: #{raft_plus_dicl_forward.80}
  #allocation0 [shape = 'u32[]', space=smem, size = 0x4, offset = 0x4, fixed_abs, tag = 'smem constant byte address 0x4 - core index']
  #allocation1 [shape = 'u32[72,128]{1,0:T(1,128)}', space=vmem, size = 0x9000, scoped, tag = 'internal scratch']
  %s0 = inlined_call_operand.vmem [shape: bf16[32,576], index: 0, kind: input, shape index: {}]
  %s1 = inlined_call_operand.vmem [shape: bf16[576,2], index: 1, kind: input, shape index: {}]
  %s2 = inlined_call_operand.vmem [shape: f32[1,2], index: 2, kind: input, shape index: {}]
  %s3 = inlined_call_operand.vmem [shape: f32[32,2], index: 3, kind: output, shape index: {}]
  %s4 = sld [smem:[#allocation0]]
  $region22: #{raft_plus_dicl_forward.80} parent=0
    _
  %s6 = ssub.s32 1, %s4
  %s7 = scalar_select 0, %s6, %s4
  // Predicated region
  $region2: #{raft_plus_dicl_forward.80} parent=0 // pred_check
    _
  $region3: #{raft_plus_dicl_forward.80} parent=0 // pred_check_branch
    %9 = sbr.rel (0) target = $region5
  $region4: #{raft_plus_dicl_forward.80} parent=0 // pred_region
    _
  $region5: #{raft_plus_dicl_forward.80} parent=0 // pred_fallthru
    _
  // Predicated region
  $region6: #{raft_plus_dicl_forward.80} parent=0 // pred_check
    _
  $region7: #{raft_plus_dicl_forward.80} parent=0 // pred_check_branch
    %11 = sbr.rel (0) target = $region9
  $region8: #{raft_plus_dicl_forward.80} parent=0 // pred_region
    _
  $region9: #{raft_plus_dicl_forward.80} parent=0 // pred_fallthru
    _
  // Predicated region
  $region10: #{raft_plus_dicl_forward.80} parent=0 // pred_check
    _
  $region11: #{raft_plus_dicl_forward.80} parent=0 // pred_check_branch
    %13 = sbr.rel (0) target = $region13
  $region12: #{raft_plus_dicl_forward.80} parent=0 // pred_region
    _
  $region13: #{raft_plus_dicl_forward.80} parent=0 // pred_fallthru
    _
  %v15 = vld [vmem:[%s0] sm:$0xff]
  %v16 = vld [vmem:[%s0 + $0x8] sm:$0xff]
  %v17 = vld [vmem:[%s0 + $0x10] sm:$0xf]
  %v18 = vld [vmem:[%s0 + $0x14] sm:$0xff]
  %v19 = vld [vmem:[%s0 + $0x1c] sm:$0xff]
  %v20 = vld [vmem:[%s0 + $0x24] sm:$0xf]
  %v21 = vld [vmem:[%s0 + $0x28] sm:$0xff]
  %v22 = vld [vmem:[%s0 + $0x30] sm:$0xff]
  %v23 = vld [vmem:[%s0 + $0x38] sm:$0xf]
  %v24 = vld [vmem:[%s0 + $0x3c] sm:$0xff]
  %v25 = vld [vmem:[%s0 + $0x44] sm:$0xff]
  %v26 = vld [vmem:[%s0 + $0x4c] sm:$0xf]
  %v27 = vld [vmem:[%s1] sm:$0xf]
  %v28 = vld [vmem:[%s1 + $0x4] sm:$0xf]
  %v29 = vld [vmem:[%s1 + $0x8] sm:$0xf]
  %v30 = vld [vmem:[%s1 + $0xc] sm:$0xf]
  %v31 = vld [vmem:[%s1 + $0x10] sm:$0xf]
  %v32 = vld [vmem:[%s1 + $0x14] sm:$0xf]
  %v33 = vld [vmem:[%s1 + $0x18] sm:$0xf]
  %v34 = vld [vmem:[%s1 + $0x1c] sm:$0xf]
  %v35 = vld [vmem:[%s1 + $0x20] sm:$0xf]
  %v36 = vld [vmem:[%s1 + $0x24] sm:$0xf]
  %v37 = vld [vmem:[%s1 + $0x28] sm:$0xf]
  %v38 = vld [vmem:[%s1 + $0x2c] sm:$0xf]
  %v39 = vld [vmem:[%s1 + $0x30] sm:$0xf]
  %v40 = vld [vmem:[%s1 + $0x34] sm:$0xf]
  %v41 = vld [vmem:[%s1 + $0x38] sm:$0xf]
  %v42 = vld [vmem:[%s1 + $0x3c] sm:$0xf]
  %v43 = vld [vmem:[%s1 + $0x40] sm:$0xf]
  %v44 = vld [vmem:[%s1 + $0x44] sm:$0xf]
  %v45 = vld [vmem:[%s1 + $0x48] sm:$0xf]
  %v46 = vld [vmem:[%s1 + $0x4c] sm:$0xf]
  %v47 = vld [vmem:[%s1 + $0x50] sm:$0xf]
  %v48 = vld [vmem:[%s1 + $0x54] sm:$0xf]
  %v49 = vld [vmem:[%s1 + $0x58] sm:$0xf]
  %v50 = vld [vmem:[%s1 + $0x5c] sm:$0xf]
  %v51 = vld [vmem:[%s1 + $0x60] sm:$0xf]
  %v52 = vld [vmem:[%s1 + $0x64] sm:$0xf]
  %v53 = vld [vmem:[%s1 + $0x68] sm:$0xf]
  %v54 = vld [vmem:[%s1 + $0x6c] sm:$0xf]
  %v55 = vld [vmem:[%s1 + $0x70] sm:$0xf]
  %v56 = vld [vmem:[%s1 + $0x74] sm:$0xf]
  %v57 = vld [vmem:[%s1 + $0x78] sm:$0xf]
  %v58 = vld [vmem:[%s1 + $0x7c] sm:$0xf]
  %v59 = vld [vmem:[%s1 + $0x80] sm:$0xf]
  %v60 = vld [vmem:[%s1 + $0x84] sm:$0xf]
  %v61 = vld [vmem:[%s1 + $0x88] sm:$0xf]
  %v62 = vld [vmem:[%s1 + $0x8c] sm:$0xf]
  %v63 = vld [vmem:[%s1 + $0x90] sm:$0xf]
  %v64 = vld [vmem:[%s1 + $0x94] sm:$0xf]
  %v65 = vld [vmem:[%s1 + $0x98] sm:$0xf]
  %v66 = vld [vmem:[%s1 + $0x9c] sm:$0xf]
  %v67 = vld [vmem:[%s1 + $0xa0] sm:$0xf]
  %v68 = vld [vmem:[%s1 + $0xa4] sm:$0xf]
  %v69 = vld [vmem:[%s1 + $0xa8] sm:$0xf]
  %v70 = vld [vmem:[%s1 + $0xac] sm:$0xf]
  %v71 = vld [vmem:[%s1 + $0xb0] sm:$0xf]
  %v72 = vld [vmem:[%s1 + $0xb4] sm:$0xf]
  %v73 = vld [vmem:[%s1 + $0xb8] sm:$0xf]
  %v74 = vld [vmem:[%s1 + $0xbc] sm:$0xf]
  %v75 = vld [vmem:[%s1 + $0xc0] sm:$0xf]
  %v76 = vld [vmem:[%s1 + $0xc4] sm:$0xf]
  %v77 = vld [vmem:[%s1 + $0xc8] sm:$0xf]
  %v78 = vld [vmem:[%s1 + $0xcc] sm:$0xf]
  %v79 = vld [vmem:[%s1 + $0xd0] sm:$0xf]
  %v80 = vld [vmem:[%s1 + $0xd4] sm:$0xf]
  %v81 = vld [vmem:[%s1 + $0xd8] sm:$0xf]
  %v82 = vld [vmem:[%s1 + $0xdc] sm:$0xf]
  %v83 = vld [vmem:[%s1 + $0xe0] sm:$0xf]
  %v84 = vld [vmem:[%s1 + $0xe4] sm:$0xf]
  %v85 = vld [vmem:[%s1 + $0xe8] sm:$0xf]
  %v86 = vld [vmem:[%s1 + $0xec] sm:$0xf]
  %v87 = vld [vmem:[%s1 + $0xf0] sm:$0xf]
  %v88 = vld [vmem:[%s1 + $0xf4] sm:$0xf]
  %v89 = vld [vmem:[%s1 + $0xf8] sm:$0xf]
  %v90 = vld [vmem:[%s1 + $0xfc] sm:$0xf]
  %v91 = vld [vmem:[%s1 + $0x100] sm:$0xf]
  %v92 = vld [vmem:[%s1 + $0x104] sm:$0xf]
  %v93 = vld [vmem:[%s1 + $0x108] sm:$0xf]
  %v94 = vld [vmem:[%s1 + $0x10c] sm:$0xf]
  %v95 = vld [vmem:[%s1 + $0x110] sm:$0xf]
  %v96 = vld [vmem:[%s1 + $0x114] sm:$0xf]
  %v97 = vld [vmem:[%s1 + $0x118] sm:$0xf]
  %v98 = vld [vmem:[%s1 + $0x11c] sm:$0xf]
  %v99 = vld [vmem:[%s2] sm:$0x1]
  %v101 = vperm.slane %v99, 0
  %v115 = vunpack.c.l.b16 %v15
  %v116 = vunpack.c.h.b16 %v15
  %v117 = vunpack.c.l.b16 %v16
  %v118 = vunpack.c.h.b16 %v16
  %v119 = vunpack.c.l.b16 %v17
  %v120 = vunpack.c.l.b16 %v18
  %v121 = vunpack.c.h.b16 %v18
  %v122 = vunpack.c.l.b16 %v19
  %v123 = vunpack.c.h.b16 %v19
  %v124 = vunpack.c.l.b16 %v20
  %v125 = vunpack.c.l.b16 %v21
  %v126 = vunpack.c.h.b16 %v21
  %v127 = vunpack.c.l.b16 %v22
  %v128 = vunpack.c.h.b16 %v22
  %v129 = vunpack.c.l.b16 %v23
  %v130 = vunpack.c.l.b16 %v24
  %v131 = vunpack.c.h.b16 %v24
  %v132 = vunpack.c.l.b16 %v25
  %v133 = vunpack.c.h.b16 %v25
  %v134 = vunpack.c.l.b16 %v26
  %v135 = vpack.c.b16 %v120, %v115
  %v136 = vpack.c.b16 %v121, %v116
  %v137 = vpack.c.b16 %v122, %v117
  %v138 = vpack.c.b16 %v123, %v118
  %v139 = vpack.c.b16 %v124, %v119
  %v140 = vpack.c.b16 %v130, %v125
  %v141 = vpack.c.b16 %v131, %v126
  %v142 = vpack.c.b16 %v132, %v127
  %v143 = vpack.c.b16 %v133, %v128
  %v144 = vpack.c.b16 %v134, %v129
  %v225 = vunpack.c.l.b16 %v27
  %v226 = vunpack.c.l.b16 %v28
  %v227 = vunpack.c.l.b16 %v29
  %v228 = vunpack.c.l.b16 %v30
  %v229 = vunpack.c.l.b16 %v31
  %v230 = vunpack.c.l.b16 %v32
  %v231 = vunpack.c.l.b16 %v33
  %v232 = vunpack.c.l.b16 %v34
  %v233 = vunpack.c.l.b16 %v35
  %v234 = vunpack.c.l.b16 %v36
  %v235 = vunpack.c.l.b16 %v37
  %v236 = vunpack.c.l.b16 %v38
  %v237 = vunpack.c.l.b16 %v39
  %v238 = vunpack.c.l.b16 %v40
  %v239 = vunpack.c.l.b16 %v41
  %v240 = vunpack.c.l.b16 %v42
  %v241 = vunpack.c.l.b16 %v43
  %v242 = vunpack.c.l.b16 %v44
  %v243 = vunpack.c.l.b16 %v45
  %v244 = vunpack.c.l.b16 %v46
  %v245 = vunpack.c.l.b16 %v47
  %v246 = vunpack.c.l.b16 %v48
  %v247 = vunpack.c.l.b16 %v49
  %v248 = vunpack.c.l.b16 %v50
  %v249 = vunpack.c.l.b16 %v51
  %v250 = vunpack.c.l.b16 %v52
  %v251 = vunpack.c.l.b16 %v53
  %v252 = vunpack.c.l.b16 %v54
  %v253 = vunpack.c.l.b16 %v55
  %v254 = vunpack.c.l.b16 %v56
  %v255 = vunpack.c.l.b16 %v57
  %v256 = vunpack.c.l.b16 %v58
  %v257 = vunpack.c.l.b16 %v59
  %v258 = vunpack.c.l.b16 %v60
  %v259 = vunpack.c.l.b16 %v61
  %v260 = vunpack.c.l.b16 %v62
  %v261 = vunpack.c.l.b16 %v63
  %v262 = vunpack.c.l.b16 %v64
  %v263 = vunpack.c.l.b16 %v65
  %v264 = vunpack.c.l.b16 %v66
  %v265 = vunpack.c.l.b16 %v67
  %v266 = vunpack.c.l.b16 %v68
  %v267 = vunpack.c.l.b16 %v69
  %v268 = vunpack.c.l.b16 %v70
  %v269 = vunpack.c.l.b16 %v71
  %v270 = vunpack.c.l.b16 %v72
  %v271 = vunpack.c.l.b16 %v73
  %v272 = vunpack.c.l.b16 %v74
  %v273 = vunpack.c.l.b16 %v75
  %v274 = vunpack.c.l.b16 %v76
  %v275 = vunpack.c.l.b16 %v77
  %v276 = vunpack.c.l.b16 %v78
  %v277 = vunpack.c.l.b16 %v79
  %v278 = vunpack.c.l.b16 %v80
  %v279 = vunpack.c.l.b16 %v81
  %v280 = vunpack.c.l.b16 %v82
  %v281 = vunpack.c.l.b16 %v83
  %v282 = vunpack.c.l.b16 %v84
  %v283 = vunpack.c.l.b16 %v85
  %v284 = vunpack.c.l.b16 %v86
  %v285 = vunpack.c.l.b16 %v87
  %v286 = vunpack.c.l.b16 %v88
  %v287 = vunpack.c.l.b16 %v89
  %v288 = vunpack.c.l.b16 %v90
  %v289 = vunpack.c.l.b16 %v91
  %v290 = vunpack.c.l.b16 %v92
  %v291 = vunpack.c.l.b16 %v93
  %v292 = vunpack.c.l.b16 %v94
  %v293 = vunpack.c.l.b16 %v95
  %v294 = vunpack.c.l.b16 %v96
  %v295 = vunpack.c.l.b16 %v97
  %v296 = vunpack.c.l.b16 %v98
  %v297 = vpack.c.b16 %v226, %v225
  %v298 = vpack.c.b16 %v228, %v227
  %v299 = vpack.c.b16 %v230, %v229
  %v300 = vpack.c.b16 %v232, %v231
  %v301 = vpack.c.b16 %v234, %v233
  %v302 = vpack.c.b16 %v236, %v235
  %v303 = vpack.c.b16 %v238, %v237
  %v304 = vpack.c.b16 %v240, %v239
  %v305 = vpack.c.b16 %v242, %v241
  %v306 = vpack.c.b16 %v244, %v243
  %v307 = vpack.c.b16 %v246, %v245
  %v308 = vpack.c.b16 %v248, %v247
  %v309 = vpack.c.b16 %v250, %v249
  %v310 = vpack.c.b16 %v252, %v251
  %v311 = vpack.c.b16 %v254, %v253
  %v312 = vpack.c.b16 %v256, %v255
  %v313 = vpack.c.b16 %v258, %v257
  %v314 = vpack.c.b16 %v260, %v259
  %v315 = vpack.c.b16 %v262, %v261
  %v316 = vpack.c.b16 %v264, %v263
  %v317 = vpack.c.b16 %v266, %v265
  %v318 = vpack.c.b16 %v268, %v267
  %v319 = vpack.c.b16 %v270, %v269
  %v320 = vpack.c.b16 %v272, %v271
  %v321 = vpack.c.b16 %v274, %v273
  %v322 = vpack.c.b16 %v276, %v275
  %v323 = vpack.c.b16 %v278, %v277
  %v324 = vpack.c.b16 %v280, %v279
  %v325 = vpack.c.b16 %v282, %v281
  %v326 = vpack.c.b16 %v284, %v283
  %v327 = vpack.c.b16 %v286, %v285
  %v328 = vpack.c.b16 %v288, %v287
  %v329 = vpack.c.b16 %v290, %v289
  %v330 = vpack.c.b16 %v292, %v291
  %v331 = vpack.c.b16 %v294, %v293
  %v332 = vpack.c.b16 %v296, %v295
  %vm369 = vcmask 523264
  %v371 = vsel %vm369, %v139, 0
  %v374 = vsel %vm369, %v144, 0
  %376 = vmatpush.bf16.msra.mxu0 %v304
  %377 = vmatpush.bf16.msra.mxu0 %v303
  %378 = vmatpush.bf16.msra.mxu0 %v302
  %379 = vmatpush.bf16.msra.mxu0 %v301
  %380 = vmatpush.bf16.msra.mxu0 %v300
  %381 = vmatpush.bf16.msra.mxu0 %v299
  %382 = vmatpush.bf16.msra.mxu0 %v298
  %383 = vmatpush.bf16.msra.mxu0 %v297
  %384 = vmatmul.bf16.gmra.mxu0 %v135
  %v385 = vpop.f32.mrf.mxu0
  %v386 = vadd.f32 %v101, %v385
  %v387 = vpop.f32.mrf.mxu0
  %v388 = vadd.f32 %v101, %v387
  %389 = vmatmul.bf16.gmra.mxu0 %v140
  %v390 = vpop.f32.mrf.mxu0
  %v391 = vadd.f32 %v101, %v390
  %v392 = vpop.f32.mrf.mxu0
  %v393 = vadd.f32 %v101, %v392
  %394 = vdwg.mxu0
  %395 = vmatpush.bf16.msra.mxu0 %v312
  %396 = vmatpush.bf16.msra.mxu0 %v311
  %397 = vmatpush.bf16.msra.mxu0 %v310
  %398 = vmatpush.bf16.msra.mxu0 %v309
  %399 = vmatpush.bf16.msra.mxu0 %v308
  %400 = vmatpush.bf16.msra.mxu0 %v307
  %401 = vmatpush.bf16.msra.mxu0 %v306
  %402 = vmatpush.bf16.msra.mxu0 %v305
  %403 = vmatmul.bf16.gmra.mxu0 %v136
  %v404 = vpop.f32.mrf.mxu0
  %v405 = vadd.f32 %v386, %v404
  %v406 = vpop.f32.mrf.mxu0
  %v407 = vadd.f32 %v388, %v406
  %408 = vmatmul.bf16.gmra.mxu0 %v141
  %v409 = vpop.f32.mrf.mxu0
  %v410 = vadd.f32 %v391, %v409
  %v411 = vpop.f32.mrf.mxu0
  %v412 = vadd.f32 %v393, %v411
  %413 = vdwg.mxu0
  %414 = vmatpush.bf16.msra.mxu0 %v320
  %415 = vmatpush.bf16.msra.mxu0 %v319
  %416 = vmatpush.bf16.msra.mxu0 %v318
  %417 = vmatpush.bf16.msra.mxu0 %v317
  %418 = vmatpush.bf16.msra.mxu0 %v316
  %419 = vmatpush.bf16.msra.mxu0 %v315
  %420 = vmatpush.bf16.msra.mxu0 %v314
  %421 = vmatpush.bf16.msra.mxu0 %v313
  %422 = vmatmul.bf16.gmra.mxu0 %v137
  %v423 = vpop.f32.mrf.mxu0
  %v424 = vadd.f32 %v405, %v423
  %v425 = vpop.f32.mrf.mxu0
  %v426 = vadd.f32 %v407, %v425
  %427 = vmatmul.bf16.gmra.mxu0 %v142
  %v428 = vpop.f32.mrf.mxu0
  %v429 = vadd.f32 %v410, %v428
  %v430 = vpop.f32.mrf.mxu0
  %v431 = vadd.f32 %v412, %v430
  %432 = vdwg.mxu0
  %433 = vmatpush.bf16.msra.mxu0 %v328
  %434 = vmatpush.bf16.msra.mxu0 %v327
  %435 = vmatpush.bf16.msra.mxu0 %v326
  %436 = vmatpush.bf16.msra.mxu0 %v325
  %437 = vmatpush.bf16.msra.mxu0 %v324
  %438 = vmatpush.bf16.msra.mxu0 %v323
  %439 = vmatpush.bf16.msra.mxu0 %v322
  %440 = vmatpush.bf16.msra.mxu0 %v321
  %441 = vmatmul.bf16.gmra.mxu0 %v138
  %v442 = vpop.f32.mrf.mxu0
  %v443 = vadd.f32 %v424, %v442
  %v444 = vpop.f32.mrf.mxu0
  %v445 = vadd.f32 %v426, %v444
  %446 = vmatmul.bf16.gmra.mxu0 %v143
  %v447 = vpop.f32.mrf.mxu0
  %v448 = vadd.f32 %v429, %v447
  %v449 = vpop.f32.mrf.mxu0
  %v450 = vadd.f32 %v431, %v449
  %451 = vdwg.mxu0
  %452 = vmatpush.bf16.msra.mxu0 0
  %453 = vmatpush.bf16.msra.mxu0 0
  %454 = vmatpush.bf16.msra.mxu0 0
  %455 = vmatpush.bf16.msra.mxu0 0
  %456 = vmatpush.bf16.msra.mxu0 %v332
  %457 = vmatpush.bf16.msra.mxu0 %v331
  %458 = vmatpush.bf16.msra.mxu0 %v330
  %459 = vmatpush.bf16.msra.mxu0 %v329
  %460 = vmatmul.bf16.gmra.mxu0 %v371
  %v461 = vpop.f32.mrf.mxu0
  %v462 = vadd.f32 %v443, %v461
  %v463 = vpop.f32.mrf.mxu0
  %v464 = vadd.f32 %v445, %v463
  %465 = vmatmul.bf16.gmra.mxu0 %v374
  %v466 = vpop.f32.mrf.mxu0
  %v467 = vadd.f32 %v448, %v466
  %v468 = vpop.f32.mrf.mxu0
  %v469 = vadd.f32 %v450, %v468
  %470 = vdwg.mxu0
  %vm471 = vcmask 15360
  %472 = vst.msk [vmem:[%s3] sm:$0xff] %vm471, %v462
  %473 = vst.msk [vmem:[%s3 + $0x8] sm:$0xff] %vm471, %v464
  %474 = vst.msk [vmem:[%s3 + $0x10] sm:$0xff] %vm471, %v467
  %475 = vst.msk [vmem:[%s3 + $0x18] sm:$0xff] %vm471, %v469
  // Predicated region
  $region14: #{raft_plus_dicl_forward.80} parent=0 // pred_check
    _
  $region15: #{raft_plus_dicl_forward.80} parent=0 // pred_check_branch
    %477 = sbr.rel (0) target = $region17
  $region16: #{raft_plus_dicl_forward.80} parent=0 // pred_region
    _
  $region17: #{raft_plus_dicl_forward.80} parent=0 // pred_fallthru
    _
  // Predicated region
  $region18: #{raft_plus_dicl_forward.80} parent=0 // pred_check
    _
  $region19: #{raft_plus_dicl_forward.80} parent=0 // pred_check_branch
    %479 = sbr.rel (0) target = $region21
  $region20: #{raft_plus_dicl_forward.80} parent=0 // pred_region
    _
  $region21: #{raft_plus_dicl_forward.80} parent=0 // pred_fallthru
    _

// kernel: raft_plus_dicl_forward.101
$region0: #{raft_plus_dicl_forward.101}
  #allocation0 [shape = 'u32[]', space=smem, size = 0x4, offset = 0x4, fixed_abs, tag = 'smem constant byte address 0x4 - core index']
  #allocation1 [shape = 'u32[72,128]{1,0:T(1,128)}', space=vmem, size = 0x9000, scoped, tag = 'internal scratch']
  %s0 = inlined_call_operand.vmem [shape: bf16[32,64], index: 0, kind: input, shape index: {}]
  %s1 = inlined_call_operand.vmem [shape: bf16[64,576], index: 1, kind: input, shape index: {}]
  %s2 = inlined_call_operand.vmem [shape: f32[1,576], index: 2, kind: input, shape index: {}]
  %s3 = inlined_call_operand.vmem [shape: f32[32,576], index: 3, kind: output, shape index: {}]
  %s4 = sld [smem:[#allocation0]]
  $region22: #{raft_plus_dicl_forward.101} parent=0
    _
  %s6 = ssub.s32 1, %s4
  %s7 = scalar_select 0, %s6, %s4
  // Predicated region
  $region2: #{raft_plus_dicl_forward.101} parent=0 // pred_check
    _
  $region3: #{raft_plus_dicl_forward.101} parent=0 // pred_check_branch
    %9 = sbr.rel (0) target = $region5
  $region4: #{raft_plus_dicl_forward.101} parent=0 // pred_region
    _
  $region5: #{raft_plus_dicl_forward.101} parent=0 // pred_fallthru
    _
  // Predicated region
  $region6: #{raft_plus_dicl_forward.101} parent=0 // pred_check
    _
  $region7: #{raft_plus_dicl_forward.101} parent=0 // pred_check_branch
    %11 = sbr.rel (0) target = $region9
  $region8: #{raft_plus_dicl_forward.101} parent=0 // pred_region
    _
  $region9: #{raft_plus_dicl_forward.101} parent=0 // pred_fallthru
    _
  // Predicated region
  $region10: #{raft_plus_dicl_forward.101} parent=0 // pred_check
    _
  $region11: #{raft_plus_dicl_forward.101} parent=0 // pred_check_branch
    %13 = sbr.rel (0) target = $region13
  $region12: #{raft_plus_dicl_forward.101} parent=0 // pred_region
    _
  $region13: #{raft_plus_dicl_forward.101} parent=0 // pred_fallthru
    _
  %v15 = vld [vmem:[%s0] sm:$0xf]
  %v16 = vld [vmem:[%s0 + $0x4] sm:$0xf]
  %v17 = vld [vmem:[%s0 + $0x8] sm:$0xf]
  %v18 = vld [vmem:[%s0 + $0xc] sm:$0xf]
  %v19 = vld [vmem:[%s1] sm:$0xff]
  %v20 = vld [vmem:[%s1 + $0x8] sm:$0xff]
  %v21 = vld [vmem:[%s1 + $0x10] sm:$0xf]
  %v22 = vld [vmem:[%s1 + $0x14] sm:$0xff]
  %v23 = vld [vmem:[%s1 + $0x1c] sm:$0xff]
  %v24 = vld [vmem:[%s1 + $0x24] sm:$0xf]
  %v25 = vld [vmem:[%s1 + $0x28] sm:$0xff]
  %v26 = vld [vmem:[%s1 + $0x30] sm:$0xff]
  %v27 = vld [vmem:[%s1 + $0x38] sm:$0xf]
  %v28 = vld [vmem:[%s1 + $0x3c] sm:$0xff]
  %v29 = vld [vmem:[%s1 + $0x44] sm:$0xff]
  %v30 = vld [vmem:[%s1 + $0x4c] sm:$0xf]
  %v31 = vld [vmem:[%s1 + $0x50] sm:$0xff]
  %v32 = vld [vmem:[%s1 + $0x58] sm:$0xff]
  %v33 = vld [vmem:[%s1 + $0x60] sm:$0xf]
  %v34 = vld [vmem:[%s1 + $0x64] sm:$0xff]
  %v35 = vld [vmem:[%s1 + $0x6c] sm:$0xff]
  %v36 = vld [vmem:[%s1 + $0x74] sm:$0xf]
  %v37 = vld [vmem:[%s1 + $0x78] sm:$0xff]
  %v38 = vld [vmem:[%s1 + $0x80] sm:$0xff]
  %v39 = vld [vmem:[%s1 + $0x88] sm:$0xf]
  %v40 = vld [vmem:[%s1 + $0x8c] sm:$0xff]
  %v41 = vld [vmem:[%s1 + $0x94] sm:$0xff]
  %v42 = vld [vmem:[%s1 + $0x9c] sm:$0xf]
  %v43 = vld [vmem:[%s2] sm:$0x1f]
  %v45 = vperm.slane %v43, 0
  %v46 = vperm.slane %v43, 1
  %v47 = vperm.slane %v43, 2
  %v48 = vperm.slane %v43, 3
  %v49 = vperm.slane %v43, 4
  %v59 = vunpack.c.l.b16 %v15
  %v60 = vunpack.c.l.b16 %v16
  %v61 = vunpack.c.l.b16 %v17
  %v62 = vunpack.c.l.b16 %v18
  %v63 = vpack.c.b16 %v60, %v59
  %v64 = vpack.c.b16 %v62, %v61
  %v89 = vunpack.c.l.b16 %v19
  %v90 = vunpack.c.h.b16 %v19
  %v91 = vunpack.c.l.b16 %v20
  %v92 = vunpack.c.h.b16 %v20
  %v93 = vunpack.c.l.b16 %v21
  %v94 = vunpack.c.l.b16 %v22
  %v95 = vunpack.c.h.b16 %v22
  %v96 = vunpack.c.l.b16 %v23
  %v97 = vunpack.c.h.b16 %v23
  %v98 = vunpack.c.l.b16 %v24
  %v99 = vunpack.c.l.b16 %v25
  %v100 = vunpack.c.h.b16 %v25
  %v101 = vunpack.c.l.b16 %v26
  %v102 = vunpack.c.h.b16 %v26
  %v103 = vunpack.c.l.b16 %v27
  %v104 = vunpack.c.l.b16 %v28
  %v105 = vunpack.c.h.b16 %v28
  %v106 = vunpack.c.l.b16 %v29
  %v107 = vunpack.c.h.b16 %v29
  %v108 = vunpack.c.l.b16 %v30
  %v109 = vunpack.c.l.b16 %v31
  %v110 = vunpack.c.h.b16 %v31
  %v111 = vunpack.c.l.b16 %v32
  %v112 = vunpack.c.h.b16 %v32
  %v113 = vunpack.c.l.b16 %v33
  %v114 = vunpack.c.l.b16 %v34
  %v115 = vunpack.c.h.b16 %v34
  %v116 = vunpack.c.l.b16 %v35
  %v117 = vunpack.c.h.b16 %v35
  %v118 = vunpack.c.l.b16 %v36
  %v119 = vunpack.c.l.b16 %v37
  %v120 = vunpack.c.h.b16 %v37
  %v121 = vunpack.c.l.b16 %v38
  %v122 = vunpack.c.h.b16 %v38
  %v123 = vunpack.c.l.b16 %v39
  %v124 = vunpack.c.l.b16 %v40
  %v125 = vunpack.c.h.b16 %v40
  %v126 = vunpack.c.l.b16 %v41
  %v127 = vunpack.c.h.b16 %v41
  %v128 = vunpack.c.l.b16 %v42
  %v129 = vpack.c.b16 %v94, %v89
  %v130 = vpack.c.b16 %v95, %v90
  %v131 = vpack.c.b16 %v96, %v91
  %v132 = vpack.c.b16 %v97, %v92
  %v133 = vpack.c.b16 %v98, %v93
  %v134 = vpack.c.b16 %v104, %v99
  %v135 = vpack.c.b16 %v105, %v100
  %v136 = vpack.c.b16 %v106, %v101
  %v137 = vpack.c.b16 %v107, %v102
  %v138 = vpack.c.b16 %v108, %v103
  %v139 = vpack.c.b16 %v114, %v109
  %v140 = vpack.c.b16 %v115, %v110
  %v141 = vpack.c.b16 %v116, %v111
  %v142 = vpack.c.b16 %v117, %v112
  %v143 = vpack.c.b16 %v118, %v113
  %v144 = vpack.c.b16 %v124, %v119
  %v145 = vpack.c.b16 %v125, %v120
  %v146 = vpack.c.b16 %v126, %v121
  %v147 = vpack.c.b16 %v127, %v122
  %v148 = vpack.c.b16 %v128, %v123
  %vm169 = vcmask 523264
  %v171 = vsel %vm169, %v63, 0
  %v174 = vsel %vm169, %v64, 0
  %176 = vmatpush.bf16.msra.mxu0 0
  %177 = vmatpush.bf16.msra.mxu0 0
  %178 = vmatpush.bf16.msra.mxu0 0
  %179 = vmatpush.bf16.msra.mxu0 0
  %180 = vmatpush.bf16.msra.mxu0 %v144
  %181 = vmatpush.bf16.msra.mxu0 %v139
  %182 = vmatpush.bf16.msra.mxu0 %v134
  %183 = vmatpush.bf16.msra.mxu0 %v129
  %184 = vmatmul.bf16.gmra.mxu0 %v171
  %v185 = vpop.f32.mrf.mxu0
  %v186 = vadd.f32 %v45, %v185
  %v187 = vpop.f32.mrf.mxu0
  %v188 = vadd.f32 %v45, %v187
  %189 = vmatmul.bf16.gmra.mxu0 %v174
  %v190 = vpop.f32.mrf.mxu0
  %v191 = vadd.f32 %v45, %v190
  %v192 = vpop.f32.mrf.mxu0
  %v193 = vadd.f32 %v45, %v192
  %194 = vdwg.mxu0
  %195 = vmatpush.bf16.msra.mxu0 0
  %196 = vmatpush.bf16.msra.mxu0 0
  %197 = vmatpush.bf16.msra.mxu0 0
  %198 = vmatpush.bf16.msra.mxu0 0
  %199 = vmatpush.bf16.msra.mxu0 %v145
  %200 = vmatpush.bf16.msra.mxu0 %v140
  %201 = vmatpush.bf16.msra.mxu0 %v135
  %202 = vmatpush.bf16.msra.mxu0 %v130
  %203 = vmatmul.bf16.gmra.mxu0 %v171
  %v204 = vpop.f32.mrf.mxu0
  %v205 = vadd.f32 %v46, %v204
  %v206 = vpop.f32.mrf.mxu0
  %v207 = vadd.f32 %v46, %v206
  %208 = vmatmul.bf16.gmra.mxu0 %v174
  %v209 = vpop.f32.mrf.mxu0
  %v210 = vadd.f32 %v46, %v209
  %v211 = vpop.f32.mrf.mxu0
  %v212 = vadd.f32 %v46, %v211
  %213 = vdwg.mxu0
  %214 = vmatpush.bf16.msra.mxu0 0
  %215 = vmatpush.bf16.msra.mxu0 0
  %216 = vmatpush.bf16.msra.mxu0 0
  %217 = vmatpush.bf16.msra.mxu0 0
  %218 = vmatpush.bf16.msra.mxu0 %v146
  %219 = vmatpush.bf16.msra.mxu0 %v141
  %220 = vmatpush.bf16.msra.mxu0 %v136
  %221 = vmatpush.bf16.msra.mxu0 %v131
  %222 = vmatmul.bf16.gmra.mxu0 %v171
  %v223 = vpop.f32.mrf.mxu0
  %v224 = vadd.f32 %v47, %v223
  %v225 = vpop.f32.mrf.mxu0
  %v226 = vadd.f32 %v47, %v225
  %227 = vmatmul.bf16.gmra.mxu0 %v174
  %v228 = vpop.f32.mrf.mxu0
  %v229 = vadd.f32 %v47, %v228
  %v230 = vpop.f32.mrf.mxu0
  %v231 = vadd.f32 %v47, %v230
  %232 = vdwg.mxu0
  %233 = vmatpush.bf16.msra.mxu0 0
  %234 = vmatpush.bf16.msra.mxu0 0
  %235 = vmatpush.bf16.msra.mxu0 0
  %236 = vmatpush.bf16.msra.mxu0 0
  %237 = vmatpush.bf16.msra.mxu0 %v147
  %238 = vmatpush.bf16.msra.mxu0 %v142
  %239 = vmatpush.bf16.msra.mxu0 %v137
  %240 = vmatpush.bf16.msra.mxu0 %v132
  %241 = vmatmul.bf16.gmra.mxu0 %v171
  %v242 = vpop.f32.mrf.mxu0
  %v243 = vadd.f32 %v48, %v242
  %v244 = vpop.f32.mrf.mxu0
  %v245 = vadd.f32 %v48, %v244
  %246 = vmatmul.bf16.gmra.mxu0 %v174
  %v247 = vpop.f32.mrf.mxu0
  %v248 = vadd.f32 %v48, %v247
  %v249 = vpop.f32.mrf.mxu0
  %v250 = vadd.f32 %v48, %v249
  %251 = vdwg.mxu0
  %252 = vmatpush.bf16.msra.mxu0 0
  %253 = vmatpush.bf16.msra.mxu0 0
  %254 = vmatpush.bf16.msra.mxu0 0
  %255 = vmatpush.bf16.msra.mxu0 0
  %256 = vmatpush.bf16.msra.mxu0 %v148
  %257 = vmatpush.bf16.msra.mxu0 %v143
  %258 = vmatpush.bf16.msra.mxu0 %v138
  %259 = vmatpush.bf16.msra.mxu0 %v133
  %260 = vmatmul.bf16.gmra.mxu0 %v171
  %v261 = vpop.f32.mrf.mxu0
  %v262 = vadd.f32 %v49, %v261
  %v263 = vpop.f32.mrf.mxu0
  %v264 = vadd.f32 %v49, %v263
  %265 = vmatmul.bf16.gmra.mxu0 %v174
  %v266 = vpop.f32.mrf.mxu0
  %v267 = vadd.f32 %v49, %v266
  %v268 = vpop.f32.mrf.mxu0
  %v269 = vadd.f32 %v49, %v268
  %270 = vdwg.mxu0
  %271 = vst [vmem:[%s3] sm:$0xff] %v186
  %272 = vst [vmem:[%s3 + $0x8] sm:$0xff] %v205
  %273 = vst [vmem:[%s3 + $0x10] sm:$0xff] %v224
  %274 = vst [vmem:[%s3 + $0x18] sm:$0xff] %v243
  %275 = vst.msk [vmem:[%s3 + $0x20] sm:$0xff] %vm169, %v262
  %276 = vst [vmem:[%s3 + $0x28] sm:$0xff] %v188
  %277 = vst [vmem:[%s3 + $0x30] sm:$0xff] %v207
  %278 = vst [vmem:[%s3 + $0x38] sm:$0xff] %v226
  %279 = vst [vmem:[%s3 + $0x40] sm:$0xff] %v245
  %280 = vst.msk [vmem:[%s3 + $0x48] sm:$0xff] %vm169, %v264
  %281 = vst [vmem:[%s3 + $0x50] sm:$0xff] %v191
  %282 = vst [vmem:[%s3 + $0x58] sm:$0xff] %v210
  %283 = vst [vmem:[%s3 + $0x60] sm:$0xff] %v229
  %284 = vst [vmem:[%s3 + $0x68] sm:$0xff] %v248
  %285 = vst.msk [vmem:[%s3 + $0x70] sm:$0xff] %vm169, %v267
  %286 = vst [vmem:[%s3 + $0x78] sm:$0xff] %v193
  %287 = vst [vmem:[%s3 + $0x80] sm:$0xff] %v212
  %288 = vst [vmem:[%s3 + $0x88] sm:$0xff] %v231
  %289 = vst [vmem:[%s3 + $0x90] sm:$0xff] %v250
  %290 = vst.msk [vmem:[%s3 + $0x98] sm:$0xff] %vm169, %v269
  // Predicated region
  $region14: #{raft_plus_dicl_forward.101} parent=0 // pred_check
    _
  $region15: #{raft_plus_dicl_forward.101} parent=0 // pred_check_branch
    %292 = sbr.rel (0) target = $region17
  $region16: #{raft_plus_dicl_forward.101} parent=0 // pred_region
    _
  $region17: #{raft_plus_dicl_forward.101} parent=0 // pred_fallthru
    _
  // Predicated region
  $region18: #{raft_plus_dicl_forward.101} parent=0 // pred_check
    _
  $region19: #{raft_plus_dicl_forward.101} parent=0 // pred_check_branch
    %294 = sbr.rel (0) target = $region21
  $region20: #{raft_plus_dicl_forward.101} parent=0 // pred_region
    _
  $region21: #{raft_plus_dicl_forward.101} parent=0 // pred_fallthru
    _

</llo_original>
